<compile_context>
chip_gen: v6e
topology: v6e:2x2x1
jax: 0.10.0
libtpu: 0.0.40
codegen_flags: <defaults>
</compile_context>

<pallas_src>
import jax
import jax.numpy as jnp
from jax.experimental import pallas as pl
from jax.experimental.pallas import tpu as pltpu


# ---------------------------------------------------------------------------
# Model-size constants (scaled-down synthetic backbone; head structure per spec)
# ---------------------------------------------------------------------------
IN_CH = 3            # RGB input
C1 = 8               # conv1 output channels (real, unpadded)
C2 = 16              # conv2 output channels (real, unpadded)
HIDDEN = 32          # scaled from 4096 (real, unpadded)
NUM_CLASSES = 102
POOLED_HW = 2        # scaled from VGG's adaptive (7, 7)


# ---------------------------------------------------------------------------
# Pallas kernels
# ---------------------------------------------------------------------------

def _conv3x3_relu_pool_kernel(x_ref, w_ref, b_ref, o_ref, patches_ref):
    """One image per grid step: o = maxpool2x2(relu(conv3x3_same(x) + b)).

    x_ref:       (1, H+2, W+2, Cin)     bf16 halo-padded input tile
    w_ref:       (9*Cin, Cout)          bf16 taps flattened (kh, kw, cin) row-major
    b_ref:       (1, Cout)              f32 bias
    o_ref:       (1, H//2, W//2, Cout)  bf16 pooled output (maxpool fused here)
    patches_ref: (H*W, 9*Cin)           bf16 VMEM im2col slab (never touches HBM)
    """
    _, Ho, Wo, Cout = o_ref.shape
    H, W = 2 * Ho, 2 * Wo
    Cin = x_ref.shape[3]

    # Assemble the im2col slab in VMEM: the 9 shifted windows sit side by side along
    # lanes, so the whole conv collapses into ONE (H*W, 9*Cin) x (9*Cin, Cout) matmul
    # instead of nine K=Cin micro-matmuls (MXU push/drain latency). Input ref is
    # already bf16, so no per-window casts.
    for kh in range(3):
        for kw in range(3):
            t = kh * 3 + kw
            win = x_ref[0, kh:kh + H, kw:kw + W, :].reshape(H * W, Cin)
            patches_ref[:, t * Cin:(t + 1) * Cin] = win

    acc = jnp.dot(patches_ref[...], w_ref[...],
                  preferred_element_type=jnp.float32)          # (H*W, Cout) f32
    y = jnp.maximum(acc + b_ref[...], 0.0)                     # f32 epilogue on VPU

    # Fused 2x2 / stride-2 max pool (rows are ordered h*W + w):
    y = jnp.max(y.reshape(H * Wo, 2, Cout), axis=1)            # pool along W
    y = jnp.max(y.reshape(Ho, 2, Wo, Cout), axis=1)            # pool along H
    o_ref[0] = y.astype(o_ref.dtype)                           # bf16 store


def _classifier_head_kernel(x_ref, w1_ref, b1_ref, w2_ref, b2_ref, o_ref):
    """o = log_softmax(relu(x @ w1 + b1) @ w2 + b2); all dims real (no padding)."""
    x = x_ref[...]                                             # (TB, D) bf16
    h = jnp.dot(x, w1_ref[...], preferred_element_type=jnp.float32)
    h = jnp.maximum(h + b1_ref[...], 0.0)
    z = jnp.dot(h.astype(jnp.bfloat16), w2_ref[...],
                preferred_element_type=jnp.float32)
    z = z + b2_ref[...]                                        # (TB, 102) f32 logits
    m = jnp.max(z, axis=1, keepdims=True)
    e = jnp.exp(z - m)
    lse = jnp.log(jnp.sum(e, axis=1, keepdims=True)) + m
    o_ref[...] = (z - lse).astype(o_ref.dtype)


# ---------------------------------------------------------------------------
# Pallas wrappers
# ---------------------------------------------------------------------------

def conv3x3_relu_pool(x, w, b):
    """x: (B, H, W, Cin) bf16 NHWC; w: (9*Cin, Cout) bf16; b: (1, Cout) f32.

    Returns maxpool2x2(relu(conv3x3_same(x) + b)) as (B, H//2, W//2, Cout) bf16.
    """
    B, H, W, Cin = x.shape
    Cout = w.shape[1]
    Ho, Wo = H // 2, W // 2
    xp = jnp.pad(x, ((0, 0), (1, 1), (1, 1), (0, 0)))          # 'same' halo (XLA glue)
    Hp, Wp = H + 2, W + 2
    cost = pl.CostEstimate(                                    # real channel counts
        flops=2 * B * H * W * 9 * Cin * Cout,
        transcendentals=0,
        bytes_accessed=(2 * B * Hp * Wp * Cin + 2 * B * Ho * Wo * Cout
                        + 2 * 9 * Cin * Cout + 4 * Cout),
    )
    return pl.pallas_call(
        _conv3x3_relu_pool_kernel,
        out_shape=jax.ShapeDtypeStruct((B, Ho, Wo, Cout), jnp.bfloat16),
        grid=(B,),
        in_specs=[
            pl.BlockSpec((1, Hp, Wp, Cin), lambda i: (i, 0, 0, 0)),
            pl.BlockSpec((9 * Cin, Cout), lambda i: (0, 0)),
            pl.BlockSpec((1, Cout), lambda i: (0, 0)),
        ],
        out_specs=pl.BlockSpec((1, Ho, Wo, Cout), lambda i: (i, 0, 0, 0)),
        scratch_shapes=[pltpu.VMEM((H * W, 9 * Cin), jnp.bfloat16)],
        compiler_params=pltpu.CompilerParams(
            dimension_semantics=("parallel",),   # megacore sharding over batch
            vmem_limit_bytes=16 * 1024 * 1024,   # per-step buffers are only a few KiB
        ),
        cost_estimate=cost,
    )(xp, w, b)


def pallas_classifier_head(x, w1, b1, w2, b2):
    """x: (B, D) bf16 features -> (B, NUM_CLASSES) f32 log-probabilities."""
    B, D = x.shape
    Hd = w1.shape[1]
    C = w2.shape[1]
    TB = B if B <= 128 else 128                                 # batch tile per grid step
    nb = pl.cdiv(B, TB)
    cost = pl.CostEstimate(
        flops=2 * B * D * Hd + 2 * B * Hd * C,
        transcendentals=B * C,
        bytes_accessed=(2 * B * D + 2 * D * Hd + 4 * Hd
                        + 2 * Hd * C + 4 * C + 4 * B * C),
    )
    return pl.pallas_call(
        _classifier_head_kernel,
        out_shape=jax.ShapeDtypeStruct((B, C), jnp.float32),
        grid=(nb,),
        in_specs=[
            pl.BlockSpec((TB, D), lambda i: (i, 0)),
            pl.BlockSpec((D, Hd), lambda i: (0, 0)),
            pl.BlockSpec((1, Hd), lambda i: (0, 0)),
            pl.BlockSpec((Hd, C), lambda i: (0, 0)),
            pl.BlockSpec((1, C), lambda i: (0, 0)),
        ],
        out_specs=pl.BlockSpec((TB, C), lambda i: (i, 0)),
        compiler_params=pltpu.CompilerParams(
            dimension_semantics=("parallel",),   # batch axis shared across TCs
            vmem_limit_bytes=16 * 1024 * 1024,
        ),
        cost_estimate=cost,
    )(x, w1, b1, w2, b2)


# ---------------------------------------------------------------------------
# Plain-JAX glue: adaptive average pooling (tiny tensor; exact-divisor case)
# ---------------------------------------------------------------------------

def adaptive_avgpool_nhwc(x, out_hw):
    # TODO(synk): PyTorch's adaptive_avg_pool2d handles non-divisible sizes with
    # variable windows; only the exact-divisor case is implemented here.
    B, H, W, C = x.shape
    sh, sw = H // out_hw, W // out_hw
    xf = x.reshape(B, out_hw, sh, out_hw, sw, C).astype(jnp.float32)
    return jnp.mean(xf, axis=(2, 4)).astype(jnp.bfloat16)


# ---------------------------------------------------------------------------
# Params: real-sized synthetic weights (no lane padding); frozen weights in bf16
# ---------------------------------------------------------------------------

def init_params(key):
    k = jax.random.split(key, 8)
    s = 0.05
    c1w = s * jax.random.normal(k[0], (3, 3, IN_CH, C1), jnp.float32)
    c1b = s * jax.random.normal(k[1], (C1,), jnp.float32)
    c2w = s * jax.random.normal(k[2], (3, 3, C1, C2), jnp.float32)
    c2b = s * jax.random.normal(k[3], (C2,), jnp.float32)
    f1w = s * jax.random.normal(k[4], (POOLED_HW * POOLED_HW * C2, HIDDEN), jnp.float32)
    f1b = s * jax.random.normal(k[5], (HIDDEN,), jnp.float32)
    f2w = s * jax.random.normal(k[6], (HIDDEN, NUM_CLASSES), jnp.float32)
    f2b = s * jax.random.normal(k[7], (NUM_CLASSES,), jnp.float32)
    return {
        # conv weights flattened to (9*Cin, Cout), rows ordered (kh, kw, cin)
        "conv1_w": c1w.reshape(9 * IN_CH, C1).astype(jnp.bfloat16),
        "conv1_b": c1b.reshape(1, C1),
        "conv2_w": c2w.reshape(9 * C1, C2).astype(jnp.bfloat16),
        "conv2_b": c2b.reshape(1, C2),
        "fc1_w": f1w.astype(jnp.bfloat16),
        "fc1_b": f1b.reshape(1, HIDDEN),
        "fc2_w": f2w.astype(jnp.bfloat16),
        "fc2_b": f2b.reshape(1, NUM_CLASSES),
    }


# ---------------------------------------------------------------------------
# Forward pass
# ---------------------------------------------------------------------------

@jax.jit
def img_model_forward(params, x_nchw):
    """x_nchw: (B, 3, H, W) float32  ->  (B, 102) log-probabilities."""
    x = jnp.transpose(x_nchw, (0, 2, 3, 1)).astype(jnp.bfloat16)   # NCHW->NHWC, bf16
    # backbone (VGG-style): conv3x3 + ReLU + fused 2x2 maxpool, twice
    x = conv3x3_relu_pool(x, params["conv1_w"], params["conv1_b"])  # (B, H/2, W/2, 8)
    x = conv3x3_relu_pool(x, params["conv2_w"], params["conv2_b"])  # (B, H/4, W/4, 16)
    x = adaptive_avgpool_nhwc(x, POOLED_HW)                         # (B, 2, 2, 16)
    feats = x.reshape(x.shape[0], -1)                               # (B, 64) bf16
    # classifier head: Linear -> ReLU -> Linear -> LogSoftmax, fused in one kernel
    return pallas_classifier_head(
        feats, params["fc1_w"], params["fc1_b"], params["fc2_w"], params["fc2_b"])


# ---------------------------------------------------------------------------
# Pure-JAX reference (mirrors the kernel's bf16 cast points) for validation
# ---------------------------------------------------------------------------

def _reference_forward(params, x_nchw):
    f32 = jnp.float32
    hi = jax.lax.Precision.HIGHEST

    def conv_block(x, w_flat, b):
        B, H, W, Cin = x.shape
        Cout = w_flat.shape[1]
        w = w_flat.astype(f32).reshape(3, 3, Cin, Cout)
        xp = jnp.pad(x.astype(f32), ((0, 0), (1, 1), (1, 1), (0, 0)))
        acc = jnp.zeros((B, H, W, Cout), f32)
        for kh in range(3):
            for kw in range(3):
                acc = acc + jnp.einsum("bhwc,co->bhwo",
                                       xp[:, kh:kh + H, kw:kw + W, :], w[kh, kw],
                                       precision=hi)
        y = jnp.maximum(acc + b, 0.0)
        y = jnp.max(y.reshape(B, H // 2, 2, W // 2, 2, Cout), axis=(2, 4))
        return y.astype(jnp.bfloat16)

    x = jnp.transpose(x_nchw, (0, 2, 3, 1)).astype(jnp.bfloat16)
    x = conv_block(x, params["conv1_w"], params["conv1_b"])
    x = conv_block(x, params["conv2_w"], params["conv2_b"])
    x = adaptive_avgpool_nhwc(x, POOLED_HW)
    feats = x.reshape(x.shape[0], -1).astype(f32)
    h = jnp.maximum(jnp.dot(feats, params["fc1_w"].astype(f32), precision=hi)
                    + params["fc1_b"], 0.0)
    h = h.astype(jnp.bfloat16).astype(f32)
    z = jnp.dot(h, params["fc2_w"].astype(f32), precision=hi) + params["fc2_b"]
    return jax.nn.log_softmax(z, axis=1)


if __name__ == "__main__":
    key = jax.random.PRNGKey(0)
    kx, kp = jax.random.split(key)
    x = jax.random.normal(kx, (2, 3, 16, 16), jnp.float32)          # NCHW input
    params = init_params(kp)

    out = img_model_forward(params, x)
    jax.block_until_ready(out)

    assert out.shape == (2, NUM_CLASSES)
    ref = _reference_forward(params, x)
    assert bool(jnp.all(jnp.abs(out - ref) < 2e-2)), "mismatch vs pure-JAX reference"
    # log-softmax rows must exponentiate-and-sum to ~1 over the 102 classes
    row_sums = jnp.exp(out).sum(axis=1)
    assert bool(jnp.all(jnp.abs(row_sums - 1.0) < 1e-3))
    print("KERNEL_OK")
</pallas_src>

<mosaic_0001>
module attributes {stable_mosaic.version = 11 : i64} {
  func.func @_conv3x3_relu_pool_kernel(%arg0: i32, %arg1: memref<1x18x18x3xbf16, #tpu.memory_space<vmem>>, %arg2: memref<27x8xbf16, #tpu.memory_space<vmem>>, %arg3: memref<1x8xf32, #tpu.memory_space<vmem>>, %arg4: memref<1x8x8x8xbf16, #tpu.memory_space<vmem>>, %arg5: memref<256x27xbf16, #tpu.memory_space<vmem>>) attributes {dimension_semantics = [#tpu.dimension_semantics<parallel>], iteration_bounds = array<i64: 2>, scalar_prefetch = 0 : i64, scratch_operands = 1 : i64, tpu.core_type = #tpu.core_type<tc>, window_params = [{transform_indices = @transform_0, window_bounds = array<i64: 1, 18, 18, 3>}, {pipeline_mode = #tpu.pipeline_mode<synchronous>, transform_indices = @transform_1, window_bounds = array<i64: 27, 8>}, {pipeline_mode = #tpu.pipeline_mode<synchronous>, transform_indices = @transform_2, window_bounds = array<i64: 1, 8>}, {transform_indices = @transform_3, window_bounds = array<i64: 1, 8, 8, 8>}]} {
    %c0 = arith.constant 0 : index
    %c0_0 = arith.constant 0 : index
    %c0_1 = arith.constant 0 : index
    %c0_2 = arith.constant 0 : index
    %0 = vector.load %arg1[%c0, %c0_0, %c0_1, %c0_2] : memref<1x18x18x3xbf16, #tpu.memory_space<vmem>>, vector<1x16x16x3xbf16>
    %1 = vector.shape_cast %0 : vector<1x16x16x3xbf16> to vector<16x16x3xbf16>
    %2 = vector.shape_cast %1 : vector<16x16x3xbf16> to vector<256x3xbf16>
    %c0_3 = arith.constant 0 : index
    %c0_4 = arith.constant 0 : index
    %3 = vector.load %arg5[%c0_3, %c0_4] : memref<256x27xbf16, #tpu.memory_space<vmem>>, vector<256x3xbf16>
    tpu.vector_store %arg5[%c0_3, %c0_4], %2 {strides = array<i32>} : memref<256x27xbf16, #tpu.memory_space<vmem>>, vector<256x3xbf16>,
    %c0_5 = arith.constant 0 : index
    %c0_6 = arith.constant 0 : index
    %c1 = arith.constant 1 : index
    %c0_7 = arith.constant 0 : index
    %4 = vector.load %arg1[%c0_5, %c0_6, %c1, %c0_7] : memref<1x18x18x3xbf16, #tpu.memory_space<vmem>>, vector<1x16x16x3xbf16>
    %5 = vector.shape_cast %4 : vector<1x16x16x3xbf16> to vector<16x16x3xbf16>
    %6 = vector.shape_cast %5 : vector<16x16x3xbf16> to vector<256x3xbf16>
    %c0_8 = arith.constant 0 : index
    %c3 = arith.constant 3 : index
    %7 = vector.load %arg5[%c0_8, %c3] : memref<256x27xbf16, #tpu.memory_space<vmem>>, vector<256x3xbf16>
    tpu.vector_store %arg5[%c0_8, %c3], %6 {strides = array<i32>} : memref<256x27xbf16, #tpu.memory_space<vmem>>, vector<256x3xbf16>,
    %c0_9 = arith.constant 0 : index
    %c0_10 = arith.constant 0 : index
    %c2 = arith.constant 2 : index
    %c0_11 = arith.constant 0 : index
    %8 = vector.load %arg1[%c0_9, %c0_10, %c2, %c0_11] : memref<1x18x18x3xbf16, #tpu.memory_space<vmem>>, vector<1x16x16x3xbf16>
    %9 = vector.shape_cast %8 : vector<1x16x16x3xbf16> to vector<16x16x3xbf16>
    %10 = vector.shape_cast %9 : vector<16x16x3xbf16> to vector<256x3xbf16>
    %c0_12 = arith.constant 0 : index
    %c6 = arith.constant 6 : index
    %11 = vector.load %arg5[%c0_12, %c6] : memref<256x27xbf16, #tpu.memory_space<vmem>>, vector<256x3xbf16>
    tpu.vector_store %arg5[%c0_12, %c6], %10 {strides = array<i32>} : memref<256x27xbf16, #tpu.memory_space<vmem>>, vector<256x3xbf16>,
    %c0_13 = arith.constant 0 : index
    %c1_14 = arith.constant 1 : index
    %c0_15 = arith.constant 0 : index
    %c0_16 = arith.constant 0 : index
    %12 = vector.load %arg1[%c0_13, %c1_14, %c0_15, %c0_16] : memref<1x18x18x3xbf16, #tpu.memory_space<vmem>>, vector<1x16x16x3xbf16>
    %13 = vector.shape_cast %12 : vector<1x16x16x3xbf16> to vector<16x16x3xbf16>
    %14 = vector.shape_cast %13 : vector<16x16x3xbf16> to vector<256x3xbf16>
    %c0_17 = arith.constant 0 : index
    %c9 = arith.constant 9 : index
    %15 = vector.load %arg5[%c0_17, %c9] : memref<256x27xbf16, #tpu.memory_space<vmem>>, vector<256x3xbf16>
    tpu.vector_store %arg5[%c0_17, %c9], %14 {strides = array<i32>} : memref<256x27xbf16, #tpu.memory_space<vmem>>, vector<256x3xbf16>,
    %c0_18 = arith.constant 0 : index
    %c1_19 = arith.constant 1 : index
    %c1_20 = arith.constant 1 : index
    %c0_21 = arith.constant 0 : index
    %16 = vector.load %arg1[%c0_18, %c1_19, %c1_20, %c0_21] : memref<1x18x18x3xbf16, #tpu.memory_space<vmem>>, vector<1x16x16x3xbf16>
    %17 = vector.shape_cast %16 : vector<1x16x16x3xbf16> to vector<16x16x3xbf16>
    %18 = vector.shape_cast %17 : vector<16x16x3xbf16> to vector<256x3xbf16>
    %c0_22 = arith.constant 0 : index
    %c12 = arith.constant 12 : index
    %19 = vector.load %arg5[%c0_22, %c12] : memref<256x27xbf16, #tpu.memory_space<vmem>>, vector<256x3xbf16>
    tpu.vector_store %arg5[%c0_22, %c12], %18 {strides = array<i32>} : memref<256x27xbf16, #tpu.memory_space<vmem>>, vector<256x3xbf16>,
    %c0_23 = arith.constant 0 : index
    %c1_24 = arith.constant 1 : index
    %c2_25 = arith.constant 2 : index
    %c0_26 = arith.constant 0 : index
    %20 = vector.load %arg1[%c0_23, %c1_24, %c2_25, %c0_26] : memref<1x18x18x3xbf16, #tpu.memory_space<vmem>>, vector<1x16x16x3xbf16>
    %21 = vector.shape_cast %20 : vector<1x16x16x3xbf16> to vector<16x16x3xbf16>
    %22 = vector.shape_cast %21 : vector<16x16x3xbf16> to vector<256x3xbf16>
    %c0_27 = arith.constant 0 : index
    %c15 = arith.constant 15 : index
    %23 = vector.load %arg5[%c0_27, %c15] : memref<256x27xbf16, #tpu.memory_space<vmem>>, vector<256x3xbf16>
    tpu.vector_store %arg5[%c0_27, %c15], %22 {strides = array<i32>} : memref<256x27xbf16, #tpu.memory_space<vmem>>, vector<256x3xbf16>,
    %c0_28 = arith.constant 0 : index
    %c2_29 = arith.constant 2 : index
    %c0_30 = arith.constant 0 : index
    %c0_31 = arith.constant 0 : index
    %24 = vector.load %arg1[%c0_28, %c2_29, %c0_30, %c0_31] : memref<1x18x18x3xbf16, #tpu.memory_space<vmem>>, vector<1x16x16x3xbf16>
    %25 = vector.shape_cast %24 : vector<1x16x16x3xbf16> to vector<16x16x3xbf16>
    %26 = vector.shape_cast %25 : vector<16x16x3xbf16> to vector<256x3xbf16>
    %c0_32 = arith.constant 0 : index
    %c18 = arith.constant 18 : index
    %27 = vector.load %arg5[%c0_32, %c18] : memref<256x27xbf16, #tpu.memory_space<vmem>>, vector<256x3xbf16>
    tpu.vector_store %arg5[%c0_32, %c18], %26 {strides = array<i32>} : memref<256x27xbf16, #tpu.memory_space<vmem>>, vector<256x3xbf16>,
    %c0_33 = arith.constant 0 : index
    %c2_34 = arith.constant 2 : index
    %c1_35 = arith.constant 1 : index
    %c0_36 = arith.constant 0 : index
    %28 = vector.load %arg1[%c0_33, %c2_34, %c1_35, %c0_36] : memref<1x18x18x3xbf16, #tpu.memory_space<vmem>>, vector<1x16x16x3xbf16>
    %29 = vector.shape_cast %28 : vector<1x16x16x3xbf16> to vector<16x16x3xbf16>
    %30 = vector.shape_cast %29 : vector<16x16x3xbf16> to vector<256x3xbf16>
    %c0_37 = arith.constant 0 : index
    %c21 = arith.constant 21 : index
    %31 = vector.load %arg5[%c0_37, %c21] : memref<256x27xbf16, #tpu.memory_space<vmem>>, vector<256x3xbf16>
    tpu.vector_store %arg5[%c0_37, %c21], %30 {strides = array<i32>} : memref<256x27xbf16, #tpu.memory_space<vmem>>, vector<256x3xbf16>,
    %c0_38 = arith.constant 0 : index
    %c2_39 = arith.constant 2 : index
    %c2_40 = arith.constant 2 : index
    %c0_41 = arith.constant 0 : index
    %32 = vector.load %arg1[%c0_38, %c2_39, %c2_40, %c0_41] : memref<1x18x18x3xbf16, #tpu.memory_space<vmem>>, vector<1x16x16x3xbf16>
    %33 = vector.shape_cast %32 : vector<1x16x16x3xbf16> to vector<16x16x3xbf16>
    %34 = vector.shape_cast %33 : vector<16x16x3xbf16> to vector<256x3xbf16>
    %c0_42 = arith.constant 0 : index
    %c24 = arith.constant 24 : index
    %35 = vector.load %arg5[%c0_42, %c24] : memref<256x27xbf16, #tpu.memory_space<vmem>>, vector<256x3xbf16>
    tpu.vector_store %arg5[%c0_42, %c24], %34 {strides = array<i32>} : memref<256x27xbf16, #tpu.memory_space<vmem>>, vector<256x3xbf16>,
    %c0_43 = arith.constant 0 : index
    %c0_44 = arith.constant 0 : index
    %36 = vector.load %arg5[%c0_43, %c0_44] : memref<256x27xbf16, #tpu.memory_space<vmem>>, vector<256x27xbf16>
    %c0_45 = arith.constant 0 : index
    %c0_46 = arith.constant 0 : index
    %37 = vector.load %arg2[%c0_45, %c0_46] : memref<27x8xbf16, #tpu.memory_space<vmem>>, vector<27x8xbf16>
    %cst = arith.constant dense<0.000000e+00> : vector<256x8xf32>
    %38 = tpu.matmul %36, %37, %cst {dimension_numbers = #tpu.dot_dimension_numbers<[1], [0], [0], [1], [0, 0, 1, 1], [], []>} : vector<256x27xbf16>, vector<27x8xbf16>, vector<256x8xf32> -> vector<256x8xf32>
    %c0_47 = arith.constant 0 : index
    %c0_48 = arith.constant 0 : index
    %39 = vector.load %arg3[%c0_47, %c0_48] : memref<1x8xf32, #tpu.memory_space<vmem>>, vector<1x8xf32>
    %40 = vector.broadcast %39 : vector<1x8xf32> to vector<256x8xf32>
    %41 = arith.addf %38, %40 : vector<256x8xf32>
    %cst_49 = arith.constant 0.000000e+00 : f32
    %42 = vector.broadcast %cst_49 : f32 to vector<256x8xf32>
    %43 = arith.maximumf %41, %42 : vector<256x8xf32>
    %44 = vector.shape_cast %43 : vector<256x8xf32> to vector<128x2x8xf32>
    %cst_50 = arith.constant dense<0xFF800000> : vector<128x8xf32>
    %45 = vector.multi_reduction <maximumf>, %44, %cst_50 [1] : vector<128x2x8xf32> to vector<128x8xf32>
    %46 = vector.shape_cast %45 : vector<128x8xf32> to vector<8x2x8x8xf32>
    %cst_51 = arith.constant dense<0xFF800000> : vector<8x8x8xf32>
    %47 = vector.multi_reduction <maximumf>, %46, %cst_51 [1] : vector<8x2x8x8xf32> to vector<8x8x8xf32>
    %48 = arith.truncf %47 : vector<8x8x8xf32> to vector<8x8x8xbf16>
    %c0_52 = arith.constant 0 : index
    %c0_53 = arith.constant 0 : index
    %c0_54 = arith.constant 0 : index
    %c0_55 = arith.constant 0 : index
    %49 = vector.load %arg4[%c0_52, %c0_53, %c0_54, %c0_55] : memref<1x8x8x8xbf16, #tpu.memory_space<vmem>>, vector<1x8x8x8xbf16>
    %50 = vector.shape_cast %49 : vector<1x8x8x8xbf16> to vector<8x8x8xbf16>
    %51 = vector.shape_cast %48 : vector<8x8x8xbf16> to vector<1x8x8x8xbf16>
    tpu.vector_store %arg4[%c0_52, %c0_53, %c0_54, %c0_55], %51 {strides = array<i32>} : memref<1x8x8x8xbf16, #tpu.memory_space<vmem>>, vector<1x8x8x8xbf16>,
    return
  }
  func.func @transform_0(%arg0: i32) -> (i32, i32, i32, i32) {
    %c0_i32 = arith.constant 0 : i32
    %c0_i32_0 = arith.constant 0 : i32
    %c0_i32_1 = arith.constant 0 : i32
    %c0_i32_2 = arith.constant 0 : i32
    return %arg0, %c0_i32, %c0_i32_0, %c0_i32_1 : i32, i32, i32, i32
  }
  func.func @transform_1(%arg0: i32) -> (i32, i32) {
    %c0_i32 = arith.constant 0 : i32
    %c0_i32_0 = arith.constant 0 : i32
    %c0_i32_1 = arith.constant 0 : i32
    return %c0_i32, %c0_i32_0 : i32, i32
  }
  func.func @transform_2(%arg0: i32) -> (i32, i32) {
    %c0_i32 = arith.constant 0 : i32
    %c0_i32_0 = arith.constant 0 : i32
    %c0_i32_1 = arith.constant 0 : i32
    return %c0_i32, %c0_i32_0 : i32, i32
  }
  func.func @transform_3(%arg0: i32) -> (i32, i32, i32, i32) {
    %c0_i32 = arith.constant 0 : i32
    %c0_i32_0 = arith.constant 0 : i32
    %c0_i32_1 = arith.constant 0 : i32
    %c0_i32_2 = arith.constant 0 : i32
    return %arg0, %c0_i32, %c0_i32_0, %c0_i32_1 : i32, i32, i32, i32
  }
}

module attributes {stable_mosaic.version = 11 : i64} {
  func.func @_conv3x3_relu_pool_kernel(%arg0: i32, %arg1: memref<1x10x10x8xbf16, #tpu.memory_space<vmem>>, %arg2: memref<72x16xbf16, #tpu.memory_space<vmem>>, %arg3: memref<1x16xf32, #tpu.memory_space<vmem>>, %arg4: memref<1x4x4x16xbf16, #tpu.memory_space<vmem>>, %arg5: memref<64x72xbf16, #tpu.memory_space<vmem>>) attributes {dimension_semantics = [#tpu.dimension_semantics<parallel>], iteration_bounds = array<i64: 2>, scalar_prefetch = 0 : i64, scratch_operands = 1 : i64, tpu.core_type = #tpu.core_type<tc>, window_params = [{transform_indices = @transform_0, window_bounds = array<i64: 1, 10, 10, 8>}, {pipeline_mode = #tpu.pipeline_mode<synchronous>, transform_indices = @transform_1, window_bounds = array<i64: 72, 16>}, {pipeline_mode = #tpu.pipeline_mode<synchronous>, transform_indices = @transform_2, window_bounds = array<i64: 1, 16>}, {transform_indices = @transform_3, window_bounds = array<i64: 1, 4, 4, 16>}]} {
    %c0 = arith.constant 0 : index
    %c0_0 = arith.constant 0 : index
    %c0_1 = arith.constant 0 : index
    %c0_2 = arith.constant 0 : index
    %0 = vector.load %arg1[%c0, %c0_0, %c0_1, %c0_2] : memref<1x10x10x8xbf16, #tpu.memory_space<vmem>>, vector<1x8x8x8xbf16>
    %1 = vector.shape_cast %0 : vector<1x8x8x8xbf16> to vector<8x8x8xbf16>
    %2 = vector.shape_cast %1 : vector<8x8x8xbf16> to vector<64x8xbf16>
    %c0_3 = arith.constant 0 : index
    %c0_4 = arith.constant 0 : index
    %3 = vector.load %arg5[%c0_3, %c0_4] : memref<64x72xbf16, #tpu.memory_space<vmem>>, vector<64x8xbf16>
    tpu.vector_store %arg5[%c0_3, %c0_4], %2 {strides = array<i32>} : memref<64x72xbf16, #tpu.memory_space<vmem>>, vector<64x8xbf16>,
    %c0_5 = arith.constant 0 : index
    %c0_6 = arith.constant 0 : index
    %c1 = arith.constant 1 : index
    %c0_7 = arith.constant 0 : index
    %4 = vector.load %arg1[%c0_5, %c0_6, %c1, %c0_7] : memref<1x10x10x8xbf16, #tpu.memory_space<vmem>>, vector<1x8x8x8xbf16>
    %5 = vector.shape_cast %4 : vector<1x8x8x8xbf16> to vector<8x8x8xbf16>
    %6 = vector.shape_cast %5 : vector<8x8x8xbf16> to vector<64x8xbf16>
    %c0_8 = arith.constant 0 : index
    %c8 = arith.constant 8 : index
    %7 = vector.load %arg5[%c0_8, %c8] : memref<64x72xbf16, #tpu.memory_space<vmem>>, vector<64x8xbf16>
    tpu.vector_store %arg5[%c0_8, %c8], %6 {strides = array<i32>} : memref<64x72xbf16, #tpu.memory_space<vmem>>, vector<64x8xbf16>,
    %c0_9 = arith.constant 0 : index
    %c0_10 = arith.constant 0 : index
    %c2 = arith.constant 2 : index
    %c0_11 = arith.constant 0 : index
    %8 = vector.load %arg1[%c0_9, %c0_10, %c2, %c0_11] : memref<1x10x10x8xbf16, #tpu.memory_space<vmem>>, vector<1x8x8x8xbf16>
    %9 = vector.shape_cast %8 : vector<1x8x8x8xbf16> to vector<8x8x8xbf16>
    %10 = vector.shape_cast %9 : vector<8x8x8xbf16> to vector<64x8xbf16>
    %c0_12 = arith.constant 0 : index
    %c16 = arith.constant 16 : index
    %11 = vector.load %arg5[%c0_12, %c16] : memref<64x72xbf16, #tpu.memory_space<vmem>>, vector<64x8xbf16>
    tpu.vector_store %arg5[%c0_12, %c16], %10 {strides = array<i32>} : memref<64x72xbf16, #tpu.memory_space<vmem>>, vector<64x8xbf16>,
    %c0_13 = arith.constant 0 : index
    %c1_14 = arith.constant 1 : index
    %c0_15 = arith.constant 0 : index
    %c0_16 = arith.constant 0 : index
    %12 = vector.load %arg1[%c0_13, %c1_14, %c0_15, %c0_16] : memref<1x10x10x8xbf16, #tpu.memory_space<vmem>>, vector<1x8x8x8xbf16>
    %13 = vector.shape_cast %12 : vector<1x8x8x8xbf16> to vector<8x8x8xbf16>
    %14 = vector.shape_cast %13 : vector<8x8x8xbf16> to vector<64x8xbf16>
    %c0_17 = arith.constant 0 : index
    %c24 = arith.constant 24 : index
    %15 = vector.load %arg5[%c0_17, %c24] : memref<64x72xbf16, #tpu.memory_space<vmem>>, vector<64x8xbf16>
    tpu.vector_store %arg5[%c0_17, %c24], %14 {strides = array<i32>} : memref<64x72xbf16, #tpu.memory_space<vmem>>, vector<64x8xbf16>,
    %c0_18 = arith.constant 0 : index
    %c1_19 = arith.constant 1 : index
    %c1_20 = arith.constant 1 : index
    %c0_21 = arith.constant 0 : index
    %16 = vector.load %arg1[%c0_18, %c1_19, %c1_20, %c0_21] : memref<1x10x10x8xbf16, #tpu.memory_space<vmem>>, vector<1x8x8x8xbf16>
    %17 = vector.shape_cast %16 : vector<1x8x8x8xbf16> to vector<8x8x8xbf16>
    %18 = vector.shape_cast %17 : vector<8x8x8xbf16> to vector<64x8xbf16>
    %c0_22 = arith.constant 0 : index
    %c32 = arith.constant 32 : index
    %19 = vector.load %arg5[%c0_22, %c32] : memref<64x72xbf16, #tpu.memory_space<vmem>>, vector<64x8xbf16>
    tpu.vector_store %arg5[%c0_22, %c32], %18 {strides = array<i32>} : memref<64x72xbf16, #tpu.memory_space<vmem>>, vector<64x8xbf16>,
    %c0_23 = arith.constant 0 : index
    %c1_24 = arith.constant 1 : index
    %c2_25 = arith.constant 2 : index
    %c0_26 = arith.constant 0 : index
    %20 = vector.load %arg1[%c0_23, %c1_24, %c2_25, %c0_26] : memref<1x10x10x8xbf16, #tpu.memory_space<vmem>>, vector<1x8x8x8xbf16>
    %21 = vector.shape_cast %20 : vector<1x8x8x8xbf16> to vector<8x8x8xbf16>
    %22 = vector.shape_cast %21 : vector<8x8x8xbf16> to vector<64x8xbf16>
    %c0_27 = arith.constant 0 : index
    %c40 = arith.constant 40 : index
    %23 = vector.load %arg5[%c0_27, %c40] : memref<64x72xbf16, #tpu.memory_space<vmem>>, vector<64x8xbf16>
    tpu.vector_store %arg5[%c0_27, %c40], %22 {strides = array<i32>} : memref<64x72xbf16, #tpu.memory_space<vmem>>, vector<64x8xbf16>,
    %c0_28 = arith.constant 0 : index
    %c2_29 = arith.constant 2 : index
    %c0_30 = arith.constant 0 : index
    %c0_31 = arith.constant 0 : index
    %24 = vector.load %arg1[%c0_28, %c2_29, %c0_30, %c0_31] : memref<1x10x10x8xbf16, #tpu.memory_space<vmem>>, vector<1x8x8x8xbf16>
    %25 = vector.shape_cast %24 : vector<1x8x8x8xbf16> to vector<8x8x8xbf16>
    %26 = vector.shape_cast %25 : vector<8x8x8xbf16> to vector<64x8xbf16>
    %c0_32 = arith.constant 0 : index
    %c48 = arith.constant 48 : index
    %27 = vector.load %arg5[%c0_32, %c48] : memref<64x72xbf16, #tpu.memory_space<vmem>>, vector<64x8xbf16>
    tpu.vector_store %arg5[%c0_32, %c48], %26 {strides = array<i32>} : memref<64x72xbf16, #tpu.memory_space<vmem>>, vector<64x8xbf16>,
    %c0_33 = arith.constant 0 : index
    %c2_34 = arith.constant 2 : index
    %c1_35 = arith.constant 1 : index
    %c0_36 = arith.constant 0 : index
    %28 = vector.load %arg1[%c0_33, %c2_34, %c1_35, %c0_36] : memref<1x10x10x8xbf16, #tpu.memory_space<vmem>>, vector<1x8x8x8xbf16>
    %29 = vector.shape_cast %28 : vector<1x8x8x8xbf16> to vector<8x8x8xbf16>
    %30 = vector.shape_cast %29 : vector<8x8x8xbf16> to vector<64x8xbf16>
    %c0_37 = arith.constant 0 : index
    %c56 = arith.constant 56 : index
    %31 = vector.load %arg5[%c0_37, %c56] : memref<64x72xbf16, #tpu.memory_space<vmem>>, vector<64x8xbf16>
    tpu.vector_store %arg5[%c0_37, %c56], %30 {strides = array<i32>} : memref<64x72xbf16, #tpu.memory_space<vmem>>, vector<64x8xbf16>,
    %c0_38 = arith.constant 0 : index
    %c2_39 = arith.constant 2 : index
    %c2_40 = arith.constant 2 : index
    %c0_41 = arith.constant 0 : index
    %32 = vector.load %arg1[%c0_38, %c2_39, %c2_40, %c0_41] : memref<1x10x10x8xbf16, #tpu.memory_space<vmem>>, vector<1x8x8x8xbf16>
    %33 = vector.shape_cast %32 : vector<1x8x8x8xbf16> to vector<8x8x8xbf16>
    %34 = vector.shape_cast %33 : vector<8x8x8xbf16> to vector<64x8xbf16>
    %c0_42 = arith.constant 0 : index
    %c64 = arith.constant 64 : index
    %35 = vector.load %arg5[%c0_42, %c64] : memref<64x72xbf16, #tpu.memory_space<vmem>>, vector<64x8xbf16>
    tpu.vector_store %arg5[%c0_42, %c64], %34 {strides = array<i32>} : memref<64x72xbf16, #tpu.memory_space<vmem>>, vector<64x8xbf16>,
    %c0_43 = arith.constant 0 : index
    %c0_44 = arith.constant 0 : index
    %36 = vector.load %arg5[%c0_43, %c0_44] : memref<64x72xbf16, #tpu.memory_space<vmem>>, vector<64x72xbf16>
    %c0_45 = arith.constant 0 : index
    %c0_46 = arith.constant 0 : index
    %37 = vector.load %arg2[%c0_45, %c0_46] : memref<72x16xbf16, #tpu.memory_space<vmem>>, vector<72x16xbf16>
    %cst = arith.constant dense<0.000000e+00> : vector<64x16xf32>
    %38 = tpu.matmul %36, %37, %cst {dimension_numbers = #tpu.dot_dimension_numbers<[1], [0], [0], [1], [0, 0, 1, 1], [], []>} : vector<64x72xbf16>, vector<72x16xbf16>, vector<64x16xf32> -> vector<64x16xf32>
    %c0_47 = arith.constant 0 : index
    %c0_48 = arith.constant 0 : index
    %39 = vector.load %arg3[%c0_47, %c0_48] : memref<1x16xf32, #tpu.memory_space<vmem>>, vector<1x16xf32>
    %40 = vector.broadcast %39 : vector<1x16xf32> to vector<64x16xf32>
    %41 = arith.addf %38, %40 : vector<64x16xf32>
    %cst_49 = arith.constant 0.000000e+00 : f32
    %42 = vector.broadcast %cst_49 : f32 to vector<64x16xf32>
    %43 = arith.maximumf %41, %42 : vector<64x16xf32>
    %44 = vector.shape_cast %43 : vector<64x16xf32> to vector<32x2x16xf32>
    %cst_50 = arith.constant dense<0xFF800000> : vector<32x16xf32>
    %45 = vector.multi_reduction <maximumf>, %44, %cst_50 [1] : vector<32x2x16xf32> to vector<32x16xf32>
    %46 = vector.shape_cast %45 : vector<32x16xf32> to vector<4x2x4x16xf32>
    %cst_51 = arith.constant dense<0xFF800000> : vector<4x4x16xf32>
    %47 = vector.multi_reduction <maximumf>, %46, %cst_51 [1] : vector<4x2x4x16xf32> to vector<4x4x16xf32>
    %48 = arith.truncf %47 : vector<4x4x16xf32> to vector<4x4x16xbf16>
    %c0_52 = arith.constant 0 : index
    %c0_53 = arith.constant 0 : index
    %c0_54 = arith.constant 0 : index
    %c0_55 = arith.constant 0 : index
    %49 = vector.load %arg4[%c0_52, %c0_53, %c0_54, %c0_55] : memref<1x4x4x16xbf16, #tpu.memory_space<vmem>>, vector<1x4x4x16xbf16>
    %50 = vector.shape_cast %49 : vector<1x4x4x16xbf16> to vector<4x4x16xbf16>
    %51 = vector.shape_cast %48 : vector<4x4x16xbf16> to vector<1x4x4x16xbf16>
    tpu.vector_store %arg4[%c0_52, %c0_53, %c0_54, %c0_55], %51 {strides = array<i32>} : memref<1x4x4x16xbf16, #tpu.memory_space<vmem>>, vector<1x4x4x16xbf16>,
    return
  }
  func.func @transform_0(%arg0: i32) -> (i32, i32, i32, i32) {
    %c0_i32 = arith.constant 0 : i32
    %c0_i32_0 = arith.constant 0 : i32
    %c0_i32_1 = arith.constant 0 : i32
    %c0_i32_2 = arith.constant 0 : i32
    return %arg0, %c0_i32, %c0_i32_0, %c0_i32_1 : i32, i32, i32, i32
  }
  func.func @transform_1(%arg0: i32) -> (i32, i32) {
    %c0_i32 = arith.constant 0 : i32
    %c0_i32_0 = arith.constant 0 : i32
    %c0_i32_1 = arith.constant 0 : i32
    return %c0_i32, %c0_i32_0 : i32, i32
  }
  func.func @transform_2(%arg0: i32) -> (i32, i32) {
    %c0_i32 = arith.constant 0 : i32
    %c0_i32_0 = arith.constant 0 : i32
    %c0_i32_1 = arith.constant 0 : i32
    return %c0_i32, %c0_i32_0 : i32, i32
  }
  func.func @transform_3(%arg0: i32) -> (i32, i32, i32, i32) {
    %c0_i32 = arith.constant 0 : i32
    %c0_i32_0 = arith.constant 0 : i32
    %c0_i32_1 = arith.constant 0 : i32
    %c0_i32_2 = arith.constant 0 : i32
    return %arg0, %c0_i32, %c0_i32_0, %c0_i32_1 : i32, i32, i32, i32
  }
}

module attributes {stable_mosaic.version = 11 : i64} {
  func.func @_classifier_head_kernel(%arg0: i32, %arg1: memref<2x64xbf16, #tpu.memory_space<vmem>>, %arg2: memref<64x32xbf16, #tpu.memory_space<vmem>>, %arg3: memref<1x32xf32, #tpu.memory_space<vmem>>, %arg4: memref<32x102xbf16, #tpu.memory_space<vmem>>, %arg5: memref<1x102xf32, #tpu.memory_space<vmem>>, %arg6: memref<2x102xf32, #tpu.memory_space<vmem>>) attributes {dimension_semantics = [#tpu.dimension_semantics<parallel>], iteration_bounds = array<i64: 1>, scalar_prefetch = 0 : i64, scratch_operands = 0 : i64, tpu.core_type = #tpu.core_type<tc>, window_params = [{transform_indices = @transform_0, window_bounds = array<i64: 2, 64>}, {pipeline_mode = #tpu.pipeline_mode<synchronous>, transform_indices = @transform_1, window_bounds = array<i64: 64, 32>}, {pipeline_mode = #tpu.pipeline_mode<synchronous>, transform_indices = @transform_2, window_bounds = array<i64: 1, 32>}, {pipeline_mode = #tpu.pipeline_mode<synchronous>, transform_indices = @transform_3, window_bounds = array<i64: 32, 102>}, {pipeline_mode = #tpu.pipeline_mode<synchronous>, transform_indices = @transform_4, window_bounds = array<i64: 1, 102>}, {transform_indices = @transform_5, window_bounds = array<i64: 2, 102>}]} {
    %c0 = arith.constant 0 : index
    %c0_0 = arith.constant 0 : index
    %0 = vector.load %arg1[%c0, %c0_0] : memref<2x64xbf16, #tpu.memory_space<vmem>>, vector<2x64xbf16>
    %c0_1 = arith.constant 0 : index
    %c0_2 = arith.constant 0 : index
    %1 = vector.load %arg2[%c0_1, %c0_2] : memref<64x32xbf16, #tpu.memory_space<vmem>>, vector<64x32xbf16>
    %cst = arith.constant dense<0.000000e+00> : vector<2x32xf32>
    %2 = tpu.matmul %0, %1, %cst {dimension_numbers = #tpu.dot_dimension_numbers<[1], [0], [0], [1], [0, 0, 1, 1], [], []>} : vector<2x64xbf16>, vector<64x32xbf16>, vector<2x32xf32> -> vector<2x32xf32>
    %c0_3 = arith.constant 0 : index
    %c0_4 = arith.constant 0 : index
    %3 = vector.load %arg3[%c0_3, %c0_4] : memref<1x32xf32, #tpu.memory_space<vmem>>, vector<1x32xf32>
    %4 = vector.broadcast %3 : vector<1x32xf32> to vector<2x32xf32>
    %5 = arith.addf %2, %4 : vector<2x32xf32>
    %cst_5 = arith.constant 0.000000e+00 : f32
    %6 = vector.broadcast %cst_5 : f32 to vector<2x32xf32>
    %7 = arith.maximumf %5, %6 : vector<2x32xf32>
    %8 = arith.truncf %7 : vector<2x32xf32> to vector<2x32xbf16>
    %c0_6 = arith.constant 0 : index
    %c0_7 = arith.constant 0 : index
    %9 = vector.load %arg4[%c0_6, %c0_7] : memref<32x102xbf16, #tpu.memory_space<vmem>>, vector<32x102xbf16>
    %cst_8 = arith.constant dense<0.000000e+00> : vector<2x102xf32>
    %10 = tpu.matmul %8, %9, %cst_8 {dimension_numbers = #tpu.dot_dimension_numbers<[1], [0], [0], [1], [0, 0, 1, 1], [], []>} : vector<2x32xbf16>, vector<32x102xbf16>, vector<2x102xf32> -> vector<2x102xf32>
    %c0_9 = arith.constant 0 : index
    %c0_10 = arith.constant 0 : index
    %11 = vector.load %arg5[%c0_9, %c0_10] : memref<1x102xf32, #tpu.memory_space<vmem>>, vector<1x102xf32>
    %12 = vector.broadcast %11 : vector<1x102xf32> to vector<2x102xf32>
    %13 = arith.addf %10, %12 : vector<2x102xf32>
    %cst_11 = arith.constant dense<0xFF800000> : vector<2xf32>
    %14 = vector.multi_reduction <maximumf>, %13, %cst_11 [1] : vector<2x102xf32> to vector<2xf32>
    %15 = vector.shape_cast %14 : vector<2xf32> to vector<2x1xf32>
    %16 = vector.broadcast %15 : vector<2x1xf32> to vector<2x102xf32>
    %17 = arith.subf %13, %16 : vector<2x102xf32>
    %18 = math.exp %17 : vector<2x102xf32>
    %cst_12 = arith.constant dense<0.000000e+00> : vector<2xf32>
    %19 = vector.multi_reduction <add>, %18, %cst_12 [1] : vector<2x102xf32> to vector<2xf32>
    %20 = vector.shape_cast %19 : vector<2xf32> to vector<2x1xf32>
    %21 = math.log %20 : vector<2x1xf32>
    %22 = arith.addf %21, %15 : vector<2x1xf32>
    %23 = vector.broadcast %22 : vector<2x1xf32> to vector<2x102xf32>
    %24 = arith.subf %13, %23 : vector<2x102xf32>
    %c0_13 = arith.constant 0 : index
    %c0_14 = arith.constant 0 : index
    %25 = vector.load %arg6[%c0_13, %c0_14] : memref<2x102xf32, #tpu.memory_space<vmem>>, vector<2x102xf32>
    tpu.vector_store %arg6[%c0_13, %c0_14], %24 {strides = array<i32>} : memref<2x102xf32, #tpu.memory_space<vmem>>, vector<2x102xf32>,
    return
  }
  func.func @transform_0(%arg0: i32) -> (i32, i32) {
    %c0_i32 = arith.constant 0 : i32
    %c0_i32_0 = arith.constant 0 : i32
    return %arg0, %c0_i32 : i32, i32
  }
  func.func @transform_1(%arg0: i32) -> (i32, i32) {
    %c0_i32 = arith.constant 0 : i32
    %c0_i32_0 = arith.constant 0 : i32
    %c0_i32_1 = arith.constant 0 : i32
    return %c0_i32, %c0_i32_0 : i32, i32
  }
  func.func @transform_2(%arg0: i32) -> (i32, i32) {
    %c0_i32 = arith.constant 0 : i32
    %c0_i32_0 = arith.constant 0 : i32
    %c0_i32_1 = arith.constant 0 : i32
    return %c0_i32, %c0_i32_0 : i32, i32
  }
  func.func @transform_3(%arg0: i32) -> (i32, i32) {
    %c0_i32 = arith.constant 0 : i32
    %c0_i32_0 = arith.constant 0 : i32
    %c0_i32_1 = arith.constant 0 : i32
    return %c0_i32, %c0_i32_0 : i32, i32
  }
  func.func @transform_4(%arg0: i32) -> (i32, i32) {
    %c0_i32 = arith.constant 0 : i32
    %c0_i32_0 = arith.constant 0 : i32
    %c0_i32_1 = arith.constant 0 : i32
    return %c0_i32, %c0_i32_0 : i32, i32
  }
  func.func @transform_5(%arg0: i32) -> (i32, i32) {
    %c0_i32 = arith.constant 0 : i32
    %c0_i32_0 = arith.constant 0 : i32
    return %arg0, %c0_i32 : i32, i32
  }
}

</mosaic_0001>

<llo_original>
// kernel: img_model_forward.5
$region0: #{img_model_forward.5}
  #allocation0 [shape = 'u32[]', space=smem, size = 0x4, offset = 0x4, fixed_abs, tag = 'smem constant byte address 0x4 - core index']
  #allocation1 [shape = 'u32[144,128]{1,0:T(1,128)}', space=vmem, size = 0x12000, scoped, tag = 'internal scratch']
  %s0 = inlined_call_operand.vmem [shape: bf16[2,64], index: 0, kind: input, shape index: {}]
  %s1 = inlined_call_operand.vmem [shape: bf16[64,32], index: 1, kind: input, shape index: {}]
  %s2 = inlined_call_operand.vmem [shape: f32[1,32], index: 2, kind: input, shape index: {}]
  %s3 = inlined_call_operand.vmem [shape: bf16[32,102], index: 3, kind: input, shape index: {}]
  %s4 = inlined_call_operand.vmem [shape: f32[1,102], index: 4, kind: input, shape index: {}]
  %s5 = inlined_call_operand.hbm [shape: f32[2,102], index: 5, kind: output, shape index: {}]
  %s6 = sld [smem:[#allocation0]]
  $region30: #{img_model_forward.5} parent=0
    _
  %s8 = ssub.s32 1, %s6
  %s9 = scalar_select 0, %s8, %s6
  $region1: #{img_model_forward.5} parent=0
    #allocation2 [shape = 'u8[1024]{0}', space=vmem, size = 0x400, scoped, tag = 'output window, operand 0, single buffered']
    #allocation3 [shape = 's32[1]{0}', space=sflag, size = 0x4, scoped, tag = 'scoped memory for img_model_forward.5']
    %10 = vsyncpa [#allocation3], 0
    // Predicated region
    $region2: #{img_model_forward.5} parent=1 // pred_check
      _
    $region3: #{img_model_forward.5} parent=1 // pred_check_branch
      %12 = sbr.rel (0) target = $region5
    $region4: #{img_model_forward.5} parent=1 // pred_region
      _
    $region5: #{img_model_forward.5} parent=1 // pred_fallthru
      _
    // Predicated region
    $region6: #{img_model_forward.5} parent=1 // pred_check
      _
    $region7: #{img_model_forward.5} parent=1 // pred_check_branch
      %14 = sbr.rel (0) target = $region9
    $region8: #{img_model_forward.5} parent=1 // pred_region
      _
    $region9: #{img_model_forward.5} parent=1 // pred_fallthru
      _
    // Predicated region
    $region10: #{img_model_forward.5} parent=1 // pred_check
      _
    $region11: #{img_model_forward.5} parent=1 // pred_check_branch
      %16 = sbr.rel (0) target = $region13
    $region12: #{img_model_forward.5} parent=1 // pred_region
      _
    $region13: #{img_model_forward.5} parent=1 // pred_fallthru
      _
    // Predicated region
    $region14: #{img_model_forward.5} parent=1 // pred_check
      _
    $region15: #{img_model_forward.5} parent=1 // pred_check_branch
      %18 = sbr.rel (0) target = $region17
    $region16: #{img_model_forward.5} parent=1 // pred_region
      _
    $region17: #{img_model_forward.5} parent=1 // pred_fallthru
      _
    // Predicated region
    $region18: #{img_model_forward.5} parent=1 // pred_check
      _
    $region19: #{img_model_forward.5} parent=1 // pred_check_branch
      %20 = sbr.rel (0) target = $region21
    $region20: #{img_model_forward.5} parent=1 // pred_region
      _
    $region21: #{img_model_forward.5} parent=1 // pred_fallthru
      _
    %v22 = vld [vmem:[%s0] sm:$0x1]
    %v23 = vld [vmem:[%s1] sm:$0xf]
    %v24 = vld [vmem:[%s1 + $0x4] sm:$0xf]
    %v25 = vld [vmem:[%s1 + $0x8] sm:$0xf]
    %v26 = vld [vmem:[%s1 + $0xc] sm:$0xf]
    %v27 = vld [vmem:[%s1 + $0x10] sm:$0xf]
    %v28 = vld [vmem:[%s1 + $0x14] sm:$0xf]
    %v29 = vld [vmem:[%s1 + $0x18] sm:$0xf]
    %v30 = vld [vmem:[%s1 + $0x1c] sm:$0xf]
    %v31 = vld [vmem:[%s2] sm:$0x1]
    %v33 = vlaneseq
    %v34 = vshrl.u32 %v33, 7
    %v35 = vsub.s32 0, %v34
    %v36 = vrot.slane %v31, %v35
    %v46 = vunpack.c.l.b16 %v23
    %v47 = vunpack.c.l.b16 %v24
    %v48 = vunpack.c.l.b16 %v25
    %v49 = vunpack.c.l.b16 %v26
    %v50 = vunpack.c.l.b16 %v27
    %v51 = vunpack.c.l.b16 %v28
    %v52 = vunpack.c.l.b16 %v29
    %v53 = vunpack.c.l.b16 %v30
    %v54 = vpack.c.b16 %v47, %v46
    %v55 = vpack.c.b16 %v49, %v48
    %v56 = vpack.c.b16 %v51, %v50
    %v57 = vpack.c.b16 %v53, %v52
    %vm62 = vcmask 523264
    %v64 = vsel %vm62, %v22, 0
    %66 = vmatprep.subr.bf16.mxu0 0
    %67 = vmatpush1.bf16.msra.mxu0 0
    %68 = vmatprep.subr.bf16.mxu0 0
    %69 = vmatpush1.bf16.msra.mxu0 0
    %70 = vmatprep.subr.bf16.mxu0 0
    %71 = vmatpush1.bf16.msra.mxu0 0
    %72 = vmatprep.subr.bf16.mxu0 0
    %73 = vmatpush1.bf16.msra.mxu0 0
    %74 = vmatprep.subr.bf16.mxu0 0
    %75 = vmatpush1.bf16.msra.mxu0 %v57
    %76 = vmatprep.subr.bf16.mxu0 0
    %77 = vmatpush1.bf16.msra.mxu0 %v56
    %78 = vmatprep.subr.bf16.mxu0 0
    %79 = vmatpush1.bf16.msra.mxu0 %v55
    %80 = vmatprep.subr.bf16.mxu0 0
    %81 = vmatpush1.bf16.msra.mxu0 %v54
    %82 = vmatprep.subr.bf16.mxu0 0
    %83 = vmatpush2.bf16.msra.mxu0 0
    %84 = vmatprep.subr.bf16.mxu0 0
    %85 = vmatpush2.bf16.msra.mxu0 0
    %86 = vmatprep.subr.bf16.mxu0 0
    %87 = vmatpush2.bf16.msra.mxu0 0
    %88 = vmatprep.subr.bf16.mxu0 0
    %89 = vmatpush2.bf16.msra.mxu0 0
    %90 = vmatprep.subr.bf16.mxu0 0
    %91 = vmatpush2.bf16.msra.mxu0 0
    %92 = vmatprep.subr.bf16.mxu0 0
    %93 = vmatpush2.bf16.msra.mxu0 0
    %94 = vmatprep.subr.bf16.mxu0 0
    %95 = vmatpush2.bf16.msra.mxu0 0
    %96 = vmatprep.subr.bf16.mxu0 0
    %97 = vmatpush2.bf16.msra.mxu0 0
    %98 = vmatprep.mubr.bf16.mxu0 0
    %99 = vmatmul.mubr.bf16.gmra.mxu0 %v64
    %v100 = vpop.f32.mrf.mxu0
    %v101 = vadd.f32 %v36, %v100
    %v102 = vpop.f32.mrf.mxu0
    %v103 = vpop.f32.mrf.mxu0
    %v104 = vpop.f32.mrf.mxu0
    %105 = vdwg.mxu0
    %v106 = vmax.f32 %v101, 0.0
    %v107 = vpack.c.bf16 %v106, %v106
    %v108 = vld [vmem:[%s3] sm:$0xf]
    %v109 = vld [vmem:[%s3 + $0x4] sm:$0xf]
    %v110 = vld [vmem:[%s3 + $0x8] sm:$0xf]
    %v111 = vld [vmem:[%s3 + $0xc] sm:$0xf]
    %v112 = vld [vmem:[%s4] sm:$0x1]
    %v114 = vlaneseq
    %v115 = vshrl.u32 %v114, 7
    %v116 = vsub.s32 0, %v115
    %v117 = vrot.slane %v112, %v116
    %v123 = vunpack.c.l.b16 %v108
    %v124 = vunpack.c.l.b16 %v109
    %v125 = vunpack.c.l.b16 %v110
    %v126 = vunpack.c.l.b16 %v111
    %v127 = vpack.c.b16 %v124, %v123
    %v128 = vpack.c.b16 %v126, %v125
    %vm131 = vcmask 261120
    %v133 = vsel %vm131, %v107, 0
    %135 = vmatprep.subr.bf16.mxu0 0
    %136 = vmatpush1.bf16.msra.mxu0 0
    %137 = vmatprep.subr.bf16.mxu0 0
    %138 = vmatpush1.bf16.msra.mxu0 0
    %139 = vmatprep.subr.bf16.mxu0 0
    %140 = vmatpush1.bf16.msra.mxu0 0
    %141 = vmatprep.subr.bf16.mxu0 0
    %142 = vmatpush1.bf16.msra.mxu0 0
    %143 = vmatprep.subr.bf16.mxu0 0
    %144 = vmatpush1.bf16.msra.mxu0 0
    %145 = vmatprep.subr.bf16.mxu0 0
    %146 = vmatpush1.bf16.msra.mxu0 0
    %147 = vmatprep.subr.bf16.mxu0 0
    %148 = vmatpush1.bf16.msra.mxu0 %v128
    %149 = vmatprep.subr.bf16.mxu0 0
    %150 = vmatpush1.bf16.msra.mxu0 %v127
    %151 = vmatprep.subr.bf16.mxu0 0
    %152 = vmatpush2.bf16.msra.mxu0 0
    %153 = vmatprep.subr.bf16.mxu0 0
    %154 = vmatpush2.bf16.msra.mxu0 0
    %155 = vmatprep.subr.bf16.mxu0 0
    %156 = vmatpush2.bf16.msra.mxu0 0
    %157 = vmatprep.subr.bf16.mxu0 0
    %158 = vmatpush2.bf16.msra.mxu0 0
    %159 = vmatprep.subr.bf16.mxu0 0
    %160 = vmatpush2.bf16.msra.mxu0 0
    %161 = vmatprep.subr.bf16.mxu0 0
    %162 = vmatpush2.bf16.msra.mxu0 0
    %163 = vmatprep.subr.bf16.mxu0 0
    %164 = vmatpush2.bf16.msra.mxu0 0
    %165 = vmatprep.subr.bf16.mxu0 0
    %166 = vmatpush2.bf16.msra.mxu0 0
    %167 = vmatprep.mubr.bf16.mxu0 0
    %168 = vmatmul.mubr.bf16.gmra.mxu0 %v133
    %v169 = vpop.f32.mrf.mxu0
    %v170 = vadd.f32 %v117, %v169
    %v171 = vpop.f32.mrf.mxu0
    %v172 = vpop.f32.mrf.mxu0
    %v173 = vpop.f32.mrf.mxu0
    %174 = vdwg.mxu0
    %vm175 = vcmask 828416
    %v176 = vsel %vm175, %v170, -inf
    %177 = vmax.xlane.f32.xlu0 %v176
    %v178 = vpop.xlane.xlu0 %177
    %v179 = vsub.f32 %v170, %v178
    %v180 = vmul.f32 %v179, 1.442695
    %v181 = vpow.pop %v180
    %v182 = vsel %vm175, %v181, 0.0
    %183 = vadd.xlane.f32.xlu0 %v182
    %v184 = vpop.xlane.xlu0 %183
    %v185 = vlog2.pop %v184
    %v186 = vmul.f32 %v185, 0.6931472
    %v187 = vadd.f32 %v186, %v178
    %v188 = vsub.f32 %v170, %v187
    %189 = vst.msk [vmem:[#allocation2] sm:$0x3] %vm175, %v188
    // Predicated region
    $region22: #{img_model_forward.5} parent=1 // pred_check
      _
    $region23: #{img_model_forward.5} parent=1 // pred_check_branch
      %191 = sbr.rel (0) target = $region25
    $region24: #{img_model_forward.5} parent=1 // pred_region
      %s193 = ssub.s32 32, 32
      %194 = vsyncadd [#allocation3], %s193
      %s196 = sshll.u32 [#allocation2], 4
      %s197 = int_to_ptr.vmem [resolvable:$true] %s196
      %199 = dma.vmem_to_hbm [thread:$0]  %s197, 32, %s5, [#allocation3]
    $region25: #{img_model_forward.5} parent=1 // pred_fallthru
      _
    // Predicated region
    $region26: #{img_model_forward.5} parent=1 // pred_check
      _
    $region27: #{img_model_forward.5} parent=1 // pred_check_branch
      %201 = sbr.rel (0) target = $region29
    $region28: #{img_model_forward.5} parent=1 // pred_region
      %202 = dma.done [#allocation3], 32
    $region29: #{img_model_forward.5} parent=1 // pred_fallthru
      _
    %203 = vsyncpa [#allocation3], 1

// kernel: img_model_forward.4
$region0: #{img_model_forward.4}
  #allocation0 [shape = 'u32[]', space=smem, size = 0x4, offset = 0x4, fixed_abs, tag = 'smem constant byte address 0x4 - core index']
  #allocation1 [shape = 'u32[144,128]{1,0:T(1,128)}', space=vmem, size = 0x12000, scoped, tag = 'internal scratch']
  #allocation2 [shape = 'bf16[64,72]{1,0:T(8,128)(2,1)}', space=vmem, size = 0x4000, scoped, tag = 'scratch operand']
  %s0 = inlined_call_operand.vmem [shape: bf16[2,10,10,8], index: 0, kind: input, shape index: {}]
  %s1 = inlined_call_operand.vmem [shape: bf16[72,16], index: 1, kind: input, shape index: {}]
  %s2 = inlined_call_operand.vmem [shape: f32[1,16], index: 2, kind: input, shape index: {}]
  %s3 = inlined_call_operand.vmem [shape: bf16[2,4,4,16], index: 3, kind: output, shape index: {}]
  %s4 = sld [smem:[#allocation0]]
  $region45: #{img_model_forward.4} parent=0
    _
  %s6 = ssub.s32 1, %s4
  %s7 = scalar_select 0, %s6, %s4
  loop: start=0, step=1, limit=4
  $region2: #{img_model_forward.4} parent=0 // loop_pre_header
    _
  $region3: #{img_model_forward.4} parent=0 // loop_header
    %s9 = sphi 0, %s13
    %p10 = scmp.ge.s32.totalorder %s9, 4
    %s19 = sphi 0, %s21
    %s22 = sphi 0, %s19
    %s23 = sphi 0, %s22
    %s39 = sphi 0, %s23
    %s43 = sphi 0, %s43
    %s45 = sphi 0, %s43
    %s46 = sphi 0, %s45
    %s60 = sphi 0, %s46
    %s64 = sphi 0, %s64
    %s66 = sphi 0, %s64
    %s67 = sphi 0, %s66
    %s81 = sphi 0, %s67
    %s87 = sphi 0, %s89
    %s90 = sphi 0, %s87
    %s91 = sphi 0, %s90
    %s107 = sphi 0, %s91
  $region4: #{img_model_forward.4} parent=0 // loop_header_branch
    %12 = sbr.rel (%p10) target = $region8
  $region5: #{img_model_forward.4} parent=0 // loop_body
    %s14 = ssub.s32 %s9, 1
    %s15 = ssub.s32 %s9, 2
    %s16 = sadd.s32 %s9, 1
    %s17 = ssub.s32 %s9, %s16
    %p18 = scmp.eq.s32.totalorder %s17, 0
    %s20 = sadd.s32 %s19, 1
    %s21 = scalar_select %p18, %s19, %s20
    %p24 = pneg %p18
    %p25 = scmp.eq.s32.totalorder %s9, 1
    %p26 = por %p24, %p25
    %p27 = scmp.ne.s32.totalorder %s19, %s22
    %p28 = scmp.eq.s32.totalorder %s9, 0
    %p29 = por %p27, %p28
    %p30 = scmp.ne.s32.totalorder %s19, %s22
    %p31 = scmp.eq.s32.totalorder %s14, 1
    %p32 = por %p30, %p31
    %p33 = scmp.ne.s32.totalorder %s22, %s23
    %p34 = scmp.eq.s32.totalorder %s14, 0
    %p35 = por %p33, %p34
    %p36 = scmp.ne.s32.totalorder %s22, %s23
    %p37 = scmp.eq.s32.totalorder %s15, 1
    %p38 = por %p36, %p37
    %p40 = scmp.ne.s32.totalorder %s23, %s39
    %p41 = scmp.eq.s32.totalorder %s15, 0
    %p42 = por %p40, %p41
    %s44 = sadd.s32 %s43, 1
    %p47 = scmp.eq.s32.totalorder %s9, 1
    %p48 = scmp.ne.s32.totalorder %s43, %s45
    %p49 = scmp.eq.s32.totalorder %s9, 0
    %p50 = por %p48, %p49
    %p51 = scmp.ne.s32.totalorder %s43, %s45
    %p52 = scmp.eq.s32.totalorder %s14, 1
    %p53 = por %p51, %p52
    %p54 = scmp.ne.s32.totalorder %s45, %s46
    %p55 = scmp.eq.s32.totalorder %s14, 0
    %p56 = por %p54, %p55
    %p57 = scmp.ne.s32.totalorder %s45, %s46
    %p58 = scmp.eq.s32.totalorder %s15, 1
    %p59 = por %p57, %p58
    %p61 = scmp.ne.s32.totalorder %s46, %s60
    %p62 = scmp.eq.s32.totalorder %s15, 0
    %p63 = por %p61, %p62
    %s65 = sadd.s32 %s64, 1
    %p68 = scmp.eq.s32.totalorder %s9, 1
    %p69 = scmp.ne.s32.totalorder %s64, %s66
    %p70 = scmp.eq.s32.totalorder %s9, 0
    %p71 = por %p69, %p70
    %p72 = scmp.ne.s32.totalorder %s64, %s66
    %p73 = scmp.eq.s32.totalorder %s14, 1
    %p74 = por %p72, %p73
    %p75 = scmp.ne.s32.totalorder %s66, %s67
    %p76 = scmp.eq.s32.totalorder %s14, 0
    %p77 = por %p75, %p76
    %p78 = scmp.ne.s32.totalorder %s66, %s67
    %p79 = scmp.eq.s32.totalorder %s15, 1
    %p80 = por %p78, %p79
    %p82 = scmp.ne.s32.totalorder %s67, %s81
    %p83 = scmp.eq.s32.totalorder %s15, 0
    %p84 = por %p82, %p83
    %s85 = ssub.s32 %s9, %s16
    %p86 = scmp.eq.s32.totalorder %s85, 0
    %s88 = sadd.s32 %s87, 1
    %s89 = scalar_select %p86, %s87, %s88
    %p92 = pneg %p86
    %p93 = scmp.eq.s32.totalorder %s9, 1
    %p94 = por %p92, %p93
    %p95 = scmp.ne.s32.totalorder %s87, %s90
    %p96 = scmp.eq.s32.totalorder %s9, 0
    %p97 = por %p95, %p96
    %p98 = scmp.ne.s32.totalorder %s87, %s90
    %p99 = scmp.eq.s32.totalorder %s14, 1
    %p100 = por %p98, %p99
    %p101 = scmp.ne.s32.totalorder %s90, %s91
    %p102 = scmp.eq.s32.totalorder %s14, 0
    %p103 = por %p101, %p102
    %p104 = scmp.ne.s32.totalorder %s90, %s91
    %p105 = scmp.eq.s32.totalorder %s15, 1
    %p106 = por %p104, %p105
    %p108 = scmp.ne.s32.totalorder %s91, %s107
    %p109 = scmp.eq.s32.totalorder %s15, 0
    %p110 = por %p108, %p109
    %p111 = scmp.le.s32.totalorder 1, %s9
    %p112 = scmp.lt.s32.totalorder %s9, 3
    %p113 = pnand %p111, %p112
    %p114 = pneg %p113
    // Predicated region
    $region9: #{img_model_forward.4} parent=5 // pred_check
      _
    $region10: #{img_model_forward.4} parent=5 // pred_check_branch
      %116 = sbr.rel (%p113) target = $region12
    $region11: #{img_model_forward.4} parent=5 // pred_region
      %s117 = ssub.s32 %s9, 1
      // Predicated region
      $region13: #{img_model_forward.4} parent=11 // pred_check
        %p118 = pneg %p56
      $region14: #{img_model_forward.4} parent=11 // pred_check_branch
        %120 = sbr.rel (%p118) target = $region16
      $region15: #{img_model_forward.4} parent=11 // pred_region
        _
      $region16: #{img_model_forward.4} parent=11 // pred_fallthru
        _
      // Predicated region
      $region17: #{img_model_forward.4} parent=11 // pred_check
        %p121 = pneg %p77
      $region18: #{img_model_forward.4} parent=11 // pred_check_branch
        %123 = sbr.rel (%p121) target = $region20
      $region19: #{img_model_forward.4} parent=11 // pred_region
        _
      $region20: #{img_model_forward.4} parent=11 // pred_fallthru
        _
    $region12: #{img_model_forward.4} parent=5 // pred_fallthru
      _
    %p124 = scmp.lt.s32.totalorder %s9, 2
    // Predicated region
    $region21: #{img_model_forward.4} parent=5 // pred_check
      %p125 = pneg %p124
    $region22: #{img_model_forward.4} parent=5 // pred_check_branch
      %127 = sbr.rel (%p125) target = $region24
    $region23: #{img_model_forward.4} parent=5 // pred_region
      // Predicated region
      $region25: #{img_model_forward.4} parent=23 // pred_check
        %p128 = pneg %p29
      $region26: #{img_model_forward.4} parent=23 // pred_check_branch
        %130 = sbr.rel (%p128) target = $region28
      $region27: #{img_model_forward.4} parent=23 // pred_region
        %p131 = scmp.lt.s32.totalorder %s9, 1
        %s132 = scalar_select %p131, %s9, 1
        %s133 = smul.addr %s132, 20
        %s134 = smul.addr %s133, 4
        %s135 = scalar_lea.vmem %s0, %s134
      $region28: #{img_model_forward.4} parent=23 // pred_fallthru
        _
    $region24: #{img_model_forward.4} parent=5 // pred_fallthru
      _
    %p136 = scmp.le.s32.totalorder 1, %s9
    %p137 = scmp.lt.s32.totalorder %s9, 3
    %p138 = pnand %p136, %p137
    %p139 = pneg %p138
    // Predicated region
    $region29: #{img_model_forward.4} parent=5 // pred_check
      _
    $region30: #{img_model_forward.4} parent=5 // pred_check_branch
      %141 = sbr.rel (%p138) target = $region32
    $region31: #{img_model_forward.4} parent=5 // pred_region
      %s142 = ssub.s32 %s9, 1
      %p143 = scmp.lt.s32.totalorder %s14, 1
      %s144 = scalar_select %p143, %s14, 1
      %s145 = smul.addr %s144, 20
      %s146 = smul.addr %s145, 4
      %s147 = scalar_lea.vmem %s0, %s146
      %p148 = pneg %p35
      %p149 = pneg %p32
      %p150 = pneg %p56
      %p151 = pneg %p53
      %p152 = pneg %p77
      %p153 = pneg %p74
      %p154 = pneg %p103
      %p155 = pneg %p100
      %p156 = scmp.lt.s32.totalorder %s14, 1
      %s157 = scalar_select %p156, %s14, 1
      %s158 = smul.addr %s157, 4
      %s159 = smul.addr %s158, 2
      %s160 = scalar_lea.vmem %s3, %s159
      %p161 = scmp.lt.s32.totalorder %s14, 1
      %s162 = scalar_select %p161, %s14, 1
      %s163 = smul.addr %s162, 20
      %s164 = smul.addr %s163, 4
      %s165 = scalar_lea.vmem %s0, %s164
      %p166 = scmp.lt.s32.totalorder %s14, 1
      %s167 = scalar_select %p166, %s14, 1
      %s168 = smul.addr %s167, 4
      %s169 = smul.addr %s168, 2
      %s170 = scalar_lea.vmem %s3, %s169
      %v172 = vld [vmem:[%s165] sm:$0xf]
      %v173 = vld [vmem:[%s165 + $0x8] sm:$0xf]
      %v174 = vld [vmem:[%s165 + $0x10] sm:$0xf]
      %v175 = vld [vmem:[%s165 + $0x18] sm:$0xf]
      %v176 = vld [vmem:[%s165 + $0x20] sm:$0xf]
      %v177 = vld [vmem:[%s165 + $0x28] sm:$0xf]
      %v178 = vld [vmem:[%s165 + $0x30] sm:$0xf]
      %v179 = vld [vmem:[%s165 + $0x38] sm:$0xf]
      %vm180 = vcmask 60416
      %181 = vst.msk [vmem:[#allocation2] sm:$0xf] %vm180, %v172
      %182 = vst.msk [vmem:[#allocation2 + $0x4] sm:$0xf] %vm180, %v173
      %183 = vst.msk [vmem:[#allocation2 + $0x8] sm:$0xf] %vm180, %v174
      %184 = vst.msk [vmem:[#allocation2 + $0xc] sm:$0xf] %vm180, %v175
      %185 = vst.msk [vmem:[#allocation2 + $0x10] sm:$0xf] %vm180, %v176
      %186 = vst.msk [vmem:[#allocation2 + $0x14] sm:$0xf] %vm180, %v177
      %187 = vst.msk [vmem:[#allocation2 + $0x18] sm:$0xf] %vm180, %v178
      %188 = vst.msk [vmem:[#allocation2 + $0x1c] sm:$0xf] %vm180, %v179
      %v189 = vld [vmem:[%s165] sm:$0xf]
      %v190 = vld [vmem:[%s165 + $0x4] sm:$0x1]
      %v191 = vld [vmem:[%s165 + $0x8] sm:$0xf]
      %v192 = vld [vmem:[%s165 + $0xc] sm:$0x1]
      %v193 = vld [vmem:[%s165 + $0x10] sm:$0xf]
      %v194 = vld [vmem:[%s165 + $0x14] sm:$0x1]
      %v195 = vld [vmem:[%s165 + $0x18] sm:$0xf]
      %v196 = vld [vmem:[%s165 + $0x1c] sm:$0x1]
      %v197 = vld [vmem:[%s165 + $0x20] sm:$0xf]
      %v198 = vld [vmem:[%s165 + $0x24] sm:$0x1]
      %v199 = vld [vmem:[%s165 + $0x28] sm:$0xf]
      %v200 = vld [vmem:[%s165 + $0x2c] sm:$0x1]
      %v201 = vld [vmem:[%s165 + $0x30] sm:$0xf]
      %v202 = vld [vmem:[%s165 + $0x34] sm:$0x1]
      %v203 = vld [vmem:[%s165 + $0x38] sm:$0xf]
      %v204 = vld [vmem:[%s165 + $0x3c] sm:$0x1]
      %vm205 = vsmask.f32 3328
      %vm206 = vsmask.f32 7440
      %vm207 = vmor %vm205, %vm206
      %v209 = vshrl.u32 %v189, 16
      %v211 = vrot.slane %v209, 4
      %v212 = vshll.u32 %v189, 16
      %v214 = vrot.slane %v212, 5
      %v215 = vor.u32 %v211, %v214
      %v216 = vrot.slane %v215, 4
      %v218 = vshll.u32 %v190, 16
      %v220 = vrot.slane %v218, 5
      %v221 = vsel %vm207, %v216, %v220
      %v223 = vshrl.u32 %v191, 16
      %v225 = vrot.slane %v223, 4
      %v226 = vshll.u32 %v191, 16
      %v228 = vrot.slane %v226, 5
      %v229 = vor.u32 %v225, %v228
      %v230 = vrot.slane %v229, 4
      %v232 = vshll.u32 %v192, 16
      %v234 = vrot.slane %v232, 5
      %v235 = vsel %vm207, %v230, %v234
      %v237 = vshrl.u32 %v193, 16
      %v239 = vrot.slane %v237, 4
      %v240 = vshll.u32 %v193, 16
      %v242 = vrot.slane %v240, 5
      %v243 = vor.u32 %v239, %v242
      %v244 = vrot.slane %v243, 4
      %v246 = vshll.u32 %v194, 16
      %v248 = vrot.slane %v246, 5
      %v249 = vsel %vm207, %v244, %v248
      %v251 = vshrl.u32 %v195, 16
      %v253 = vrot.slane %v251, 4
      %v254 = vshll.u32 %v195, 16
      %v256 = vrot.slane %v254, 5
      %v257 = vor.u32 %v253, %v256
      %v258 = vrot.slane %v257, 4
      %v260 = vshll.u32 %v196, 16
      %v262 = vrot.slane %v260, 5
      %v263 = vsel %vm207, %v258, %v262
      %v265 = vshrl.u32 %v197, 16
      %v267 = vrot.slane %v265, 4
      %v268 = vshll.u32 %v197, 16
      %v270 = vrot.slane %v268, 5
      %v271 = vor.u32 %v267, %v270
      %v272 = vrot.slane %v271, 4
      %v274 = vshll.u32 %v198, 16
      %v276 = vrot.slane %v274, 5
      %v277 = vsel %vm207, %v272, %v276
      %v279 = vshrl.u32 %v199, 16
      %v281 = vrot.slane %v279, 4
      %v282 = vshll.u32 %v199, 16
      %v284 = vrot.slane %v282, 5
      %v285 = vor.u32 %v281, %v284
      %v286 = vrot.slane %v285, 4
      %v288 = vshll.u32 %v200, 16
      %v290 = vrot.slane %v288, 5
      %v291 = vsel %vm207, %v286, %v290
      %v293 = vshrl.u32 %v201, 16
      %v295 = vrot.slane %v293, 4
      %v296 = vshll.u32 %v201, 16
      %v298 = vrot.slane %v296, 5
      %v299 = vor.u32 %v295, %v298
      %v300 = vrot.slane %v299, 4
      %v302 = vshll.u32 %v202, 16
      %v304 = vrot.slane %v302, 5
      %v305 = vsel %vm207, %v300, %v304
      %v307 = vshrl.u32 %v203, 16
      %v309 = vrot.slane %v307, 4
      %v310 = vshll.u32 %v203, 16
      %v312 = vrot.slane %v310, 5
      %v313 = vor.u32 %v309, %v312
      %v314 = vrot.slane %v313, 4
      %v316 = vshll.u32 %v204, 16
      %v318 = vrot.slane %v316, 5
      %v319 = vsel %vm207, %v314, %v318
      %320 = vrot.lane.b32.xlu0 %v221, 8
      %v321 = vpop.permute.xlu0 %320
      %322 = vrot.lane.b32.xlu0 %v235, 8
      %v323 = vpop.permute.xlu0 %322
      %324 = vrot.lane.b32.xlu0 %v249, 8
      %v325 = vpop.permute.xlu0 %324
      %326 = vrot.lane.b32.xlu0 %v263, 8
      %v327 = vpop.permute.xlu0 %326
      %328 = vrot.lane.b32.xlu0 %v277, 8
      %v329 = vpop.permute.xlu0 %328
      %330 = vrot.lane.b32.xlu0 %v291, 8
      %v331 = vpop.permute.xlu0 %330
      %332 = vrot.lane.b32.xlu0 %v305, 8
      %v333 = vpop.permute.xlu0 %332
      %334 = vrot.lane.b32.xlu0 %v319, 8
      %v335 = vpop.permute.xlu0 %334
      %vm344 = vcmask 126016
      %345 = vst.msk [vmem:[#allocation2] sm:$0xf] %vm344, %v321
      %346 = vst.msk [vmem:[#allocation2 + $0x4] sm:$0xf] %vm344, %v323
      %347 = vst.msk [vmem:[#allocation2 + $0x8] sm:$0xf] %vm344, %v325
      %348 = vst.msk [vmem:[#allocation2 + $0xc] sm:$0xf] %vm344, %v327
      %349 = vst.msk [vmem:[#allocation2 + $0x10] sm:$0xf] %vm344, %v329
      %350 = vst.msk [vmem:[#allocation2 + $0x14] sm:$0xf] %vm344, %v331
      %351 = vst.msk [vmem:[#allocation2 + $0x18] sm:$0xf] %vm344, %v333
      %352 = vst.msk [vmem:[#allocation2 + $0x1c] sm:$0xf] %vm344, %v335
      %v353 = vld [vmem:[%s165] sm:$0xe]
      %v354 = vld [vmem:[%s165 + $0x4] sm:$0x1]
      %v355 = vld [vmem:[%s165 + $0x8] sm:$0xe]
      %v356 = vld [vmem:[%s165 + $0xc] sm:$0x1]
      %v357 = vld [vmem:[%s165 + $0x10] sm:$0xe]
      %v358 = vld [vmem:[%s165 + $0x14] sm:$0x1]
      %v359 = vld [vmem:[%s165 + $0x18] sm:$0xe]
      %v360 = vld [vmem:[%s165 + $0x1c] sm:$0x1]
      %v361 = vld [vmem:[%s165 + $0x20] sm:$0xe]
      %v362 = vld [vmem:[%s165 + $0x24] sm:$0x1]
      %v363 = vld [vmem:[%s165 + $0x28] sm:$0xe]
      %v364 = vld [vmem:[%s165 + $0x2c] sm:$0x1]
      %v365 = vld [vmem:[%s165 + $0x30] sm:$0xe]
      %v366 = vld [vmem:[%s165 + $0x34] sm:$0x1]
      %v367 = vld [vmem:[%s165 + $0x38] sm:$0xe]
      %v368 = vld [vmem:[%s165 + $0x3c] sm:$0x1]
      %vm385 = vcmask 1042432
      %vm386 = vcmask 1046532
      %vm387 = vmor %vm385, %vm386
      %v388 = vrot.slane %v353, 5
      %v389 = vrot.slane %v388, 4
      %v390 = vrot.slane %v354, 5
      %v391 = vsel %vm387, %v389, %v390
      %v392 = vrot.slane %v355, 5
      %v393 = vrot.slane %v392, 4
      %v394 = vrot.slane %v356, 5
      %v395 = vsel %vm387, %v393, %v394
      %v396 = vrot.slane %v357, 5
      %v397 = vrot.slane %v396, 4
      %v398 = vrot.slane %v358, 5
      %v399 = vsel %vm387, %v397, %v398
      %v400 = vrot.slane %v359, 5
      %v401 = vrot.slane %v400, 4
      %v402 = vrot.slane %v360, 5
      %v403 = vsel %vm387, %v401, %v402
      %v404 = vrot.slane %v361, 5
      %v405 = vrot.slane %v404, 4
      %v406 = vrot.slane %v362, 5
      %v407 = vsel %vm387, %v405, %v406
      %v408 = vrot.slane %v363, 5
      %v409 = vrot.slane %v408, 4
      %v410 = vrot.slane %v364, 5
      %v411 = vsel %vm387, %v409, %v410
      %v412 = vrot.slane %v365, 5
      %v413 = vrot.slane %v412, 4
      %v414 = vrot.slane %v366, 5
      %v415 = vsel %vm387, %v413, %v414
      %v416 = vrot.slane %v367, 5
      %v417 = vrot.slane %v416, 4
      %v418 = vrot.slane %v368, 5
      %v419 = vsel %vm387, %v417, %v418
      %420 = vrot.lane.b32.xlu0 %v391, 16
      %v421 = vpop.permute.xlu0 %420
      %422 = vrot.lane.b32.xlu0 %v395, 16
      %v423 = vpop.permute.xlu0 %422
      %424 = vrot.lane.b32.xlu0 %v399, 16
      %v425 = vpop.permute.xlu0 %424
      %426 = vrot.lane.b32.xlu0 %v403, 16
      %v427 = vpop.permute.xlu0 %426
      %428 = vrot.lane.b32.xlu0 %v407, 16
      %v429 = vpop.permute.xlu0 %428
      %430 = vrot.lane.b32.xlu0 %v411, 16
      %v431 = vpop.permute.xlu0 %430
      %432 = vrot.lane.b32.xlu0 %v415, 16
      %v433 = vpop.permute.xlu0 %432
      %434 = vrot.lane.b32.xlu0 %v419, 16
      %v435 = vpop.permute.xlu0 %434
      %vm444 = vcmask 191616
      %445 = vst.msk [vmem:[#allocation2] sm:$0xf] %vm444, %v421
      %446 = vst.msk [vmem:[#allocation2 + $0x4] sm:$0xf] %vm444, %v423
      %447 = vst.msk [vmem:[#allocation2 + $0x8] sm:$0xf] %vm444, %v425
      %448 = vst.msk [vmem:[#allocation2 + $0xc] sm:$0xf] %vm444, %v427
      %449 = vst.msk [vmem:[#allocation2 + $0x10] sm:$0xf] %vm444, %v429
      %450 = vst.msk [vmem:[#allocation2 + $0x14] sm:$0xf] %vm444, %v431
      %451 = vst.msk [vmem:[#allocation2 + $0x18] sm:$0xf] %vm444, %v433
      %452 = vst.msk [vmem:[#allocation2 + $0x1c] sm:$0xf] %vm444, %v435
      %s453 = scalar_lea.vmem %s165, 8
      %v454 = vld [vmem:[%s453] sm:$0xf]
      %v455 = vld [vmem:[%s453 + $0x8] sm:$0xf]
      %v456 = vld [vmem:[%s453 + $0x10] sm:$0xf]
      %v457 = vld [vmem:[%s453 + $0x18] sm:$0xf]
      %v458 = vld [vmem:[%s453 + $0x20] sm:$0xf]
      %v459 = vld [vmem:[%s453 + $0x28] sm:$0xf]
      %v460 = vld [vmem:[%s453 + $0x30] sm:$0xf]
      %v461 = vld [vmem:[%s453 + $0x38] sm:$0xf]
      %470 = vrot.lane.b32.xlu0 %v454, 24
      %v471 = vpop.permute.xlu0 %470
      %472 = vrot.lane.b32.xlu0 %v455, 24
      %v473 = vpop.permute.xlu0 %472
      %474 = vrot.lane.b32.xlu0 %v456, 24
      %v475 = vpop.permute.xlu0 %474
      %476 = vrot.lane.b32.xlu0 %v457, 24
      %v477 = vpop.permute.xlu0 %476
      %478 = vrot.lane.b32.xlu0 %v458, 24
      %v479 = vpop.permute.xlu0 %478
      %480 = vrot.lane.b32.xlu0 %v459, 24
      %v481 = vpop.permute.xlu0 %480
      %482 = vrot.lane.b32.xlu0 %v460, 24
      %v483 = vpop.permute.xlu0 %482
      %484 = vrot.lane.b32.xlu0 %v461, 24
      %v485 = vpop.permute.xlu0 %484
      %vm494 = vcmask 257216
      %495 = vst.msk [vmem:[#allocation2] sm:$0xf] %vm494, %v471
      %496 = vst.msk [vmem:[#allocation2 + $0x4] sm:$0xf] %vm494, %v473
      %497 = vst.msk [vmem:[#allocation2 + $0x8] sm:$0xf] %vm494, %v475
      %498 = vst.msk [vmem:[#allocation2 + $0xc] sm:$0xf] %vm494, %v477
      %499 = vst.msk [vmem:[#allocation2 + $0x10] sm:$0xf] %vm494, %v479
      %500 = vst.msk [vmem:[#allocation2 + $0x14] sm:$0xf] %vm494, %v481
      %501 = vst.msk [vmem:[#allocation2 + $0x18] sm:$0xf] %vm494, %v483
      %502 = vst.msk [vmem:[#allocation2 + $0x1c] sm:$0xf] %vm494, %v485
      %v503 = vld [vmem:[%s453] sm:$0xf]
      %v504 = vld [vmem:[%s453 + $0x4] sm:$0x1]
      %v505 = vld [vmem:[%s453 + $0x8] sm:$0xf]
      %v506 = vld [vmem:[%s453 + $0xc] sm:$0x1]
      %v507 = vld [vmem:[%s453 + $0x10] sm:$0xf]
      %v508 = vld [vmem:[%s453 + $0x14] sm:$0x1]
      %v509 = vld [vmem:[%s453 + $0x18] sm:$0xf]
      %v510 = vld [vmem:[%s453 + $0x1c] sm:$0x1]
      %v511 = vld [vmem:[%s453 + $0x20] sm:$0xf]
      %v512 = vld [vmem:[%s453 + $0x24] sm:$0x1]
      %v513 = vld [vmem:[%s453 + $0x28] sm:$0xf]
      %v514 = vld [vmem:[%s453 + $0x2c] sm:$0x1]
      %v515 = vld [vmem:[%s453 + $0x30] sm:$0xf]
      %v516 = vld [vmem:[%s453 + $0x34] sm:$0x1]
      %v517 = vld [vmem:[%s453 + $0x38] sm:$0xf]
      %v518 = vld [vmem:[%s453 + $0x3c] sm:$0x1]
      %v520 = vshrl.u32 %v503, 16
      %v522 = vrot.slane %v520, 4
      %v523 = vshll.u32 %v503, 16
      %v525 = vrot.slane %v523, 5
      %v526 = vor.u32 %v522, %v525
      %v527 = vrot.slane %v526, 4
      %v529 = vshll.u32 %v504, 16
      %v531 = vrot.slane %v529, 5
      %v532 = vsel %vm207, %v527, %v531
      %v534 = vshrl.u32 %v505, 16
      %v536 = vrot.slane %v534, 4
      %v537 = vshll.u32 %v505, 16
      %v539 = vrot.slane %v537, 5
      %v540 = vor.u32 %v536, %v539
      %v541 = vrot.slane %v540, 4
      %v543 = vshll.u32 %v506, 16
      %v545 = vrot.slane %v543, 5
      %v546 = vsel %vm207, %v541, %v545
      %v548 = vshrl.u32 %v507, 16
      %v550 = vrot.slane %v548, 4
      %v551 = vshll.u32 %v507, 16
      %v553 = vrot.slane %v551, 5
      %v554 = vor.u32 %v550, %v553
      %v555 = vrot.slane %v554, 4
      %v557 = vshll.u32 %v508, 16
      %v559 = vrot.slane %v557, 5
      %v560 = vsel %vm207, %v555, %v559
      %v562 = vshrl.u32 %v509, 16
      %v564 = vrot.slane %v562, 4
      %v565 = vshll.u32 %v509, 16
      %v567 = vrot.slane %v565, 5
      %v568 = vor.u32 %v564, %v567
      %v569 = vrot.slane %v568, 4
      %v571 = vshll.u32 %v510, 16
      %v573 = vrot.slane %v571, 5
      %v574 = vsel %vm207, %v569, %v573
      %v576 = vshrl.u32 %v511, 16
      %v578 = vrot.slane %v576, 4
      %v579 = vshll.u32 %v511, 16
      %v581 = vrot.slane %v579, 5
      %v582 = vor.u32 %v578, %v581
      %v583 = vrot.slane %v582, 4
      %v585 = vshll.u32 %v512, 16
      %v587 = vrot.slane %v585, 5
      %v588 = vsel %vm207, %v583, %v587
      %v590 = vshrl.u32 %v513, 16
      %v592 = vrot.slane %v590, 4
      %v593 = vshll.u32 %v513, 16
      %v595 = vrot.slane %v593, 5
      %v596 = vor.u32 %v592, %v595
      %v597 = vrot.slane %v596, 4
      %v599 = vshll.u32 %v514, 16
      %v601 = vrot.slane %v599, 5
      %v602 = vsel %vm207, %v597, %v601
      %v604 = vshrl.u32 %v515, 16
      %v606 = vrot.slane %v604, 4
      %v607 = vshll.u32 %v515, 16
      %v609 = vrot.slane %v607, 5
      %v610 = vor.u32 %v606, %v609
      %v611 = vrot.slane %v610, 4
      %v613 = vshll.u32 %v516, 16
      %v615 = vrot.slane %v613, 5
      %v616 = vsel %vm207, %v611, %v615
      %v618 = vshrl.u32 %v517, 16
      %v620 = vrot.slane %v618, 4
      %v621 = vshll.u32 %v517, 16
      %v623 = vrot.slane %v621, 5
      %v624 = vor.u32 %v620, %v623
      %v625 = vrot.slane %v624, 4
      %v627 = vshll.u32 %v518, 16
      %v629 = vrot.slane %v627, 5
      %v630 = vsel %vm207, %v625, %v629
      %631 = vrot.lane.b32.xlu0 %v532, 32
      %v632 = vpop.permute.xlu0 %631
      %633 = vrot.lane.b32.xlu0 %v546, 32
      %v634 = vpop.permute.xlu0 %633
      %635 = vrot.lane.b32.xlu0 %v560, 32
      %v636 = vpop.permute.xlu0 %635
      %637 = vrot.lane.b32.xlu0 %v574, 32
      %v638 = vpop.permute.xlu0 %637
      %639 = vrot.lane.b32.xlu0 %v588, 32
      %v640 = vpop.permute.xlu0 %639
      %641 = vrot.lane.b32.xlu0 %v602, 32
      %v642 = vpop.permute.xlu0 %641
      %643 = vrot.lane.b32.xlu0 %v616, 32
      %v644 = vpop.permute.xlu0 %643
      %645 = vrot.lane.b32.xlu0 %v630, 32
      %v646 = vpop.permute.xlu0 %645
      %vm655 = vcmask 322816
      %656 = vst.msk [vmem:[#allocation2] sm:$0xf] %vm655, %v632
      %657 = vst.msk [vmem:[#allocation2 + $0x4] sm:$0xf] %vm655, %v634
      %658 = vst.msk [vmem:[#allocation2 + $0x8] sm:$0xf] %vm655, %v636
      %659 = vst.msk [vmem:[#allocation2 + $0xc] sm:$0xf] %vm655, %v638
      %660 = vst.msk [vmem:[#allocation2 + $0x10] sm:$0xf] %vm655, %v640
      %661 = vst.msk [vmem:[#allocation2 + $0x14] sm:$0xf] %vm655, %v642
      %662 = vst.msk [vmem:[#allocation2 + $0x18] sm:$0xf] %vm655, %v644
      %663 = vst.msk [vmem:[#allocation2 + $0x1c] sm:$0xf] %vm655, %v646
      %v664 = vld [vmem:[%s453] sm:$0xe]
      %v665 = vld [vmem:[%s453 + $0x4] sm:$0x1]
      %v666 = vld [vmem:[%s453 + $0x8] sm:$0xe]
      %v667 = vld [vmem:[%s453 + $0xc] sm:$0x1]
      %v668 = vld [vmem:[%s453 + $0x10] sm:$0xe]
      %v669 = vld [vmem:[%s453 + $0x14] sm:$0x1]
      %v670 = vld [vmem:[%s453 + $0x18] sm:$0xe]
      %v671 = vld [vmem:[%s453 + $0x1c] sm:$0x1]
      %v672 = vld [vmem:[%s453 + $0x20] sm:$0xe]
      %v673 = vld [vmem:[%s453 + $0x24] sm:$0x1]
      %v674 = vld [vmem:[%s453 + $0x28] sm:$0xe]
      %v675 = vld [vmem:[%s453 + $0x2c] sm:$0x1]
      %v676 = vld [vmem:[%s453 + $0x30] sm:$0xe]
      %v677 = vld [vmem:[%s453 + $0x34] sm:$0x1]
      %v678 = vld [vmem:[%s453 + $0x38] sm:$0xe]
      %v679 = vld [vmem:[%s453 + $0x3c] sm:$0x1]
      %v696 = vrot.slane %v664, 5
      %v697 = vrot.slane %v696, 4
      %v698 = vrot.slane %v665, 5
      %v699 = vsel %vm387, %v697, %v698
      %v700 = vrot.slane %v666, 5
      %v701 = vrot.slane %v700, 4
      %v702 = vrot.slane %v667, 5
      %v703 = vsel %vm387, %v701, %v702
      %v704 = vrot.slane %v668, 5
      %v705 = vrot.slane %v704, 4
      %v706 = vrot.slane %v669, 5
      %v707 = vsel %vm387, %v705, %v706
      %v708 = vrot.slane %v670, 5
      %v709 = vrot.slane %v708, 4
      %v710 = vrot.slane %v671, 5
      %v711 = vsel %vm387, %v709, %v710
      %v712 = vrot.slane %v672, 5
      %v713 = vrot.slane %v712, 4
      %v714 = vrot.slane %v673, 5
      %v715 = vsel %vm387, %v713, %v714
      %v716 = vrot.slane %v674, 5
      %v717 = vrot.slane %v716, 4
      %v718 = vrot.slane %v675, 5
      %v719 = vsel %vm387, %v717, %v718
      %v720 = vrot.slane %v676, 5
      %v721 = vrot.slane %v720, 4
      %v722 = vrot.slane %v677, 5
      %v723 = vsel %vm387, %v721, %v722
      %v724 = vrot.slane %v678, 5
      %v725 = vrot.slane %v724, 4
      %v726 = vrot.slane %v679, 5
      %v727 = vsel %vm387, %v725, %v726
      %728 = vrot.lane.b32.xlu0 %v699, 40
      %v729 = vpop.permute.xlu0 %728
      %730 = vrot.lane.b32.xlu0 %v703, 40
      %v731 = vpop.permute.xlu0 %730
      %732 = vrot.lane.b32.xlu0 %v707, 40
      %v733 = vpop.permute.xlu0 %732
      %734 = vrot.lane.b32.xlu0 %v711, 40
      %v735 = vpop.permute.xlu0 %734
      %736 = vrot.lane.b32.xlu0 %v715, 40
      %v737 = vpop.permute.xlu0 %736
      %738 = vrot.lane.b32.xlu0 %v719, 40
      %v739 = vpop.permute.xlu0 %738
      %740 = vrot.lane.b32.xlu0 %v723, 40
      %v741 = vpop.permute.xlu0 %740
      %742 = vrot.lane.b32.xlu0 %v727, 40
      %v743 = vpop.permute.xlu0 %742
      %vm752 = vcmask 388416
      %753 = vst.msk [vmem:[#allocation2] sm:$0xf] %vm752, %v729
      %754 = vst.msk [vmem:[#allocation2 + $0x4] sm:$0xf] %vm752, %v731
      %755 = vst.msk [vmem:[#allocation2 + $0x8] sm:$0xf] %vm752, %v733
      %756 = vst.msk [vmem:[#allocation2 + $0xc] sm:$0xf] %vm752, %v735
      %757 = vst.msk [vmem:[#allocation2 + $0x10] sm:$0xf] %vm752, %v737
      %758 = vst.msk [vmem:[#allocation2 + $0x14] sm:$0xf] %vm752, %v739
      %759 = vst.msk [vmem:[#allocation2 + $0x18] sm:$0xf] %vm752, %v741
      %760 = vst.msk [vmem:[#allocation2 + $0x1c] sm:$0xf] %vm752, %v743
      %s761 = scalar_lea.vmem %s165, 16
      %v762 = vld [vmem:[%s761] sm:$0xf]
      %v763 = vld [vmem:[%s761 + $0x8] sm:$0xf]
      %v764 = vld [vmem:[%s761 + $0x10] sm:$0xf]
      %v765 = vld [vmem:[%s761 + $0x18] sm:$0xf]
      %v766 = vld [vmem:[%s761 + $0x20] sm:$0xf]
      %v767 = vld [vmem:[%s761 + $0x28] sm:$0xf]
      %v768 = vld [vmem:[%s761 + $0x30] sm:$0xf]
      %v769 = vld [vmem:[%s761 + $0x38] sm:$0xf]
      %778 = vrot.lane.b32.xlu0 %v762, 48
      %v779 = vpop.permute.xlu0 %778
      %780 = vrot.lane.b32.xlu0 %v763, 48
      %v781 = vpop.permute.xlu0 %780
      %782 = vrot.lane.b32.xlu0 %v764, 48
      %v783 = vpop.permute.xlu0 %782
      %784 = vrot.lane.b32.xlu0 %v765, 48
      %v785 = vpop.permute.xlu0 %784
      %786 = vrot.lane.b32.xlu0 %v766, 48
      %v787 = vpop.permute.xlu0 %786
      %788 = vrot.lane.b32.xlu0 %v767, 48
      %v789 = vpop.permute.xlu0 %788
      %790 = vrot.lane.b32.xlu0 %v768, 48
      %v791 = vpop.permute.xlu0 %790
      %792 = vrot.lane.b32.xlu0 %v769, 48
      %v793 = vpop.permute.xlu0 %792
      %vm802 = vcmask 454016
      %803 = vst.msk [vmem:[#allocation2] sm:$0xf] %vm802, %v779
      %804 = vst.msk [vmem:[#allocation2 + $0x4] sm:$0xf] %vm802, %v781
      %805 = vst.msk [vmem:[#allocation2 + $0x8] sm:$0xf] %vm802, %v783
      %806 = vst.msk [vmem:[#allocation2 + $0xc] sm:$0xf] %vm802, %v785
      %807 = vst.msk [vmem:[#allocation2 + $0x10] sm:$0xf] %vm802, %v787
      %808 = vst.msk [vmem:[#allocation2 + $0x14] sm:$0xf] %vm802, %v789
      %809 = vst.msk [vmem:[#allocation2 + $0x18] sm:$0xf] %vm802, %v791
      %810 = vst.msk [vmem:[#allocation2 + $0x1c] sm:$0xf] %vm802, %v793
      %v811 = vld [vmem:[%s761] sm:$0xf]
      %v812 = vld [vmem:[%s761 + $0x4] sm:$0x1]
      %v813 = vld [vmem:[%s761 + $0x8] sm:$0xf]
      %v814 = vld [vmem:[%s761 + $0xc] sm:$0x1]
      %v815 = vld [vmem:[%s761 + $0x10] sm:$0xf]
      %v816 = vld [vmem:[%s761 + $0x14] sm:$0x1]
      %v817 = vld [vmem:[%s761 + $0x18] sm:$0xf]
      %v818 = vld [vmem:[%s761 + $0x1c] sm:$0x1]
      %v819 = vld [vmem:[%s761 + $0x20] sm:$0xf]
      %v820 = vld [vmem:[%s761 + $0x24] sm:$0x1]
      %v821 = vld [vmem:[%s761 + $0x28] sm:$0xf]
      %v822 = vld [vmem:[%s761 + $0x2c] sm:$0x1]
      %v823 = vld [vmem:[%s761 + $0x30] sm:$0xf]
      %v824 = vld [vmem:[%s761 + $0x34] sm:$0x1]
      %v825 = vld [vmem:[%s761 + $0x38] sm:$0xf]
      %v826 = vld [vmem:[%s761 + $0x3c] sm:$0x1]
      %v828 = vshrl.u32 %v811, 16
      %v830 = vrot.slane %v828, 4
      %v831 = vshll.u32 %v811, 16
      %v833 = vrot.slane %v831, 5
      %v834 = vor.u32 %v830, %v833
      %v835 = vrot.slane %v834, 4
      %v837 = vshll.u32 %v812, 16
      %v839 = vrot.slane %v837, 5
      %v840 = vsel %vm207, %v835, %v839
      %v842 = vshrl.u32 %v813, 16
      %v844 = vrot.slane %v842, 4
      %v845 = vshll.u32 %v813, 16
      %v847 = vrot.slane %v845, 5
      %v848 = vor.u32 %v844, %v847
      %v849 = vrot.slane %v848, 4
      %v851 = vshll.u32 %v814, 16
      %v853 = vrot.slane %v851, 5
      %v854 = vsel %vm207, %v849, %v853
      %v856 = vshrl.u32 %v815, 16
      %v858 = vrot.slane %v856, 4
      %v859 = vshll.u32 %v815, 16
      %v861 = vrot.slane %v859, 5
      %v862 = vor.u32 %v858, %v861
      %v863 = vrot.slane %v862, 4
      %v865 = vshll.u32 %v816, 16
      %v867 = vrot.slane %v865, 5
      %v868 = vsel %vm207, %v863, %v867
      %v870 = vshrl.u32 %v817, 16
      %v872 = vrot.slane %v870, 4
      %v873 = vshll.u32 %v817, 16
      %v875 = vrot.slane %v873, 5
      %v876 = vor.u32 %v872, %v875
      %v877 = vrot.slane %v876, 4
      %v879 = vshll.u32 %v818, 16
      %v881 = vrot.slane %v879, 5
      %v882 = vsel %vm207, %v877, %v881
      %v884 = vshrl.u32 %v819, 16
      %v886 = vrot.slane %v884, 4
      %v887 = vshll.u32 %v819, 16
      %v889 = vrot.slane %v887, 5
      %v890 = vor.u32 %v886, %v889
      %v891 = vrot.slane %v890, 4
      %v893 = vshll.u32 %v820, 16
      %v895 = vrot.slane %v893, 5
      %v896 = vsel %vm207, %v891, %v895
      %v898 = vshrl.u32 %v821, 16
      %v900 = vrot.slane %v898, 4
      %v901 = vshll.u32 %v821, 16
      %v903 = vrot.slane %v901, 5
      %v904 = vor.u32 %v900, %v903
      %v905 = vrot.slane %v904, 4
      %v907 = vshll.u32 %v822, 16
      %v909 = vrot.slane %v907, 5
      %v910 = vsel %vm207, %v905, %v909
      %v912 = vshrl.u32 %v823, 16
      %v914 = vrot.slane %v912, 4
      %v915 = vshll.u32 %v823, 16
      %v917 = vrot.slane %v915, 5
      %v918 = vor.u32 %v914, %v917
      %v919 = vrot.slane %v918, 4
      %v921 = vshll.u32 %v824, 16
      %v923 = vrot.slane %v921, 5
      %v924 = vsel %vm207, %v919, %v923
      %v926 = vshrl.u32 %v825, 16
      %v928 = vrot.slane %v926, 4
      %v929 = vshll.u32 %v825, 16
      %v931 = vrot.slane %v929, 5
      %v932 = vor.u32 %v928, %v931
      %v933 = vrot.slane %v932, 4
      %v935 = vshll.u32 %v826, 16
      %v937 = vrot.slane %v935, 5
      %v938 = vsel %vm207, %v933, %v937
      %939 = vrot.lane.b32.xlu0 %v840, 56
      %v940 = vpop.permute.xlu0 %939
      %941 = vrot.lane.b32.xlu0 %v854, 56
      %v942 = vpop.permute.xlu0 %941
      %943 = vrot.lane.b32.xlu0 %v868, 56
      %v944 = vpop.permute.xlu0 %943
      %945 = vrot.lane.b32.xlu0 %v882, 56
      %v946 = vpop.permute.xlu0 %945
      %947 = vrot.lane.b32.xlu0 %v896, 56
      %v948 = vpop.permute.xlu0 %947
      %949 = vrot.lane.b32.xlu0 %v910, 56
      %v950 = vpop.permute.xlu0 %949
      %951 = vrot.lane.b32.xlu0 %v924, 56
      %v952 = vpop.permute.xlu0 %951
      %953 = vrot.lane.b32.xlu0 %v938, 56
      %v954 = vpop.permute.xlu0 %953
      %vm963 = vcmask 519616
      %964 = vst.msk [vmem:[#allocation2] sm:$0xf] %vm963, %v940
      %965 = vst.msk [vmem:[#allocation2 + $0x4] sm:$0xf] %vm963, %v942
      %966 = vst.msk [vmem:[#allocation2 + $0x8] sm:$0xf] %vm963, %v944
      %967 = vst.msk [vmem:[#allocation2 + $0xc] sm:$0xf] %vm963, %v946
      %968 = vst.msk [vmem:[#allocation2 + $0x10] sm:$0xf] %vm963, %v948
      %969 = vst.msk [vmem:[#allocation2 + $0x14] sm:$0xf] %vm963, %v950
      %970 = vst.msk [vmem:[#allocation2 + $0x18] sm:$0xf] %vm963, %v952
      %971 = vst.msk [vmem:[#allocation2 + $0x1c] sm:$0xf] %vm963, %v954
      %v972 = vld [vmem:[%s761] sm:$0xe]
      %v973 = vld [vmem:[%s761 + $0x4] sm:$0x1]
      %v974 = vld [vmem:[%s761 + $0x8] sm:$0xe]
      %v975 = vld [vmem:[%s761 + $0xc] sm:$0x1]
      %v976 = vld [vmem:[%s761 + $0x10] sm:$0xe]
      %v977 = vld [vmem:[%s761 + $0x14] sm:$0x1]
      %v978 = vld [vmem:[%s761 + $0x18] sm:$0xe]
      %v979 = vld [vmem:[%s761 + $0x1c] sm:$0x1]
      %v980 = vld [vmem:[%s761 + $0x20] sm:$0xe]
      %v981 = vld [vmem:[%s761 + $0x24] sm:$0x1]
      %v982 = vld [vmem:[%s761 + $0x28] sm:$0xe]
      %v983 = vld [vmem:[%s761 + $0x2c] sm:$0x1]
      %v984 = vld [vmem:[%s761 + $0x30] sm:$0xe]
      %v985 = vld [vmem:[%s761 + $0x34] sm:$0x1]
      %v986 = vld [vmem:[%s761 + $0x38] sm:$0xe]
      %v987 = vld [vmem:[%s761 + $0x3c] sm:$0x1]
      %v1004 = vrot.slane %v972, 5
      %v1005 = vrot.slane %v1004, 4
      %v1006 = vrot.slane %v973, 5
      %v1007 = vsel %vm387, %v1005, %v1006
      %v1008 = vrot.slane %v974, 5
      %v1009 = vrot.slane %v1008, 4
      %v1010 = vrot.slane %v975, 5
      %v1011 = vsel %vm387, %v1009, %v1010
      %v1012 = vrot.slane %v976, 5
      %v1013 = vrot.slane %v1012, 4
      %v1014 = vrot.slane %v977, 5
      %v1015 = vsel %vm387, %v1013, %v1014
      %v1016 = vrot.slane %v978, 5
      %v1017 = vrot.slane %v1016, 4
      %v1018 = vrot.slane %v979, 5
      %v1019 = vsel %vm387, %v1017, %v1018
      %v1020 = vrot.slane %v980, 5
      %v1021 = vrot.slane %v1020, 4
      %v1022 = vrot.slane %v981, 5
      %v1023 = vsel %vm387, %v1021, %v1022
      %v1024 = vrot.slane %v982, 5
      %v1025 = vrot.slane %v1024, 4
      %v1026 = vrot.slane %v983, 5
      %v1027 = vsel %vm387, %v1025, %v1026
      %v1028 = vrot.slane %v984, 5
      %v1029 = vrot.slane %v1028, 4
      %v1030 = vrot.slane %v985, 5
      %v1031 = vsel %vm387, %v1029, %v1030
      %v1032 = vrot.slane %v986, 5
      %v1033 = vrot.slane %v1032, 4
      %v1034 = vrot.slane %v987, 5
      %v1035 = vsel %vm387, %v1033, %v1034
      %1036 = vrot.lane.b32.xlu0 %v1007, 64
      %v1037 = vpop.permute.xlu0 %1036
      %1038 = vrot.lane.b32.xlu0 %v1011, 64
      %v1039 = vpop.permute.xlu0 %1038
      %1040 = vrot.lane.b32.xlu0 %v1015, 64
      %v1041 = vpop.permute.xlu0 %1040
      %1042 = vrot.lane.b32.xlu0 %v1019, 64
      %v1043 = vpop.permute.xlu0 %1042
      %1044 = vrot.lane.b32.xlu0 %v1023, 64
      %v1045 = vpop.permute.xlu0 %1044
      %1046 = vrot.lane.b32.xlu0 %v1027, 64
      %v1047 = vpop.permute.xlu0 %1046
      %1048 = vrot.lane.b32.xlu0 %v1031, 64
      %v1049 = vpop.permute.xlu0 %1048
      %1050 = vrot.lane.b32.xlu0 %v1035, 64
      %v1051 = vpop.permute.xlu0 %1050
      %vm1060 = vcmask 585216
      %1061 = vst.msk [vmem:[#allocation2] sm:$0xf] %vm1060, %v1037
      %1062 = vst.msk [vmem:[#allocation2 + $0x4] sm:$0xf] %vm1060, %v1039
      %1063 = vst.msk [vmem:[#allocation2 + $0x8] sm:$0xf] %vm1060, %v1041
      %1064 = vst.msk [vmem:[#allocation2 + $0xc] sm:$0xf] %vm1060, %v1043
      %1065 = vst.msk [vmem:[#allocation2 + $0x10] sm:$0xf] %vm1060, %v1045
      %1066 = vst.msk [vmem:[#allocation2 + $0x14] sm:$0xf] %vm1060, %v1047
      %1067 = vst.msk [vmem:[#allocation2 + $0x18] sm:$0xf] %vm1060, %v1049
      %1068 = vst.msk [vmem:[#allocation2 + $0x1c] sm:$0xf] %vm1060, %v1051
      %v1069 = vld [vmem:[#allocation2] sm:$0xf]
      %v1070 = vld [vmem:[#allocation2 + $0x4] sm:$0xf]
      %v1071 = vld [vmem:[#allocation2 + $0x8] sm:$0xf]
      %v1072 = vld [vmem:[#allocation2 + $0xc] sm:$0xf]
      %v1073 = vld [vmem:[#allocation2 + $0x10] sm:$0xf]
      %v1074 = vld [vmem:[#allocation2 + $0x14] sm:$0xf]
      %v1075 = vld [vmem:[#allocation2 + $0x18] sm:$0xf]
      %v1076 = vld [vmem:[#allocation2 + $0x1c] sm:$0xf]
      %v1077 = vld [vmem:[%s1] sm:$0xf]
      %v1078 = vld [vmem:[%s1 + $0x4] sm:$0xf]
      %v1079 = vld [vmem:[%s1 + $0x8] sm:$0xf]
      %v1080 = vld [vmem:[%s1 + $0xc] sm:$0xf]
      %v1081 = vld [vmem:[%s1 + $0x10] sm:$0xf]
      %v1082 = vld [vmem:[%s1 + $0x14] sm:$0xf]
      %v1083 = vld [vmem:[%s1 + $0x18] sm:$0xf]
      %v1084 = vld [vmem:[%s1 + $0x1c] sm:$0xf]
      %v1085 = vld [vmem:[%s1 + $0x20] sm:$0xf]
      %v1086 = vld [vmem:[%s2] sm:$0x1]
      %v1088 = vlaneseq
      %v1089 = vshrl.u32 %v1088, 7
      %v1090 = vsub.s32 0, %v1089
      %v1091 = vrot.slane %v1086, %v1090
      %v1101 = vunpack.c.l.b16 %v1069
      %v1102 = vunpack.c.l.b16 %v1070
      %v1103 = vunpack.c.l.b16 %v1071
      %v1104 = vunpack.c.l.b16 %v1072
      %v1105 = vunpack.c.l.b16 %v1073
      %v1106 = vunpack.c.l.b16 %v1074
      %v1107 = vunpack.c.l.b16 %v1075
      %v1108 = vunpack.c.l.b16 %v1076
      %v1109 = vpack.c.b16 %v1102, %v1101
      %v1110 = vpack.c.b16 %v1104, %v1103
      %v1111 = vpack.c.b16 %v1106, %v1105
      %v1112 = vpack.c.b16 %v1108, %v1107
      %v1122 = vunpack.c.l.b16 %v1077
      %v1123 = vunpack.c.l.b16 %v1078
      %v1124 = vunpack.c.l.b16 %v1079
      %v1125 = vunpack.c.l.b16 %v1080
      %v1126 = vunpack.c.l.b16 %v1081
      %v1127 = vunpack.c.l.b16 %v1082
      %v1128 = vunpack.c.l.b16 %v1083
      %v1129 = vunpack.c.l.b16 %v1084
      %v1130 = vunpack.c.l.b16 %v1085
      %v1131 = vpack.c.b16 %v1123, %v1122
      %v1132 = vpack.c.b16 %v1125, %v1124
      %v1133 = vpack.c.b16 %v1127, %v1126
      %v1134 = vpack.c.b16 %v1129, %v1128
      %v1135 = vpack.c.b16 %v1130, %v1130
      %vm1140 = vcmask 588800
      %v1142 = vsel %vm1140, %v1109, 0
      %v1145 = vsel %vm1140, %v1110, 0
      %v1148 = vsel %vm1140, %v1111, 0
      %v1151 = vsel %vm1140, %v1112, 0
      %vm1153 = vcmask 1043456
      %v1155 = vsel %vm1153, %v1135, 0
      %1157 = vmatprep.subr.bf16.mxu0 0
      %1158 = vmatpush1.bf16.msra.mxu0 0
      %1159 = vmatprep.subr.bf16.mxu0 0
      %1160 = vmatpush1.bf16.msra.mxu0 0
      %1161 = vmatprep.subr.bf16.mxu0 0
      %1162 = vmatpush1.bf16.msra.mxu0 0
      %1163 = vmatprep.subr.bf16.mxu0 0
      %1164 = vmatpush1.bf16.msra.mxu0 %v1155
      %1165 = vmatprep.subr.bf16.mxu0 0
      %1166 = vmatpush1.bf16.msra.mxu0 %v1134
      %1167 = vmatprep.subr.bf16.mxu0 0
      %1168 = vmatpush1.bf16.msra.mxu0 %v1133
      %1169 = vmatprep.subr.bf16.mxu0 0
      %1170 = vmatpush1.bf16.msra.mxu0 %v1132
      %1171 = vmatprep.subr.bf16.mxu0 0
      %1172 = vmatpush1.bf16.msra.mxu0 %v1131
      %1173 = vmatprep.subr.bf16.mxu0 0
      %1174 = vmatpush2.bf16.msra.mxu0 0
      %1175 = vmatprep.subr.bf16.mxu0 0
      %1176 = vmatpush2.bf16.msra.mxu0 0
      %1177 = vmatprep.subr.bf16.mxu0 0
      %1178 = vmatpush2.bf16.msra.mxu0 0
      %1179 = vmatprep.subr.bf16.mxu0 0
      %1180 = vmatpush2.bf16.msra.mxu0 0
      %1181 = vmatprep.subr.bf16.mxu0 0
      %1182 = vmatpush2.bf16.msra.mxu0 0
      %1183 = vmatprep.subr.bf16.mxu0 0
      %1184 = vmatpush2.bf16.msra.mxu0 0
      %1185 = vmatprep.subr.bf16.mxu0 0
      %1186 = vmatpush2.bf16.msra.mxu0 0
      %1187 = vmatprep.subr.bf16.mxu0 0
      %1188 = vmatpush2.bf16.msra.mxu0 0
      %1189 = vmatprep.mubr.bf16.mxu0 0
      %1190 = vmatmul.mubr.bf16.gmra.mxu0 %v1142
      %v1191 = vpop.f32.mrf.mxu0
      %v1192 = vadd.f32 %v1091, %v1191
      %v1193 = vpop.f32.mrf.mxu0
      %v1194 = vpop.f32.mrf.mxu0
      %v1195 = vadd.f32 %v1091, %v1194
      %v1196 = vpop.f32.mrf.mxu0
      %1197 = vmatprep.mubr.bf16.mxu0 0
      %1198 = vmatmul.mubr.bf16.gmra.mxu0 %v1145
      %v1199 = vpop.f32.mrf.mxu0
      %v1200 = vadd.f32 %v1091, %v1199
      %v1201 = vpop.f32.mrf.mxu0
      %v1202 = vpop.f32.mrf.mxu0
      %v1203 = vadd.f32 %v1091, %v1202
      %v1204 = vpop.f32.mrf.mxu0
      %1205 = vmatprep.mubr.bf16.mxu0 0
      %1206 = vmatmul.mubr.bf16.gmra.mxu0 %v1148
      %v1207 = vpop.f32.mrf.mxu0
      %v1208 = vadd.f32 %v1091, %v1207
      %v1209 = vpop.f32.mrf.mxu0
      %v1210 = vpop.f32.mrf.mxu0
      %v1211 = vadd.f32 %v1091, %v1210
      %v1212 = vpop.f32.mrf.mxu0
      %1213 = vmatprep.mubr.bf16.mxu0 0
      %1214 = vmatmul.mubr.bf16.gmra.mxu0 %v1151
      %v1215 = vpop.f32.mrf.mxu0
      %v1216 = vadd.f32 %v1091, %v1215
      %v1217 = vpop.f32.mrf.mxu0
      %v1218 = vpop.f32.mrf.mxu0
      %v1219 = vadd.f32 %v1091, %v1218
      %v1220 = vpop.f32.mrf.mxu0
      %1221 = vdwg.mxu0
      %v1222 = vmax.f32 %v1192, 0.0
      %v1223 = vmax.f32 %v1195, 0.0
      %v1224 = vmax.f32 %v1200, 0.0
      %v1225 = vmax.f32 %v1203, 0.0
      %v1226 = vmax.f32 %v1208, 0.0
      %v1227 = vmax.f32 %v1211, 0.0
      %v1228 = vmax.f32 %v1216, 0.0
      %v1229 = vmax.f32 %v1219, 0.0
      %v1238 = vcombine.high %v1222, %v1222
      %v1240 = vunpack.c.l.s4 1983009808
      %v1241 = vunpack.c.0.s8 %v1240
      %v1242 = vlaneseq
      %v1243 = vshrl.u32 %v1242, 7
      %v1244 = vsub.s32 %v1241, %v1243
      %v1245 = vrot.slane %v1222, %v1244
      %v1247 = vunpack.c.l.s4 1983009808
      %v1248 = vunpack.c.0.s8 %v1247
      %v1249 = vlaneseq
      %v1250 = vshrl.u32 %v1249, 7
      %v1251 = vsub.s32 %v1248, %v1250
      %v1252 = vrot.slane %v1238, %v1251
      %v1253 = vcombine.high %v1245, %v1245
      %v1254 = vcombine.high %v1252, %v1252
      %v1255 = vcombine.high %v1223, %v1223
      %v1257 = vunpack.c.l.s4 1983009808
      %v1258 = vunpack.c.0.s8 %v1257
      %v1259 = vlaneseq
      %v1260 = vshrl.u32 %v1259, 7
      %v1261 = vsub.s32 %v1258, %v1260
      %v1262 = vrot.slane %v1223, %v1261
      %v1264 = vunpack.c.l.s4 1983009808
      %v1265 = vunpack.c.0.s8 %v1264
      %v1266 = vlaneseq
      %v1267 = vshrl.u32 %v1266, 7
      %v1268 = vsub.s32 %v1265, %v1267
      %v1269 = vrot.slane %v1255, %v1268
      %v1270 = vcombine.high %v1262, %v1262
      %v1271 = vcombine.high %v1269, %v1269
      %v1272 = vcombine.high %v1224, %v1224
      %v1274 = vunpack.c.l.s4 1983009808
      %v1275 = vunpack.c.0.s8 %v1274
      %v1276 = vlaneseq
      %v1277 = vshrl.u32 %v1276, 7
      %v1278 = vsub.s32 %v1275, %v1277
      %v1279 = vrot.slane %v1224, %v1278
      %v1281 = vunpack.c.l.s4 1983009808
      %v1282 = vunpack.c.0.s8 %v1281
      %v1283 = vlaneseq
      %v1284 = vshrl.u32 %v1283, 7
      %v1285 = vsub.s32 %v1282, %v1284
      %v1286 = vrot.slane %v1272, %v1285
      %v1287 = vcombine.high %v1279, %v1279
      %v1288 = vcombine.high %v1286, %v1286
      %v1289 = vcombine.high %v1225, %v1225
      %v1291 = vunpack.c.l.s4 1983009808
      %v1292 = vunpack.c.0.s8 %v1291
      %v1293 = vlaneseq
      %v1294 = vshrl.u32 %v1293, 7
      %v1295 = vsub.s32 %v1292, %v1294
      %v1296 = vrot.slane %v1225, %v1295
      %v1298 = vunpack.c.l.s4 1983009808
      %v1299 = vunpack.c.0.s8 %v1298
      %v1300 = vlaneseq
      %v1301 = vshrl.u32 %v1300, 7
      %v1302 = vsub.s32 %v1299, %v1301
      %v1303 = vrot.slane %v1289, %v1302
      %v1304 = vcombine.high %v1296, %v1296
      %v1305 = vcombine.high %v1303, %v1303
      %v1306 = vcombine.high %v1226, %v1226
      %v1308 = vunpack.c.l.s4 1983009808
      %v1309 = vunpack.c.0.s8 %v1308
      %v1310 = vlaneseq
      %v1311 = vshrl.u32 %v1310, 7
      %v1312 = vsub.s32 %v1309, %v1311
      %v1313 = vrot.slane %v1226, %v1312
      %v1315 = vunpack.c.l.s4 1983009808
      %v1316 = vunpack.c.0.s8 %v1315
      %v1317 = vlaneseq
      %v1318 = vshrl.u32 %v1317, 7
      %v1319 = vsub.s32 %v1316, %v1318
      %v1320 = vrot.slane %v1306, %v1319
      %v1321 = vcombine.high %v1313, %v1313
      %v1322 = vcombine.high %v1320, %v1320
      %v1323 = vcombine.high %v1227, %v1227
      %v1325 = vunpack.c.l.s4 1983009808
      %v1326 = vunpack.c.0.s8 %v1325
      %v1327 = vlaneseq
      %v1328 = vshrl.u32 %v1327, 7
      %v1329 = vsub.s32 %v1326, %v1328
      %v1330 = vrot.slane %v1227, %v1329
      %v1332 = vunpack.c.l.s4 1983009808
      %v1333 = vunpack.c.0.s8 %v1332
      %v1334 = vlaneseq
      %v1335 = vshrl.u32 %v1334, 7
      %v1336 = vsub.s32 %v1333, %v1335
      %v1337 = vrot.slane %v1323, %v1336
      %v1338 = vcombine.high %v1330, %v1330
      %v1339 = vcombine.high %v1337, %v1337
      %v1340 = vcombine.high %v1228, %v1228
      %v1342 = vunpack.c.l.s4 1983009808
      %v1343 = vunpack.c.0.s8 %v1342
      %v1344 = vlaneseq
      %v1345 = vshrl.u32 %v1344, 7
      %v1346 = vsub.s32 %v1343, %v1345
      %v1347 = vrot.slane %v1228, %v1346
      %v1349 = vunpack.c.l.s4 1983009808
      %v1350 = vunpack.c.0.s8 %v1349
      %v1351 = vlaneseq
      %v1352 = vshrl.u32 %v1351, 7
      %v1353 = vsub.s32 %v1350, %v1352
      %v1354 = vrot.slane %v1340, %v1353
      %v1355 = vcombine.high %v1347, %v1347
      %v1356 = vcombine.high %v1354, %v1354
      %v1357 = vcombine.high %v1229, %v1229
      %v1359 = vunpack.c.l.s4 1983009808
      %v1360 = vunpack.c.0.s8 %v1359
      %v1361 = vlaneseq
      %v1362 = vshrl.u32 %v1361, 7
      %v1363 = vsub.s32 %v1360, %v1362
      %v1364 = vrot.slane %v1229, %v1363
      %v1366 = vunpack.c.l.s4 1983009808
      %v1367 = vunpack.c.0.s8 %v1366
      %v1368 = vlaneseq
      %v1369 = vshrl.u32 %v1368, 7
      %v1370 = vsub.s32 %v1367, %v1369
      %v1371 = vrot.slane %v1357, %v1370
      %v1372 = vcombine.high %v1364, %v1364
      %v1373 = vcombine.high %v1371, %v1371
      %vm1406 = vcmask 123904
      %v1407 = vsel %vm1406, %v1245, -inf
      %v1408 = vrot.slane %v1407, 4
      %v1409 = vmax.f32 %v1407, %v1408
      %v1410 = vrot.slane %v1409, 2
      %v1411 = vmax.f32 %v1409, %v1410
      %v1412 = vrot.slane %v1411, 1
      %v1413 = vmax.f32 %v1411, %v1412
      %v1414 = vsel %vm1406, %v1253, -inf
      %v1415 = vrot.slane %v1414, 4
      %v1416 = vmax.f32 %v1414, %v1415
      %v1417 = vrot.slane %v1416, 2
      %v1418 = vmax.f32 %v1416, %v1417
      %v1419 = vrot.slane %v1418, 1
      %v1420 = vmax.f32 %v1418, %v1419
      %v1421 = vsel %vm1406, %v1252, -inf
      %v1422 = vrot.slane %v1421, 4
      %v1423 = vmax.f32 %v1421, %v1422
      %v1424 = vrot.slane %v1423, 2
      %v1425 = vmax.f32 %v1423, %v1424
      %v1426 = vrot.slane %v1425, 1
      %v1427 = vmax.f32 %v1425, %v1426
      %v1428 = vsel %vm1406, %v1254, -inf
      %v1429 = vrot.slane %v1428, 4
      %v1430 = vmax.f32 %v1428, %v1429
      %v1431 = vrot.slane %v1430, 2
      %v1432 = vmax.f32 %v1430, %v1431
      %v1433 = vrot.slane %v1432, 1
      %v1434 = vmax.f32 %v1432, %v1433
      %v1435 = vsel %vm1406, %v1262, -inf
      %v1436 = vrot.slane %v1435, 4
      %v1437 = vmax.f32 %v1435, %v1436
      %v1438 = vrot.slane %v1437, 2
      %v1439 = vmax.f32 %v1437, %v1438
      %v1440 = vrot.slane %v1439, 1
      %v1441 = vmax.f32 %v1439, %v1440
      %v1442 = vsel %vm1406, %v1270, -inf
      %v1443 = vrot.slane %v1442, 4
      %v1444 = vmax.f32 %v1442, %v1443
      %v1445 = vrot.slane %v1444, 2
      %v1446 = vmax.f32 %v1444, %v1445
      %v1447 = vrot.slane %v1446, 1
      %v1448 = vmax.f32 %v1446, %v1447
      %v1449 = vsel %vm1406, %v1269, -inf
      %v1450 = vrot.slane %v1449, 4
      %v1451 = vmax.f32 %v1449, %v1450
      %v1452 = vrot.slane %v1451, 2
      %v1453 = vmax.f32 %v1451, %v1452
      %v1454 = vrot.slane %v1453, 1
      %v1455 = vmax.f32 %v1453, %v1454
      %v1456 = vsel %vm1406, %v1271, -inf
      %v1457 = vrot.slane %v1456, 4
      %v1458 = vmax.f32 %v1456, %v1457
      %v1459 = vrot.slane %v1458, 2
      %v1460 = vmax.f32 %v1458, %v1459
      %v1461 = vrot.slane %v1460, 1
      %v1462 = vmax.f32 %v1460, %v1461
      %v1463 = vsel %vm1406, %v1279, -inf
      %v1464 = vrot.slane %v1463, 4
      %v1465 = vmax.f32 %v1463, %v1464
      %v1466 = vrot.slane %v1465, 2
      %v1467 = vmax.f32 %v1465, %v1466
      %v1468 = vrot.slane %v1467, 1
      %v1469 = vmax.f32 %v1467, %v1468
      %v1470 = vsel %vm1406, %v1287, -inf
      %v1471 = vrot.slane %v1470, 4
      %v1472 = vmax.f32 %v1470, %v1471
      %v1473 = vrot.slane %v1472, 2
      %v1474 = vmax.f32 %v1472, %v1473
      %v1475 = vrot.slane %v1474, 1
      %v1476 = vmax.f32 %v1474, %v1475
      %v1477 = vsel %vm1406, %v1286, -inf
      %v1478 = vrot.slane %v1477, 4
      %v1479 = vmax.f32 %v1477, %v1478
      %v1480 = vrot.slane %v1479, 2
      %v1481 = vmax.f32 %v1479, %v1480
      %v1482 = vrot.slane %v1481, 1
      %v1483 = vmax.f32 %v1481, %v1482
      %v1484 = vsel %vm1406, %v1288, -inf
      %v1485 = vrot.slane %v1484, 4
      %v1486 = vmax.f32 %v1484, %v1485
      %v1487 = vrot.slane %v1486, 2
      %v1488 = vmax.f32 %v1486, %v1487
      %v1489 = vrot.slane %v1488, 1
      %v1490 = vmax.f32 %v1488, %v1489
      %v1491 = vsel %vm1406, %v1296, -inf
      %v1492 = vrot.slane %v1491, 4
      %v1493 = vmax.f32 %v1491, %v1492
      %v1494 = vrot.slane %v1493, 2
      %v1495 = vmax.f32 %v1493, %v1494
      %v1496 = vrot.slane %v1495, 1
      %v1497 = vmax.f32 %v1495, %v1496
      %v1498 = vsel %vm1406, %v1304, -inf
      %v1499 = vrot.slane %v1498, 4
      %v1500 = vmax.f32 %v1498, %v1499
      %v1501 = vrot.slane %v1500, 2
      %v1502 = vmax.f32 %v1500, %v1501
      %v1503 = vrot.slane %v1502, 1
      %v1504 = vmax.f32 %v1502, %v1503
      %v1505 = vsel %vm1406, %v1303, -inf
      %v1506 = vrot.slane %v1505, 4
      %v1507 = vmax.f32 %v1505, %v1506
      %v1508 = vrot.slane %v1507, 2
      %v1509 = vmax.f32 %v1507, %v1508
      %v1510 = vrot.slane %v1509, 1
      %v1511 = vmax.f32 %v1509, %v1510
      %v1512 = vsel %vm1406, %v1305, -inf
      %v1513 = vrot.slane %v1512, 4
      %v1514 = vmax.f32 %v1512, %v1513
      %v1515 = vrot.slane %v1514, 2
      %v1516 = vmax.f32 %v1514, %v1515
      %v1517 = vrot.slane %v1516, 1
      %v1518 = vmax.f32 %v1516, %v1517
      %v1519 = vsel %vm1406, %v1313, -inf
      %v1520 = vrot.slane %v1519, 4
      %v1521 = vmax.f32 %v1519, %v1520
      %v1522 = vrot.slane %v1521, 2
      %v1523 = vmax.f32 %v1521, %v1522
      %v1524 = vrot.slane %v1523, 1
      %v1525 = vmax.f32 %v1523, %v1524
      %v1526 = vsel %vm1406, %v1321, -inf
      %v1527 = vrot.slane %v1526, 4
      %v1528 = vmax.f32 %v1526, %v1527
      %v1529 = vrot.slane %v1528, 2
      %v1530 = vmax.f32 %v1528, %v1529
      %v1531 = vrot.slane %v1530, 1
      %v1532 = vmax.f32 %v1530, %v1531
      %v1533 = vsel %vm1406, %v1320, -inf
      %v1534 = vrot.slane %v1533, 4
      %v1535 = vmax.f32 %v1533, %v1534
      %v1536 = vrot.slane %v1535, 2
      %v1537 = vmax.f32 %v1535, %v1536
      %v1538 = vrot.slane %v1537, 1
      %v1539 = vmax.f32 %v1537, %v1538
      %v1540 = vsel %vm1406, %v1322, -inf
      %v1541 = vrot.slane %v1540, 4
      %v1542 = vmax.f32 %v1540, %v1541
      %v1543 = vrot.slane %v1542, 2
      %v1544 = vmax.f32 %v1542, %v1543
      %v1545 = vrot.slane %v1544, 1
      %v1546 = vmax.f32 %v1544, %v1545
      %v1547 = vsel %vm1406, %v1330, -inf
      %v1548 = vrot.slane %v1547, 4
      %v1549 = vmax.f32 %v1547, %v1548
      %v1550 = vrot.slane %v1549, 2
      %v1551 = vmax.f32 %v1549, %v1550
      %v1552 = vrot.slane %v1551, 1
      %v1553 = vmax.f32 %v1551, %v1552
      %v1554 = vsel %vm1406, %v1338, -inf
      %v1555 = vrot.slane %v1554, 4
      %v1556 = vmax.f32 %v1554, %v1555
      %v1557 = vrot.slane %v1556, 2
      %v1558 = vmax.f32 %v1556, %v1557
      %v1559 = vrot.slane %v1558, 1
      %v1560 = vmax.f32 %v1558, %v1559
      %v1561 = vsel %vm1406, %v1337, -inf
      %v1562 = vrot.slane %v1561, 4
      %v1563 = vmax.f32 %v1561, %v1562
      %v1564 = vrot.slane %v1563, 2
      %v1565 = vmax.f32 %v1563, %v1564
      %v1566 = vrot.slane %v1565, 1
      %v1567 = vmax.f32 %v1565, %v1566
      %v1568 = vsel %vm1406, %v1339, -inf
      %v1569 = vrot.slane %v1568, 4
      %v1570 = vmax.f32 %v1568, %v1569
      %v1571 = vrot.slane %v1570, 2
      %v1572 = vmax.f32 %v1570, %v1571
      %v1573 = vrot.slane %v1572, 1
      %v1574 = vmax.f32 %v1572, %v1573
      %v1575 = vsel %vm1406, %v1347, -inf
      %v1576 = vrot.slane %v1575, 4
      %v1577 = vmax.f32 %v1575, %v1576
      %v1578 = vrot.slane %v1577, 2
      %v1579 = vmax.f32 %v1577, %v1578
      %v1580 = vrot.slane %v1579, 1
      %v1581 = vmax.f32 %v1579, %v1580
      %v1582 = vsel %vm1406, %v1355, -inf
      %v1583 = vrot.slane %v1582, 4
      %v1584 = vmax.f32 %v1582, %v1583
      %v1585 = vrot.slane %v1584, 2
      %v1586 = vmax.f32 %v1584, %v1585
      %v1587 = vrot.slane %v1586, 1
      %v1588 = vmax.f32 %v1586, %v1587
      %v1589 = vsel %vm1406, %v1354, -inf
      %v1590 = vrot.slane %v1589, 4
      %v1591 = vmax.f32 %v1589, %v1590
      %v1592 = vrot.slane %v1591, 2
      %v1593 = vmax.f32 %v1591, %v1592
      %v1594 = vrot.slane %v1593, 1
      %v1595 = vmax.f32 %v1593, %v1594
      %v1596 = vsel %vm1406, %v1356, -inf
      %v1597 = vrot.slane %v1596, 4
      %v1598 = vmax.f32 %v1596, %v1597
      %v1599 = vrot.slane %v1598, 2
      %v1600 = vmax.f32 %v1598, %v1599
      %v1601 = vrot.slane %v1600, 1
      %v1602 = vmax.f32 %v1600, %v1601
      %v1603 = vsel %vm1406, %v1364, -inf
      %v1604 = vrot.slane %v1603, 4
      %v1605 = vmax.f32 %v1603, %v1604
      %v1606 = vrot.slane %v1605, 2
      %v1607 = vmax.f32 %v1605, %v1606
      %v1608 = vrot.slane %v1607, 1
      %v1609 = vmax.f32 %v1607, %v1608
      %v1610 = vsel %vm1406, %v1372, -inf
      %v1611 = vrot.slane %v1610, 4
      %v1612 = vmax.f32 %v1610, %v1611
      %v1613 = vrot.slane %v1612, 2
      %v1614 = vmax.f32 %v1612, %v1613
      %v1615 = vrot.slane %v1614, 1
      %v1616 = vmax.f32 %v1614, %v1615
      %v1617 = vsel %vm1406, %v1371, -inf
      %v1618 = vrot.slane %v1617, 4
      %v1619 = vmax.f32 %v1617, %v1618
      %v1620 = vrot.slane %v1619, 2
      %v1621 = vmax.f32 %v1619, %v1620
      %v1622 = vrot.slane %v1621, 1
      %v1623 = vmax.f32 %v1621, %v1622
      %v1624 = vsel %vm1406, %v1373, -inf
      %v1625 = vrot.slane %v1624, 4
      %v1626 = vmax.f32 %v1624, %v1625
      %v1627 = vrot.slane %v1626, 2
      %v1628 = vmax.f32 %v1626, %v1627
      %v1629 = vrot.slane %v1628, 1
      %v1630 = vmax.f32 %v1628, %v1629
      %vm1631 = vcmask 130048
      %v1632 = vsel %vm1631, %v1413, -inf
      %v1633 = vsel %vm1631, %v1441, -inf
      %v1634 = vmax.f32 %v1632, %v1633
      %v1635 = vsel %vm1631, %v1420, -inf
      %v1636 = vsel %vm1631, %v1448, -inf
      %v1637 = vmax.f32 %v1635, %v1636
      %v1638 = vsel %vm1631, %v1427, -inf
      %v1639 = vsel %vm1631, %v1455, -inf
      %v1640 = vmax.f32 %v1638, %v1639
      %v1641 = vsel %vm1631, %v1434, -inf
      %v1642 = vsel %vm1631, %v1462, -inf
      %v1643 = vmax.f32 %v1641, %v1642
      %v1644 = vsel %vm1631, %v1469, -inf
      %v1645 = vsel %vm1631, %v1497, -inf
      %v1646 = vmax.f32 %v1644, %v1645
      %v1647 = vsel %vm1631, %v1476, -inf
      %v1648 = vsel %vm1631, %v1504, -inf
      %v1649 = vmax.f32 %v1647, %v1648
      %v1650 = vsel %vm1631, %v1483, -inf
      %v1651 = vsel %vm1631, %v1511, -inf
      %v1652 = vmax.f32 %v1650, %v1651
      %v1653 = vsel %vm1631, %v1490, -inf
      %v1654 = vsel %vm1631, %v1518, -inf
      %v1655 = vmax.f32 %v1653, %v1654
      %v1656 = vsel %vm1631, %v1525, -inf
      %v1657 = vsel %vm1631, %v1553, -inf
      %v1658 = vmax.f32 %v1656, %v1657
      %v1659 = vsel %vm1631, %v1532, -inf
      %v1660 = vsel %vm1631, %v1560, -inf
      %v1661 = vmax.f32 %v1659, %v1660
      %v1662 = vsel %vm1631, %v1539, -inf
      %v1663 = vsel %vm1631, %v1567, -inf
      %v1664 = vmax.f32 %v1662, %v1663
      %v1665 = vsel %vm1631, %v1546, -inf
      %v1666 = vsel %vm1631, %v1574, -inf
      %v1667 = vmax.f32 %v1665, %v1666
      %v1668 = vsel %vm1631, %v1581, -inf
      %v1669 = vsel %vm1631, %v1609, -inf
      %v1670 = vmax.f32 %v1668, %v1669
      %v1671 = vsel %vm1631, %v1588, -inf
      %v1672 = vsel %vm1631, %v1616, -inf
      %v1673 = vmax.f32 %v1671, %v1672
      %v1674 = vsel %vm1631, %v1595, -inf
      %v1675 = vsel %vm1631, %v1623, -inf
      %v1676 = vmax.f32 %v1674, %v1675
      %v1677 = vsel %vm1631, %v1602, -inf
      %v1678 = vsel %vm1631, %v1630, -inf
      %v1679 = vmax.f32 %v1677, %v1678
      %v1680 = vpack.c.bf16 %v1634, %v1634
      %v1681 = vpack.c.bf16 %v1637, %v1637
      %v1682 = vpack.c.bf16 %v1640, %v1640
      %v1683 = vpack.c.bf16 %v1643, %v1643
      %v1684 = vpack.c.bf16 %v1646, %v1646
      %v1685 = vpack.c.bf16 %v1649, %v1649
      %v1686 = vpack.c.bf16 %v1652, %v1652
      %v1687 = vpack.c.bf16 %v1655, %v1655
      %v1688 = vpack.c.bf16 %v1658, %v1658
      %v1689 = vpack.c.bf16 %v1661, %v1661
      %v1690 = vpack.c.bf16 %v1664, %v1664
      %v1691 = vpack.c.bf16 %v1667, %v1667
      %v1692 = vpack.c.bf16 %v1670, %v1670
      %v1693 = vpack.c.bf16 %v1673, %v1673
      %v1694 = vpack.c.bf16 %v1676, %v1676
      %v1695 = vpack.c.bf16 %v1679, %v1679
      %v1713 = vunpack.c.l.s4 1983009808
      %v1714 = vunpack.c.0.s8 %v1713
      %v1715 = vlaneseq
      %v1716 = vshrl.u32 %v1715, 7
      %v1717 = vsub.s32 %v1714, %v1716
      %v1718 = vrot.slane %v1680, %v1717
      %v1720 = vunpack.c.l.s4 1983009808
      %v1721 = vunpack.c.0.s8 %v1720
      %v1722 = vlaneseq
      %v1723 = vshrl.u32 %v1722, 7
      %v1724 = vsub.s32 %v1721, %v1723
      %v1725 = vrot.slane %v1681, %v1724
      %v1727 = vunpack.c.l.s4 1983009808
      %v1728 = vunpack.c.0.s8 %v1727
      %v1729 = vlaneseq
      %v1730 = vshrl.u32 %v1729, 7
      %v1731 = vsub.s32 %v1728, %v1730
      %v1732 = vrot.slane %v1682, %v1731
      %v1734 = vunpack.c.l.s4 1983009808
      %v1735 = vunpack.c.0.s8 %v1734
      %v1736 = vlaneseq
      %v1737 = vshrl.u32 %v1736, 7
      %v1738 = vsub.s32 %v1735, %v1737
      %v1739 = vrot.slane %v1683, %v1738
      %v1741 = vunpack.c.l.s4 1983009808
      %v1742 = vunpack.c.0.s8 %v1741
      %v1743 = vlaneseq
      %v1744 = vshrl.u32 %v1743, 7
      %v1745 = vsub.s32 %v1742, %v1744
      %v1746 = vrot.slane %v1684, %v1745
      %v1748 = vunpack.c.l.s4 1983009808
      %v1749 = vunpack.c.0.s8 %v1748
      %v1750 = vlaneseq
      %v1751 = vshrl.u32 %v1750, 7
      %v1752 = vsub.s32 %v1749, %v1751
      %v1753 = vrot.slane %v1685, %v1752
      %v1755 = vunpack.c.l.s4 1983009808
      %v1756 = vunpack.c.0.s8 %v1755
      %v1757 = vlaneseq
      %v1758 = vshrl.u32 %v1757, 7
      %v1759 = vsub.s32 %v1756, %v1758
      %v1760 = vrot.slane %v1686, %v1759
      %v1762 = vunpack.c.l.s4 1983009808
      %v1763 = vunpack.c.0.s8 %v1762
      %v1764 = vlaneseq
      %v1765 = vshrl.u32 %v1764, 7
      %v1766 = vsub.s32 %v1763, %v1765
      %v1767 = vrot.slane %v1687, %v1766
      %v1769 = vunpack.c.l.s4 1983009808
      %v1770 = vunpack.c.0.s8 %v1769
      %v1771 = vlaneseq
      %v1772 = vshrl.u32 %v1771, 7
      %v1773 = vsub.s32 %v1770, %v1772
      %v1774 = vrot.slane %v1688, %v1773
      %v1776 = vunpack.c.l.s4 1983009808
      %v1777 = vunpack.c.0.s8 %v1776
      %v1778 = vlaneseq
      %v1779 = vshrl.u32 %v1778, 7
      %v1780 = vsub.s32 %v1777, %v1779
      %v1781 = vrot.slane %v1689, %v1780
      %v1783 = vunpack.c.l.s4 1983009808
      %v1784 = vunpack.c.0.s8 %v1783
      %v1785 = vlaneseq
      %v1786 = vshrl.u32 %v1785, 7
      %v1787 = vsub.s32 %v1784, %v1786
      %v1788 = vrot.slane %v1690, %v1787
      %v1790 = vunpack.c.l.s4 1983009808
      %v1791 = vunpack.c.0.s8 %v1790
      %v1792 = vlaneseq
      %v1793 = vshrl.u32 %v1792, 7
      %v1794 = vsub.s32 %v1791, %v1793
      %v1795 = vrot.slane %v1691, %v1794
      %v1797 = vunpack.c.l.s4 1983009808
      %v1798 = vunpack.c.0.s8 %v1797
      %v1799 = vlaneseq
      %v1800 = vshrl.u32 %v1799, 7
      %v1801 = vsub.s32 %v1798, %v1800
      %v1802 = vrot.slane %v1692, %v1801
      %v1804 = vunpack.c.l.s4 1983009808
      %v1805 = vunpack.c.0.s8 %v1804
      %v1806 = vlaneseq
      %v1807 = vshrl.u32 %v1806, 7
      %v1808 = vsub.s32 %v1805, %v1807
      %v1809 = vrot.slane %v1693, %v1808
      %v1811 = vunpack.c.l.s4 1983009808
      %v1812 = vunpack.c.0.s8 %v1811
      %v1813 = vlaneseq
      %v1814 = vshrl.u32 %v1813, 7
      %v1815 = vsub.s32 %v1812, %v1814
      %v1816 = vrot.slane %v1694, %v1815
      %v1818 = vunpack.c.l.s4 1983009808
      %v1819 = vunpack.c.0.s8 %v1818
      %v1820 = vlaneseq
      %v1821 = vshrl.u32 %v1820, 7
      %v1822 = vsub.s32 %v1819, %v1821
      %v1823 = vrot.slane %v1695, %v1822
      %v1825 = vunpack.c.l.s4 1983009808
      %v1826 = vunpack.c.0.s8 %v1825
      %v1827 = vlaneseq
      %v1828 = vshrl.u32 %v1827, 7
      %v1829 = vsub.s32 %v1826, %v1828
      %v1830 = vrot.slane %v1718, %v1829
      %v1832 = vunpack.c.l.s4 1983009808
      %v1833 = vunpack.c.0.s8 %v1832
      %v1834 = vlaneseq
      %v1835 = vshrl.u32 %v1834, 7
      %v1836 = vsub.s32 %v1833, %v1835
      %v1837 = vrot.slane %v1725, %v1836
      %v1839 = vunpack.c.l.s4 1983009808
      %v1840 = vunpack.c.0.s8 %v1839
      %v1841 = vlaneseq
      %v1842 = vshrl.u32 %v1841, 7
      %v1843 = vsub.s32 %v1840, %v1842
      %v1844 = vrot.slane %v1732, %v1843
      %v1846 = vunpack.c.l.s4 1983009808
      %v1847 = vunpack.c.0.s8 %v1846
      %v1848 = vlaneseq
      %v1849 = vshrl.u32 %v1848, 7
      %v1850 = vsub.s32 %v1847, %v1849
      %v1851 = vrot.slane %v1739, %v1850
      %v1853 = vunpack.c.l.s4 1983009808
      %v1854 = vunpack.c.0.s8 %v1853
      %v1855 = vlaneseq
      %v1856 = vshrl.u32 %v1855, 7
      %v1857 = vsub.s32 %v1854, %v1856
      %v1858 = vrot.slane %v1746, %v1857
      %v1860 = vunpack.c.l.s4 1983009808
      %v1861 = vunpack.c.0.s8 %v1860
      %v1862 = vlaneseq
      %v1863 = vshrl.u32 %v1862, 7
      %v1864 = vsub.s32 %v1861, %v1863
      %v1865 = vrot.slane %v1753, %v1864
      %v1867 = vunpack.c.l.s4 1983009808
      %v1868 = vunpack.c.0.s8 %v1867
      %v1869 = vlaneseq
      %v1870 = vshrl.u32 %v1869, 7
      %v1871 = vsub.s32 %v1868, %v1870
      %v1872 = vrot.slane %v1760, %v1871
      %v1874 = vunpack.c.l.s4 1983009808
      %v1875 = vunpack.c.0.s8 %v1874
      %v1876 = vlaneseq
      %v1877 = vshrl.u32 %v1876, 7
      %v1878 = vsub.s32 %v1875, %v1877
      %v1879 = vrot.slane %v1767, %v1878
      %v1881 = vunpack.c.l.s4 1983009808
      %v1882 = vunpack.c.0.s8 %v1881
      %v1883 = vlaneseq
      %v1884 = vshrl.u32 %v1883, 7
      %v1885 = vsub.s32 %v1882, %v1884
      %v1886 = vrot.slane %v1774, %v1885
      %v1888 = vunpack.c.l.s4 1983009808
      %v1889 = vunpack.c.0.s8 %v1888
      %v1890 = vlaneseq
      %v1891 = vshrl.u32 %v1890, 7
      %v1892 = vsub.s32 %v1889, %v1891
      %v1893 = vrot.slane %v1781, %v1892
      %v1895 = vunpack.c.l.s4 1983009808
      %v1896 = vunpack.c.0.s8 %v1895
      %v1897 = vlaneseq
      %v1898 = vshrl.u32 %v1897, 7
      %v1899 = vsub.s32 %v1896, %v1898
      %v1900 = vrot.slane %v1788, %v1899
      %v1902 = vunpack.c.l.s4 1983009808
      %v1903 = vunpack.c.0.s8 %v1902
      %v1904 = vlaneseq
      %v1905 = vshrl.u32 %v1904, 7
      %v1906 = vsub.s32 %v1903, %v1905
      %v1907 = vrot.slane %v1795, %v1906
      %v1909 = vunpack.c.l.s4 1983009808
      %v1910 = vunpack.c.0.s8 %v1909
      %v1911 = vlaneseq
      %v1912 = vshrl.u32 %v1911, 7
      %v1913 = vsub.s32 %v1910, %v1912
      %v1914 = vrot.slane %v1802, %v1913
      %v1916 = vunpack.c.l.s4 1983009808
      %v1917 = vunpack.c.0.s8 %v1916
      %v1918 = vlaneseq
      %v1919 = vshrl.u32 %v1918, 7
      %v1920 = vsub.s32 %v1917, %v1919
      %v1921 = vrot.slane %v1809, %v1920
      %v1923 = vunpack.c.l.s4 1983009808
      %v1924 = vunpack.c.0.s8 %v1923
      %v1925 = vlaneseq
      %v1926 = vshrl.u32 %v1925, 7
      %v1927 = vsub.s32 %v1924, %v1926
      %v1928 = vrot.slane %v1816, %v1927
      %v1930 = vunpack.c.l.s4 1983009808
      %v1931 = vunpack.c.0.s8 %v1930
      %v1932 = vlaneseq
      %v1933 = vshrl.u32 %v1932, 7
      %v1934 = vsub.s32 %v1931, %v1933
      %v1935 = vrot.slane %v1823, %v1934
      %v1936 = vunpack.c.l.b16 %v1830
      %v1937 = vunpack.c.l.b16 %v1837
      %v1938 = vunpack.c.l.b16 %v1844
      %v1939 = vunpack.c.l.b16 %v1851
      %v1940 = vunpack.c.l.b16 %v1858
      %v1941 = vunpack.c.l.b16 %v1865
      %v1942 = vunpack.c.l.b16 %v1872
      %v1943 = vunpack.c.l.b16 %v1879
      %v1944 = vunpack.c.l.b16 %v1886
      %v1945 = vunpack.c.l.b16 %v1893
      %v1946 = vunpack.c.l.b16 %v1900
      %v1947 = vunpack.c.l.b16 %v1907
      %v1948 = vunpack.c.l.b16 %v1914
      %v1949 = vunpack.c.l.b16 %v1921
      %v1950 = vunpack.c.l.b16 %v1928
      %v1951 = vunpack.c.l.b16 %v1935
      %v1952 = vrot.slane %v1937, 7
      %vm1953 = vcmask 1041409
      %v1954 = vsel %vm1953, %v1952, %v1936
      %v1955 = vrot.slane %v1938, 6
      %vm1956 = vcmask 1042434
      %v1957 = vsel %vm1956, %v1955, %v1954
      %v1958 = vrot.slane %v1939, 5
      %vm1959 = vcmask 1043459
      %v1960 = vsel %vm1959, %v1958, %v1957
      %v1961 = vrot.slane %v1941, 7
      %v1962 = vsel %vm1953, %v1961, %v1940
      %v1963 = vrot.slane %v1942, 6
      %v1964 = vsel %vm1956, %v1963, %v1962
      %v1965 = vrot.slane %v1943, 5
      %v1966 = vsel %vm1959, %v1965, %v1964
      %v1967 = vrot.slane %v1945, 7
      %v1968 = vsel %vm1953, %v1967, %v1944
      %v1969 = vrot.slane %v1946, 6
      %v1970 = vsel %vm1956, %v1969, %v1968
      %v1971 = vrot.slane %v1947, 5
      %v1972 = vsel %vm1959, %v1971, %v1970
      %v1973 = vrot.slane %v1949, 7
      %v1974 = vsel %vm1953, %v1973, %v1948
      %v1975 = vrot.slane %v1950, 6
      %v1976 = vsel %vm1956, %v1975, %v1974
      %v1977 = vrot.slane %v1951, 5
      %v1978 = vsel %vm1959, %v1977, %v1976
      %v1979 = vpack.c.b16 %v1960, %v1960
      %v1980 = vpack.c.b16 %v1966, %v1966
      %v1981 = vpack.c.b16 %v1972, %v1972
      %v1982 = vpack.c.b16 %v1978, %v1978
      %v1984 = vunpack.c.l.s4 1983009808
      %v1985 = vunpack.c.0.s8 %v1984
      %v1986 = vlaneseq
      %v1987 = vshrl.u32 %v1986, 7
      %v1988 = vsub.s32 %v1985, %v1987
      %v1989 = vrot.slane %v1979, %v1988
      %v1991 = vunpack.c.l.s4 1983009808
      %v1992 = vunpack.c.0.s8 %v1991
      %v1993 = vlaneseq
      %v1994 = vshrl.u32 %v1993, 7
      %v1995 = vsub.s32 %v1992, %v1994
      %v1996 = vrot.slane %v1980, %v1995
      %v1998 = vunpack.c.l.s4 1983009808
      %v1999 = vunpack.c.0.s8 %v1998
      %v2000 = vlaneseq
      %v2001 = vshrl.u32 %v2000, 7
      %v2002 = vsub.s32 %v1999, %v2001
      %v2003 = vrot.slane %v1981, %v2002
      %v2005 = vunpack.c.l.s4 1983009808
      %v2006 = vunpack.c.0.s8 %v2005
      %v2007 = vlaneseq
      %v2008 = vshrl.u32 %v2007, 7
      %v2009 = vsub.s32 %v2006, %v2008
      %v2010 = vrot.slane %v1982, %v2009
      %2015 = vst.msk [vmem:[%s170] sm:$0x3] %vm1406, %v1989
      %2016 = vst.msk [vmem:[%s170 + $0x2] sm:$0x3] %vm1406, %v1996
      %2017 = vst.msk [vmem:[%s170 + $0x4] sm:$0x3] %vm1406, %v2003
      %2018 = vst.msk [vmem:[%s170 + $0x6] sm:$0x3] %vm1406, %v2010
      %p2019 = scmp.lt.s32.totalorder %s14, 1
      %s2020 = scalar_select %p2019, %s14, 1
      %s2021 = smul.addr %s2020, 4
      %s2022 = smul.addr %s2021, 2
      %s2023 = scalar_lea.vmem %s3, %s2022
      // Predicated region
      $region33: #{img_model_forward.4} parent=31 // pred_check
        %p2024 = pneg %p100
      $region34: #{img_model_forward.4} parent=31 // pred_check_branch
        %2026 = sbr.rel (%p2024) target = $region36
      $region35: #{img_model_forward.4} parent=31 // pred_region
        _
      $region36: #{img_model_forward.4} parent=31 // pred_fallthru
        _
    $region32: #{img_model_forward.4} parent=5 // pred_fallthru
      _
    %p2027 = scmp.le.s32.totalorder 2, %s9
    // Predicated region
    $region37: #{img_model_forward.4} parent=5 // pred_check
      %p2028 = pneg %p2027
    $region38: #{img_model_forward.4} parent=5 // pred_check_branch
      %2030 = sbr.rel (%p2028) target = $region40
    $region39: #{img_model_forward.4} parent=5 // pred_region
      %s2031 = ssub.s32 %s9, 2
      // Predicated region
      $region41: #{img_model_forward.4} parent=39 // pred_check
        %p2032 = pneg %p106
      $region42: #{img_model_forward.4} parent=39 // pred_check_branch
        %2034 = sbr.rel (%p2032) target = $region44
      $region43: #{img_model_forward.4} parent=39 // pred_region
        %p2035 = scmp.lt.s32.totalorder %s15, 1
        %s2036 = scalar_select %p2035, %s15, 1
        %s2037 = smul.addr %s2036, 4
        %s2038 = smul.addr %s2037, 2
        %s2039 = scalar_lea.vmem %s3, %s2038
      $region44: #{img_model_forward.4} parent=39 // pred_fallthru
        _
    $region40: #{img_model_forward.4} parent=5 // pred_fallthru
      _
  $region6: #{img_model_forward.4} parent=0 // loop_footer
    %s13 = sadd.s32 1, %s9
  $region7: #{img_model_forward.4} parent=0 // loop_footer_branch
    %8 = sbr.rel target = $region3
  $region8: #{img_model_forward.4} parent=0 // loop_exit
    _

// kernel: img_model_forward.3
$region0: #{img_model_forward.3}
  #allocation0 [shape = 'u32[]', space=smem, size = 0x4, offset = 0x4, fixed_abs, tag = 'smem constant byte address 0x4 - core index']
  #allocation1 [shape = 'u32[144,128]{1,0:T(1,128)}', space=vmem, size = 0x12000, scoped, tag = 'internal scratch']
  #allocation2 [shape = 'bf16[256,27]{1,0:T(8,128)(2,1)}', space=vmem, size = 0x10000, scoped, tag = 'scratch operand']
  %s0 = inlined_call_operand.vmem [shape: bf16[2,18,18,3], index: 0, kind: input, shape index: {}]
  %s1 = inlined_call_operand.vmem [shape: bf16[27,8], index: 1, kind: input, shape index: {}]
  %s2 = inlined_call_operand.vmem [shape: f32[1,8], index: 2, kind: input, shape index: {}]
  %s3 = inlined_call_operand.vmem [shape: bf16[2,8,8,8], index: 3, kind: output, shape index: {}]
  %s4 = sld [smem:[#allocation0]]
  $region45: #{img_model_forward.3} parent=0
    _
  %s6 = ssub.s32 1, %s4
  %s7 = scalar_select 0, %s6, %s4
  loop: start=0, step=1, limit=4
  $region2: #{img_model_forward.3} parent=0 // loop_pre_header
    _
  $region3: #{img_model_forward.3} parent=0 // loop_header
    %s9 = sphi 0, %s13
    %p10 = scmp.ge.s32.totalorder %s9, 4
    %s19 = sphi 0, %s21
    %s22 = sphi 0, %s19
    %s23 = sphi 0, %s22
    %s39 = sphi 0, %s23
    %s43 = sphi 0, %s43
    %s45 = sphi 0, %s43
    %s46 = sphi 0, %s45
    %s60 = sphi 0, %s46
    %s64 = sphi 0, %s64
    %s66 = sphi 0, %s64
    %s67 = sphi 0, %s66
    %s81 = sphi 0, %s67
    %s87 = sphi 0, %s89
    %s90 = sphi 0, %s87
    %s91 = sphi 0, %s90
    %s107 = sphi 0, %s91
  $region4: #{img_model_forward.3} parent=0 // loop_header_branch
    %12 = sbr.rel (%p10) target = $region8
  $region5: #{img_model_forward.3} parent=0 // loop_body
    %s14 = ssub.s32 %s9, 1
    %s15 = ssub.s32 %s9, 2
    %s16 = sadd.s32 %s9, 1
    %s17 = ssub.s32 %s9, %s16
    %p18 = scmp.eq.s32.totalorder %s17, 0
    %s20 = sadd.s32 %s19, 1
    %s21 = scalar_select %p18, %s19, %s20
    %p24 = pneg %p18
    %p25 = scmp.eq.s32.totalorder %s9, 1
    %p26 = por %p24, %p25
    %p27 = scmp.ne.s32.totalorder %s19, %s22
    %p28 = scmp.eq.s32.totalorder %s9, 0
    %p29 = por %p27, %p28
    %p30 = scmp.ne.s32.totalorder %s19, %s22
    %p31 = scmp.eq.s32.totalorder %s14, 1
    %p32 = por %p30, %p31
    %p33 = scmp.ne.s32.totalorder %s22, %s23
    %p34 = scmp.eq.s32.totalorder %s14, 0
    %p35 = por %p33, %p34
    %p36 = scmp.ne.s32.totalorder %s22, %s23
    %p37 = scmp.eq.s32.totalorder %s15, 1
    %p38 = por %p36, %p37
    %p40 = scmp.ne.s32.totalorder %s23, %s39
    %p41 = scmp.eq.s32.totalorder %s15, 0
    %p42 = por %p40, %p41
    %s44 = sadd.s32 %s43, 1
    %p47 = scmp.eq.s32.totalorder %s9, 1
    %p48 = scmp.ne.s32.totalorder %s43, %s45
    %p49 = scmp.eq.s32.totalorder %s9, 0
    %p50 = por %p48, %p49
    %p51 = scmp.ne.s32.totalorder %s43, %s45
    %p52 = scmp.eq.s32.totalorder %s14, 1
    %p53 = por %p51, %p52
    %p54 = scmp.ne.s32.totalorder %s45, %s46
    %p55 = scmp.eq.s32.totalorder %s14, 0
    %p56 = por %p54, %p55
    %p57 = scmp.ne.s32.totalorder %s45, %s46
    %p58 = scmp.eq.s32.totalorder %s15, 1
    %p59 = por %p57, %p58
    %p61 = scmp.ne.s32.totalorder %s46, %s60
    %p62 = scmp.eq.s32.totalorder %s15, 0
    %p63 = por %p61, %p62
    %s65 = sadd.s32 %s64, 1
    %p68 = scmp.eq.s32.totalorder %s9, 1
    %p69 = scmp.ne.s32.totalorder %s64, %s66
    %p70 = scmp.eq.s32.totalorder %s9, 0
    %p71 = por %p69, %p70
    %p72 = scmp.ne.s32.totalorder %s64, %s66
    %p73 = scmp.eq.s32.totalorder %s14, 1
    %p74 = por %p72, %p73
    %p75 = scmp.ne.s32.totalorder %s66, %s67
    %p76 = scmp.eq.s32.totalorder %s14, 0
    %p77 = por %p75, %p76
    %p78 = scmp.ne.s32.totalorder %s66, %s67
    %p79 = scmp.eq.s32.totalorder %s15, 1
    %p80 = por %p78, %p79
    %p82 = scmp.ne.s32.totalorder %s67, %s81
    %p83 = scmp.eq.s32.totalorder %s15, 0
    %p84 = por %p82, %p83
    %s85 = ssub.s32 %s9, %s16
    %p86 = scmp.eq.s32.totalorder %s85, 0
    %s88 = sadd.s32 %s87, 1
    %s89 = scalar_select %p86, %s87, %s88
    %p92 = pneg %p86
    %p93 = scmp.eq.s32.totalorder %s9, 1
    %p94 = por %p92, %p93
    %p95 = scmp.ne.s32.totalorder %s87, %s90
    %p96 = scmp.eq.s32.totalorder %s9, 0
    %p97 = por %p95, %p96
    %p98 = scmp.ne.s32.totalorder %s87, %s90
    %p99 = scmp.eq.s32.totalorder %s14, 1
    %p100 = por %p98, %p99
    %p101 = scmp.ne.s32.totalorder %s90, %s91
    %p102 = scmp.eq.s32.totalorder %s14, 0
    %p103 = por %p101, %p102
    %p104 = scmp.ne.s32.totalorder %s90, %s91
    %p105 = scmp.eq.s32.totalorder %s15, 1
    %p106 = por %p104, %p105
    %p108 = scmp.ne.s32.totalorder %s91, %s107
    %p109 = scmp.eq.s32.totalorder %s15, 0
    %p110 = por %p108, %p109
    %p111 = scmp.le.s32.totalorder 1, %s9
    %p112 = scmp.lt.s32.totalorder %s9, 3
    %p113 = pnand %p111, %p112
    %p114 = pneg %p113
    // Predicated region
    $region9: #{img_model_forward.3} parent=5 // pred_check
      _
    $region10: #{img_model_forward.3} parent=5 // pred_check_branch
      %116 = sbr.rel (%p113) target = $region12
    $region11: #{img_model_forward.3} parent=5 // pred_region
      %s117 = ssub.s32 %s9, 1
      // Predicated region
      $region13: #{img_model_forward.3} parent=11 // pred_check
        %p118 = pneg %p56
      $region14: #{img_model_forward.3} parent=11 // pred_check_branch
        %120 = sbr.rel (%p118) target = $region16
      $region15: #{img_model_forward.3} parent=11 // pred_region
        _
      $region16: #{img_model_forward.3} parent=11 // pred_fallthru
        _
      // Predicated region
      $region17: #{img_model_forward.3} parent=11 // pred_check
        %p121 = pneg %p77
      $region18: #{img_model_forward.3} parent=11 // pred_check_branch
        %123 = sbr.rel (%p121) target = $region20
      $region19: #{img_model_forward.3} parent=11 // pred_region
        _
      $region20: #{img_model_forward.3} parent=11 // pred_fallthru
        _
    $region12: #{img_model_forward.3} parent=5 // pred_fallthru
      _
    %p124 = scmp.lt.s32.totalorder %s9, 2
    // Predicated region
    $region21: #{img_model_forward.3} parent=5 // pred_check
      %p125 = pneg %p124
    $region22: #{img_model_forward.3} parent=5 // pred_check_branch
      %127 = sbr.rel (%p125) target = $region24
    $region23: #{img_model_forward.3} parent=5 // pred_region
      // Predicated region
      $region25: #{img_model_forward.3} parent=23 // pred_check
        %p128 = pneg %p29
      $region26: #{img_model_forward.3} parent=23 // pred_check_branch
        %130 = sbr.rel (%p128) target = $region28
      $region27: #{img_model_forward.3} parent=23 // pred_region
        %p131 = scmp.lt.s32.totalorder %s9, 1
        %s132 = scalar_select %p131, %s9, 1
        %s133 = smul.addr %s132, 54
        %s134 = smul.addr %s133, 4
        %s135 = scalar_lea.vmem %s0, %s134
      $region28: #{img_model_forward.3} parent=23 // pred_fallthru
        _
    $region24: #{img_model_forward.3} parent=5 // pred_fallthru
      _
    %p136 = scmp.le.s32.totalorder 1, %s9
    %p137 = scmp.lt.s32.totalorder %s9, 3
    %p138 = pnand %p136, %p137
    %p139 = pneg %p138
    // Predicated region
    $region29: #{img_model_forward.3} parent=5 // pred_check
      _
    $region30: #{img_model_forward.3} parent=5 // pred_check_branch
      %141 = sbr.rel (%p138) target = $region32
    $region31: #{img_model_forward.3} parent=5 // pred_region
      %s142 = ssub.s32 %s9, 1
      %p143 = scmp.lt.s32.totalorder %s14, 1
      %s144 = scalar_select %p143, %s14, 1
      %s145 = smul.addr %s144, 54
      %s146 = smul.addr %s145, 4
      %s147 = scalar_lea.vmem %s0, %s146
      %p148 = pneg %p35
      %p149 = pneg %p32
      %p150 = pneg %p56
      %p151 = pneg %p53
      %p152 = pneg %p77
      %p153 = pneg %p74
      %p154 = pneg %p103
      %p155 = pneg %p100
      %p156 = scmp.lt.s32.totalorder %s14, 1
      %s157 = scalar_select %p156, %s14, 1
      %s158 = smul.addr %s157, 8
      %s159 = smul.addr %s158, 4
      %s160 = scalar_lea.vmem %s3, %s159
      %p161 = scmp.lt.s32.totalorder %s14, 1
      %s162 = scalar_select %p161, %s14, 1
      %s163 = smul.addr %s162, 54
      %s164 = smul.addr %s163, 4
      %s165 = scalar_lea.vmem %s0, %s164
      %p166 = scmp.lt.s32.totalorder %s14, 1
      %s167 = scalar_select %p166, %s14, 1
      %s168 = smul.addr %s167, 8
      %s169 = smul.addr %s168, 4
      %s170 = scalar_lea.vmem %s3, %s169
      %v172 = vld [vmem:[%s165] sm:$0xf]
      %v173 = vld [vmem:[%s165 + $0x4] sm:$0xf]
      %v174 = vld [vmem:[%s165 + $0xc] sm:$0xf]
      %v175 = vld [vmem:[%s165 + $0x10] sm:$0xf]
      %v176 = vld [vmem:[%s165 + $0x18] sm:$0xf]
      %v177 = vld [vmem:[%s165 + $0x1c] sm:$0xf]
      %v178 = vld [vmem:[%s165 + $0x24] sm:$0xf]
      %v179 = vld [vmem:[%s165 + $0x28] sm:$0xf]
      %v180 = vld [vmem:[%s165 + $0x30] sm:$0xf]
      %v181 = vld [vmem:[%s165 + $0x34] sm:$0xf]
      %v182 = vld [vmem:[%s165 + $0x3c] sm:$0xf]
      %v183 = vld [vmem:[%s165 + $0x40] sm:$0xf]
      %v184 = vld [vmem:[%s165 + $0x48] sm:$0xf]
      %v185 = vld [vmem:[%s165 + $0x4c] sm:$0xf]
      %v186 = vld [vmem:[%s165 + $0x54] sm:$0xf]
      %v187 = vld [vmem:[%s165 + $0x58] sm:$0xf]
      %v188 = vld [vmem:[%s165 + $0x60] sm:$0xf]
      %v189 = vld [vmem:[%s165 + $0x64] sm:$0xf]
      %v190 = vld [vmem:[%s165 + $0x6c] sm:$0xf]
      %v191 = vld [vmem:[%s165 + $0x70] sm:$0xf]
      %v192 = vld [vmem:[%s165 + $0x78] sm:$0xf]
      %v193 = vld [vmem:[%s165 + $0x7c] sm:$0xf]
      %v194 = vld [vmem:[%s165 + $0x84] sm:$0xf]
      %v195 = vld [vmem:[%s165 + $0x88] sm:$0xf]
      %v196 = vld [vmem:[%s165 + $0x90] sm:$0xf]
      %v197 = vld [vmem:[%s165 + $0x94] sm:$0xf]
      %v198 = vld [vmem:[%s165 + $0x9c] sm:$0xf]
      %v199 = vld [vmem:[%s165 + $0xa0] sm:$0xf]
      %v200 = vld [vmem:[%s165 + $0xa8] sm:$0xf]
      %v201 = vld [vmem:[%s165 + $0xac] sm:$0xf]
      %v202 = vld [vmem:[%s165 + $0xb4] sm:$0xf]
      %v203 = vld [vmem:[%s165 + $0xb8] sm:$0xf]
      %vm204 = vcmask 19456
      %205 = vst.msk [vmem:[#allocation2] sm:$0xf] %vm204, %v172
      %206 = vst.msk [vmem:[#allocation2 + $0x4] sm:$0xf] %vm204, %v173
      %207 = vst.msk [vmem:[#allocation2 + $0x8] sm:$0xf] %vm204, %v174
      %208 = vst.msk [vmem:[#allocation2 + $0xc] sm:$0xf] %vm204, %v175
      %209 = vst.msk [vmem:[#allocation2 + $0x10] sm:$0xf] %vm204, %v176
      %210 = vst.msk [vmem:[#allocation2 + $0x14] sm:$0xf] %vm204, %v177
      %211 = vst.msk [vmem:[#allocation2 + $0x18] sm:$0xf] %vm204, %v178
      %212 = vst.msk [vmem:[#allocation2 + $0x1c] sm:$0xf] %vm204, %v179
      %213 = vst.msk [vmem:[#allocation2 + $0x20] sm:$0xf] %vm204, %v180
      %214 = vst.msk [vmem:[#allocation2 + $0x24] sm:$0xf] %vm204, %v181
      %215 = vst.msk [vmem:[#allocation2 + $0x28] sm:$0xf] %vm204, %v182
      %216 = vst.msk [vmem:[#allocation2 + $0x2c] sm:$0xf] %vm204, %v183
      %217 = vst.msk [vmem:[#allocation2 + $0x30] sm:$0xf] %vm204, %v184
      %218 = vst.msk [vmem:[#allocation2 + $0x34] sm:$0xf] %vm204, %v185
      %219 = vst.msk [vmem:[#allocation2 + $0x38] sm:$0xf] %vm204, %v186
      %220 = vst.msk [vmem:[#allocation2 + $0x3c] sm:$0xf] %vm204, %v187
      %221 = vst.msk [vmem:[#allocation2 + $0x40] sm:$0xf] %vm204, %v188
      %222 = vst.msk [vmem:[#allocation2 + $0x44] sm:$0xf] %vm204, %v189
      %223 = vst.msk [vmem:[#allocation2 + $0x48] sm:$0xf] %vm204, %v190
      %224 = vst.msk [vmem:[#allocation2 + $0x4c] sm:$0xf] %vm204, %v191
      %225 = vst.msk [vmem:[#allocation2 + $0x50] sm:$0xf] %vm204, %v192
      %226 = vst.msk [vmem:[#allocation2 + $0x54] sm:$0xf] %vm204, %v193
      %227 = vst.msk [vmem:[#allocation2 + $0x58] sm:$0xf] %vm204, %v194
      %228 = vst.msk [vmem:[#allocation2 + $0x5c] sm:$0xf] %vm204, %v195
      %229 = vst.msk [vmem:[#allocation2 + $0x60] sm:$0xf] %vm204, %v196
      %230 = vst.msk [vmem:[#allocation2 + $0x64] sm:$0xf] %vm204, %v197
      %231 = vst.msk [vmem:[#allocation2 + $0x68] sm:$0xf] %vm204, %v198
      %232 = vst.msk [vmem:[#allocation2 + $0x6c] sm:$0xf] %vm204, %v199
      %233 = vst.msk [vmem:[#allocation2 + $0x70] sm:$0xf] %vm204, %v200
      %234 = vst.msk [vmem:[#allocation2 + $0x74] sm:$0xf] %vm204, %v201
      %235 = vst.msk [vmem:[#allocation2 + $0x78] sm:$0xf] %vm204, %v202
      %236 = vst.msk [vmem:[#allocation2 + $0x7c] sm:$0xf] %vm204, %v203
      %v237 = vld [vmem:[%s165] sm:$0xf]
      %v238 = vld [vmem:[%s165 + $0x4] sm:$0xf]
      %v239 = vld [vmem:[%s165 + $0x8] sm:$0x1]
      %v240 = vld [vmem:[%s165 + $0xc] sm:$0xf]
      %v241 = vld [vmem:[%s165 + $0x10] sm:$0xf]
      %v242 = vld [vmem:[%s165 + $0x14] sm:$0x1]
      %v243 = vld [vmem:[%s165 + $0x18] sm:$0xf]
      %v244 = vld [vmem:[%s165 + $0x1c] sm:$0xf]
      %v245 = vld [vmem:[%s165 + $0x20] sm:$0x1]
      %v246 = vld [vmem:[%s165 + $0x24] sm:$0xf]
      %v247 = vld [vmem:[%s165 + $0x28] sm:$0xf]
      %v248 = vld [vmem:[%s165 + $0x2c] sm:$0x1]
      %v249 = vld [vmem:[%s165 + $0x30] sm:$0xf]
      %v250 = vld [vmem:[%s165 + $0x34] sm:$0xf]
      %v251 = vld [vmem:[%s165 + $0x38] sm:$0x1]
      %v252 = vld [vmem:[%s165 + $0x3c] sm:$0xf]
      %v253 = vld [vmem:[%s165 + $0x40] sm:$0xf]
      %v254 = vld [vmem:[%s165 + $0x44] sm:$0x1]
      %v255 = vld [vmem:[%s165 + $0x48] sm:$0xf]
      %v256 = vld [vmem:[%s165 + $0x4c] sm:$0xf]
      %v257 = vld [vmem:[%s165 + $0x50] sm:$0x1]
      %v258 = vld [vmem:[%s165 + $0x54] sm:$0xf]
      %v259 = vld [vmem:[%s165 + $0x58] sm:$0xf]
      %v260 = vld [vmem:[%s165 + $0x5c] sm:$0x1]
      %v261 = vld [vmem:[%s165 + $0x60] sm:$0xf]
      %v262 = vld [vmem:[%s165 + $0x64] sm:$0xf]
      %v263 = vld [vmem:[%s165 + $0x68] sm:$0x1]
      %v264 = vld [vmem:[%s165 + $0x6c] sm:$0xf]
      %v265 = vld [vmem:[%s165 + $0x70] sm:$0xf]
      %v266 = vld [vmem:[%s165 + $0x74] sm:$0x1]
      %v267 = vld [vmem:[%s165 + $0x78] sm:$0xf]
      %v268 = vld [vmem:[%s165 + $0x7c] sm:$0xf]
      %v269 = vld [vmem:[%s165 + $0x80] sm:$0x1]
      %v270 = vld [vmem:[%s165 + $0x84] sm:$0xf]
      %v271 = vld [vmem:[%s165 + $0x88] sm:$0xf]
      %v272 = vld [vmem:[%s165 + $0x8c] sm:$0x1]
      %v273 = vld [vmem:[%s165 + $0x90] sm:$0xf]
      %v274 = vld [vmem:[%s165 + $0x94] sm:$0xf]
      %v275 = vld [vmem:[%s165 + $0x98] sm:$0x1]
      %v276 = vld [vmem:[%s165 + $0x9c] sm:$0xf]
      %v277 = vld [vmem:[%s165 + $0xa0] sm:$0xf]
      %v278 = vld [vmem:[%s165 + $0xa4] sm:$0x1]
      %v279 = vld [vmem:[%s165 + $0xa8] sm:$0xf]
      %v280 = vld [vmem:[%s165 + $0xac] sm:$0xf]
      %v281 = vld [vmem:[%s165 + $0xb0] sm:$0x1]
      %v282 = vld [vmem:[%s165 + $0xb4] sm:$0xf]
      %v283 = vld [vmem:[%s165 + $0xb8] sm:$0xf]
      %v284 = vld [vmem:[%s165 + $0xbc] sm:$0x1]
      %vm285 = vsmask.f32 3328
      %vm286 = vsmask.f32 7440
      %vm287 = vmor %vm285, %vm286
      %v289 = vshrl.u32 %v237, 16
      %v291 = vrot.slane %v289, 4
      %v292 = vshll.u32 %v237, 16
      %v294 = vrot.slane %v292, 5
      %v295 = vor.u32 %v291, %v294
      %v296 = vrot.slane %v295, 4
      %v298 = vshll.u32 %v238, 16
      %v300 = vrot.slane %v298, 5
      %v301 = vsel %vm287, %v296, %v300
      %v302 = vshrl.u32 %v238, 16
      %v304 = vrot.slane %v302, 4
      %v305 = vor.u32 %v304, %v300
      %v306 = vrot.slane %v305, 4
      %v308 = vshll.u32 %v239, 16
      %v310 = vrot.slane %v308, 5
      %v311 = vsel %vm287, %v306, %v310
      %v313 = vshrl.u32 %v240, 16
      %v315 = vrot.slane %v313, 4
      %v316 = vshll.u32 %v240, 16
      %v318 = vrot.slane %v316, 5
      %v319 = vor.u32 %v315, %v318
      %v320 = vrot.slane %v319, 4
      %v322 = vshll.u32 %v241, 16
      %v324 = vrot.slane %v322, 5
      %v325 = vsel %vm287, %v320, %v324
      %v326 = vshrl.u32 %v241, 16
      %v328 = vrot.slane %v326, 4
      %v329 = vor.u32 %v328, %v324
      %v330 = vrot.slane %v329, 4
      %v332 = vshll.u32 %v242, 16
      %v334 = vrot.slane %v332, 5
      %v335 = vsel %vm287, %v330, %v334
      %v337 = vshrl.u32 %v243, 16
      %v339 = vrot.slane %v337, 4
      %v340 = vshll.u32 %v243, 16
      %v342 = vrot.slane %v340, 5
      %v343 = vor.u32 %v339, %v342
      %v344 = vrot.slane %v343, 4
      %v346 = vshll.u32 %v244, 16
      %v348 = vrot.slane %v346, 5
      %v349 = vsel %vm287, %v344, %v348
      %v350 = vshrl.u32 %v244, 16
      %v352 = vrot.slane %v350, 4
      %v353 = vor.u32 %v352, %v348
      %v354 = vrot.slane %v353, 4
      %v356 = vshll.u32 %v245, 16
      %v358 = vrot.slane %v356, 5
      %v359 = vsel %vm287, %v354, %v358
      %v361 = vshrl.u32 %v246, 16
      %v363 = vrot.slane %v361, 4
      %v364 = vshll.u32 %v246, 16
      %v366 = vrot.slane %v364, 5
      %v367 = vor.u32 %v363, %v366
      %v368 = vrot.slane %v367, 4
      %v370 = vshll.u32 %v247, 16
      %v372 = vrot.slane %v370, 5
      %v373 = vsel %vm287, %v368, %v372
      %v374 = vshrl.u32 %v247, 16
      %v376 = vrot.slane %v374, 4
      %v377 = vor.u32 %v376, %v372
      %v378 = vrot.slane %v377, 4
      %v380 = vshll.u32 %v248, 16
      %v382 = vrot.slane %v380, 5
      %v383 = vsel %vm287, %v378, %v382
      %v385 = vshrl.u32 %v249, 16
      %v387 = vrot.slane %v385, 4
      %v388 = vshll.u32 %v249, 16
      %v390 = vrot.slane %v388, 5
      %v391 = vor.u32 %v387, %v390
      %v392 = vrot.slane %v391, 4
      %v394 = vshll.u32 %v250, 16
      %v396 = vrot.slane %v394, 5
      %v397 = vsel %vm287, %v392, %v396
      %v398 = vshrl.u32 %v250, 16
      %v400 = vrot.slane %v398, 4
      %v401 = vor.u32 %v400, %v396
      %v402 = vrot.slane %v401, 4
      %v404 = vshll.u32 %v251, 16
      %v406 = vrot.slane %v404, 5
      %v407 = vsel %vm287, %v402, %v406
      %v409 = vshrl.u32 %v252, 16
      %v411 = vrot.slane %v409, 4
      %v412 = vshll.u32 %v252, 16
      %v414 = vrot.slane %v412, 5
      %v415 = vor.u32 %v411, %v414
      %v416 = vrot.slane %v415, 4
      %v418 = vshll.u32 %v253, 16
      %v420 = vrot.slane %v418, 5
      %v421 = vsel %vm287, %v416, %v420
      %v422 = vshrl.u32 %v253, 16
      %v424 = vrot.slane %v422, 4
      %v425 = vor.u32 %v424, %v420
      %v426 = vrot.slane %v425, 4
      %v428 = vshll.u32 %v254, 16
      %v430 = vrot.slane %v428, 5
      %v431 = vsel %vm287, %v426, %v430
      %v433 = vshrl.u32 %v255, 16
      %v435 = vrot.slane %v433, 4
      %v436 = vshll.u32 %v255, 16
      %v438 = vrot.slane %v436, 5
      %v439 = vor.u32 %v435, %v438
      %v440 = vrot.slane %v439, 4
      %v442 = vshll.u32 %v256, 16
      %v444 = vrot.slane %v442, 5
      %v445 = vsel %vm287, %v440, %v444
      %v446 = vshrl.u32 %v256, 16
      %v448 = vrot.slane %v446, 4
      %v449 = vor.u32 %v448, %v444
      %v450 = vrot.slane %v449, 4
      %v452 = vshll.u32 %v257, 16
      %v454 = vrot.slane %v452, 5
      %v455 = vsel %vm287, %v450, %v454
      %v457 = vshrl.u32 %v258, 16
      %v459 = vrot.slane %v457, 4
      %v460 = vshll.u32 %v258, 16
      %v462 = vrot.slane %v460, 5
      %v463 = vor.u32 %v459, %v462
      %v464 = vrot.slane %v463, 4
      %v466 = vshll.u32 %v259, 16
      %v468 = vrot.slane %v466, 5
      %v469 = vsel %vm287, %v464, %v468
      %v470 = vshrl.u32 %v259, 16
      %v472 = vrot.slane %v470, 4
      %v473 = vor.u32 %v472, %v468
      %v474 = vrot.slane %v473, 4
      %v476 = vshll.u32 %v260, 16
      %v478 = vrot.slane %v476, 5
      %v479 = vsel %vm287, %v474, %v478
      %v481 = vshrl.u32 %v261, 16
      %v483 = vrot.slane %v481, 4
      %v484 = vshll.u32 %v261, 16
      %v486 = vrot.slane %v484, 5
      %v487 = vor.u32 %v483, %v486
      %v488 = vrot.slane %v487, 4
      %v490 = vshll.u32 %v262, 16
      %v492 = vrot.slane %v490, 5
      %v493 = vsel %vm287, %v488, %v492
      %v494 = vshrl.u32 %v262, 16
      %v496 = vrot.slane %v494, 4
      %v497 = vor.u32 %v496, %v492
      %v498 = vrot.slane %v497, 4
      %v500 = vshll.u32 %v263, 16
      %v502 = vrot.slane %v500, 5
      %v503 = vsel %vm287, %v498, %v502
      %v505 = vshrl.u32 %v264, 16
      %v507 = vrot.slane %v505, 4
      %v508 = vshll.u32 %v264, 16
      %v510 = vrot.slane %v508, 5
      %v511 = vor.u32 %v507, %v510
      %v512 = vrot.slane %v511, 4
      %v514 = vshll.u32 %v265, 16
      %v516 = vrot.slane %v514, 5
      %v517 = vsel %vm287, %v512, %v516
      %v518 = vshrl.u32 %v265, 16
      %v520 = vrot.slane %v518, 4
      %v521 = vor.u32 %v520, %v516
      %v522 = vrot.slane %v521, 4
      %v524 = vshll.u32 %v266, 16
      %v526 = vrot.slane %v524, 5
      %v527 = vsel %vm287, %v522, %v526
      %v529 = vshrl.u32 %v267, 16
      %v531 = vrot.slane %v529, 4
      %v532 = vshll.u32 %v267, 16
      %v534 = vrot.slane %v532, 5
      %v535 = vor.u32 %v531, %v534
      %v536 = vrot.slane %v535, 4
      %v538 = vshll.u32 %v268, 16
      %v540 = vrot.slane %v538, 5
      %v541 = vsel %vm287, %v536, %v540
      %v542 = vshrl.u32 %v268, 16
      %v544 = vrot.slane %v542, 4
      %v545 = vor.u32 %v544, %v540
      %v546 = vrot.slane %v545, 4
      %v548 = vshll.u32 %v269, 16
      %v550 = vrot.slane %v548, 5
      %v551 = vsel %vm287, %v546, %v550
      %v553 = vshrl.u32 %v270, 16
      %v555 = vrot.slane %v553, 4
      %v556 = vshll.u32 %v270, 16
      %v558 = vrot.slane %v556, 5
      %v559 = vor.u32 %v555, %v558
      %v560 = vrot.slane %v559, 4
      %v562 = vshll.u32 %v271, 16
      %v564 = vrot.slane %v562, 5
      %v565 = vsel %vm287, %v560, %v564
      %v566 = vshrl.u32 %v271, 16
      %v568 = vrot.slane %v566, 4
      %v569 = vor.u32 %v568, %v564
      %v570 = vrot.slane %v569, 4
      %v572 = vshll.u32 %v272, 16
      %v574 = vrot.slane %v572, 5
      %v575 = vsel %vm287, %v570, %v574
      %v577 = vshrl.u32 %v273, 16
      %v579 = vrot.slane %v577, 4
      %v580 = vshll.u32 %v273, 16
      %v582 = vrot.slane %v580, 5
      %v583 = vor.u32 %v579, %v582
      %v584 = vrot.slane %v583, 4
      %v586 = vshll.u32 %v274, 16
      %v588 = vrot.slane %v586, 5
      %v589 = vsel %vm287, %v584, %v588
      %v590 = vshrl.u32 %v274, 16
      %v592 = vrot.slane %v590, 4
      %v593 = vor.u32 %v592, %v588
      %v594 = vrot.slane %v593, 4
      %v596 = vshll.u32 %v275, 16
      %v598 = vrot.slane %v596, 5
      %v599 = vsel %vm287, %v594, %v598
      %v601 = vshrl.u32 %v276, 16
      %v603 = vrot.slane %v601, 4
      %v604 = vshll.u32 %v276, 16
      %v606 = vrot.slane %v604, 5
      %v607 = vor.u32 %v603, %v606
      %v608 = vrot.slane %v607, 4
      %v610 = vshll.u32 %v277, 16
      %v612 = vrot.slane %v610, 5
      %v613 = vsel %vm287, %v608, %v612
      %v614 = vshrl.u32 %v277, 16
      %v616 = vrot.slane %v614, 4
      %v617 = vor.u32 %v616, %v612
      %v618 = vrot.slane %v617, 4
      %v620 = vshll.u32 %v278, 16
      %v622 = vrot.slane %v620, 5
      %v623 = vsel %vm287, %v618, %v622
      %v625 = vshrl.u32 %v279, 16
      %v627 = vrot.slane %v625, 4
      %v628 = vshll.u32 %v279, 16
      %v630 = vrot.slane %v628, 5
      %v631 = vor.u32 %v627, %v630
      %v632 = vrot.slane %v631, 4
      %v634 = vshll.u32 %v280, 16
      %v636 = vrot.slane %v634, 5
      %v637 = vsel %vm287, %v632, %v636
      %v638 = vshrl.u32 %v280, 16
      %v640 = vrot.slane %v638, 4
      %v641 = vor.u32 %v640, %v636
      %v642 = vrot.slane %v641, 4
      %v644 = vshll.u32 %v281, 16
      %v646 = vrot.slane %v644, 5
      %v647 = vsel %vm287, %v642, %v646
      %v649 = vshrl.u32 %v282, 16
      %v651 = vrot.slane %v649, 4
      %v652 = vshll.u32 %v282, 16
      %v654 = vrot.slane %v652, 5
      %v655 = vor.u32 %v651, %v654
      %v656 = vrot.slane %v655, 4
      %v658 = vshll.u32 %v283, 16
      %v660 = vrot.slane %v658, 5
      %v661 = vsel %vm287, %v656, %v660
      %v662 = vshrl.u32 %v283, 16
      %v664 = vrot.slane %v662, 4
      %v665 = vor.u32 %v664, %v660
      %v666 = vrot.slane %v665, 4
      %v668 = vshll.u32 %v284, 16
      %v670 = vrot.slane %v668, 5
      %v671 = vsel %vm287, %v666, %v670
      %672 = vrot.lane.b32.xlu0 %v301, 3
      %v673 = vpop.permute.xlu0 %672
      %674 = vrot.lane.b32.xlu0 %v311, 3
      %v675 = vpop.permute.xlu0 %674
      %676 = vrot.lane.b32.xlu0 %v325, 3
      %v677 = vpop.permute.xlu0 %676
      %678 = vrot.lane.b32.xlu0 %v335, 3
      %v679 = vpop.permute.xlu0 %678
      %680 = vrot.lane.b32.xlu0 %v349, 3
      %v681 = vpop.permute.xlu0 %680
      %682 = vrot.lane.b32.xlu0 %v359, 3
      %v683 = vpop.permute.xlu0 %682
      %684 = vrot.lane.b32.xlu0 %v373, 3
      %v685 = vpop.permute.xlu0 %684
      %686 = vrot.lane.b32.xlu0 %v383, 3
      %v687 = vpop.permute.xlu0 %686
      %688 = vrot.lane.b32.xlu0 %v397, 3
      %v689 = vpop.permute.xlu0 %688
      %690 = vrot.lane.b32.xlu0 %v407, 3
      %v691 = vpop.permute.xlu0 %690
      %692 = vrot.lane.b32.xlu0 %v421, 3
      %v693 = vpop.permute.xlu0 %692
      %694 = vrot.lane.b32.xlu0 %v431, 3
      %v695 = vpop.permute.xlu0 %694
      %696 = vrot.lane.b32.xlu0 %v445, 3
      %v697 = vpop.permute.xlu0 %696
      %698 = vrot.lane.b32.xlu0 %v455, 3
      %v699 = vpop.permute.xlu0 %698
      %700 = vrot.lane.b32.xlu0 %v469, 3
      %v701 = vpop.permute.xlu0 %700
      %702 = vrot.lane.b32.xlu0 %v479, 3
      %v703 = vpop.permute.xlu0 %702
      %704 = vrot.lane.b32.xlu0 %v493, 3
      %v705 = vpop.permute.xlu0 %704
      %706 = vrot.lane.b32.xlu0 %v503, 3
      %v707 = vpop.permute.xlu0 %706
      %708 = vrot.lane.b32.xlu0 %v517, 3
      %v709 = vpop.permute.xlu0 %708
      %710 = vrot.lane.b32.xlu0 %v527, 3
      %v711 = vpop.permute.xlu0 %710
      %712 = vrot.lane.b32.xlu0 %v541, 3
      %v713 = vpop.permute.xlu0 %712
      %714 = vrot.lane.b32.xlu0 %v551, 3
      %v715 = vpop.permute.xlu0 %714
      %716 = vrot.lane.b32.xlu0 %v565, 3
      %v717 = vpop.permute.xlu0 %716
      %718 = vrot.lane.b32.xlu0 %v575, 3
      %v719 = vpop.permute.xlu0 %718
      %720 = vrot.lane.b32.xlu0 %v589, 3
      %v721 = vpop.permute.xlu0 %720
      %722 = vrot.lane.b32.xlu0 %v599, 3
      %v723 = vpop.permute.xlu0 %722
      %724 = vrot.lane.b32.xlu0 %v613, 3
      %v725 = vpop.permute.xlu0 %724
      %726 = vrot.lane.b32.xlu0 %v623, 3
      %v727 = vpop.permute.xlu0 %726
      %728 = vrot.lane.b32.xlu0 %v637, 3
      %v729 = vpop.permute.xlu0 %728
      %730 = vrot.lane.b32.xlu0 %v647, 3
      %v731 = vpop.permute.xlu0 %730
      %732 = vrot.lane.b32.xlu0 %v661, 3
      %v733 = vpop.permute.xlu0 %732
      %734 = vrot.lane.b32.xlu0 %v671, 3
      %v735 = vpop.permute.xlu0 %734
      %vm768 = vcmask 44056
      %769 = vst.msk [vmem:[#allocation2] sm:$0xf] %vm768, %v673
      %770 = vst.msk [vmem:[#allocation2 + $0x4] sm:$0xf] %vm768, %v675
      %771 = vst.msk [vmem:[#allocation2 + $0x8] sm:$0xf] %vm768, %v677
      %772 = vst.msk [vmem:[#allocation2 + $0xc] sm:$0xf] %vm768, %v679
      %773 = vst.msk [vmem:[#allocation2 + $0x10] sm:$0xf] %vm768, %v681
      %774 = vst.msk [vmem:[#allocation2 + $0x14] sm:$0xf] %vm768, %v683
      %775 = vst.msk [vmem:[#allocation2 + $0x18] sm:$0xf] %vm768, %v685
      %776 = vst.msk [vmem:[#allocation2 + $0x1c] sm:$0xf] %vm768, %v687
      %777 = vst.msk [vmem:[#allocation2 + $0x20] sm:$0xf] %vm768, %v689
      %778 = vst.msk [vmem:[#allocation2 + $0x24] sm:$0xf] %vm768, %v691
      %779 = vst.msk [vmem:[#allocation2 + $0x28] sm:$0xf] %vm768, %v693
      %780 = vst.msk [vmem:[#allocation2 + $0x2c] sm:$0xf] %vm768, %v695
      %781 = vst.msk [vmem:[#allocation2 + $0x30] sm:$0xf] %vm768, %v697
      %782 = vst.msk [vmem:[#allocation2 + $0x34] sm:$0xf] %vm768, %v699
      %783 = vst.msk [vmem:[#allocation2 + $0x38] sm:$0xf] %vm768, %v701
      %784 = vst.msk [vmem:[#allocation2 + $0x3c] sm:$0xf] %vm768, %v703
      %785 = vst.msk [vmem:[#allocation2 + $0x40] sm:$0xf] %vm768, %v705
      %786 = vst.msk [vmem:[#allocation2 + $0x44] sm:$0xf] %vm768, %v707
      %787 = vst.msk [vmem:[#allocation2 + $0x48] sm:$0xf] %vm768, %v709
      %788 = vst.msk [vmem:[#allocation2 + $0x4c] sm:$0xf] %vm768, %v711
      %789 = vst.msk [vmem:[#allocation2 + $0x50] sm:$0xf] %vm768, %v713
      %790 = vst.msk [vmem:[#allocation2 + $0x54] sm:$0xf] %vm768, %v715
      %791 = vst.msk [vmem:[#allocation2 + $0x58] sm:$0xf] %vm768, %v717
      %792 = vst.msk [vmem:[#allocation2 + $0x5c] sm:$0xf] %vm768, %v719
      %793 = vst.msk [vmem:[#allocation2 + $0x60] sm:$0xf] %vm768, %v721
      %794 = vst.msk [vmem:[#allocation2 + $0x64] sm:$0xf] %vm768, %v723
      %795 = vst.msk [vmem:[#allocation2 + $0x68] sm:$0xf] %vm768, %v725
      %796 = vst.msk [vmem:[#allocation2 + $0x6c] sm:$0xf] %vm768, %v727
      %797 = vst.msk [vmem:[#allocation2 + $0x70] sm:$0xf] %vm768, %v729
      %798 = vst.msk [vmem:[#allocation2 + $0x74] sm:$0xf] %vm768, %v731
      %799 = vst.msk [vmem:[#allocation2 + $0x78] sm:$0xf] %vm768, %v733
      %800 = vst.msk [vmem:[#allocation2 + $0x7c] sm:$0xf] %vm768, %v735
      %v801 = vld [vmem:[%s165] sm:$0xe]
      %v802 = vld [vmem:[%s165 + $0x4] sm:$0xf]
      %v803 = vld [vmem:[%s165 + $0x8] sm:$0x1]
      %v804 = vld [vmem:[%s165 + $0xc] sm:$0xe]
      %v805 = vld [vmem:[%s165 + $0x10] sm:$0xf]
      %v806 = vld [vmem:[%s165 + $0x14] sm:$0x1]
      %v807 = vld [vmem:[%s165 + $0x18] sm:$0xe]
      %v808 = vld [vmem:[%s165 + $0x1c] sm:$0xf]
      %v809 = vld [vmem:[%s165 + $0x20] sm:$0x1]
      %v810 = vld [vmem:[%s165 + $0x24] sm:$0xe]
      %v811 = vld [vmem:[%s165 + $0x28] sm:$0xf]
      %v812 = vld [vmem:[%s165 + $0x2c] sm:$0x1]
      %v813 = vld [vmem:[%s165 + $0x30] sm:$0xe]
      %v814 = vld [vmem:[%s165 + $0x34] sm:$0xf]
      %v815 = vld [vmem:[%s165 + $0x38] sm:$0x1]
      %v816 = vld [vmem:[%s165 + $0x3c] sm:$0xe]
      %v817 = vld [vmem:[%s165 + $0x40] sm:$0xf]
      %v818 = vld [vmem:[%s165 + $0x44] sm:$0x1]
      %v819 = vld [vmem:[%s165 + $0x48] sm:$0xe]
      %v820 = vld [vmem:[%s165 + $0x4c] sm:$0xf]
      %v821 = vld [vmem:[%s165 + $0x50] sm:$0x1]
      %v822 = vld [vmem:[%s165 + $0x54] sm:$0xe]
      %v823 = vld [vmem:[%s165 + $0x58] sm:$0xf]
      %v824 = vld [vmem:[%s165 + $0x5c] sm:$0x1]
      %v825 = vld [vmem:[%s165 + $0x60] sm:$0xe]
      %v826 = vld [vmem:[%s165 + $0x64] sm:$0xf]
      %v827 = vld [vmem:[%s165 + $0x68] sm:$0x1]
      %v828 = vld [vmem:[%s165 + $0x6c] sm:$0xe]
      %v829 = vld [vmem:[%s165 + $0x70] sm:$0xf]
      %v830 = vld [vmem:[%s165 + $0x74] sm:$0x1]
      %v831 = vld [vmem:[%s165 + $0x78] sm:$0xe]
      %v832 = vld [vmem:[%s165 + $0x7c] sm:$0xf]
      %v833 = vld [vmem:[%s165 + $0x80] sm:$0x1]
      %v834 = vld [vmem:[%s165 + $0x84] sm:$0xe]
      %v835 = vld [vmem:[%s165 + $0x88] sm:$0xf]
      %v836 = vld [vmem:[%s165 + $0x8c] sm:$0x1]
      %v837 = vld [vmem:[%s165 + $0x90] sm:$0xe]
      %v838 = vld [vmem:[%s165 + $0x94] sm:$0xf]
      %v839 = vld [vmem:[%s165 + $0x98] sm:$0x1]
      %v840 = vld [vmem:[%s165 + $0x9c] sm:$0xe]
      %v841 = vld [vmem:[%s165 + $0xa0] sm:$0xf]
      %v842 = vld [vmem:[%s165 + $0xa4] sm:$0x1]
      %v843 = vld [vmem:[%s165 + $0xa8] sm:$0xe]
      %v844 = vld [vmem:[%s165 + $0xac] sm:$0xf]
      %v845 = vld [vmem:[%s165 + $0xb0] sm:$0x1]
      %v846 = vld [vmem:[%s165 + $0xb4] sm:$0xe]
      %v847 = vld [vmem:[%s165 + $0xb8] sm:$0xf]
      %v848 = vld [vmem:[%s165 + $0xbc] sm:$0x1]
      %vm897 = vcmask 1042432
      %vm898 = vcmask 1046532
      %vm899 = vmor %vm897, %vm898
      %v900 = vrot.slane %v801, 5
      %v901 = vrot.slane %v900, 4
      %v902 = vrot.slane %v802, 5
      %v903 = vsel %vm899, %v901, %v902
      %v904 = vrot.slane %v902, 4
      %v905 = vrot.slane %v803, 5
      %v906 = vsel %vm899, %v904, %v905
      %v907 = vrot.slane %v804, 5
      %v908 = vrot.slane %v907, 4
      %v909 = vrot.slane %v805, 5
      %v910 = vsel %vm899, %v908, %v909
      %v911 = vrot.slane %v909, 4
      %v912 = vrot.slane %v806, 5
      %v913 = vsel %vm899, %v911, %v912
      %v914 = vrot.slane %v807, 5
      %v915 = vrot.slane %v914, 4
      %v916 = vrot.slane %v808, 5
      %v917 = vsel %vm899, %v915, %v916
      %v918 = vrot.slane %v916, 4
      %v919 = vrot.slane %v809, 5
      %v920 = vsel %vm899, %v918, %v919
      %v921 = vrot.slane %v810, 5
      %v922 = vrot.slane %v921, 4
      %v923 = vrot.slane %v811, 5
      %v924 = vsel %vm899, %v922, %v923
      %v925 = vrot.slane %v923, 4
      %v926 = vrot.slane %v812, 5
      %v927 = vsel %vm899, %v925, %v926
      %v928 = vrot.slane %v813, 5
      %v929 = vrot.slane %v928, 4
      %v930 = vrot.slane %v814, 5
      %v931 = vsel %vm899, %v929, %v930
      %v932 = vrot.slane %v930, 4
      %v933 = vrot.slane %v815, 5
      %v934 = vsel %vm899, %v932, %v933
      %v935 = vrot.slane %v816, 5
      %v936 = vrot.slane %v935, 4
      %v937 = vrot.slane %v817, 5
      %v938 = vsel %vm899, %v936, %v937
      %v939 = vrot.slane %v937, 4
      %v940 = vrot.slane %v818, 5
      %v941 = vsel %vm899, %v939, %v940
      %v942 = vrot.slane %v819, 5
      %v943 = vrot.slane %v942, 4
      %v944 = vrot.slane %v820, 5
      %v945 = vsel %vm899, %v943, %v944
      %v946 = vrot.slane %v944, 4
      %v947 = vrot.slane %v821, 5
      %v948 = vsel %vm899, %v946, %v947
      %v949 = vrot.slane %v822, 5
      %v950 = vrot.slane %v949, 4
      %v951 = vrot.slane %v823, 5
      %v952 = vsel %vm899, %v950, %v951
      %v953 = vrot.slane %v951, 4
      %v954 = vrot.slane %v824, 5
      %v955 = vsel %vm899, %v953, %v954
      %v956 = vrot.slane %v825, 5
      %v957 = vrot.slane %v956, 4
      %v958 = vrot.slane %v826, 5
      %v959 = vsel %vm899, %v957, %v958
      %v960 = vrot.slane %v958, 4
      %v961 = vrot.slane %v827, 5
      %v962 = vsel %vm899, %v960, %v961
      %v963 = vrot.slane %v828, 5
      %v964 = vrot.slane %v963, 4
      %v965 = vrot.slane %v829, 5
      %v966 = vsel %vm899, %v964, %v965
      %v967 = vrot.slane %v965, 4
      %v968 = vrot.slane %v830, 5
      %v969 = vsel %vm899, %v967, %v968
      %v970 = vrot.slane %v831, 5
      %v971 = vrot.slane %v970, 4
      %v972 = vrot.slane %v832, 5
      %v973 = vsel %vm899, %v971, %v972
      %v974 = vrot.slane %v972, 4
      %v975 = vrot.slane %v833, 5
      %v976 = vsel %vm899, %v974, %v975
      %v977 = vrot.slane %v834, 5
      %v978 = vrot.slane %v977, 4
      %v979 = vrot.slane %v835, 5
      %v980 = vsel %vm899, %v978, %v979
      %v981 = vrot.slane %v979, 4
      %v982 = vrot.slane %v836, 5
      %v983 = vsel %vm899, %v981, %v982
      %v984 = vrot.slane %v837, 5
      %v985 = vrot.slane %v984, 4
      %v986 = vrot.slane %v838, 5
      %v987 = vsel %vm899, %v985, %v986
      %v988 = vrot.slane %v986, 4
      %v989 = vrot.slane %v839, 5
      %v990 = vsel %vm899, %v988, %v989
      %v991 = vrot.slane %v840, 5
      %v992 = vrot.slane %v991, 4
      %v993 = vrot.slane %v841, 5
      %v994 = vsel %vm899, %v992, %v993
      %v995 = vrot.slane %v993, 4
      %v996 = vrot.slane %v842, 5
      %v997 = vsel %vm899, %v995, %v996
      %v998 = vrot.slane %v843, 5
      %v999 = vrot.slane %v998, 4
      %v1000 = vrot.slane %v844, 5
      %v1001 = vsel %vm899, %v999, %v1000
      %v1002 = vrot.slane %v1000, 4
      %v1003 = vrot.slane %v845, 5
      %v1004 = vsel %vm899, %v1002, %v1003
      %v1005 = vrot.slane %v846, 5
      %v1006 = vrot.slane %v1005, 4
      %v1007 = vrot.slane %v847, 5
      %v1008 = vsel %vm899, %v1006, %v1007
      %v1009 = vrot.slane %v1007, 4
      %v1010 = vrot.slane %v848, 5
      %v1011 = vsel %vm899, %v1009, %v1010
      %1012 = vrot.lane.b32.xlu0 %v903, 6
      %v1013 = vpop.permute.xlu0 %1012
      %1014 = vrot.lane.b32.xlu0 %v906, 6
      %v1015 = vpop.permute.xlu0 %1014
      %1016 = vrot.lane.b32.xlu0 %v910, 6
      %v1017 = vpop.permute.xlu0 %1016
      %1018 = vrot.lane.b32.xlu0 %v913, 6
      %v1019 = vpop.permute.xlu0 %1018
      %1020 = vrot.lane.b32.xlu0 %v917, 6
      %v1021 = vpop.permute.xlu0 %1020
      %1022 = vrot.lane.b32.xlu0 %v920, 6
      %v1023 = vpop.permute.xlu0 %1022
      %1024 = vrot.lane.b32.xlu0 %v924, 6
      %v1025 = vpop.permute.xlu0 %1024
      %1026 = vrot.lane.b32.xlu0 %v927, 6
      %v1027 = vpop.permute.xlu0 %1026
      %1028 = vrot.lane.b32.xlu0 %v931, 6
      %v1029 = vpop.permute.xlu0 %1028
      %1030 = vrot.lane.b32.xlu0 %v934, 6
      %v1031 = vpop.permute.xlu0 %1030
      %1032 = vrot.lane.b32.xlu0 %v938, 6
      %v1033 = vpop.permute.xlu0 %1032
      %1034 = vrot.lane.b32.xlu0 %v941, 6
      %v1035 = vpop.permute.xlu0 %1034
      %1036 = vrot.lane.b32.xlu0 %v945, 6
      %v1037 = vpop.permute.xlu0 %1036
      %1038 = vrot.lane.b32.xlu0 %v948, 6
      %v1039 = vpop.permute.xlu0 %1038
      %1040 = vrot.lane.b32.xlu0 %v952, 6
      %v1041 = vpop.permute.xlu0 %1040
      %1042 = vrot.lane.b32.xlu0 %v955, 6
      %v1043 = vpop.permute.xlu0 %1042
      %1044 = vrot.lane.b32.xlu0 %v959, 6
      %v1045 = vpop.permute.xlu0 %1044
      %1046 = vrot.lane.b32.xlu0 %v962, 6
      %v1047 = vpop.permute.xlu0 %1046
      %1048 = vrot.lane.b32.xlu0 %v966, 6
      %v1049 = vpop.permute.xlu0 %1048
      %1050 = vrot.lane.b32.xlu0 %v969, 6
      %v1051 = vpop.permute.xlu0 %1050
      %1052 = vrot.lane.b32.xlu0 %v973, 6
      %v1053 = vpop.permute.xlu0 %1052
      %1054 = vrot.lane.b32.xlu0 %v976, 6
      %v1055 = vpop.permute.xlu0 %1054
      %1056 = vrot.lane.b32.xlu0 %v980, 6
      %v1057 = vpop.permute.xlu0 %1056
      %1058 = vrot.lane.b32.xlu0 %v983, 6
      %v1059 = vpop.permute.xlu0 %1058
      %1060 = vrot.lane.b32.xlu0 %v987, 6
      %v1061 = vpop.permute.xlu0 %1060
      %1062 = vrot.lane.b32.xlu0 %v990, 6
      %v1063 = vpop.permute.xlu0 %1062
      %1064 = vrot.lane.b32.xlu0 %v994, 6
      %v1065 = vpop.permute.xlu0 %1064
      %1066 = vrot.lane.b32.xlu0 %v997, 6
      %v1067 = vpop.permute.xlu0 %1066
      %1068 = vrot.lane.b32.xlu0 %v1001, 6
      %v1069 = vpop.permute.xlu0 %1068
      %1070 = vrot.lane.b32.xlu0 %v1004, 6
      %v1071 = vpop.permute.xlu0 %1070
      %1072 = vrot.lane.b32.xlu0 %v1008, 6
      %v1073 = vpop.permute.xlu0 %1072
      %1074 = vrot.lane.b32.xlu0 %v1011, 6
      %v1075 = vpop.permute.xlu0 %1074
      %vm1108 = vcmask 68656
      %1109 = vst.msk [vmem:[#allocation2] sm:$0xf] %vm1108, %v1013
      %1110 = vst.msk [vmem:[#allocation2 + $0x4] sm:$0xf] %vm1108, %v1015
      %1111 = vst.msk [vmem:[#allocation2 + $0x8] sm:$0xf] %vm1108, %v1017
      %1112 = vst.msk [vmem:[#allocation2 + $0xc] sm:$0xf] %vm1108, %v1019
      %1113 = vst.msk [vmem:[#allocation2 + $0x10] sm:$0xf] %vm1108, %v1021
      %1114 = vst.msk [vmem:[#allocation2 + $0x14] sm:$0xf] %vm1108, %v1023
      %1115 = vst.msk [vmem:[#allocation2 + $0x18] sm:$0xf] %vm1108, %v1025
      %1116 = vst.msk [vmem:[#allocation2 + $0x1c] sm:$0xf] %vm1108, %v1027
      %1117 = vst.msk [vmem:[#allocation2 + $0x20] sm:$0xf] %vm1108, %v1029
      %1118 = vst.msk [vmem:[#allocation2 + $0x24] sm:$0xf] %vm1108, %v1031
      %1119 = vst.msk [vmem:[#allocation2 + $0x28] sm:$0xf] %vm1108, %v1033
      %1120 = vst.msk [vmem:[#allocation2 + $0x2c] sm:$0xf] %vm1108, %v1035
      %1121 = vst.msk [vmem:[#allocation2 + $0x30] sm:$0xf] %vm1108, %v1037
      %1122 = vst.msk [vmem:[#allocation2 + $0x34] sm:$0xf] %vm1108, %v1039
      %1123 = vst.msk [vmem:[#allocation2 + $0x38] sm:$0xf] %vm1108, %v1041
      %1124 = vst.msk [vmem:[#allocation2 + $0x3c] sm:$0xf] %vm1108, %v1043
      %1125 = vst.msk [vmem:[#allocation2 + $0x40] sm:$0xf] %vm1108, %v1045
      %1126 = vst.msk [vmem:[#allocation2 + $0x44] sm:$0xf] %vm1108, %v1047
      %1127 = vst.msk [vmem:[#allocation2 + $0x48] sm:$0xf] %vm1108, %v1049
      %1128 = vst.msk [vmem:[#allocation2 + $0x4c] sm:$0xf] %vm1108, %v1051
      %1129 = vst.msk [vmem:[#allocation2 + $0x50] sm:$0xf] %vm1108, %v1053
      %1130 = vst.msk [vmem:[#allocation2 + $0x54] sm:$0xf] %vm1108, %v1055
      %1131 = vst.msk [vmem:[#allocation2 + $0x58] sm:$0xf] %vm1108, %v1057
      %1132 = vst.msk [vmem:[#allocation2 + $0x5c] sm:$0xf] %vm1108, %v1059
      %1133 = vst.msk [vmem:[#allocation2 + $0x60] sm:$0xf] %vm1108, %v1061
      %1134 = vst.msk [vmem:[#allocation2 + $0x64] sm:$0xf] %vm1108, %v1063
      %1135 = vst.msk [vmem:[#allocation2 + $0x68] sm:$0xf] %vm1108, %v1065
      %1136 = vst.msk [vmem:[#allocation2 + $0x6c] sm:$0xf] %vm1108, %v1067
      %1137 = vst.msk [vmem:[#allocation2 + $0x70] sm:$0xf] %vm1108, %v1069
      %1138 = vst.msk [vmem:[#allocation2 + $0x74] sm:$0xf] %vm1108, %v1071
      %1139 = vst.msk [vmem:[#allocation2 + $0x78] sm:$0xf] %vm1108, %v1073
      %1140 = vst.msk [vmem:[#allocation2 + $0x7c] sm:$0xf] %vm1108, %v1075
      %s1141 = scalar_lea.vmem %s165, 12
      %v1142 = vld [vmem:[%s1141] sm:$0xf]
      %v1143 = vld [vmem:[%s1141 + $0x4] sm:$0xf]
      %v1144 = vld [vmem:[%s1141 + $0xc] sm:$0xf]
      %v1145 = vld [vmem:[%s1141 + $0x10] sm:$0xf]
      %v1146 = vld [vmem:[%s1141 + $0x18] sm:$0xf]
      %v1147 = vld [vmem:[%s1141 + $0x1c] sm:$0xf]
      %v1148 = vld [vmem:[%s1141 + $0x24] sm:$0xf]
      %v1149 = vld [vmem:[%s1141 + $0x28] sm:$0xf]
      %v1150 = vld [vmem:[%s1141 + $0x30] sm:$0xf]
      %v1151 = vld [vmem:[%s1141 + $0x34] sm:$0xf]
      %v1152 = vld [vmem:[%s1141 + $0x3c] sm:$0xf]
      %v1153 = vld [vmem:[%s1141 + $0x40] sm:$0xf]
      %v1154 = vld [vmem:[%s1141 + $0x48] sm:$0xf]
      %v1155 = vld [vmem:[%s1141 + $0x4c] sm:$0xf]
      %v1156 = vld [vmem:[%s1141 + $0x54] sm:$0xf]
      %v1157 = vld [vmem:[%s1141 + $0x58] sm:$0xf]
      %v1158 = vld [vmem:[%s1141 + $0x60] sm:$0xf]
      %v1159 = vld [vmem:[%s1141 + $0x64] sm:$0xf]
      %v1160 = vld [vmem:[%s1141 + $0x6c] sm:$0xf]
      %v1161 = vld [vmem:[%s1141 + $0x70] sm:$0xf]
      %v1162 = vld [vmem:[%s1141 + $0x78] sm:$0xf]
      %v1163 = vld [vmem:[%s1141 + $0x7c] sm:$0xf]
      %v1164 = vld [vmem:[%s1141 + $0x84] sm:$0xf]
      %v1165 = vld [vmem:[%s1141 + $0x88] sm:$0xf]
      %v1166 = vld [vmem:[%s1141 + $0x90] sm:$0xf]
      %v1167 = vld [vmem:[%s1141 + $0x94] sm:$0xf]
      %v1168 = vld [vmem:[%s1141 + $0x9c] sm:$0xf]
      %v1169 = vld [vmem:[%s1141 + $0xa0] sm:$0xf]
      %v1170 = vld [vmem:[%s1141 + $0xa8] sm:$0xf]
      %v1171 = vld [vmem:[%s1141 + $0xac] sm:$0xf]
      %v1172 = vld [vmem:[%s1141 + $0xb4] sm:$0xf]
      %v1173 = vld [vmem:[%s1141 + $0xb8] sm:$0xf]
      %1206 = vrot.lane.b32.xlu0 %v1142, 9
      %v1207 = vpop.permute.xlu0 %1206
      %1208 = vrot.lane.b32.xlu0 %v1143, 9
      %v1209 = vpop.permute.xlu0 %1208
      %1210 = vrot.lane.b32.xlu0 %v1144, 9
      %v1211 = vpop.permute.xlu0 %1210
      %1212 = vrot.lane.b32.xlu0 %v1145, 9
      %v1213 = vpop.permute.xlu0 %1212
      %1214 = vrot.lane.b32.xlu0 %v1146, 9
      %v1215 = vpop.permute.xlu0 %1214
      %1216 = vrot.lane.b32.xlu0 %v1147, 9
      %v1217 = vpop.permute.xlu0 %1216
      %1218 = vrot.lane.b32.xlu0 %v1148, 9
      %v1219 = vpop.permute.xlu0 %1218
      %1220 = vrot.lane.b32.xlu0 %v1149, 9
      %v1221 = vpop.permute.xlu0 %1220
      %1222 = vrot.lane.b32.xlu0 %v1150, 9
      %v1223 = vpop.permute.xlu0 %1222
      %1224 = vrot.lane.b32.xlu0 %v1151, 9
      %v1225 = vpop.permute.xlu0 %1224
      %1226 = vrot.lane.b32.xlu0 %v1152, 9
      %v1227 = vpop.permute.xlu0 %1226
      %1228 = vrot.lane.b32.xlu0 %v1153, 9
      %v1229 = vpop.permute.xlu0 %1228
      %1230 = vrot.lane.b32.xlu0 %v1154, 9
      %v1231 = vpop.permute.xlu0 %1230
      %1232 = vrot.lane.b32.xlu0 %v1155, 9
      %v1233 = vpop.permute.xlu0 %1232
      %1234 = vrot.lane.b32.xlu0 %v1156, 9
      %v1235 = vpop.permute.xlu0 %1234
      %1236 = vrot.lane.b32.xlu0 %v1157, 9
      %v1237 = vpop.permute.xlu0 %1236
      %1238 = vrot.lane.b32.xlu0 %v1158, 9
      %v1239 = vpop.permute.xlu0 %1238
      %1240 = vrot.lane.b32.xlu0 %v1159, 9
      %v1241 = vpop.permute.xlu0 %1240
      %1242 = vrot.lane.b32.xlu0 %v1160, 9
      %v1243 = vpop.permute.xlu0 %1242
      %1244 = vrot.lane.b32.xlu0 %v1161, 9
      %v1245 = vpop.permute.xlu0 %1244
      %1246 = vrot.lane.b32.xlu0 %v1162, 9
      %v1247 = vpop.permute.xlu0 %1246
      %1248 = vrot.lane.b32.xlu0 %v1163, 9
      %v1249 = vpop.permute.xlu0 %1248
      %1250 = vrot.lane.b32.xlu0 %v1164, 9
      %v1251 = vpop.permute.xlu0 %1250
      %1252 = vrot.lane.b32.xlu0 %v1165, 9
      %v1253 = vpop.permute.xlu0 %1252
      %1254 = vrot.lane.b32.xlu0 %v1166, 9
      %v1255 = vpop.permute.xlu0 %1254
      %1256 = vrot.lane.b32.xlu0 %v1167, 9
      %v1257 = vpop.permute.xlu0 %1256
      %1258 = vrot.lane.b32.xlu0 %v1168, 9
      %v1259 = vpop.permute.xlu0 %1258
      %1260 = vrot.lane.b32.xlu0 %v1169, 9
      %v1261 = vpop.permute.xlu0 %1260
      %1262 = vrot.lane.b32.xlu0 %v1170, 9
      %v1263 = vpop.permute.xlu0 %1262
      %1264 = vrot.lane.b32.xlu0 %v1171, 9
      %v1265 = vpop.permute.xlu0 %1264
      %1266 = vrot.lane.b32.xlu0 %v1172, 9
      %v1267 = vpop.permute.xlu0 %1266
      %1268 = vrot.lane.b32.xlu0 %v1173, 9
      %v1269 = vpop.permute.xlu0 %1268
      %vm1302 = vcmask 93256
      %1303 = vst.msk [vmem:[#allocation2] sm:$0xf] %vm1302, %v1207
      %1304 = vst.msk [vmem:[#allocation2 + $0x4] sm:$0xf] %vm1302, %v1209
      %1305 = vst.msk [vmem:[#allocation2 + $0x8] sm:$0xf] %vm1302, %v1211
      %1306 = vst.msk [vmem:[#allocation2 + $0xc] sm:$0xf] %vm1302, %v1213
      %1307 = vst.msk [vmem:[#allocation2 + $0x10] sm:$0xf] %vm1302, %v1215
      %1308 = vst.msk [vmem:[#allocation2 + $0x14] sm:$0xf] %vm1302, %v1217
      %1309 = vst.msk [vmem:[#allocation2 + $0x18] sm:$0xf] %vm1302, %v1219
      %1310 = vst.msk [vmem:[#allocation2 + $0x1c] sm:$0xf] %vm1302, %v1221
      %1311 = vst.msk [vmem:[#allocation2 + $0x20] sm:$0xf] %vm1302, %v1223
      %1312 = vst.msk [vmem:[#allocation2 + $0x24] sm:$0xf] %vm1302, %v1225
      %1313 = vst.msk [vmem:[#allocation2 + $0x28] sm:$0xf] %vm1302, %v1227
      %1314 = vst.msk [vmem:[#allocation2 + $0x2c] sm:$0xf] %vm1302, %v1229
      %1315 = vst.msk [vmem:[#allocation2 + $0x30] sm:$0xf] %vm1302, %v1231
      %1316 = vst.msk [vmem:[#allocation2 + $0x34] sm:$0xf] %vm1302, %v1233
      %1317 = vst.msk [vmem:[#allocation2 + $0x38] sm:$0xf] %vm1302, %v1235
      %1318 = vst.msk [vmem:[#allocation2 + $0x3c] sm:$0xf] %vm1302, %v1237
      %1319 = vst.msk [vmem:[#allocation2 + $0x40] sm:$0xf] %vm1302, %v1239
      %1320 = vst.msk [vmem:[#allocation2 + $0x44] sm:$0xf] %vm1302, %v1241
      %1321 = vst.msk [vmem:[#allocation2 + $0x48] sm:$0xf] %vm1302, %v1243
      %1322 = vst.msk [vmem:[#allocation2 + $0x4c] sm:$0xf] %vm1302, %v1245
      %1323 = vst.msk [vmem:[#allocation2 + $0x50] sm:$0xf] %vm1302, %v1247
      %1324 = vst.msk [vmem:[#allocation2 + $0x54] sm:$0xf] %vm1302, %v1249
      %1325 = vst.msk [vmem:[#allocation2 + $0x58] sm:$0xf] %vm1302, %v1251
      %1326 = vst.msk [vmem:[#allocation2 + $0x5c] sm:$0xf] %vm1302, %v1253
      %1327 = vst.msk [vmem:[#allocation2 + $0x60] sm:$0xf] %vm1302, %v1255
      %1328 = vst.msk [vmem:[#allocation2 + $0x64] sm:$0xf] %vm1302, %v1257
      %1329 = vst.msk [vmem:[#allocation2 + $0x68] sm:$0xf] %vm1302, %v1259
      %1330 = vst.msk [vmem:[#allocation2 + $0x6c] sm:$0xf] %vm1302, %v1261
      %1331 = vst.msk [vmem:[#allocation2 + $0x70] sm:$0xf] %vm1302, %v1263
      %1332 = vst.msk [vmem:[#allocation2 + $0x74] sm:$0xf] %vm1302, %v1265
      %1333 = vst.msk [vmem:[#allocation2 + $0x78] sm:$0xf] %vm1302, %v1267
      %1334 = vst.msk [vmem:[#allocation2 + $0x7c] sm:$0xf] %vm1302, %v1269
      %v1335 = vld [vmem:[%s1141] sm:$0xf]
      %v1336 = vld [vmem:[%s1141 + $0x4] sm:$0xf]
      %v1337 = vld [vmem:[%s1141 + $0x8] sm:$0x1]
      %v1338 = vld [vmem:[%s1141 + $0xc] sm:$0xf]
      %v1339 = vld [vmem:[%s1141 + $0x10] sm:$0xf]
      %v1340 = vld [vmem:[%s1141 + $0x14] sm:$0x1]
      %v1341 = vld [vmem:[%s1141 + $0x18] sm:$0xf]
      %v1342 = vld [vmem:[%s1141 + $0x1c] sm:$0xf]
      %v1343 = vld [vmem:[%s1141 + $0x20] sm:$0x1]
      %v1344 = vld [vmem:[%s1141 + $0x24] sm:$0xf]
      %v1345 = vld [vmem:[%s1141 + $0x28] sm:$0xf]
      %v1346 = vld [vmem:[%s1141 + $0x2c] sm:$0x1]
      %v1347 = vld [vmem:[%s1141 + $0x30] sm:$0xf]
      %v1348 = vld [vmem:[%s1141 + $0x34] sm:$0xf]
      %v1349 = vld [vmem:[%s1141 + $0x38] sm:$0x1]
      %v1350 = vld [vmem:[%s1141 + $0x3c] sm:$0xf]
      %v1351 = vld [vmem:[%s1141 + $0x40] sm:$0xf]
      %v1352 = vld [vmem:[%s1141 + $0x44] sm:$0x1]
      %v1353 = vld [vmem:[%s1141 + $0x48] sm:$0xf]
      %v1354 = vld [vmem:[%s1141 + $0x4c] sm:$0xf]
      %v1355 = vld [vmem:[%s1141 + $0x50] sm:$0x1]
      %v1356 = vld [vmem:[%s1141 + $0x54] sm:$0xf]
      %v1357 = vld [vmem:[%s1141 + $0x58] sm:$0xf]
      %v1358 = vld [vmem:[%s1141 + $0x5c] sm:$0x1]
      %v1359 = vld [vmem:[%s1141 + $0x60] sm:$0xf]
      %v1360 = vld [vmem:[%s1141 + $0x64] sm:$0xf]
      %v1361 = vld [vmem:[%s1141 + $0x68] sm:$0x1]
      %v1362 = vld [vmem:[%s1141 + $0x6c] sm:$0xf]
      %v1363 = vld [vmem:[%s1141 + $0x70] sm:$0xf]
      %v1364 = vld [vmem:[%s1141 + $0x74] sm:$0x1]
      %v1365 = vld [vmem:[%s1141 + $0x78] sm:$0xf]
      %v1366 = vld [vmem:[%s1141 + $0x7c] sm:$0xf]
      %v1367 = vld [vmem:[%s1141 + $0x80] sm:$0x1]
      %v1368 = vld [vmem:[%s1141 + $0x84] sm:$0xf]
      %v1369 = vld [vmem:[%s1141 + $0x88] sm:$0xf]
      %v1370 = vld [vmem:[%s1141 + $0x8c] sm:$0x1]
      %v1371 = vld [vmem:[%s1141 + $0x90] sm:$0xf]
      %v1372 = vld [vmem:[%s1141 + $0x94] sm:$0xf]
      %v1373 = vld [vmem:[%s1141 + $0x98] sm:$0x1]
      %v1374 = vld [vmem:[%s1141 + $0x9c] sm:$0xf]
      %v1375 = vld [vmem:[%s1141 + $0xa0] sm:$0xf]
      %v1376 = vld [vmem:[%s1141 + $0xa4] sm:$0x1]
      %v1377 = vld [vmem:[%s1141 + $0xa8] sm:$0xf]
      %v1378 = vld [vmem:[%s1141 + $0xac] sm:$0xf]
      %v1379 = vld [vmem:[%s1141 + $0xb0] sm:$0x1]
      %v1380 = vld [vmem:[%s1141 + $0xb4] sm:$0xf]
      %v1381 = vld [vmem:[%s1141 + $0xb8] sm:$0xf]
      %v1382 = vld [vmem:[%s1141 + $0xbc] sm:$0x1]
      %v1384 = vshrl.u32 %v1335, 16
      %v1386 = vrot.slane %v1384, 4
      %v1387 = vshll.u32 %v1335, 16
      %v1389 = vrot.slane %v1387, 5
      %v1390 = vor.u32 %v1386, %v1389
      %v1391 = vrot.slane %v1390, 4
      %v1393 = vshll.u32 %v1336, 16
      %v1395 = vrot.slane %v1393, 5
      %v1396 = vsel %vm287, %v1391, %v1395
      %v1397 = vshrl.u32 %v1336, 16
      %v1399 = vrot.slane %v1397, 4
      %v1400 = vor.u32 %v1399, %v1395
      %v1401 = vrot.slane %v1400, 4
      %v1403 = vshll.u32 %v1337, 16
      %v1405 = vrot.slane %v1403, 5
      %v1406 = vsel %vm287, %v1401, %v1405
      %v1408 = vshrl.u32 %v1338, 16
      %v1410 = vrot.slane %v1408, 4
      %v1411 = vshll.u32 %v1338, 16
      %v1413 = vrot.slane %v1411, 5
      %v1414 = vor.u32 %v1410, %v1413
      %v1415 = vrot.slane %v1414, 4
      %v1417 = vshll.u32 %v1339, 16
      %v1419 = vrot.slane %v1417, 5
      %v1420 = vsel %vm287, %v1415, %v1419
      %v1421 = vshrl.u32 %v1339, 16
      %v1423 = vrot.slane %v1421, 4
      %v1424 = vor.u32 %v1423, %v1419
      %v1425 = vrot.slane %v1424, 4
      %v1427 = vshll.u32 %v1340, 16
      %v1429 = vrot.slane %v1427, 5
      %v1430 = vsel %vm287, %v1425, %v1429
      %v1432 = vshrl.u32 %v1341, 16
      %v1434 = vrot.slane %v1432, 4
      %v1435 = vshll.u32 %v1341, 16
      %v1437 = vrot.slane %v1435, 5
      %v1438 = vor.u32 %v1434, %v1437
      %v1439 = vrot.slane %v1438, 4
      %v1441 = vshll.u32 %v1342, 16
      %v1443 = vrot.slane %v1441, 5
      %v1444 = vsel %vm287, %v1439, %v1443
      %v1445 = vshrl.u32 %v1342, 16
      %v1447 = vrot.slane %v1445, 4
      %v1448 = vor.u32 %v1447, %v1443
      %v1449 = vrot.slane %v1448, 4
      %v1451 = vshll.u32 %v1343, 16
      %v1453 = vrot.slane %v1451, 5
      %v1454 = vsel %vm287, %v1449, %v1453
      %v1456 = vshrl.u32 %v1344, 16
      %v1458 = vrot.slane %v1456, 4
      %v1459 = vshll.u32 %v1344, 16
      %v1461 = vrot.slane %v1459, 5
      %v1462 = vor.u32 %v1458, %v1461
      %v1463 = vrot.slane %v1462, 4
      %v1465 = vshll.u32 %v1345, 16
      %v1467 = vrot.slane %v1465, 5
      %v1468 = vsel %vm287, %v1463, %v1467
      %v1469 = vshrl.u32 %v1345, 16
      %v1471 = vrot.slane %v1469, 4
      %v1472 = vor.u32 %v1471, %v1467
      %v1473 = vrot.slane %v1472, 4
      %v1475 = vshll.u32 %v1346, 16
      %v1477 = vrot.slane %v1475, 5
      %v1478 = vsel %vm287, %v1473, %v1477
      %v1480 = vshrl.u32 %v1347, 16
      %v1482 = vrot.slane %v1480, 4
      %v1483 = vshll.u32 %v1347, 16
      %v1485 = vrot.slane %v1483, 5
      %v1486 = vor.u32 %v1482, %v1485
      %v1487 = vrot.slane %v1486, 4
      %v1489 = vshll.u32 %v1348, 16
      %v1491 = vrot.slane %v1489, 5
      %v1492 = vsel %vm287, %v1487, %v1491
      %v1493 = vshrl.u32 %v1348, 16
      %v1495 = vrot.slane %v1493, 4
      %v1496 = vor.u32 %v1495, %v1491
      %v1497 = vrot.slane %v1496, 4
      %v1499 = vshll.u32 %v1349, 16
      %v1501 = vrot.slane %v1499, 5
      %v1502 = vsel %vm287, %v1497, %v1501
      %v1504 = vshrl.u32 %v1350, 16
      %v1506 = vrot.slane %v1504, 4
      %v1507 = vshll.u32 %v1350, 16
      %v1509 = vrot.slane %v1507, 5
      %v1510 = vor.u32 %v1506, %v1509
      %v1511 = vrot.slane %v1510, 4
      %v1513 = vshll.u32 %v1351, 16
      %v1515 = vrot.slane %v1513, 5
      %v1516 = vsel %vm287, %v1511, %v1515
      %v1517 = vshrl.u32 %v1351, 16
      %v1519 = vrot.slane %v1517, 4
      %v1520 = vor.u32 %v1519, %v1515
      %v1521 = vrot.slane %v1520, 4
      %v1523 = vshll.u32 %v1352, 16
      %v1525 = vrot.slane %v1523, 5
      %v1526 = vsel %vm287, %v1521, %v1525
      %v1528 = vshrl.u32 %v1353, 16
      %v1530 = vrot.slane %v1528, 4
      %v1531 = vshll.u32 %v1353, 16
      %v1533 = vrot.slane %v1531, 5
      %v1534 = vor.u32 %v1530, %v1533
      %v1535 = vrot.slane %v1534, 4
      %v1537 = vshll.u32 %v1354, 16
      %v1539 = vrot.slane %v1537, 5
      %v1540 = vsel %vm287, %v1535, %v1539
      %v1541 = vshrl.u32 %v1354, 16
      %v1543 = vrot.slane %v1541, 4
      %v1544 = vor.u32 %v1543, %v1539
      %v1545 = vrot.slane %v1544, 4
      %v1547 = vshll.u32 %v1355, 16
      %v1549 = vrot.slane %v1547, 5
      %v1550 = vsel %vm287, %v1545, %v1549
      %v1552 = vshrl.u32 %v1356, 16
      %v1554 = vrot.slane %v1552, 4
      %v1555 = vshll.u32 %v1356, 16
      %v1557 = vrot.slane %v1555, 5
      %v1558 = vor.u32 %v1554, %v1557
      %v1559 = vrot.slane %v1558, 4
      %v1561 = vshll.u32 %v1357, 16
      %v1563 = vrot.slane %v1561, 5
      %v1564 = vsel %vm287, %v1559, %v1563
      %v1565 = vshrl.u32 %v1357, 16
      %v1567 = vrot.slane %v1565, 4
      %v1568 = vor.u32 %v1567, %v1563
      %v1569 = vrot.slane %v1568, 4
      %v1571 = vshll.u32 %v1358, 16
      %v1573 = vrot.slane %v1571, 5
      %v1574 = vsel %vm287, %v1569, %v1573
      %v1576 = vshrl.u32 %v1359, 16
      %v1578 = vrot.slane %v1576, 4
      %v1579 = vshll.u32 %v1359, 16
      %v1581 = vrot.slane %v1579, 5
      %v1582 = vor.u32 %v1578, %v1581
      %v1583 = vrot.slane %v1582, 4
      %v1585 = vshll.u32 %v1360, 16
      %v1587 = vrot.slane %v1585, 5
      %v1588 = vsel %vm287, %v1583, %v1587
      %v1589 = vshrl.u32 %v1360, 16
      %v1591 = vrot.slane %v1589, 4
      %v1592 = vor.u32 %v1591, %v1587
      %v1593 = vrot.slane %v1592, 4
      %v1595 = vshll.u32 %v1361, 16
      %v1597 = vrot.slane %v1595, 5
      %v1598 = vsel %vm287, %v1593, %v1597
      %v1600 = vshrl.u32 %v1362, 16
      %v1602 = vrot.slane %v1600, 4
      %v1603 = vshll.u32 %v1362, 16
      %v1605 = vrot.slane %v1603, 5
      %v1606 = vor.u32 %v1602, %v1605
      %v1607 = vrot.slane %v1606, 4
      %v1609 = vshll.u32 %v1363, 16
      %v1611 = vrot.slane %v1609, 5
      %v1612 = vsel %vm287, %v1607, %v1611
      %v1613 = vshrl.u32 %v1363, 16
      %v1615 = vrot.slane %v1613, 4
      %v1616 = vor.u32 %v1615, %v1611
      %v1617 = vrot.slane %v1616, 4
      %v1619 = vshll.u32 %v1364, 16
      %v1621 = vrot.slane %v1619, 5
      %v1622 = vsel %vm287, %v1617, %v1621
      %v1624 = vshrl.u32 %v1365, 16
      %v1626 = vrot.slane %v1624, 4
      %v1627 = vshll.u32 %v1365, 16
      %v1629 = vrot.slane %v1627, 5
      %v1630 = vor.u32 %v1626, %v1629
      %v1631 = vrot.slane %v1630, 4
      %v1633 = vshll.u32 %v1366, 16
      %v1635 = vrot.slane %v1633, 5
      %v1636 = vsel %vm287, %v1631, %v1635
      %v1637 = vshrl.u32 %v1366, 16
      %v1639 = vrot.slane %v1637, 4
      %v1640 = vor.u32 %v1639, %v1635
      %v1641 = vrot.slane %v1640, 4
      %v1643 = vshll.u32 %v1367, 16
      %v1645 = vrot.slane %v1643, 5
      %v1646 = vsel %vm287, %v1641, %v1645
      %v1648 = vshrl.u32 %v1368, 16
      %v1650 = vrot.slane %v1648, 4
      %v1651 = vshll.u32 %v1368, 16
      %v1653 = vrot.slane %v1651, 5
      %v1654 = vor.u32 %v1650, %v1653
      %v1655 = vrot.slane %v1654, 4
      %v1657 = vshll.u32 %v1369, 16
      %v1659 = vrot.slane %v1657, 5
      %v1660 = vsel %vm287, %v1655, %v1659
      %v1661 = vshrl.u32 %v1369, 16
      %v1663 = vrot.slane %v1661, 4
      %v1664 = vor.u32 %v1663, %v1659
      %v1665 = vrot.slane %v1664, 4
      %v1667 = vshll.u32 %v1370, 16
      %v1669 = vrot.slane %v1667, 5
      %v1670 = vsel %vm287, %v1665, %v1669
      %v1672 = vshrl.u32 %v1371, 16
      %v1674 = vrot.slane %v1672, 4
      %v1675 = vshll.u32 %v1371, 16
      %v1677 = vrot.slane %v1675, 5
      %v1678 = vor.u32 %v1674, %v1677
      %v1679 = vrot.slane %v1678, 4
      %v1681 = vshll.u32 %v1372, 16
      %v1683 = vrot.slane %v1681, 5
      %v1684 = vsel %vm287, %v1679, %v1683
      %v1685 = vshrl.u32 %v1372, 16
      %v1687 = vrot.slane %v1685, 4
      %v1688 = vor.u32 %v1687, %v1683
      %v1689 = vrot.slane %v1688, 4
      %v1691 = vshll.u32 %v1373, 16
      %v1693 = vrot.slane %v1691, 5
      %v1694 = vsel %vm287, %v1689, %v1693
      %v1696 = vshrl.u32 %v1374, 16
      %v1698 = vrot.slane %v1696, 4
      %v1699 = vshll.u32 %v1374, 16
      %v1701 = vrot.slane %v1699, 5
      %v1702 = vor.u32 %v1698, %v1701
      %v1703 = vrot.slane %v1702, 4
      %v1705 = vshll.u32 %v1375, 16
      %v1707 = vrot.slane %v1705, 5
      %v1708 = vsel %vm287, %v1703, %v1707
      %v1709 = vshrl.u32 %v1375, 16
      %v1711 = vrot.slane %v1709, 4
      %v1712 = vor.u32 %v1711, %v1707
      %v1713 = vrot.slane %v1712, 4
      %v1715 = vshll.u32 %v1376, 16
      %v1717 = vrot.slane %v1715, 5
      %v1718 = vsel %vm287, %v1713, %v1717
      %v1720 = vshrl.u32 %v1377, 16
      %v1722 = vrot.slane %v1720, 4
      %v1723 = vshll.u32 %v1377, 16
      %v1725 = vrot.slane %v1723, 5
      %v1726 = vor.u32 %v1722, %v1725
      %v1727 = vrot.slane %v1726, 4
      %v1729 = vshll.u32 %v1378, 16
      %v1731 = vrot.slane %v1729, 5
      %v1732 = vsel %vm287, %v1727, %v1731
      %v1733 = vshrl.u32 %v1378, 16
      %v1735 = vrot.slane %v1733, 4
      %v1736 = vor.u32 %v1735, %v1731
      %v1737 = vrot.slane %v1736, 4
      %v1739 = vshll.u32 %v1379, 16
      %v1741 = vrot.slane %v1739, 5
      %v1742 = vsel %vm287, %v1737, %v1741
      %v1744 = vshrl.u32 %v1380, 16
      %v1746 = vrot.slane %v1744, 4
      %v1747 = vshll.u32 %v1380, 16
      %v1749 = vrot.slane %v1747, 5
      %v1750 = vor.u32 %v1746, %v1749
      %v1751 = vrot.slane %v1750, 4
      %v1753 = vshll.u32 %v1381, 16
      %v1755 = vrot.slane %v1753, 5
      %v1756 = vsel %vm287, %v1751, %v1755
      %v1757 = vshrl.u32 %v1381, 16
      %v1759 = vrot.slane %v1757, 4
      %v1760 = vor.u32 %v1759, %v1755
      %v1761 = vrot.slane %v1760, 4
      %v1763 = vshll.u32 %v1382, 16
      %v1765 = vrot.slane %v1763, 5
      %v1766 = vsel %vm287, %v1761, %v1765
      %1767 = vrot.lane.b32.xlu0 %v1396, 12
      %v1768 = vpop.permute.xlu0 %1767
      %1769 = vrot.lane.b32.xlu0 %v1406, 12
      %v1770 = vpop.permute.xlu0 %1769
      %1771 = vrot.lane.b32.xlu0 %v1420, 12
      %v1772 = vpop.permute.xlu0 %1771
      %1773 = vrot.lane.b32.xlu0 %v1430, 12
      %v1774 = vpop.permute.xlu0 %1773
      %1775 = vrot.lane.b32.xlu0 %v1444, 12
      %v1776 = vpop.permute.xlu0 %1775
      %1777 = vrot.lane.b32.xlu0 %v1454, 12
      %v1778 = vpop.permute.xlu0 %1777
      %1779 = vrot.lane.b32.xlu0 %v1468, 12
      %v1780 = vpop.permute.xlu0 %1779
      %1781 = vrot.lane.b32.xlu0 %v1478, 12
      %v1782 = vpop.permute.xlu0 %1781
      %1783 = vrot.lane.b32.xlu0 %v1492, 12
      %v1784 = vpop.permute.xlu0 %1783
      %1785 = vrot.lane.b32.xlu0 %v1502, 12
      %v1786 = vpop.permute.xlu0 %1785
      %1787 = vrot.lane.b32.xlu0 %v1516, 12
      %v1788 = vpop.permute.xlu0 %1787
      %1789 = vrot.lane.b32.xlu0 %v1526, 12
      %v1790 = vpop.permute.xlu0 %1789
      %1791 = vrot.lane.b32.xlu0 %v1540, 12
      %v1792 = vpop.permute.xlu0 %1791
      %1793 = vrot.lane.b32.xlu0 %v1550, 12
      %v1794 = vpop.permute.xlu0 %1793
      %1795 = vrot.lane.b32.xlu0 %v1564, 12
      %v1796 = vpop.permute.xlu0 %1795
      %1797 = vrot.lane.b32.xlu0 %v1574, 12
      %v1798 = vpop.permute.xlu0 %1797
      %1799 = vrot.lane.b32.xlu0 %v1588, 12
      %v1800 = vpop.permute.xlu0 %1799
      %1801 = vrot.lane.b32.xlu0 %v1598, 12
      %v1802 = vpop.permute.xlu0 %1801
      %1803 = vrot.lane.b32.xlu0 %v1612, 12
      %v1804 = vpop.permute.xlu0 %1803
      %1805 = vrot.lane.b32.xlu0 %v1622, 12
      %v1806 = vpop.permute.xlu0 %1805
      %1807 = vrot.lane.b32.xlu0 %v1636, 12
      %v1808 = vpop.permute.xlu0 %1807
      %1809 = vrot.lane.b32.xlu0 %v1646, 12
      %v1810 = vpop.permute.xlu0 %1809
      %1811 = vrot.lane.b32.xlu0 %v1660, 12
      %v1812 = vpop.permute.xlu0 %1811
      %1813 = vrot.lane.b32.xlu0 %v1670, 12
      %v1814 = vpop.permute.xlu0 %1813
      %1815 = vrot.lane.b32.xlu0 %v1684, 12
      %v1816 = vpop.permute.xlu0 %1815
      %1817 = vrot.lane.b32.xlu0 %v1694, 12
      %v1818 = vpop.permute.xlu0 %1817
      %1819 = vrot.lane.b32.xlu0 %v1708, 12
      %v1820 = vpop.permute.xlu0 %1819
      %1821 = vrot.lane.b32.xlu0 %v1718, 12
      %v1822 = vpop.permute.xlu0 %1821
      %1823 = vrot.lane.b32.xlu0 %v1732, 12
      %v1824 = vpop.permute.xlu0 %1823
      %1825 = vrot.lane.b32.xlu0 %v1742, 12
      %v1826 = vpop.permute.xlu0 %1825
      %1827 = vrot.lane.b32.xlu0 %v1756, 12
      %v1828 = vpop.permute.xlu0 %1827
      %1829 = vrot.lane.b32.xlu0 %v1766, 12
      %v1830 = vpop.permute.xlu0 %1829
      %vm1863 = vcmask 117856
      %1864 = vst.msk [vmem:[#allocation2] sm:$0xf] %vm1863, %v1768
      %1865 = vst.msk [vmem:[#allocation2 + $0x4] sm:$0xf] %vm1863, %v1770
      %1866 = vst.msk [vmem:[#allocation2 + $0x8] sm:$0xf] %vm1863, %v1772
      %1867 = vst.msk [vmem:[#allocation2 + $0xc] sm:$0xf] %vm1863, %v1774
      %1868 = vst.msk [vmem:[#allocation2 + $0x10] sm:$0xf] %vm1863, %v1776
      %1869 = vst.msk [vmem:[#allocation2 + $0x14] sm:$0xf] %vm1863, %v1778
      %1870 = vst.msk [vmem:[#allocation2 + $0x18] sm:$0xf] %vm1863, %v1780
      %1871 = vst.msk [vmem:[#allocation2 + $0x1c] sm:$0xf] %vm1863, %v1782
      %1872 = vst.msk [vmem:[#allocation2 + $0x20] sm:$0xf] %vm1863, %v1784
      %1873 = vst.msk [vmem:[#allocation2 + $0x24] sm:$0xf] %vm1863, %v1786
      %1874 = vst.msk [vmem:[#allocation2 + $0x28] sm:$0xf] %vm1863, %v1788
      %1875 = vst.msk [vmem:[#allocation2 + $0x2c] sm:$0xf] %vm1863, %v1790
      %1876 = vst.msk [vmem:[#allocation2 + $0x30] sm:$0xf] %vm1863, %v1792
      %1877 = vst.msk [vmem:[#allocation2 + $0x34] sm:$0xf] %vm1863, %v1794
      %1878 = vst.msk [vmem:[#allocation2 + $0x38] sm:$0xf] %vm1863, %v1796
      %1879 = vst.msk [vmem:[#allocation2 + $0x3c] sm:$0xf] %vm1863, %v1798
      %1880 = vst.msk [vmem:[#allocation2 + $0x40] sm:$0xf] %vm1863, %v1800
      %1881 = vst.msk [vmem:[#allocation2 + $0x44] sm:$0xf] %vm1863, %v1802
      %1882 = vst.msk [vmem:[#allocation2 + $0x48] sm:$0xf] %vm1863, %v1804
      %1883 = vst.msk [vmem:[#allocation2 + $0x4c] sm:$0xf] %vm1863, %v1806
      %1884 = vst.msk [vmem:[#allocation2 + $0x50] sm:$0xf] %vm1863, %v1808
      %1885 = vst.msk [vmem:[#allocation2 + $0x54] sm:$0xf] %vm1863, %v1810
      %1886 = vst.msk [vmem:[#allocation2 + $0x58] sm:$0xf] %vm1863, %v1812
      %1887 = vst.msk [vmem:[#allocation2 + $0x5c] sm:$0xf] %vm1863, %v1814
      %1888 = vst.msk [vmem:[#allocation2 + $0x60] sm:$0xf] %vm1863, %v1816
      %1889 = vst.msk [vmem:[#allocation2 + $0x64] sm:$0xf] %vm1863, %v1818
      %1890 = vst.msk [vmem:[#allocation2 + $0x68] sm:$0xf] %vm1863, %v1820
      %1891 = vst.msk [vmem:[#allocation2 + $0x6c] sm:$0xf] %vm1863, %v1822
      %1892 = vst.msk [vmem:[#allocation2 + $0x70] sm:$0xf] %vm1863, %v1824
      %1893 = vst.msk [vmem:[#allocation2 + $0x74] sm:$0xf] %vm1863, %v1826
      %1894 = vst.msk [vmem:[#allocation2 + $0x78] sm:$0xf] %vm1863, %v1828
      %1895 = vst.msk [vmem:[#allocation2 + $0x7c] sm:$0xf] %vm1863, %v1830
      %v1896 = vld [vmem:[%s1141] sm:$0xe]
      %v1897 = vld [vmem:[%s1141 + $0x4] sm:$0xf]
      %v1898 = vld [vmem:[%s1141 + $0x8] sm:$0x1]
      %v1899 = vld [vmem:[%s1141 + $0xc] sm:$0xe]
      %v1900 = vld [vmem:[%s1141 + $0x10] sm:$0xf]
      %v1901 = vld [vmem:[%s1141 + $0x14] sm:$0x1]
      %v1902 = vld [vmem:[%s1141 + $0x18] sm:$0xe]
      %v1903 = vld [vmem:[%s1141 + $0x1c] sm:$0xf]
      %v1904 = vld [vmem:[%s1141 + $0x20] sm:$0x1]
      %v1905 = vld [vmem:[%s1141 + $0x24] sm:$0xe]
      %v1906 = vld [vmem:[%s1141 + $0x28] sm:$0xf]
      %v1907 = vld [vmem:[%s1141 + $0x2c] sm:$0x1]
      %v1908 = vld [vmem:[%s1141 + $0x30] sm:$0xe]
      %v1909 = vld [vmem:[%s1141 + $0x34] sm:$0xf]
      %v1910 = vld [vmem:[%s1141 + $0x38] sm:$0x1]
      %v1911 = vld [vmem:[%s1141 + $0x3c] sm:$0xe]
      %v1912 = vld [vmem:[%s1141 + $0x40] sm:$0xf]
      %v1913 = vld [vmem:[%s1141 + $0x44] sm:$0x1]
      %v1914 = vld [vmem:[%s1141 + $0x48] sm:$0xe]
      %v1915 = vld [vmem:[%s1141 + $0x4c] sm:$0xf]
      %v1916 = vld [vmem:[%s1141 + $0x50] sm:$0x1]
      %v1917 = vld [vmem:[%s1141 + $0x54] sm:$0xe]
      %v1918 = vld [vmem:[%s1141 + $0x58] sm:$0xf]
      %v1919 = vld [vmem:[%s1141 + $0x5c] sm:$0x1]
      %v1920 = vld [vmem:[%s1141 + $0x60] sm:$0xe]
      %v1921 = vld [vmem:[%s1141 + $0x64] sm:$0xf]
      %v1922 = vld [vmem:[%s1141 + $0x68] sm:$0x1]
      %v1923 = vld [vmem:[%s1141 + $0x6c] sm:$0xe]
      %v1924 = vld [vmem:[%s1141 + $0x70] sm:$0xf]
      %v1925 = vld [vmem:[%s1141 + $0x74] sm:$0x1]
      %v1926 = vld [vmem:[%s1141 + $0x78] sm:$0xe]
      %v1927 = vld [vmem:[%s1141 + $0x7c] sm:$0xf]
      %v1928 = vld [vmem:[%s1141 + $0x80] sm:$0x1]
      %v1929 = vld [vmem:[%s1141 + $0x84] sm:$0xe]
      %v1930 = vld [vmem:[%s1141 + $0x88] sm:$0xf]
      %v1931 = vld [vmem:[%s1141 + $0x8c] sm:$0x1]
      %v1932 = vld [vmem:[%s1141 + $0x90] sm:$0xe]
      %v1933 = vld [vmem:[%s1141 + $0x94] sm:$0xf]
      %v1934 = vld [vmem:[%s1141 + $0x98] sm:$0x1]
      %v1935 = vld [vmem:[%s1141 + $0x9c] sm:$0xe]
      %v1936 = vld [vmem:[%s1141 + $0xa0] sm:$0xf]
      %v1937 = vld [vmem:[%s1141 + $0xa4] sm:$0x1]
      %v1938 = vld [vmem:[%s1141 + $0xa8] sm:$0xe]
      %v1939 = vld [vmem:[%s1141 + $0xac] sm:$0xf]
      %v1940 = vld [vmem:[%s1141 + $0xb0] sm:$0x1]
      %v1941 = vld [vmem:[%s1141 + $0xb4] sm:$0xe]
      %v1942 = vld [vmem:[%s1141 + $0xb8] sm:$0xf]
      %v1943 = vld [vmem:[%s1141 + $0xbc] sm:$0x1]
      %v1992 = vrot.slane %v1896, 5
      %v1993 = vrot.slane %v1992, 4
      %v1994 = vrot.slane %v1897, 5
      %v1995 = vsel %vm899, %v1993, %v1994
      %v1996 = vrot.slane %v1994, 4
      %v1997 = vrot.slane %v1898, 5
      %v1998 = vsel %vm899, %v1996, %v1997
      %v1999 = vrot.slane %v1899, 5
      %v2000 = vrot.slane %v1999, 4
      %v2001 = vrot.slane %v1900, 5
      %v2002 = vsel %vm899, %v2000, %v2001
      %v2003 = vrot.slane %v2001, 4
      %v2004 = vrot.slane %v1901, 5
      %v2005 = vsel %vm899, %v2003, %v2004
      %v2006 = vrot.slane %v1902, 5
      %v2007 = vrot.slane %v2006, 4
      %v2008 = vrot.slane %v1903, 5
      %v2009 = vsel %vm899, %v2007, %v2008
      %v2010 = vrot.slane %v2008, 4
      %v2011 = vrot.slane %v1904, 5
      %v2012 = vsel %vm899, %v2010, %v2011
      %v2013 = vrot.slane %v1905, 5
      %v2014 = vrot.slane %v2013, 4
      %v2015 = vrot.slane %v1906, 5
      %v2016 = vsel %vm899, %v2014, %v2015
      %v2017 = vrot.slane %v2015, 4
      %v2018 = vrot.slane %v1907, 5
      %v2019 = vsel %vm899, %v2017, %v2018
      %v2020 = vrot.slane %v1908, 5
      %v2021 = vrot.slane %v2020, 4
      %v2022 = vrot.slane %v1909, 5
      %v2023 = vsel %vm899, %v2021, %v2022
      %v2024 = vrot.slane %v2022, 4
      %v2025 = vrot.slane %v1910, 5
      %v2026 = vsel %vm899, %v2024, %v2025
      %v2027 = vrot.slane %v1911, 5
      %v2028 = vrot.slane %v2027, 4
      %v2029 = vrot.slane %v1912, 5
      %v2030 = vsel %vm899, %v2028, %v2029
      %v2031 = vrot.slane %v2029, 4
      %v2032 = vrot.slane %v1913, 5
      %v2033 = vsel %vm899, %v2031, %v2032
      %v2034 = vrot.slane %v1914, 5
      %v2035 = vrot.slane %v2034, 4
      %v2036 = vrot.slane %v1915, 5
      %v2037 = vsel %vm899, %v2035, %v2036
      %v2038 = vrot.slane %v2036, 4
      %v2039 = vrot.slane %v1916, 5
      %v2040 = vsel %vm899, %v2038, %v2039
      %v2041 = vrot.slane %v1917, 5
      %v2042 = vrot.slane %v2041, 4
      %v2043 = vrot.slane %v1918, 5
      %v2044 = vsel %vm899, %v2042, %v2043
      %v2045 = vrot.slane %v2043, 4
      %v2046 = vrot.slane %v1919, 5
      %v2047 = vsel %vm899, %v2045, %v2046
      %v2048 = vrot.slane %v1920, 5
      %v2049 = vrot.slane %v2048, 4
      %v2050 = vrot.slane %v1921, 5
      %v2051 = vsel %vm899, %v2049, %v2050
      %v2052 = vrot.slane %v2050, 4
      %v2053 = vrot.slane %v1922, 5
      %v2054 = vsel %vm899, %v2052, %v2053
      %v2055 = vrot.slane %v1923, 5
      %v2056 = vrot.slane %v2055, 4
      %v2057 = vrot.slane %v1924, 5
      %v2058 = vsel %vm899, %v2056, %v2057
      %v2059 = vrot.slane %v2057, 4
      %v2060 = vrot.slane %v1925, 5
      %v2061 = vsel %vm899, %v2059, %v2060
      %v2062 = vrot.slane %v1926, 5
      %v2063 = vrot.slane %v2062, 4
      %v2064 = vrot.slane %v1927, 5
      %v2065 = vsel %vm899, %v2063, %v2064
      %v2066 = vrot.slane %v2064, 4
      %v2067 = vrot.slane %v1928, 5
      %v2068 = vsel %vm899, %v2066, %v2067
      %v2069 = vrot.slane %v1929, 5
      %v2070 = vrot.slane %v2069, 4
      %v2071 = vrot.slane %v1930, 5
      %v2072 = vsel %vm899, %v2070, %v2071
      %v2073 = vrot.slane %v2071, 4
      %v2074 = vrot.slane %v1931, 5
      %v2075 = vsel %vm899, %v2073, %v2074
      %v2076 = vrot.slane %v1932, 5
      %v2077 = vrot.slane %v2076, 4
      %v2078 = vrot.slane %v1933, 5
      %v2079 = vsel %vm899, %v2077, %v2078
      %v2080 = vrot.slane %v2078, 4
      %v2081 = vrot.slane %v1934, 5
      %v2082 = vsel %vm899, %v2080, %v2081
      %v2083 = vrot.slane %v1935, 5
      %v2084 = vrot.slane %v2083, 4
      %v2085 = vrot.slane %v1936, 5
      %v2086 = vsel %vm899, %v2084, %v2085
      %v2087 = vrot.slane %v2085, 4
      %v2088 = vrot.slane %v1937, 5
      %v2089 = vsel %vm899, %v2087, %v2088
      %v2090 = vrot.slane %v1938, 5
      %v2091 = vrot.slane %v2090, 4
      %v2092 = vrot.slane %v1939, 5
      %v2093 = vsel %vm899, %v2091, %v2092
      %v2094 = vrot.slane %v2092, 4
      %v2095 = vrot.slane %v1940, 5
      %v2096 = vsel %vm899, %v2094, %v2095
      %v2097 = vrot.slane %v1941, 5
      %v2098 = vrot.slane %v2097, 4
      %v2099 = vrot.slane %v1942, 5
      %v2100 = vsel %vm899, %v2098, %v2099
      %v2101 = vrot.slane %v2099, 4
      %v2102 = vrot.slane %v1943, 5
      %v2103 = vsel %vm899, %v2101, %v2102
      %2104 = vrot.lane.b32.xlu0 %v1995, 15
      %v2105 = vpop.permute.xlu0 %2104
      %2106 = vrot.lane.b32.xlu0 %v1998, 15
      %v2107 = vpop.permute.xlu0 %2106
      %2108 = vrot.lane.b32.xlu0 %v2002, 15
      %v2109 = vpop.permute.xlu0 %2108
      %2110 = vrot.lane.b32.xlu0 %v2005, 15
      %v2111 = vpop.permute.xlu0 %2110
      %2112 = vrot.lane.b32.xlu0 %v2009, 15
      %v2113 = vpop.permute.xlu0 %2112
      %2114 = vrot.lane.b32.xlu0 %v2012, 15
      %v2115 = vpop.permute.xlu0 %2114
      %2116 = vrot.lane.b32.xlu0 %v2016, 15
      %v2117 = vpop.permute.xlu0 %2116
      %2118 = vrot.lane.b32.xlu0 %v2019, 15
      %v2119 = vpop.permute.xlu0 %2118
      %2120 = vrot.lane.b32.xlu0 %v2023, 15
      %v2121 = vpop.permute.xlu0 %2120
      %2122 = vrot.lane.b32.xlu0 %v2026, 15
      %v2123 = vpop.permute.xlu0 %2122
      %2124 = vrot.lane.b32.xlu0 %v2030, 15
      %v2125 = vpop.permute.xlu0 %2124
      %2126 = vrot.lane.b32.xlu0 %v2033, 15
      %v2127 = vpop.permute.xlu0 %2126
      %2128 = vrot.lane.b32.xlu0 %v2037, 15
      %v2129 = vpop.permute.xlu0 %2128
      %2130 = vrot.lane.b32.xlu0 %v2040, 15
      %v2131 = vpop.permute.xlu0 %2130
      %2132 = vrot.lane.b32.xlu0 %v2044, 15
      %v2133 = vpop.permute.xlu0 %2132
      %2134 = vrot.lane.b32.xlu0 %v2047, 15
      %v2135 = vpop.permute.xlu0 %2134
      %2136 = vrot.lane.b32.xlu0 %v2051, 15
      %v2137 = vpop.permute.xlu0 %2136
      %2138 = vrot.lane.b32.xlu0 %v2054, 15
      %v2139 = vpop.permute.xlu0 %2138
      %2140 = vrot.lane.b32.xlu0 %v2058, 15
      %v2141 = vpop.permute.xlu0 %2140
      %2142 = vrot.lane.b32.xlu0 %v2061, 15
      %v2143 = vpop.permute.xlu0 %2142
      %2144 = vrot.lane.b32.xlu0 %v2065, 15
      %v2145 = vpop.permute.xlu0 %2144
      %2146 = vrot.lane.b32.xlu0 %v2068, 15
      %v2147 = vpop.permute.xlu0 %2146
      %2148 = vrot.lane.b32.xlu0 %v2072, 15
      %v2149 = vpop.permute.xlu0 %2148
      %2150 = vrot.lane.b32.xlu0 %v2075, 15
      %v2151 = vpop.permute.xlu0 %2150
      %2152 = vrot.lane.b32.xlu0 %v2079, 15
      %v2153 = vpop.permute.xlu0 %2152
      %2154 = vrot.lane.b32.xlu0 %v2082, 15
      %v2155 = vpop.permute.xlu0 %2154
      %2156 = vrot.lane.b32.xlu0 %v2086, 15
      %v2157 = vpop.permute.xlu0 %2156
      %2158 = vrot.lane.b32.xlu0 %v2089, 15
      %v2159 = vpop.permute.xlu0 %2158
      %2160 = vrot.lane.b32.xlu0 %v2093, 15
      %v2161 = vpop.permute.xlu0 %2160
      %2162 = vrot.lane.b32.xlu0 %v2096, 15
      %v2163 = vpop.permute.xlu0 %2162
      %2164 = vrot.lane.b32.xlu0 %v2100, 15
      %v2165 = vpop.permute.xlu0 %2164
      %2166 = vrot.lane.b32.xlu0 %v2103, 15
      %v2167 = vpop.permute.xlu0 %2166
      %vm2200 = vcmask 142456
      %2201 = vst.msk [vmem:[#allocation2] sm:$0xf] %vm2200, %v2105
      %2202 = vst.msk [vmem:[#allocation2 + $0x4] sm:$0xf] %vm2200, %v2107
      %2203 = vst.msk [vmem:[#allocation2 + $0x8] sm:$0xf] %vm2200, %v2109
      %2204 = vst.msk [vmem:[#allocation2 + $0xc] sm:$0xf] %vm2200, %v2111
      %2205 = vst.msk [vmem:[#allocation2 + $0x10] sm:$0xf] %vm2200, %v2113
      %2206 = vst.msk [vmem:[#allocation2 + $0x14] sm:$0xf] %vm2200, %v2115
      %2207 = vst.msk [vmem:[#allocation2 + $0x18] sm:$0xf] %vm2200, %v2117
      %2208 = vst.msk [vmem:[#allocation2 + $0x1c] sm:$0xf] %vm2200, %v2119
      %2209 = vst.msk [vmem:[#allocation2 + $0x20] sm:$0xf] %vm2200, %v2121
      %2210 = vst.msk [vmem:[#allocation2 + $0x24] sm:$0xf] %vm2200, %v2123
      %2211 = vst.msk [vmem:[#allocation2 + $0x28] sm:$0xf] %vm2200, %v2125
      %2212 = vst.msk [vmem:[#allocation2 + $0x2c] sm:$0xf] %vm2200, %v2127
      %2213 = vst.msk [vmem:[#allocation2 + $0x30] sm:$0xf] %vm2200, %v2129
      %2214 = vst.msk [vmem:[#allocation2 + $0x34] sm:$0xf] %vm2200, %v2131
      %2215 = vst.msk [vmem:[#allocation2 + $0x38] sm:$0xf] %vm2200, %v2133
      %2216 = vst.msk [vmem:[#allocation2 + $0x3c] sm:$0xf] %vm2200, %v2135
      %2217 = vst.msk [vmem:[#allocation2 + $0x40] sm:$0xf] %vm2200, %v2137
      %2218 = vst.msk [vmem:[#allocation2 + $0x44] sm:$0xf] %vm2200, %v2139
      %2219 = vst.msk [vmem:[#allocation2 + $0x48] sm:$0xf] %vm2200, %v2141
      %2220 = vst.msk [vmem:[#allocation2 + $0x4c] sm:$0xf] %vm2200, %v2143
      %2221 = vst.msk [vmem:[#allocation2 + $0x50] sm:$0xf] %vm2200, %v2145
      %2222 = vst.msk [vmem:[#allocation2 + $0x54] sm:$0xf] %vm2200, %v2147
      %2223 = vst.msk [vmem:[#allocation2 + $0x58] sm:$0xf] %vm2200, %v2149
      %2224 = vst.msk [vmem:[#allocation2 + $0x5c] sm:$0xf] %vm2200, %v2151
      %2225 = vst.msk [vmem:[#allocation2 + $0x60] sm:$0xf] %vm2200, %v2153
      %2226 = vst.msk [vmem:[#allocation2 + $0x64] sm:$0xf] %vm2200, %v2155
      %2227 = vst.msk [vmem:[#allocation2 + $0x68] sm:$0xf] %vm2200, %v2157
      %2228 = vst.msk [vmem:[#allocation2 + $0x6c] sm:$0xf] %vm2200, %v2159
      %2229 = vst.msk [vmem:[#allocation2 + $0x70] sm:$0xf] %vm2200, %v2161
      %2230 = vst.msk [vmem:[#allocation2 + $0x74] sm:$0xf] %vm2200, %v2163
      %2231 = vst.msk [vmem:[#allocation2 + $0x78] sm:$0xf] %vm2200, %v2165
      %2232 = vst.msk [vmem:[#allocation2 + $0x7c] sm:$0xf] %vm2200, %v2167
      %s2233 = scalar_lea.vmem %s165, 24
      %v2234 = vld [vmem:[%s2233] sm:$0xf]
      %v2235 = vld [vmem:[%s2233 + $0x4] sm:$0xf]
      %v2236 = vld [vmem:[%s2233 + $0xc] sm:$0xf]
      %v2237 = vld [vmem:[%s2233 + $0x10] sm:$0xf]
      %v2238 = vld [vmem:[%s2233 + $0x18] sm:$0xf]
      %v2239 = vld [vmem:[%s2233 + $0x1c] sm:$0xf]
      %v2240 = vld [vmem:[%s2233 + $0x24] sm:$0xf]
      %v2241 = vld [vmem:[%s2233 + $0x28] sm:$0xf]
      %v2242 = vld [vmem:[%s2233 + $0x30] sm:$0xf]
      %v2243 = vld [vmem:[%s2233 + $0x34] sm:$0xf]
      %v2244 = vld [vmem:[%s2233 + $0x3c] sm:$0xf]
      %v2245 = vld [vmem:[%s2233 + $0x40] sm:$0xf]
      %v2246 = vld [vmem:[%s2233 + $0x48] sm:$0xf]
      %v2247 = vld [vmem:[%s2233 + $0x4c] sm:$0xf]
      %v2248 = vld [vmem:[%s2233 + $0x54] sm:$0xf]
      %v2249 = vld [vmem:[%s2233 + $0x58] sm:$0xf]
      %v2250 = vld [vmem:[%s2233 + $0x60] sm:$0xf]
      %v2251 = vld [vmem:[%s2233 + $0x64] sm:$0xf]
      %v2252 = vld [vmem:[%s2233 + $0x6c] sm:$0xf]
      %v2253 = vld [vmem:[%s2233 + $0x70] sm:$0xf]
      %v2254 = vld [vmem:[%s2233 + $0x78] sm:$0xf]
      %v2255 = vld [vmem:[%s2233 + $0x7c] sm:$0xf]
      %v2256 = vld [vmem:[%s2233 + $0x84] sm:$0xf]
      %v2257 = vld [vmem:[%s2233 + $0x88] sm:$0xf]
      %v2258 = vld [vmem:[%s2233 + $0x90] sm:$0xf]
      %v2259 = vld [vmem:[%s2233 + $0x94] sm:$0xf]
      %v2260 = vld [vmem:[%s2233 + $0x9c] sm:$0xf]
      %v2261 = vld [vmem:[%s2233 + $0xa0] sm:$0xf]
      %v2262 = vld [vmem:[%s2233 + $0xa8] sm:$0xf]
      %v2263 = vld [vmem:[%s2233 + $0xac] sm:$0xf]
      %v2264 = vld [vmem:[%s2233 + $0xb4] sm:$0xf]
      %v2265 = vld [vmem:[%s2233 + $0xb8] sm:$0xf]
      %2298 = vrot.lane.b32.xlu0 %v2234, 18
      %v2299 = vpop.permute.xlu0 %2298
      %2300 = vrot.lane.b32.xlu0 %v2235, 18
      %v2301 = vpop.permute.xlu0 %2300
      %2302 = vrot.lane.b32.xlu0 %v2236, 18
      %v2303 = vpop.permute.xlu0 %2302
      %2304 = vrot.lane.b32.xlu0 %v2237, 18
      %v2305 = vpop.permute.xlu0 %2304
      %2306 = vrot.lane.b32.xlu0 %v2238, 18
      %v2307 = vpop.permute.xlu0 %2306
      %2308 = vrot.lane.b32.xlu0 %v2239, 18
      %v2309 = vpop.permute.xlu0 %2308
      %2310 = vrot.lane.b32.xlu0 %v2240, 18
      %v2311 = vpop.permute.xlu0 %2310
      %2312 = vrot.lane.b32.xlu0 %v2241, 18
      %v2313 = vpop.permute.xlu0 %2312
      %2314 = vrot.lane.b32.xlu0 %v2242, 18
      %v2315 = vpop.permute.xlu0 %2314
      %2316 = vrot.lane.b32.xlu0 %v2243, 18
      %v2317 = vpop.permute.xlu0 %2316
      %2318 = vrot.lane.b32.xlu0 %v2244, 18
      %v2319 = vpop.permute.xlu0 %2318
      %2320 = vrot.lane.b32.xlu0 %v2245, 18
      %v2321 = vpop.permute.xlu0 %2320
      %2322 = vrot.lane.b32.xlu0 %v2246, 18
      %v2323 = vpop.permute.xlu0 %2322
      %2324 = vrot.lane.b32.xlu0 %v2247, 18
      %v2325 = vpop.permute.xlu0 %2324
      %2326 = vrot.lane.b32.xlu0 %v2248, 18
      %v2327 = vpop.permute.xlu0 %2326
      %2328 = vrot.lane.b32.xlu0 %v2249, 18
      %v2329 = vpop.permute.xlu0 %2328
      %2330 = vrot.lane.b32.xlu0 %v2250, 18
      %v2331 = vpop.permute.xlu0 %2330
      %2332 = vrot.lane.b32.xlu0 %v2251, 18
      %v2333 = vpop.permute.xlu0 %2332
      %2334 = vrot.lane.b32.xlu0 %v2252, 18
      %v2335 = vpop.permute.xlu0 %2334
      %2336 = vrot.lane.b32.xlu0 %v2253, 18
      %v2337 = vpop.permute.xlu0 %2336
      %2338 = vrot.lane.b32.xlu0 %v2254, 18
      %v2339 = vpop.permute.xlu0 %2338
      %2340 = vrot.lane.b32.xlu0 %v2255, 18
      %v2341 = vpop.permute.xlu0 %2340
      %2342 = vrot.lane.b32.xlu0 %v2256, 18
      %v2343 = vpop.permute.xlu0 %2342
      %2344 = vrot.lane.b32.xlu0 %v2257, 18
      %v2345 = vpop.permute.xlu0 %2344
      %2346 = vrot.lane.b32.xlu0 %v2258, 18
      %v2347 = vpop.permute.xlu0 %2346
      %2348 = vrot.lane.b32.xlu0 %v2259, 18
      %v2349 = vpop.permute.xlu0 %2348
      %2350 = vrot.lane.b32.xlu0 %v2260, 18
      %v2351 = vpop.permute.xlu0 %2350
      %2352 = vrot.lane.b32.xlu0 %v2261, 18
      %v2353 = vpop.permute.xlu0 %2352
      %2354 = vrot.lane.b32.xlu0 %v2262, 18
      %v2355 = vpop.permute.xlu0 %2354
      %2356 = vrot.lane.b32.xlu0 %v2263, 18
      %v2357 = vpop.permute.xlu0 %2356
      %2358 = vrot.lane.b32.xlu0 %v2264, 18
      %v2359 = vpop.permute.xlu0 %2358
      %2360 = vrot.lane.b32.xlu0 %v2265, 18
      %v2361 = vpop.permute.xlu0 %2360
      %vm2394 = vcmask 167056
      %2395 = vst.msk [vmem:[#allocation2] sm:$0xf] %vm2394, %v2299
      %2396 = vst.msk [vmem:[#allocation2 + $0x4] sm:$0xf] %vm2394, %v2301
      %2397 = vst.msk [vmem:[#allocation2 + $0x8] sm:$0xf] %vm2394, %v2303
      %2398 = vst.msk [vmem:[#allocation2 + $0xc] sm:$0xf] %vm2394, %v2305
      %2399 = vst.msk [vmem:[#allocation2 + $0x10] sm:$0xf] %vm2394, %v2307
      %2400 = vst.msk [vmem:[#allocation2 + $0x14] sm:$0xf] %vm2394, %v2309
      %2401 = vst.msk [vmem:[#allocation2 + $0x18] sm:$0xf] %vm2394, %v2311
      %2402 = vst.msk [vmem:[#allocation2 + $0x1c] sm:$0xf] %vm2394, %v2313
      %2403 = vst.msk [vmem:[#allocation2 + $0x20] sm:$0xf] %vm2394, %v2315
      %2404 = vst.msk [vmem:[#allocation2 + $0x24] sm:$0xf] %vm2394, %v2317
      %2405 = vst.msk [vmem:[#allocation2 + $0x28] sm:$0xf] %vm2394, %v2319
      %2406 = vst.msk [vmem:[#allocation2 + $0x2c] sm:$0xf] %vm2394, %v2321
      %2407 = vst.msk [vmem:[#allocation2 + $0x30] sm:$0xf] %vm2394, %v2323
      %2408 = vst.msk [vmem:[#allocation2 + $0x34] sm:$0xf] %vm2394, %v2325
      %2409 = vst.msk [vmem:[#allocation2 + $0x38] sm:$0xf] %vm2394, %v2327
      %2410 = vst.msk [vmem:[#allocation2 + $0x3c] sm:$0xf] %vm2394, %v2329
      %2411 = vst.msk [vmem:[#allocation2 + $0x40] sm:$0xf] %vm2394, %v2331
      %2412 = vst.msk [vmem:[#allocation2 + $0x44] sm:$0xf] %vm2394, %v2333
      %2413 = vst.msk [vmem:[#allocation2 + $0x48] sm:$0xf] %vm2394, %v2335
      %2414 = vst.msk [vmem:[#allocation2 + $0x4c] sm:$0xf] %vm2394, %v2337
      %2415 = vst.msk [vmem:[#allocation2 + $0x50] sm:$0xf] %vm2394, %v2339
      %2416 = vst.msk [vmem:[#allocation2 + $0x54] sm:$0xf] %vm2394, %v2341
      %2417 = vst.msk [vmem:[#allocation2 + $0x58] sm:$0xf] %vm2394, %v2343
      %2418 = vst.msk [vmem:[#allocation2 + $0x5c] sm:$0xf] %vm2394, %v2345
      %2419 = vst.msk [vmem:[#allocation2 + $0x60] sm:$0xf] %vm2394, %v2347
      %2420 = vst.msk [vmem:[#allocation2 + $0x64] sm:$0xf] %vm2394, %v2349
      %2421 = vst.msk [vmem:[#allocation2 + $0x68] sm:$0xf] %vm2394, %v2351
      %2422 = vst.msk [vmem:[#allocation2 + $0x6c] sm:$0xf] %vm2394, %v2353
      %2423 = vst.msk [vmem:[#allocation2 + $0x70] sm:$0xf] %vm2394, %v2355
      %2424 = vst.msk [vmem:[#allocation2 + $0x74] sm:$0xf] %vm2394, %v2357
      %2425 = vst.msk [vmem:[#allocation2 + $0x78] sm:$0xf] %vm2394, %v2359
      %2426 = vst.msk [vmem:[#allocation2 + $0x7c] sm:$0xf] %vm2394, %v2361
      %v2427 = vld [vmem:[%s2233] sm:$0xf]
      %v2428 = vld [vmem:[%s2233 + $0x4] sm:$0xf]
      %v2429 = vld [vmem:[%s2233 + $0x8] sm:$0x1]
      %v2430 = vld [vmem:[%s2233 + $0xc] sm:$0xf]
      %v2431 = vld [vmem:[%s2233 + $0x10] sm:$0xf]
      %v2432 = vld [vmem:[%s2233 + $0x14] sm:$0x1]
      %v2433 = vld [vmem:[%s2233 + $0x18] sm:$0xf]
      %v2434 = vld [vmem:[%s2233 + $0x1c] sm:$0xf]
      %v2435 = vld [vmem:[%s2233 + $0x20] sm:$0x1]
      %v2436 = vld [vmem:[%s2233 + $0x24] sm:$0xf]
      %v2437 = vld [vmem:[%s2233 + $0x28] sm:$0xf]
      %v2438 = vld [vmem:[%s2233 + $0x2c] sm:$0x1]
      %v2439 = vld [vmem:[%s2233 + $0x30] sm:$0xf]
      %v2440 = vld [vmem:[%s2233 + $0x34] sm:$0xf]
      %v2441 = vld [vmem:[%s2233 + $0x38] sm:$0x1]
      %v2442 = vld [vmem:[%s2233 + $0x3c] sm:$0xf]
      %v2443 = vld [vmem:[%s2233 + $0x40] sm:$0xf]
      %v2444 = vld [vmem:[%s2233 + $0x44] sm:$0x1]
      %v2445 = vld [vmem:[%s2233 + $0x48] sm:$0xf]
      %v2446 = vld [vmem:[%s2233 + $0x4c] sm:$0xf]
      %v2447 = vld [vmem:[%s2233 + $0x50] sm:$0x1]
      %v2448 = vld [vmem:[%s2233 + $0x54] sm:$0xf]
      %v2449 = vld [vmem:[%s2233 + $0x58] sm:$0xf]
      %v2450 = vld [vmem:[%s2233 + $0x5c] sm:$0x1]
      %v2451 = vld [vmem:[%s2233 + $0x60] sm:$0xf]
      %v2452 = vld [vmem:[%s2233 + $0x64] sm:$0xf]
      %v2453 = vld [vmem:[%s2233 + $0x68] sm:$0x1]
      %v2454 = vld [vmem:[%s2233 + $0x6c] sm:$0xf]
      %v2455 = vld [vmem:[%s2233 + $0x70] sm:$0xf]
      %v2456 = vld [vmem:[%s2233 + $0x74] sm:$0x1]
      %v2457 = vld [vmem:[%s2233 + $0x78] sm:$0xf]
      %v2458 = vld [vmem:[%s2233 + $0x7c] sm:$0xf]
      %v2459 = vld [vmem:[%s2233 + $0x80] sm:$0x1]
      %v2460 = vld [vmem:[%s2233 + $0x84] sm:$0xf]
      %v2461 = vld [vmem:[%s2233 + $0x88] sm:$0xf]
      %v2462 = vld [vmem:[%s2233 + $0x8c] sm:$0x1]
      %v2463 = vld [vmem:[%s2233 + $0x90] sm:$0xf]
      %v2464 = vld [vmem:[%s2233 + $0x94] sm:$0xf]
      %v2465 = vld [vmem:[%s2233 + $0x98] sm:$0x1]
      %v2466 = vld [vmem:[%s2233 + $0x9c] sm:$0xf]
      %v2467 = vld [vmem:[%s2233 + $0xa0] sm:$0xf]
      %v2468 = vld [vmem:[%s2233 + $0xa4] sm:$0x1]
      %v2469 = vld [vmem:[%s2233 + $0xa8] sm:$0xf]
      %v2470 = vld [vmem:[%s2233 + $0xac] sm:$0xf]
      %v2471 = vld [vmem:[%s2233 + $0xb0] sm:$0x1]
      %v2472 = vld [vmem:[%s2233 + $0xb4] sm:$0xf]
      %v2473 = vld [vmem:[%s2233 + $0xb8] sm:$0xf]
      %v2474 = vld [vmem:[%s2233 + $0xbc] sm:$0x1]
      %v2476 = vshrl.u32 %v2427, 16
      %v2478 = vrot.slane %v2476, 4
      %v2479 = vshll.u32 %v2427, 16
      %v2481 = vrot.slane %v2479, 5
      %v2482 = vor.u32 %v2478, %v2481
      %v2483 = vrot.slane %v2482, 4
      %v2485 = vshll.u32 %v2428, 16
      %v2487 = vrot.slane %v2485, 5
      %v2488 = vsel %vm287, %v2483, %v2487
      %v2489 = vshrl.u32 %v2428, 16
      %v2491 = vrot.slane %v2489, 4
      %v2492 = vor.u32 %v2491, %v2487
      %v2493 = vrot.slane %v2492, 4
      %v2495 = vshll.u32 %v2429, 16
      %v2497 = vrot.slane %v2495, 5
      %v2498 = vsel %vm287, %v2493, %v2497
      %v2500 = vshrl.u32 %v2430, 16
      %v2502 = vrot.slane %v2500, 4
      %v2503 = vshll.u32 %v2430, 16
      %v2505 = vrot.slane %v2503, 5
      %v2506 = vor.u32 %v2502, %v2505
      %v2507 = vrot.slane %v2506, 4
      %v2509 = vshll.u32 %v2431, 16
      %v2511 = vrot.slane %v2509, 5
      %v2512 = vsel %vm287, %v2507, %v2511
      %v2513 = vshrl.u32 %v2431, 16
      %v2515 = vrot.slane %v2513, 4
      %v2516 = vor.u32 %v2515, %v2511
      %v2517 = vrot.slane %v2516, 4
      %v2519 = vshll.u32 %v2432, 16
      %v2521 = vrot.slane %v2519, 5
      %v2522 = vsel %vm287, %v2517, %v2521
      %v2524 = vshrl.u32 %v2433, 16
      %v2526 = vrot.slane %v2524, 4
      %v2527 = vshll.u32 %v2433, 16
      %v2529 = vrot.slane %v2527, 5
      %v2530 = vor.u32 %v2526, %v2529
      %v2531 = vrot.slane %v2530, 4
      %v2533 = vshll.u32 %v2434, 16
      %v2535 = vrot.slane %v2533, 5
      %v2536 = vsel %vm287, %v2531, %v2535
      %v2537 = vshrl.u32 %v2434, 16
      %v2539 = vrot.slane %v2537, 4
      %v2540 = vor.u32 %v2539, %v2535
      %v2541 = vrot.slane %v2540, 4
      %v2543 = vshll.u32 %v2435, 16
      %v2545 = vrot.slane %v2543, 5
      %v2546 = vsel %vm287, %v2541, %v2545
      %v2548 = vshrl.u32 %v2436, 16
      %v2550 = vrot.slane %v2548, 4
      %v2551 = vshll.u32 %v2436, 16
      %v2553 = vrot.slane %v2551, 5
      %v2554 = vor.u32 %v2550, %v2553
      %v2555 = vrot.slane %v2554, 4
      %v2557 = vshll.u32 %v2437, 16
      %v2559 = vrot.slane %v2557, 5
      %v2560 = vsel %vm287, %v2555, %v2559
      %v2561 = vshrl.u32 %v2437, 16
      %v2563 = vrot.slane %v2561, 4
      %v2564 = vor.u32 %v2563, %v2559
      %v2565 = vrot.slane %v2564, 4
      %v2567 = vshll.u32 %v2438, 16
      %v2569 = vrot.slane %v2567, 5
      %v2570 = vsel %vm287, %v2565, %v2569
      %v2572 = vshrl.u32 %v2439, 16
      %v2574 = vrot.slane %v2572, 4
      %v2575 = vshll.u32 %v2439, 16
      %v2577 = vrot.slane %v2575, 5
      %v2578 = vor.u32 %v2574, %v2577
      %v2579 = vrot.slane %v2578, 4
      %v2581 = vshll.u32 %v2440, 16
      %v2583 = vrot.slane %v2581, 5
      %v2584 = vsel %vm287, %v2579, %v2583
      %v2585 = vshrl.u32 %v2440, 16
      %v2587 = vrot.slane %v2585, 4
      %v2588 = vor.u32 %v2587, %v2583
      %v2589 = vrot.slane %v2588, 4
      %v2591 = vshll.u32 %v2441, 16
      %v2593 = vrot.slane %v2591, 5
      %v2594 = vsel %vm287, %v2589, %v2593
      %v2596 = vshrl.u32 %v2442, 16
      %v2598 = vrot.slane %v2596, 4
      %v2599 = vshll.u32 %v2442, 16
      %v2601 = vrot.slane %v2599, 5
      %v2602 = vor.u32 %v2598, %v2601
      %v2603 = vrot.slane %v2602, 4
      %v2605 = vshll.u32 %v2443, 16
      %v2607 = vrot.slane %v2605, 5
      %v2608 = vsel %vm287, %v2603, %v2607
      %v2609 = vshrl.u32 %v2443, 16
      %v2611 = vrot.slane %v2609, 4
      %v2612 = vor.u32 %v2611, %v2607
      %v2613 = vrot.slane %v2612, 4
      %v2615 = vshll.u32 %v2444, 16
      %v2617 = vrot.slane %v2615, 5
      %v2618 = vsel %vm287, %v2613, %v2617
      %v2620 = vshrl.u32 %v2445, 16
      %v2622 = vrot.slane %v2620, 4
      %v2623 = vshll.u32 %v2445, 16
      %v2625 = vrot.slane %v2623, 5
      %v2626 = vor.u32 %v2622, %v2625
      %v2627 = vrot.slane %v2626, 4
      %v2629 = vshll.u32 %v2446, 16
      %v2631 = vrot.slane %v2629, 5
      %v2632 = vsel %vm287, %v2627, %v2631
      %v2633 = vshrl.u32 %v2446, 16
      %v2635 = vrot.slane %v2633, 4
      %v2636 = vor.u32 %v2635, %v2631
      %v2637 = vrot.slane %v2636, 4
      %v2639 = vshll.u32 %v2447, 16
      %v2641 = vrot.slane %v2639, 5
      %v2642 = vsel %vm287, %v2637, %v2641
      %v2644 = vshrl.u32 %v2448, 16
      %v2646 = vrot.slane %v2644, 4
      %v2647 = vshll.u32 %v2448, 16
      %v2649 = vrot.slane %v2647, 5
      %v2650 = vor.u32 %v2646, %v2649
      %v2651 = vrot.slane %v2650, 4
      %v2653 = vshll.u32 %v2449, 16
      %v2655 = vrot.slane %v2653, 5
      %v2656 = vsel %vm287, %v2651, %v2655
      %v2657 = vshrl.u32 %v2449, 16
      %v2659 = vrot.slane %v2657, 4
      %v2660 = vor.u32 %v2659, %v2655
      %v2661 = vrot.slane %v2660, 4
      %v2663 = vshll.u32 %v2450, 16
      %v2665 = vrot.slane %v2663, 5
      %v2666 = vsel %vm287, %v2661, %v2665
      %v2668 = vshrl.u32 %v2451, 16
      %v2670 = vrot.slane %v2668, 4
      %v2671 = vshll.u32 %v2451, 16
      %v2673 = vrot.slane %v2671, 5
      %v2674 = vor.u32 %v2670, %v2673
      %v2675 = vrot.slane %v2674, 4
      %v2677 = vshll.u32 %v2452, 16
      %v2679 = vrot.slane %v2677, 5
      %v2680 = vsel %vm287, %v2675, %v2679
      %v2681 = vshrl.u32 %v2452, 16
      %v2683 = vrot.slane %v2681, 4
      %v2684 = vor.u32 %v2683, %v2679
      %v2685 = vrot.slane %v2684, 4
      %v2687 = vshll.u32 %v2453, 16
      %v2689 = vrot.slane %v2687, 5
      %v2690 = vsel %vm287, %v2685, %v2689
      %v2692 = vshrl.u32 %v2454, 16
      %v2694 = vrot.slane %v2692, 4
      %v2695 = vshll.u32 %v2454, 16
      %v2697 = vrot.slane %v2695, 5
      %v2698 = vor.u32 %v2694, %v2697
      %v2699 = vrot.slane %v2698, 4
      %v2701 = vshll.u32 %v2455, 16
      %v2703 = vrot.slane %v2701, 5
      %v2704 = vsel %vm287, %v2699, %v2703
      %v2705 = vshrl.u32 %v2455, 16
      %v2707 = vrot.slane %v2705, 4
      %v2708 = vor.u32 %v2707, %v2703
      %v2709 = vrot.slane %v2708, 4
      %v2711 = vshll.u32 %v2456, 16
      %v2713 = vrot.slane %v2711, 5
      %v2714 = vsel %vm287, %v2709, %v2713
      %v2716 = vshrl.u32 %v2457, 16
      %v2718 = vrot.slane %v2716, 4
      %v2719 = vshll.u32 %v2457, 16
      %v2721 = vrot.slane %v2719, 5
      %v2722 = vor.u32 %v2718, %v2721
      %v2723 = vrot.slane %v2722, 4
      %v2725 = vshll.u32 %v2458, 16
      %v2727 = vrot.slane %v2725, 5
      %v2728 = vsel %vm287, %v2723, %v2727
      %v2729 = vshrl.u32 %v2458, 16
      %v2731 = vrot.slane %v2729, 4
      %v2732 = vor.u32 %v2731, %v2727
      %v2733 = vrot.slane %v2732, 4
      %v2735 = vshll.u32 %v2459, 16
      %v2737 = vrot.slane %v2735, 5
      %v2738 = vsel %vm287, %v2733, %v2737
      %v2740 = vshrl.u32 %v2460, 16
      %v2742 = vrot.slane %v2740, 4
      %v2743 = vshll.u32 %v2460, 16
      %v2745 = vrot.slane %v2743, 5
      %v2746 = vor.u32 %v2742, %v2745
      %v2747 = vrot.slane %v2746, 4
      %v2749 = vshll.u32 %v2461, 16
      %v2751 = vrot.slane %v2749, 5
      %v2752 = vsel %vm287, %v2747, %v2751
      %v2753 = vshrl.u32 %v2461, 16
      %v2755 = vrot.slane %v2753, 4
      %v2756 = vor.u32 %v2755, %v2751
      %v2757 = vrot.slane %v2756, 4
      %v2759 = vshll.u32 %v2462, 16
      %v2761 = vrot.slane %v2759, 5
      %v2762 = vsel %vm287, %v2757, %v2761
      %v2764 = vshrl.u32 %v2463, 16
      %v2766 = vrot.slane %v2764, 4
      %v2767 = vshll.u32 %v2463, 16
      %v2769 = vrot.slane %v2767, 5
      %v2770 = vor.u32 %v2766, %v2769
      %v2771 = vrot.slane %v2770, 4
      %v2773 = vshll.u32 %v2464, 16
      %v2775 = vrot.slane %v2773, 5
      %v2776 = vsel %vm287, %v2771, %v2775
      %v2777 = vshrl.u32 %v2464, 16
      %v2779 = vrot.slane %v2777, 4
      %v2780 = vor.u32 %v2779, %v2775
      %v2781 = vrot.slane %v2780, 4
      %v2783 = vshll.u32 %v2465, 16
      %v2785 = vrot.slane %v2783, 5
      %v2786 = vsel %vm287, %v2781, %v2785
      %v2788 = vshrl.u32 %v2466, 16
      %v2790 = vrot.slane %v2788, 4
      %v2791 = vshll.u32 %v2466, 16
      %v2793 = vrot.slane %v2791, 5
      %v2794 = vor.u32 %v2790, %v2793
      %v2795 = vrot.slane %v2794, 4
      %v2797 = vshll.u32 %v2467, 16
      %v2799 = vrot.slane %v2797, 5
      %v2800 = vsel %vm287, %v2795, %v2799
      %v2801 = vshrl.u32 %v2467, 16
      %v2803 = vrot.slane %v2801, 4
      %v2804 = vor.u32 %v2803, %v2799
      %v2805 = vrot.slane %v2804, 4
      %v2807 = vshll.u32 %v2468, 16
      %v2809 = vrot.slane %v2807, 5
      %v2810 = vsel %vm287, %v2805, %v2809
      %v2812 = vshrl.u32 %v2469, 16
      %v2814 = vrot.slane %v2812, 4
      %v2815 = vshll.u32 %v2469, 16
      %v2817 = vrot.slane %v2815, 5
      %v2818 = vor.u32 %v2814, %v2817
      %v2819 = vrot.slane %v2818, 4
      %v2821 = vshll.u32 %v2470, 16
      %v2823 = vrot.slane %v2821, 5
      %v2824 = vsel %vm287, %v2819, %v2823
      %v2825 = vshrl.u32 %v2470, 16
      %v2827 = vrot.slane %v2825, 4
      %v2828 = vor.u32 %v2827, %v2823
      %v2829 = vrot.slane %v2828, 4
      %v2831 = vshll.u32 %v2471, 16
      %v2833 = vrot.slane %v2831, 5
      %v2834 = vsel %vm287, %v2829, %v2833
      %v2836 = vshrl.u32 %v2472, 16
      %v2838 = vrot.slane %v2836, 4
      %v2839 = vshll.u32 %v2472, 16
      %v2841 = vrot.slane %v2839, 5
      %v2842 = vor.u32 %v2838, %v2841
      %v2843 = vrot.slane %v2842, 4
      %v2845 = vshll.u32 %v2473, 16
      %v2847 = vrot.slane %v2845, 5
      %v2848 = vsel %vm287, %v2843, %v2847
      %v2849 = vshrl.u32 %v2473, 16
      %v2851 = vrot.slane %v2849, 4
      %v2852 = vor.u32 %v2851, %v2847
      %v2853 = vrot.slane %v2852, 4
      %v2855 = vshll.u32 %v2474, 16
      %v2857 = vrot.slane %v2855, 5
      %v2858 = vsel %vm287, %v2853, %v2857
      %2859 = vrot.lane.b32.xlu0 %v2488, 21
      %v2860 = vpop.permute.xlu0 %2859
      %2861 = vrot.lane.b32.xlu0 %v2498, 21
      %v2862 = vpop.permute.xlu0 %2861
      %2863 = vrot.lane.b32.xlu0 %v2512, 21
      %v2864 = vpop.permute.xlu0 %2863
      %2865 = vrot.lane.b32.xlu0 %v2522, 21
      %v2866 = vpop.permute.xlu0 %2865
      %2867 = vrot.lane.b32.xlu0 %v2536, 21
      %v2868 = vpop.permute.xlu0 %2867
      %2869 = vrot.lane.b32.xlu0 %v2546, 21
      %v2870 = vpop.permute.xlu0 %2869
      %2871 = vrot.lane.b32.xlu0 %v2560, 21
      %v2872 = vpop.permute.xlu0 %2871
      %2873 = vrot.lane.b32.xlu0 %v2570, 21
      %v2874 = vpop.permute.xlu0 %2873
      %2875 = vrot.lane.b32.xlu0 %v2584, 21
      %v2876 = vpop.permute.xlu0 %2875
      %2877 = vrot.lane.b32.xlu0 %v2594, 21
      %v2878 = vpop.permute.xlu0 %2877
      %2879 = vrot.lane.b32.xlu0 %v2608, 21
      %v2880 = vpop.permute.xlu0 %2879
      %2881 = vrot.lane.b32.xlu0 %v2618, 21
      %v2882 = vpop.permute.xlu0 %2881
      %2883 = vrot.lane.b32.xlu0 %v2632, 21
      %v2884 = vpop.permute.xlu0 %2883
      %2885 = vrot.lane.b32.xlu0 %v2642, 21
      %v2886 = vpop.permute.xlu0 %2885
      %2887 = vrot.lane.b32.xlu0 %v2656, 21
      %v2888 = vpop.permute.xlu0 %2887
      %2889 = vrot.lane.b32.xlu0 %v2666, 21
      %v2890 = vpop.permute.xlu0 %2889
      %2891 = vrot.lane.b32.xlu0 %v2680, 21
      %v2892 = vpop.permute.xlu0 %2891
      %2893 = vrot.lane.b32.xlu0 %v2690, 21
      %v2894 = vpop.permute.xlu0 %2893
      %2895 = vrot.lane.b32.xlu0 %v2704, 21
      %v2896 = vpop.permute.xlu0 %2895
      %2897 = vrot.lane.b32.xlu0 %v2714, 21
      %v2898 = vpop.permute.xlu0 %2897
      %2899 = vrot.lane.b32.xlu0 %v2728, 21
      %v2900 = vpop.permute.xlu0 %2899
      %2901 = vrot.lane.b32.xlu0 %v2738, 21
      %v2902 = vpop.permute.xlu0 %2901
      %2903 = vrot.lane.b32.xlu0 %v2752, 21
      %v2904 = vpop.permute.xlu0 %2903
      %2905 = vrot.lane.b32.xlu0 %v2762, 21
      %v2906 = vpop.permute.xlu0 %2905
      %2907 = vrot.lane.b32.xlu0 %v2776, 21
      %v2908 = vpop.permute.xlu0 %2907
      %2909 = vrot.lane.b32.xlu0 %v2786, 21
      %v2910 = vpop.permute.xlu0 %2909
      %2911 = vrot.lane.b32.xlu0 %v2800, 21
      %v2912 = vpop.permute.xlu0 %2911
      %2913 = vrot.lane.b32.xlu0 %v2810, 21
      %v2914 = vpop.permute.xlu0 %2913
      %2915 = vrot.lane.b32.xlu0 %v2824, 21
      %v2916 = vpop.permute.xlu0 %2915
      %2917 = vrot.lane.b32.xlu0 %v2834, 21
      %v2918 = vpop.permute.xlu0 %2917
      %2919 = vrot.lane.b32.xlu0 %v2848, 21
      %v2920 = vpop.permute.xlu0 %2919
      %2921 = vrot.lane.b32.xlu0 %v2858, 21
      %v2922 = vpop.permute.xlu0 %2921
      %vm2955 = vcmask 191656
      %2956 = vst.msk [vmem:[#allocation2] sm:$0xf] %vm2955, %v2860
      %2957 = vst.msk [vmem:[#allocation2 + $0x4] sm:$0xf] %vm2955, %v2862
      %2958 = vst.msk [vmem:[#allocation2 + $0x8] sm:$0xf] %vm2955, %v2864
      %2959 = vst.msk [vmem:[#allocation2 + $0xc] sm:$0xf] %vm2955, %v2866
      %2960 = vst.msk [vmem:[#allocation2 + $0x10] sm:$0xf] %vm2955, %v2868
      %2961 = vst.msk [vmem:[#allocation2 + $0x14] sm:$0xf] %vm2955, %v2870
      %2962 = vst.msk [vmem:[#allocation2 + $0x18] sm:$0xf] %vm2955, %v2872
      %2963 = vst.msk [vmem:[#allocation2 + $0x1c] sm:$0xf] %vm2955, %v2874
      %2964 = vst.msk [vmem:[#allocation2 + $0x20] sm:$0xf] %vm2955, %v2876
      %2965 = vst.msk [vmem:[#allocation2 + $0x24] sm:$0xf] %vm2955, %v2878
      %2966 = vst.msk [vmem:[#allocation2 + $0x28] sm:$0xf] %vm2955, %v2880
      %2967 = vst.msk [vmem:[#allocation2 + $0x2c] sm:$0xf] %vm2955, %v2882
      %2968 = vst.msk [vmem:[#allocation2 + $0x30] sm:$0xf] %vm2955, %v2884
      %2969 = vst.msk [vmem:[#allocation2 + $0x34] sm:$0xf] %vm2955, %v2886
      %2970 = vst.msk [vmem:[#allocation2 + $0x38] sm:$0xf] %vm2955, %v2888
      %2971 = vst.msk [vmem:[#allocation2 + $0x3c] sm:$0xf] %vm2955, %v2890
      %2972 = vst.msk [vmem:[#allocation2 + $0x40] sm:$0xf] %vm2955, %v2892
      %2973 = vst.msk [vmem:[#allocation2 + $0x44] sm:$0xf] %vm2955, %v2894
      %2974 = vst.msk [vmem:[#allocation2 + $0x48] sm:$0xf] %vm2955, %v2896
      %2975 = vst.msk [vmem:[#allocation2 + $0x4c] sm:$0xf] %vm2955, %v2898
      %2976 = vst.msk [vmem:[#allocation2 + $0x50] sm:$0xf] %vm2955, %v2900
      %2977 = vst.msk [vmem:[#allocation2 + $0x54] sm:$0xf] %vm2955, %v2902
      %2978 = vst.msk [vmem:[#allocation2 + $0x58] sm:$0xf] %vm2955, %v2904
      %2979 = vst.msk [vmem:[#allocation2 + $0x5c] sm:$0xf] %vm2955, %v2906
      %2980 = vst.msk [vmem:[#allocation2 + $0x60] sm:$0xf] %vm2955, %v2908
      %2981 = vst.msk [vmem:[#allocation2 + $0x64] sm:$0xf] %vm2955, %v2910
      %2982 = vst.msk [vmem:[#allocation2 + $0x68] sm:$0xf] %vm2955, %v2912
      %2983 = vst.msk [vmem:[#allocation2 + $0x6c] sm:$0xf] %vm2955, %v2914
      %2984 = vst.msk [vmem:[#allocation2 + $0x70] sm:$0xf] %vm2955, %v2916
      %2985 = vst.msk [vmem:[#allocation2 + $0x74] sm:$0xf] %vm2955, %v2918
      %2986 = vst.msk [vmem:[#allocation2 + $0x78] sm:$0xf] %vm2955, %v2920
      %2987 = vst.msk [vmem:[#allocation2 + $0x7c] sm:$0xf] %vm2955, %v2922
      %v2988 = vld [vmem:[%s2233] sm:$0xe]
      %v2989 = vld [vmem:[%s2233 + $0x4] sm:$0xf]
      %v2990 = vld [vmem:[%s2233 + $0x8] sm:$0x1]
      %v2991 = vld [vmem:[%s2233 + $0xc] sm:$0xe]
      %v2992 = vld [vmem:[%s2233 + $0x10] sm:$0xf]
      %v2993 = vld [vmem:[%s2233 + $0x14] sm:$0x1]
      %v2994 = vld [vmem:[%s2233 + $0x18] sm:$0xe]
      %v2995 = vld [vmem:[%s2233 + $0x1c] sm:$0xf]
      %v2996 = vld [vmem:[%s2233 + $0x20] sm:$0x1]
      %v2997 = vld [vmem:[%s2233 + $0x24] sm:$0xe]
      %v2998 = vld [vmem:[%s2233 + $0x28] sm:$0xf]
      %v2999 = vld [vmem:[%s2233 + $0x2c] sm:$0x1]
      %v3000 = vld [vmem:[%s2233 + $0x30] sm:$0xe]
      %v3001 = vld [vmem:[%s2233 + $0x34] sm:$0xf]
      %v3002 = vld [vmem:[%s2233 + $0x38] sm:$0x1]
      %v3003 = vld [vmem:[%s2233 + $0x3c] sm:$0xe]
      %v3004 = vld [vmem:[%s2233 + $0x40] sm:$0xf]
      %v3005 = vld [vmem:[%s2233 + $0x44] sm:$0x1]
      %v3006 = vld [vmem:[%s2233 + $0x48] sm:$0xe]
      %v3007 = vld [vmem:[%s2233 + $0x4c] sm:$0xf]
      %v3008 = vld [vmem:[%s2233 + $0x50] sm:$0x1]
      %v3009 = vld [vmem:[%s2233 + $0x54] sm:$0xe]
      %v3010 = vld [vmem:[%s2233 + $0x58] sm:$0xf]
      %v3011 = vld [vmem:[%s2233 + $0x5c] sm:$0x1]
      %v3012 = vld [vmem:[%s2233 + $0x60] sm:$0xe]
      %v3013 = vld [vmem:[%s2233 + $0x64] sm:$0xf]
      %v3014 = vld [vmem:[%s2233 + $0x68] sm:$0x1]
      %v3015 = vld [vmem:[%s2233 + $0x6c] sm:$0xe]
      %v3016 = vld [vmem:[%s2233 + $0x70] sm:$0xf]
      %v3017 = vld [vmem:[%s2233 + $0x74] sm:$0x1]
      %v3018 = vld [vmem:[%s2233 + $0x78] sm:$0xe]
      %v3019 = vld [vmem:[%s2233 + $0x7c] sm:$0xf]
      %v3020 = vld [vmem:[%s2233 + $0x80] sm:$0x1]
      %v3021 = vld [vmem:[%s2233 + $0x84] sm:$0xe]
      %v3022 = vld [vmem:[%s2233 + $0x88] sm:$0xf]
      %v3023 = vld [vmem:[%s2233 + $0x8c] sm:$0x1]
      %v3024 = vld [vmem:[%s2233 + $0x90] sm:$0xe]
      %v3025 = vld [vmem:[%s2233 + $0x94] sm:$0xf]
      %v3026 = vld [vmem:[%s2233 + $0x98] sm:$0x1]
      %v3027 = vld [vmem:[%s2233 + $0x9c] sm:$0xe]
      %v3028 = vld [vmem:[%s2233 + $0xa0] sm:$0xf]
      %v3029 = vld [vmem:[%s2233 + $0xa4] sm:$0x1]
      %v3030 = vld [vmem:[%s2233 + $0xa8] sm:$0xe]
      %v3031 = vld [vmem:[%s2233 + $0xac] sm:$0xf]
      %v3032 = vld [vmem:[%s2233 + $0xb0] sm:$0x1]
      %v3033 = vld [vmem:[%s2233 + $0xb4] sm:$0xe]
      %v3034 = vld [vmem:[%s2233 + $0xb8] sm:$0xf]
      %v3035 = vld [vmem:[%s2233 + $0xbc] sm:$0x1]
      %v3084 = vrot.slane %v2988, 5
      %v3085 = vrot.slane %v3084, 4
      %v3086 = vrot.slane %v2989, 5
      %v3087 = vsel %vm899, %v3085, %v3086
      %v3088 = vrot.slane %v3086, 4
      %v3089 = vrot.slane %v2990, 5
      %v3090 = vsel %vm899, %v3088, %v3089
      %v3091 = vrot.slane %v2991, 5
      %v3092 = vrot.slane %v3091, 4
      %v3093 = vrot.slane %v2992, 5
      %v3094 = vsel %vm899, %v3092, %v3093
      %v3095 = vrot.slane %v3093, 4
      %v3096 = vrot.slane %v2993, 5
      %v3097 = vsel %vm899, %v3095, %v3096
      %v3098 = vrot.slane %v2994, 5
      %v3099 = vrot.slane %v3098, 4
      %v3100 = vrot.slane %v2995, 5
      %v3101 = vsel %vm899, %v3099, %v3100
      %v3102 = vrot.slane %v3100, 4
      %v3103 = vrot.slane %v2996, 5
      %v3104 = vsel %vm899, %v3102, %v3103
      %v3105 = vrot.slane %v2997, 5
      %v3106 = vrot.slane %v3105, 4
      %v3107 = vrot.slane %v2998, 5
      %v3108 = vsel %vm899, %v3106, %v3107
      %v3109 = vrot.slane %v3107, 4
      %v3110 = vrot.slane %v2999, 5
      %v3111 = vsel %vm899, %v3109, %v3110
      %v3112 = vrot.slane %v3000, 5
      %v3113 = vrot.slane %v3112, 4
      %v3114 = vrot.slane %v3001, 5
      %v3115 = vsel %vm899, %v3113, %v3114
      %v3116 = vrot.slane %v3114, 4
      %v3117 = vrot.slane %v3002, 5
      %v3118 = vsel %vm899, %v3116, %v3117
      %v3119 = vrot.slane %v3003, 5
      %v3120 = vrot.slane %v3119, 4
      %v3121 = vrot.slane %v3004, 5
      %v3122 = vsel %vm899, %v3120, %v3121
      %v3123 = vrot.slane %v3121, 4
      %v3124 = vrot.slane %v3005, 5
      %v3125 = vsel %vm899, %v3123, %v3124
      %v3126 = vrot.slane %v3006, 5
      %v3127 = vrot.slane %v3126, 4
      %v3128 = vrot.slane %v3007, 5
      %v3129 = vsel %vm899, %v3127, %v3128
      %v3130 = vrot.slane %v3128, 4
      %v3131 = vrot.slane %v3008, 5
      %v3132 = vsel %vm899, %v3130, %v3131
      %v3133 = vrot.slane %v3009, 5
      %v3134 = vrot.slane %v3133, 4
      %v3135 = vrot.slane %v3010, 5
      %v3136 = vsel %vm899, %v3134, %v3135
      %v3137 = vrot.slane %v3135, 4
      %v3138 = vrot.slane %v3011, 5
      %v3139 = vsel %vm899, %v3137, %v3138
      %v3140 = vrot.slane %v3012, 5
      %v3141 = vrot.slane %v3140, 4
      %v3142 = vrot.slane %v3013, 5
      %v3143 = vsel %vm899, %v3141, %v3142
      %v3144 = vrot.slane %v3142, 4
      %v3145 = vrot.slane %v3014, 5
      %v3146 = vsel %vm899, %v3144, %v3145
      %v3147 = vrot.slane %v3015, 5
      %v3148 = vrot.slane %v3147, 4
      %v3149 = vrot.slane %v3016, 5
      %v3150 = vsel %vm899, %v3148, %v3149
      %v3151 = vrot.slane %v3149, 4
      %v3152 = vrot.slane %v3017, 5
      %v3153 = vsel %vm899, %v3151, %v3152
      %v3154 = vrot.slane %v3018, 5
      %v3155 = vrot.slane %v3154, 4
      %v3156 = vrot.slane %v3019, 5
      %v3157 = vsel %vm899, %v3155, %v3156
      %v3158 = vrot.slane %v3156, 4
      %v3159 = vrot.slane %v3020, 5
      %v3160 = vsel %vm899, %v3158, %v3159
      %v3161 = vrot.slane %v3021, 5
      %v3162 = vrot.slane %v3161, 4
      %v3163 = vrot.slane %v3022, 5
      %v3164 = vsel %vm899, %v3162, %v3163
      %v3165 = vrot.slane %v3163, 4
      %v3166 = vrot.slane %v3023, 5
      %v3167 = vsel %vm899, %v3165, %v3166
      %v3168 = vrot.slane %v3024, 5
      %v3169 = vrot.slane %v3168, 4
      %v3170 = vrot.slane %v3025, 5
      %v3171 = vsel %vm899, %v3169, %v3170
      %v3172 = vrot.slane %v3170, 4
      %v3173 = vrot.slane %v3026, 5
      %v3174 = vsel %vm899, %v3172, %v3173
      %v3175 = vrot.slane %v3027, 5
      %v3176 = vrot.slane %v3175, 4
      %v3177 = vrot.slane %v3028, 5
      %v3178 = vsel %vm899, %v3176, %v3177
      %v3179 = vrot.slane %v3177, 4
      %v3180 = vrot.slane %v3029, 5
      %v3181 = vsel %vm899, %v3179, %v3180
      %v3182 = vrot.slane %v3030, 5
      %v3183 = vrot.slane %v3182, 4
      %v3184 = vrot.slane %v3031, 5
      %v3185 = vsel %vm899, %v3183, %v3184
      %v3186 = vrot.slane %v3184, 4
      %v3187 = vrot.slane %v3032, 5
      %v3188 = vsel %vm899, %v3186, %v3187
      %v3189 = vrot.slane %v3033, 5
      %v3190 = vrot.slane %v3189, 4
      %v3191 = vrot.slane %v3034, 5
      %v3192 = vsel %vm899, %v3190, %v3191
      %v3193 = vrot.slane %v3191, 4
      %v3194 = vrot.slane %v3035, 5
      %v3195 = vsel %vm899, %v3193, %v3194
      %3196 = vrot.lane.b32.xlu0 %v3087, 24
      %v3197 = vpop.permute.xlu0 %3196
      %3198 = vrot.lane.b32.xlu0 %v3090, 24
      %v3199 = vpop.permute.xlu0 %3198
      %3200 = vrot.lane.b32.xlu0 %v3094, 24
      %v3201 = vpop.permute.xlu0 %3200
      %3202 = vrot.lane.b32.xlu0 %v3097, 24
      %v3203 = vpop.permute.xlu0 %3202
      %3204 = vrot.lane.b32.xlu0 %v3101, 24
      %v3205 = vpop.permute.xlu0 %3204
      %3206 = vrot.lane.b32.xlu0 %v3104, 24
      %v3207 = vpop.permute.xlu0 %3206
      %3208 = vrot.lane.b32.xlu0 %v3108, 24
      %v3209 = vpop.permute.xlu0 %3208
      %3210 = vrot.lane.b32.xlu0 %v3111, 24
      %v3211 = vpop.permute.xlu0 %3210
      %3212 = vrot.lane.b32.xlu0 %v3115, 24
      %v3213 = vpop.permute.xlu0 %3212
      %3214 = vrot.lane.b32.xlu0 %v3118, 24
      %v3215 = vpop.permute.xlu0 %3214
      %3216 = vrot.lane.b32.xlu0 %v3122, 24
      %v3217 = vpop.permute.xlu0 %3216
      %3218 = vrot.lane.b32.xlu0 %v3125, 24
      %v3219 = vpop.permute.xlu0 %3218
      %3220 = vrot.lane.b32.xlu0 %v3129, 24
      %v3221 = vpop.permute.xlu0 %3220
      %3222 = vrot.lane.b32.xlu0 %v3132, 24
      %v3223 = vpop.permute.xlu0 %3222
      %3224 = vrot.lane.b32.xlu0 %v3136, 24
      %v3225 = vpop.permute.xlu0 %3224
      %3226 = vrot.lane.b32.xlu0 %v3139, 24
      %v3227 = vpop.permute.xlu0 %3226
      %3228 = vrot.lane.b32.xlu0 %v3143, 24
      %v3229 = vpop.permute.xlu0 %3228
      %3230 = vrot.lane.b32.xlu0 %v3146, 24
      %v3231 = vpop.permute.xlu0 %3230
      %3232 = vrot.lane.b32.xlu0 %v3150, 24
      %v3233 = vpop.permute.xlu0 %3232
      %3234 = vrot.lane.b32.xlu0 %v3153, 24
      %v3235 = vpop.permute.xlu0 %3234
      %3236 = vrot.lane.b32.xlu0 %v3157, 24
      %v3237 = vpop.permute.xlu0 %3236
      %3238 = vrot.lane.b32.xlu0 %v3160, 24
      %v3239 = vpop.permute.xlu0 %3238
      %3240 = vrot.lane.b32.xlu0 %v3164, 24
      %v3241 = vpop.permute.xlu0 %3240
      %3242 = vrot.lane.b32.xlu0 %v3167, 24
      %v3243 = vpop.permute.xlu0 %3242
      %3244 = vrot.lane.b32.xlu0 %v3171, 24
      %v3245 = vpop.permute.xlu0 %3244
      %3246 = vrot.lane.b32.xlu0 %v3174, 24
      %v3247 = vpop.permute.xlu0 %3246
      %3248 = vrot.lane.b32.xlu0 %v3178, 24
      %v3249 = vpop.permute.xlu0 %3248
      %3250 = vrot.lane.b32.xlu0 %v3181, 24
      %v3251 = vpop.permute.xlu0 %3250
      %3252 = vrot.lane.b32.xlu0 %v3185, 24
      %v3253 = vpop.permute.xlu0 %3252
      %3254 = vrot.lane.b32.xlu0 %v3188, 24
      %v3255 = vpop.permute.xlu0 %3254
      %3256 = vrot.lane.b32.xlu0 %v3192, 24
      %v3257 = vpop.permute.xlu0 %3256
      %3258 = vrot.lane.b32.xlu0 %v3195, 24
      %v3259 = vpop.permute.xlu0 %3258
      %vm3292 = vcmask 216256
      %3293 = vst.msk [vmem:[#allocation2] sm:$0xf] %vm3292, %v3197
      %3294 = vst.msk [vmem:[#allocation2 + $0x4] sm:$0xf] %vm3292, %v3199
      %3295 = vst.msk [vmem:[#allocation2 + $0x8] sm:$0xf] %vm3292, %v3201
      %3296 = vst.msk [vmem:[#allocation2 + $0xc] sm:$0xf] %vm3292, %v3203
      %3297 = vst.msk [vmem:[#allocation2 + $0x10] sm:$0xf] %vm3292, %v3205
      %3298 = vst.msk [vmem:[#allocation2 + $0x14] sm:$0xf] %vm3292, %v3207
      %3299 = vst.msk [vmem:[#allocation2 + $0x18] sm:$0xf] %vm3292, %v3209
      %3300 = vst.msk [vmem:[#allocation2 + $0x1c] sm:$0xf] %vm3292, %v3211
      %3301 = vst.msk [vmem:[#allocation2 + $0x20] sm:$0xf] %vm3292, %v3213
      %3302 = vst.msk [vmem:[#allocation2 + $0x24] sm:$0xf] %vm3292, %v3215
      %3303 = vst.msk [vmem:[#allocation2 + $0x28] sm:$0xf] %vm3292, %v3217
      %3304 = vst.msk [vmem:[#allocation2 + $0x2c] sm:$0xf] %vm3292, %v3219
      %3305 = vst.msk [vmem:[#allocation2 + $0x30] sm:$0xf] %vm3292, %v3221
      %3306 = vst.msk [vmem:[#allocation2 + $0x34] sm:$0xf] %vm3292, %v3223
      %3307 = vst.msk [vmem:[#allocation2 + $0x38] sm:$0xf] %vm3292, %v3225
      %3308 = vst.msk [vmem:[#allocation2 + $0x3c] sm:$0xf] %vm3292, %v3227
      %3309 = vst.msk [vmem:[#allocation2 + $0x40] sm:$0xf] %vm3292, %v3229
      %3310 = vst.msk [vmem:[#allocation2 + $0x44] sm:$0xf] %vm3292, %v3231
      %3311 = vst.msk [vmem:[#allocation2 + $0x48] sm:$0xf] %vm3292, %v3233
      %3312 = vst.msk [vmem:[#allocation2 + $0x4c] sm:$0xf] %vm3292, %v3235
      %3313 = vst.msk [vmem:[#allocation2 + $0x50] sm:$0xf] %vm3292, %v3237
      %3314 = vst.msk [vmem:[#allocation2 + $0x54] sm:$0xf] %vm3292, %v3239
      %3315 = vst.msk [vmem:[#allocation2 + $0x58] sm:$0xf] %vm3292, %v3241
      %3316 = vst.msk [vmem:[#allocation2 + $0x5c] sm:$0xf] %vm3292, %v3243
      %3317 = vst.msk [vmem:[#allocation2 + $0x60] sm:$0xf] %vm3292, %v3245
      %3318 = vst.msk [vmem:[#allocation2 + $0x64] sm:$0xf] %vm3292, %v3247
      %3319 = vst.msk [vmem:[#allocation2 + $0x68] sm:$0xf] %vm3292, %v3249
      %3320 = vst.msk [vmem:[#allocation2 + $0x6c] sm:$0xf] %vm3292, %v3251
      %3321 = vst.msk [vmem:[#allocation2 + $0x70] sm:$0xf] %vm3292, %v3253
      %3322 = vst.msk [vmem:[#allocation2 + $0x74] sm:$0xf] %vm3292, %v3255
      %3323 = vst.msk [vmem:[#allocation2 + $0x78] sm:$0xf] %vm3292, %v3257
      %3324 = vst.msk [vmem:[#allocation2 + $0x7c] sm:$0xf] %vm3292, %v3259
      %v3325 = vld [vmem:[#allocation2] sm:$0xf]
      %v3326 = vld [vmem:[#allocation2 + $0x4] sm:$0xf]
      %v3327 = vld [vmem:[#allocation2 + $0x8] sm:$0xf]
      %v3328 = vld [vmem:[#allocation2 + $0xc] sm:$0xf]
      %v3329 = vld [vmem:[#allocation2 + $0x10] sm:$0xf]
      %v3330 = vld [vmem:[#allocation2 + $0x14] sm:$0xf]
      %v3331 = vld [vmem:[#allocation2 + $0x18] sm:$0xf]
      %v3332 = vld [vmem:[#allocation2 + $0x1c] sm:$0xf]
      %v3333 = vld [vmem:[#allocation2 + $0x20] sm:$0xf]
      %v3334 = vld [vmem:[#allocation2 + $0x24] sm:$0xf]
      %v3335 = vld [vmem:[#allocation2 + $0x28] sm:$0xf]
      %v3336 = vld [vmem:[#allocation2 + $0x2c] sm:$0xf]
      %v3337 = vld [vmem:[#allocation2 + $0x30] sm:$0xf]
      %v3338 = vld [vmem:[#allocation2 + $0x34] sm:$0xf]
      %v3339 = vld [vmem:[#allocation2 + $0x38] sm:$0xf]
      %v3340 = vld [vmem:[#allocation2 + $0x3c] sm:$0xf]
      %v3341 = vld [vmem:[#allocation2 + $0x40] sm:$0xf]
      %v3342 = vld [vmem:[#allocation2 + $0x44] sm:$0xf]
      %v3343 = vld [vmem:[#allocation2 + $0x48] sm:$0xf]
      %v3344 = vld [vmem:[#allocation2 + $0x4c] sm:$0xf]
      %v3345 = vld [vmem:[#allocation2 + $0x50] sm:$0xf]
      %v3346 = vld [vmem:[#allocation2 + $0x54] sm:$0xf]
      %v3347 = vld [vmem:[#allocation2 + $0x58] sm:$0xf]
      %v3348 = vld [vmem:[#allocation2 + $0x5c] sm:$0xf]
      %v3349 = vld [vmem:[#allocation2 + $0x60] sm:$0xf]
      %v3350 = vld [vmem:[#allocation2 + $0x64] sm:$0xf]
      %v3351 = vld [vmem:[#allocation2 + $0x68] sm:$0xf]
      %v3352 = vld [vmem:[#allocation2 + $0x6c] sm:$0xf]
      %v3353 = vld [vmem:[#allocation2 + $0x70] sm:$0xf]
      %v3354 = vld [vmem:[#allocation2 + $0x74] sm:$0xf]
      %v3355 = vld [vmem:[#allocation2 + $0x78] sm:$0xf]
      %v3356 = vld [vmem:[#allocation2 + $0x7c] sm:$0xf]
      %v3357 = vld [vmem:[%s1] sm:$0xf]
      %v3358 = vld [vmem:[%s1 + $0x4] sm:$0xf]
      %v3359 = vld [vmem:[%s1 + $0x8] sm:$0xf]
      %v3360 = vld [vmem:[%s1 + $0xc] sm:$0x3]
      %v3361 = vld [vmem:[%s2] sm:$0x1]
      %v3363 = vlaneseq
      %v3364 = vshrl.u32 %v3363, 7
      %v3365 = vsub.s32 0, %v3364
      %v3366 = vrot.slane %v3361, %v3365
      %v3400 = vunpack.c.l.b16 %v3325
      %v3401 = vunpack.c.l.b16 %v3326
      %v3402 = vunpack.c.l.b16 %v3327
      %v3403 = vunpack.c.l.b16 %v3328
      %v3404 = vunpack.c.l.b16 %v3329
      %v3405 = vunpack.c.l.b16 %v3330
      %v3406 = vunpack.c.l.b16 %v3331
      %v3407 = vunpack.c.l.b16 %v3332
      %v3408 = vunpack.c.l.b16 %v3333
      %v3409 = vunpack.c.l.b16 %v3334
      %v3410 = vunpack.c.l.b16 %v3335
      %v3411 = vunpack.c.l.b16 %v3336
      %v3412 = vunpack.c.l.b16 %v3337
      %v3413 = vunpack.c.l.b16 %v3338
      %v3414 = vunpack.c.l.b16 %v3339
      %v3415 = vunpack.c.l.b16 %v3340
      %v3416 = vunpack.c.l.b16 %v3341
      %v3417 = vunpack.c.l.b16 %v3342
      %v3418 = vunpack.c.l.b16 %v3343
      %v3419 = vunpack.c.l.b16 %v3344
      %v3420 = vunpack.c.l.b16 %v3345
      %v3421 = vunpack.c.l.b16 %v3346
      %v3422 = vunpack.c.l.b16 %v3347
      %v3423 = vunpack.c.l.b16 %v3348
      %v3424 = vunpack.c.l.b16 %v3349
      %v3425 = vunpack.c.l.b16 %v3350
      %v3426 = vunpack.c.l.b16 %v3351
      %v3427 = vunpack.c.l.b16 %v3352
      %v3428 = vunpack.c.l.b16 %v3353
      %v3429 = vunpack.c.l.b16 %v3354
      %v3430 = vunpack.c.l.b16 %v3355
      %v3431 = vunpack.c.l.b16 %v3356
      %v3432 = vpack.c.b16 %v3401, %v3400
      %v3433 = vpack.c.b16 %v3403, %v3402
      %v3434 = vpack.c.b16 %v3405, %v3404
      %v3435 = vpack.c.b16 %v3407, %v3406
      %v3436 = vpack.c.b16 %v3409, %v3408
      %v3437 = vpack.c.b16 %v3411, %v3410
      %v3438 = vpack.c.b16 %v3413, %v3412
      %v3439 = vpack.c.b16 %v3415, %v3414
      %v3440 = vpack.c.b16 %v3417, %v3416
      %v3441 = vpack.c.b16 %v3419, %v3418
      %v3442 = vpack.c.b16 %v3421, %v3420
      %v3443 = vpack.c.b16 %v3423, %v3422
      %v3444 = vpack.c.b16 %v3425, %v3424
      %v3445 = vpack.c.b16 %v3427, %v3426
      %v3446 = vpack.c.b16 %v3429, %v3428
      %v3447 = vpack.c.b16 %v3431, %v3430
      %v3452 = vunpack.c.l.b16 %v3357
      %v3453 = vunpack.c.l.b16 %v3358
      %v3454 = vunpack.c.l.b16 %v3359
      %v3455 = vunpack.c.l.b16 %v3360
      %v3456 = vpack.c.b16 %v3453, %v3452
      %v3457 = vpack.c.b16 %v3455, %v3454
      %vm3459 = vcmask 220160
      %v3461 = vsel %vm3459, %v3432, 0
      %v3464 = vsel %vm3459, %v3433, 0
      %v3467 = vsel %vm3459, %v3434, 0
      %v3470 = vsel %vm3459, %v3435, 0
      %v3473 = vsel %vm3459, %v3436, 0
      %v3476 = vsel %vm3459, %v3437, 0
      %v3479 = vsel %vm3459, %v3438, 0
      %v3482 = vsel %vm3459, %v3439, 0
      %v3485 = vsel %vm3459, %v3440, 0
      %v3488 = vsel %vm3459, %v3441, 0
      %v3491 = vsel %vm3459, %v3442, 0
      %v3494 = vsel %vm3459, %v3443, 0
      %v3497 = vsel %vm3459, %v3444, 0
      %v3500 = vsel %vm3459, %v3445, 0
      %v3503 = vsel %vm3459, %v3446, 0
      %v3506 = vsel %vm3459, %v3447, 0
      %vm3508 = vcmask 1044480
      %vm3509 = vcmask 1045504
      %v3510 = vsel %vm3508, 4294967295, 65535
      %v3511 = vsel %vm3509, %v3510, 0
      %v3513 = vand.u32 %v3457, %v3511
      %3515 = vmatprep.subr.bf16.mxu0 0
      %3516 = vmatpush1.bf16.msra.mxu0 0
      %3517 = vmatprep.subr.bf16.mxu0 0
      %3518 = vmatpush1.bf16.msra.mxu0 0
      %3519 = vmatprep.subr.bf16.mxu0 0
      %3520 = vmatpush1.bf16.msra.mxu0 0
      %3521 = vmatprep.subr.bf16.mxu0 0
      %3522 = vmatpush1.bf16.msra.mxu0 0
      %3523 = vmatprep.subr.bf16.mxu0 0
      %3524 = vmatpush1.bf16.msra.mxu0 0
      %3525 = vmatprep.subr.bf16.mxu0 0
      %3526 = vmatpush1.bf16.msra.mxu0 0
      %3527 = vmatprep.subr.bf16.mxu0 0
      %3528 = vmatpush1.bf16.msra.mxu0 %v3513
      %3529 = vmatprep.subr.bf16.mxu0 0
      %3530 = vmatpush1.bf16.msra.mxu0 %v3456
      %3531 = vmatprep.subr.bf16.mxu0 0
      %3532 = vmatpush2.bf16.msra.mxu0 0
      %3533 = vmatprep.subr.bf16.mxu0 0
      %3534 = vmatpush2.bf16.msra.mxu0 0
      %3535 = vmatprep.subr.bf16.mxu0 0
      %3536 = vmatpush2.bf16.msra.mxu0 0
      %3537 = vmatprep.subr.bf16.mxu0 0
      %3538 = vmatpush2.bf16.msra.mxu0 0
      %3539 = vmatprep.subr.bf16.mxu0 0
      %3540 = vmatpush2.bf16.msra.mxu0 0
      %3541 = vmatprep.subr.bf16.mxu0 0
      %3542 = vmatpush2.bf16.msra.mxu0 0
      %3543 = vmatprep.subr.bf16.mxu0 0
      %3544 = vmatpush2.bf16.msra.mxu0 0
      %3545 = vmatprep.subr.bf16.mxu0 0
      %3546 = vmatpush2.bf16.msra.mxu0 0
      %3547 = vmatprep.mubr.bf16.mxu0 0
      %3548 = vmatmul.mubr.bf16.gmra.mxu0 %v3461
      %v3549 = vpop.f32.mrf.mxu0
      %v3550 = vadd.f32 %v3366, %v3549
      %v3551 = vpop.f32.mrf.mxu0
      %v3552 = vpop.f32.mrf.mxu0
      %v3553 = vadd.f32 %v3366, %v3552
      %v3554 = vpop.f32.mrf.mxu0
      %3555 = vmatprep.mubr.bf16.mxu0 0
      %3556 = vmatmul.mubr.bf16.gmra.mxu0 %v3464
      %v3557 = vpop.f32.mrf.mxu0
      %v3558 = vadd.f32 %v3366, %v3557
      %v3559 = vpop.f32.mrf.mxu0
      %v3560 = vpop.f32.mrf.mxu0
      %v3561 = vadd.f32 %v3366, %v3560
      %v3562 = vpop.f32.mrf.mxu0
      %3563 = vmatprep.mubr.bf16.mxu0 0
      %3564 = vmatmul.mubr.bf16.gmra.mxu0 %v3467
      %v3565 = vpop.f32.mrf.mxu0
      %v3566 = vadd.f32 %v3366, %v3565
      %v3567 = vpop.f32.mrf.mxu0
      %v3568 = vpop.f32.mrf.mxu0
      %v3569 = vadd.f32 %v3366, %v3568
      %v3570 = vpop.f32.mrf.mxu0
      %3571 = vmatprep.mubr.bf16.mxu0 0
      %3572 = vmatmul.mubr.bf16.gmra.mxu0 %v3470
      %v3573 = vpop.f32.mrf.mxu0
      %v3574 = vadd.f32 %v3366, %v3573
      %v3575 = vpop.f32.mrf.mxu0
      %v3576 = vpop.f32.mrf.mxu0
      %v3577 = vadd.f32 %v3366, %v3576
      %v3578 = vpop.f32.mrf.mxu0
      %3579 = vmatprep.mubr.bf16.mxu0 0
      %3580 = vmatmul.mubr.bf16.gmra.mxu0 %v3473
      %v3581 = vpop.f32.mrf.mxu0
      %v3582 = vadd.f32 %v3366, %v3581
      %v3583 = vpop.f32.mrf.mxu0
      %v3584 = vpop.f32.mrf.mxu0
      %v3585 = vadd.f32 %v3366, %v3584
      %v3586 = vpop.f32.mrf.mxu0
      %3587 = vmatprep.mubr.bf16.mxu0 0
      %3588 = vmatmul.mubr.bf16.gmra.mxu0 %v3476
      %v3589 = vpop.f32.mrf.mxu0
      %v3590 = vadd.f32 %v3366, %v3589
      %v3591 = vpop.f32.mrf.mxu0
      %v3592 = vpop.f32.mrf.mxu0
      %v3593 = vadd.f32 %v3366, %v3592
      %v3594 = vpop.f32.mrf.mxu0
      %3595 = vmatprep.mubr.bf16.mxu0 0
      %3596 = vmatmul.mubr.bf16.gmra.mxu0 %v3479
      %v3597 = vpop.f32.mrf.mxu0
      %v3598 = vadd.f32 %v3366, %v3597
      %v3599 = vpop.f32.mrf.mxu0
      %v3600 = vpop.f32.mrf.mxu0
      %v3601 = vadd.f32 %v3366, %v3600
      %v3602 = vpop.f32.mrf.mxu0
      %3603 = vmatprep.mubr.bf16.mxu0 0
      %3604 = vmatmul.mubr.bf16.gmra.mxu0 %v3482
      %v3605 = vpop.f32.mrf.mxu0
      %v3606 = vadd.f32 %v3366, %v3605
      %v3607 = vpop.f32.mrf.mxu0
      %v3608 = vpop.f32.mrf.mxu0
      %v3609 = vadd.f32 %v3366, %v3608
      %v3610 = vpop.f32.mrf.mxu0
      %3611 = vmatprep.mubr.bf16.mxu0 0
      %3612 = vmatmul.mubr.bf16.gmra.mxu0 %v3485
      %v3613 = vpop.f32.mrf.mxu0
      %v3614 = vadd.f32 %v3366, %v3613
      %v3615 = vpop.f32.mrf.mxu0
      %v3616 = vpop.f32.mrf.mxu0
      %v3617 = vadd.f32 %v3366, %v3616
      %v3618 = vpop.f32.mrf.mxu0
      %3619 = vmatprep.mubr.bf16.mxu0 0
      %3620 = vmatmul.mubr.bf16.gmra.mxu0 %v3488
      %v3621 = vpop.f32.mrf.mxu0
      %v3622 = vadd.f32 %v3366, %v3621
      %v3623 = vpop.f32.mrf.mxu0
      %v3624 = vpop.f32.mrf.mxu0
      %v3625 = vadd.f32 %v3366, %v3624
      %v3626 = vpop.f32.mrf.mxu0
      %3627 = vmatprep.mubr.bf16.mxu0 0
      %3628 = vmatmul.mubr.bf16.gmra.mxu0 %v3491
      %v3629 = vpop.f32.mrf.mxu0
      %v3630 = vadd.f32 %v3366, %v3629
      %v3631 = vpop.f32.mrf.mxu0
      %v3632 = vpop.f32.mrf.mxu0
      %v3633 = vadd.f32 %v3366, %v3632
      %v3634 = vpop.f32.mrf.mxu0
      %3635 = vmatprep.mubr.bf16.mxu0 0
      %3636 = vmatmul.mubr.bf16.gmra.mxu0 %v3494
      %v3637 = vpop.f32.mrf.mxu0
      %v3638 = vadd.f32 %v3366, %v3637
      %v3639 = vpop.f32.mrf.mxu0
      %v3640 = vpop.f32.mrf.mxu0
      %v3641 = vadd.f32 %v3366, %v3640
      %v3642 = vpop.f32.mrf.mxu0
      %3643 = vmatprep.mubr.bf16.mxu0 0
      %3644 = vmatmul.mubr.bf16.gmra.mxu0 %v3497
      %v3645 = vpop.f32.mrf.mxu0
      %v3646 = vadd.f32 %v3366, %v3645
      %v3647 = vpop.f32.mrf.mxu0
      %v3648 = vpop.f32.mrf.mxu0
      %v3649 = vadd.f32 %v3366, %v3648
      %v3650 = vpop.f32.mrf.mxu0
      %3651 = vmatprep.mubr.bf16.mxu0 0
      %3652 = vmatmul.mubr.bf16.gmra.mxu0 %v3500
      %v3653 = vpop.f32.mrf.mxu0
      %v3654 = vadd.f32 %v3366, %v3653
      %v3655 = vpop.f32.mrf.mxu0
      %v3656 = vpop.f32.mrf.mxu0
      %v3657 = vadd.f32 %v3366, %v3656
      %v3658 = vpop.f32.mrf.mxu0
      %3659 = vmatprep.mubr.bf16.mxu0 0
      %3660 = vmatmul.mubr.bf16.gmra.mxu0 %v3503
      %v3661 = vpop.f32.mrf.mxu0
      %v3662 = vadd.f32 %v3366, %v3661
      %v3663 = vpop.f32.mrf.mxu0
      %v3664 = vpop.f32.mrf.mxu0
      %v3665 = vadd.f32 %v3366, %v3664
      %v3666 = vpop.f32.mrf.mxu0
      %3667 = vmatprep.mubr.bf16.mxu0 0
      %3668 = vmatmul.mubr.bf16.gmra.mxu0 %v3506
      %v3669 = vpop.f32.mrf.mxu0
      %v3670 = vadd.f32 %v3366, %v3669
      %v3671 = vpop.f32.mrf.mxu0
      %v3672 = vpop.f32.mrf.mxu0
      %v3673 = vadd.f32 %v3366, %v3672
      %v3674 = vpop.f32.mrf.mxu0
      %3675 = vdwg.mxu0
      %v3676 = vmax.f32 %v3550, 0.0
      %v3677 = vmax.f32 %v3553, 0.0
      %v3678 = vmax.f32 %v3558, 0.0
      %v3679 = vmax.f32 %v3561, 0.0
      %v3680 = vmax.f32 %v3566, 0.0
      %v3681 = vmax.f32 %v3569, 0.0
      %v3682 = vmax.f32 %v3574, 0.0
      %v3683 = vmax.f32 %v3577, 0.0
      %v3684 = vmax.f32 %v3582, 0.0
      %v3685 = vmax.f32 %v3585, 0.0
      %v3686 = vmax.f32 %v3590, 0.0
      %v3687 = vmax.f32 %v3593, 0.0
      %v3688 = vmax.f32 %v3598, 0.0
      %v3689 = vmax.f32 %v3601, 0.0
      %v3690 = vmax.f32 %v3606, 0.0
      %v3691 = vmax.f32 %v3609, 0.0
      %v3692 = vmax.f32 %v3614, 0.0
      %v3693 = vmax.f32 %v3617, 0.0
      %v3694 = vmax.f32 %v3622, 0.0
      %v3695 = vmax.f32 %v3625, 0.0
      %v3696 = vmax.f32 %v3630, 0.0
      %v3697 = vmax.f32 %v3633, 0.0
      %v3698 = vmax.f32 %v3638, 0.0
      %v3699 = vmax.f32 %v3641, 0.0
      %v3700 = vmax.f32 %v3646, 0.0
      %v3701 = vmax.f32 %v3649, 0.0
      %v3702 = vmax.f32 %v3654, 0.0
      %v3703 = vmax.f32 %v3657, 0.0
      %v3704 = vmax.f32 %v3662, 0.0
      %v3705 = vmax.f32 %v3665, 0.0
      %v3706 = vmax.f32 %v3670, 0.0
      %v3707 = vmax.f32 %v3673, 0.0
      %v3740 = vcombine.high %v3676, %v3676
      %v3742 = vunpack.c.l.s4 1983009808
      %v3743 = vunpack.c.0.s8 %v3742
      %v3744 = vlaneseq
      %v3745 = vshrl.u32 %v3744, 7
      %v3746 = vsub.s32 %v3743, %v3745
      %v3747 = vrot.slane %v3676, %v3746
      %v3749 = vunpack.c.l.s4 1983009808
      %v3750 = vunpack.c.0.s8 %v3749
      %v3751 = vlaneseq
      %v3752 = vshrl.u32 %v3751, 7
      %v3753 = vsub.s32 %v3750, %v3752
      %v3754 = vrot.slane %v3740, %v3753
      %v3755 = vcombine.high %v3747, %v3747
      %v3756 = vcombine.high %v3754, %v3754
      %v3757 = vcombine.high %v3677, %v3677
      %v3759 = vunpack.c.l.s4 1983009808
      %v3760 = vunpack.c.0.s8 %v3759
      %v3761 = vlaneseq
      %v3762 = vshrl.u32 %v3761, 7
      %v3763 = vsub.s32 %v3760, %v3762
      %v3764 = vrot.slane %v3677, %v3763
      %v3766 = vunpack.c.l.s4 1983009808
      %v3767 = vunpack.c.0.s8 %v3766
      %v3768 = vlaneseq
      %v3769 = vshrl.u32 %v3768, 7
      %v3770 = vsub.s32 %v3767, %v3769
      %v3771 = vrot.slane %v3757, %v3770
      %v3772 = vcombine.high %v3764, %v3764
      %v3773 = vcombine.high %v3771, %v3771
      %v3774 = vcombine.high %v3678, %v3678
      %v3776 = vunpack.c.l.s4 1983009808
      %v3777 = vunpack.c.0.s8 %v3776
      %v3778 = vlaneseq
      %v3779 = vshrl.u32 %v3778, 7
      %v3780 = vsub.s32 %v3777, %v3779
      %v3781 = vrot.slane %v3678, %v3780
      %v3783 = vunpack.c.l.s4 1983009808
      %v3784 = vunpack.c.0.s8 %v3783
      %v3785 = vlaneseq
      %v3786 = vshrl.u32 %v3785, 7
      %v3787 = vsub.s32 %v3784, %v3786
      %v3788 = vrot.slane %v3774, %v3787
      %v3789 = vcombine.high %v3781, %v3781
      %v3790 = vcombine.high %v3788, %v3788
      %v3791 = vcombine.high %v3679, %v3679
      %v3793 = vunpack.c.l.s4 1983009808
      %v3794 = vunpack.c.0.s8 %v3793
      %v3795 = vlaneseq
      %v3796 = vshrl.u32 %v3795, 7
      %v3797 = vsub.s32 %v3794, %v3796
      %v3798 = vrot.slane %v3679, %v3797
      %v3800 = vunpack.c.l.s4 1983009808
      %v3801 = vunpack.c.0.s8 %v3800
      %v3802 = vlaneseq
      %v3803 = vshrl.u32 %v3802, 7
      %v3804 = vsub.s32 %v3801, %v3803
      %v3805 = vrot.slane %v3791, %v3804
      %v3806 = vcombine.high %v3798, %v3798
      %v3807 = vcombine.high %v3805, %v3805
      %v3808 = vcombine.high %v3680, %v3680
      %v3810 = vunpack.c.l.s4 1983009808
      %v3811 = vunpack.c.0.s8 %v3810
      %v3812 = vlaneseq
      %v3813 = vshrl.u32 %v3812, 7
      %v3814 = vsub.s32 %v3811, %v3813
      %v3815 = vrot.slane %v3680, %v3814
      %v3817 = vunpack.c.l.s4 1983009808
      %v3818 = vunpack.c.0.s8 %v3817
      %v3819 = vlaneseq
      %v3820 = vshrl.u32 %v3819, 7
      %v3821 = vsub.s32 %v3818, %v3820
      %v3822 = vrot.slane %v3808, %v3821
      %v3823 = vcombine.high %v3815, %v3815
      %v3824 = vcombine.high %v3822, %v3822
      %v3825 = vcombine.high %v3681, %v3681
      %v3827 = vunpack.c.l.s4 1983009808
      %v3828 = vunpack.c.0.s8 %v3827
      %v3829 = vlaneseq
      %v3830 = vshrl.u32 %v3829, 7
      %v3831 = vsub.s32 %v3828, %v3830
      %v3832 = vrot.slane %v3681, %v3831
      %v3834 = vunpack.c.l.s4 1983009808
      %v3835 = vunpack.c.0.s8 %v3834
      %v3836 = vlaneseq
      %v3837 = vshrl.u32 %v3836, 7
      %v3838 = vsub.s32 %v3835, %v3837
      %v3839 = vrot.slane %v3825, %v3838
      %v3840 = vcombine.high %v3832, %v3832
      %v3841 = vcombine.high %v3839, %v3839
      %v3842 = vcombine.high %v3682, %v3682
      %v3844 = vunpack.c.l.s4 1983009808
      %v3845 = vunpack.c.0.s8 %v3844
      %v3846 = vlaneseq
      %v3847 = vshrl.u32 %v3846, 7
      %v3848 = vsub.s32 %v3845, %v3847
      %v3849 = vrot.slane %v3682, %v3848
      %v3851 = vunpack.c.l.s4 1983009808
      %v3852 = vunpack.c.0.s8 %v3851
      %v3853 = vlaneseq
      %v3854 = vshrl.u32 %v3853, 7
      %v3855 = vsub.s32 %v3852, %v3854
      %v3856 = vrot.slane %v3842, %v3855
      %v3857 = vcombine.high %v3849, %v3849
      %v3858 = vcombine.high %v3856, %v3856
      %v3859 = vcombine.high %v3683, %v3683
      %v3861 = vunpack.c.l.s4 1983009808
      %v3862 = vunpack.c.0.s8 %v3861
      %v3863 = vlaneseq
      %v3864 = vshrl.u32 %v3863, 7
      %v3865 = vsub.s32 %v3862, %v3864
      %v3866 = vrot.slane %v3683, %v3865
      %v3868 = vunpack.c.l.s4 1983009808
      %v3869 = vunpack.c.0.s8 %v3868
      %v3870 = vlaneseq
      %v3871 = vshrl.u32 %v3870, 7
      %v3872 = vsub.s32 %v3869, %v3871
      %v3873 = vrot.slane %v3859, %v3872
      %v3874 = vcombine.high %v3866, %v3866
      %v3875 = vcombine.high %v3873, %v3873
      %v3876 = vcombine.high %v3684, %v3684
      %v3878 = vunpack.c.l.s4 1983009808
      %v3879 = vunpack.c.0.s8 %v3878
      %v3880 = vlaneseq
      %v3881 = vshrl.u32 %v3880, 7
      %v3882 = vsub.s32 %v3879, %v3881
      %v3883 = vrot.slane %v3684, %v3882
      %v3885 = vunpack.c.l.s4 1983009808
      %v3886 = vunpack.c.0.s8 %v3885
      %v3887 = vlaneseq
      %v3888 = vshrl.u32 %v3887, 7
      %v3889 = vsub.s32 %v3886, %v3888
      %v3890 = vrot.slane %v3876, %v3889
      %v3891 = vcombine.high %v3883, %v3883
      %v3892 = vcombine.high %v3890, %v3890
      %v3893 = vcombine.high %v3685, %v3685
      %v3895 = vunpack.c.l.s4 1983009808
      %v3896 = vunpack.c.0.s8 %v3895
      %v3897 = vlaneseq
      %v3898 = vshrl.u32 %v3897, 7
      %v3899 = vsub.s32 %v3896, %v3898
      %v3900 = vrot.slane %v3685, %v3899
      %v3902 = vunpack.c.l.s4 1983009808
      %v3903 = vunpack.c.0.s8 %v3902
      %v3904 = vlaneseq
      %v3905 = vshrl.u32 %v3904, 7
      %v3906 = vsub.s32 %v3903, %v3905
      %v3907 = vrot.slane %v3893, %v3906
      %v3908 = vcombine.high %v3900, %v3900
      %v3909 = vcombine.high %v3907, %v3907
      %v3910 = vcombine.high %v3686, %v3686
      %v3912 = vunpack.c.l.s4 1983009808
      %v3913 = vunpack.c.0.s8 %v3912
      %v3914 = vlaneseq
      %v3915 = vshrl.u32 %v3914, 7
      %v3916 = vsub.s32 %v3913, %v3915
      %v3917 = vrot.slane %v3686, %v3916
      %v3919 = vunpack.c.l.s4 1983009808
      %v3920 = vunpack.c.0.s8 %v3919
      %v3921 = vlaneseq
      %v3922 = vshrl.u32 %v3921, 7
      %v3923 = vsub.s32 %v3920, %v3922
      %v3924 = vrot.slane %v3910, %v3923
      %v3925 = vcombine.high %v3917, %v3917
      %v3926 = vcombine.high %v3924, %v3924
      %v3927 = vcombine.high %v3687, %v3687
      %v3929 = vunpack.c.l.s4 1983009808
      %v3930 = vunpack.c.0.s8 %v3929
      %v3931 = vlaneseq
      %v3932 = vshrl.u32 %v3931, 7
      %v3933 = vsub.s32 %v3930, %v3932
      %v3934 = vrot.slane %v3687, %v3933
      %v3936 = vunpack.c.l.s4 1983009808
      %v3937 = vunpack.c.0.s8 %v3936
      %v3938 = vlaneseq
      %v3939 = vshrl.u32 %v3938, 7
      %v3940 = vsub.s32 %v3937, %v3939
      %v3941 = vrot.slane %v3927, %v3940
      %v3942 = vcombine.high %v3934, %v3934
      %v3943 = vcombine.high %v3941, %v3941
      %v3944 = vcombine.high %v3688, %v3688
      %v3946 = vunpack.c.l.s4 1983009808
      %v3947 = vunpack.c.0.s8 %v3946
      %v3948 = vlaneseq
      %v3949 = vshrl.u32 %v3948, 7
      %v3950 = vsub.s32 %v3947, %v3949
      %v3951 = vrot.slane %v3688, %v3950
      %v3953 = vunpack.c.l.s4 1983009808
      %v3954 = vunpack.c.0.s8 %v3953
      %v3955 = vlaneseq
      %v3956 = vshrl.u32 %v3955, 7
      %v3957 = vsub.s32 %v3954, %v3956
      %v3958 = vrot.slane %v3944, %v3957
      %v3959 = vcombine.high %v3951, %v3951
      %v3960 = vcombine.high %v3958, %v3958
      %v3961 = vcombine.high %v3689, %v3689
      %v3963 = vunpack.c.l.s4 1983009808
      %v3964 = vunpack.c.0.s8 %v3963
      %v3965 = vlaneseq
      %v3966 = vshrl.u32 %v3965, 7
      %v3967 = vsub.s32 %v3964, %v3966
      %v3968 = vrot.slane %v3689, %v3967
      %v3970 = vunpack.c.l.s4 1983009808
      %v3971 = vunpack.c.0.s8 %v3970
      %v3972 = vlaneseq
      %v3973 = vshrl.u32 %v3972, 7
      %v3974 = vsub.s32 %v3971, %v3973
      %v3975 = vrot.slane %v3961, %v3974
      %v3976 = vcombine.high %v3968, %v3968
      %v3977 = vcombine.high %v3975, %v3975
      %v3978 = vcombine.high %v3690, %v3690
      %v3980 = vunpack.c.l.s4 1983009808
      %v3981 = vunpack.c.0.s8 %v3980
      %v3982 = vlaneseq
      %v3983 = vshrl.u32 %v3982, 7
      %v3984 = vsub.s32 %v3981, %v3983
      %v3985 = vrot.slane %v3690, %v3984
      %v3987 = vunpack.c.l.s4 1983009808
      %v3988 = vunpack.c.0.s8 %v3987
      %v3989 = vlaneseq
      %v3990 = vshrl.u32 %v3989, 7
      %v3991 = vsub.s32 %v3988, %v3990
      %v3992 = vrot.slane %v3978, %v3991
      %v3993 = vcombine.high %v3985, %v3985
      %v3994 = vcombine.high %v3992, %v3992
      %v3995 = vcombine.high %v3691, %v3691
      %v3997 = vunpack.c.l.s4 1983009808
      %v3998 = vunpack.c.0.s8 %v3997
      %v3999 = vlaneseq
      %v4000 = vshrl.u32 %v3999, 7
      %v4001 = vsub.s32 %v3998, %v4000
      %v4002 = vrot.slane %v3691, %v4001
      %v4004 = vunpack.c.l.s4 1983009808
      %v4005 = vunpack.c.0.s8 %v4004
      %v4006 = vlaneseq
      %v4007 = vshrl.u32 %v4006, 7
      %v4008 = vsub.s32 %v4005, %v4007
      %v4009 = vrot.slane %v3995, %v4008
      %v4010 = vcombine.high %v4002, %v4002
      %v4011 = vcombine.high %v4009, %v4009
      %v4012 = vcombine.high %v3692, %v3692
      %v4014 = vunpack.c.l.s4 1983009808
      %v4015 = vunpack.c.0.s8 %v4014
      %v4016 = vlaneseq
      %v4017 = vshrl.u32 %v4016, 7
      %v4018 = vsub.s32 %v4015, %v4017
      %v4019 = vrot.slane %v3692, %v4018
      %v4021 = vunpack.c.l.s4 1983009808
      %v4022 = vunpack.c.0.s8 %v4021
      %v4023 = vlaneseq
      %v4024 = vshrl.u32 %v4023, 7
      %v4025 = vsub.s32 %v4022, %v4024
      %v4026 = vrot.slane %v4012, %v4025
      %v4027 = vcombine.high %v4019, %v4019
      %v4028 = vcombine.high %v4026, %v4026
      %v4029 = vcombine.high %v3693, %v3693
      %v4031 = vunpack.c.l.s4 1983009808
      %v4032 = vunpack.c.0.s8 %v4031
      %v4033 = vlaneseq
      %v4034 = vshrl.u32 %v4033, 7
      %v4035 = vsub.s32 %v4032, %v4034
      %v4036 = vrot.slane %v3693, %v4035
      %v4038 = vunpack.c.l.s4 1983009808
      %v4039 = vunpack.c.0.s8 %v4038
      %v4040 = vlaneseq
      %v4041 = vshrl.u32 %v4040, 7
      %v4042 = vsub.s32 %v4039, %v4041
      %v4043 = vrot.slane %v4029, %v4042
      %v4044 = vcombine.high %v4036, %v4036
      %v4045 = vcombine.high %v4043, %v4043
      %v4046 = vcombine.high %v3694, %v3694
      %v4048 = vunpack.c.l.s4 1983009808
      %v4049 = vunpack.c.0.s8 %v4048
      %v4050 = vlaneseq
      %v4051 = vshrl.u32 %v4050, 7
      %v4052 = vsub.s32 %v4049, %v4051
      %v4053 = vrot.slane %v3694, %v4052
      %v4055 = vunpack.c.l.s4 1983009808
      %v4056 = vunpack.c.0.s8 %v4055
      %v4057 = vlaneseq
      %v4058 = vshrl.u32 %v4057, 7
      %v4059 = vsub.s32 %v4056, %v4058
      %v4060 = vrot.slane %v4046, %v4059
      %v4061 = vcombine.high %v4053, %v4053
      %v4062 = vcombine.high %v4060, %v4060
      %v4063 = vcombine.high %v3695, %v3695
      %v4065 = vunpack.c.l.s4 1983009808
      %v4066 = vunpack.c.0.s8 %v4065
      %v4067 = vlaneseq
      %v4068 = vshrl.u32 %v4067, 7
      %v4069 = vsub.s32 %v4066, %v4068
      %v4070 = vrot.slane %v3695, %v4069
      %v4072 = vunpack.c.l.s4 1983009808
      %v4073 = vunpack.c.0.s8 %v4072
      %v4074 = vlaneseq
      %v4075 = vshrl.u32 %v4074, 7
      %v4076 = vsub.s32 %v4073, %v4075
      %v4077 = vrot.slane %v4063, %v4076
      %v4078 = vcombine.high %v4070, %v4070
      %v4079 = vcombine.high %v4077, %v4077
      %v4080 = vcombine.high %v3696, %v3696
      %v4082 = vunpack.c.l.s4 1983009808
      %v4083 = vunpack.c.0.s8 %v4082
      %v4084 = vlaneseq
      %v4085 = vshrl.u32 %v4084, 7
      %v4086 = vsub.s32 %v4083, %v4085
      %v4087 = vrot.slane %v3696, %v4086
      %v4089 = vunpack.c.l.s4 1983009808
      %v4090 = vunpack.c.0.s8 %v4089
      %v4091 = vlaneseq
      %v4092 = vshrl.u32 %v4091, 7
      %v4093 = vsub.s32 %v4090, %v4092
      %v4094 = vrot.slane %v4080, %v4093
      %v4095 = vcombine.high %v4087, %v4087
      %v4096 = vcombine.high %v4094, %v4094
      %v4097 = vcombine.high %v3697, %v3697
      %v4099 = vunpack.c.l.s4 1983009808
      %v4100 = vunpack.c.0.s8 %v4099
      %v4101 = vlaneseq
      %v4102 = vshrl.u32 %v4101, 7
      %v4103 = vsub.s32 %v4100, %v4102
      %v4104 = vrot.slane %v3697, %v4103
      %v4106 = vunpack.c.l.s4 1983009808
      %v4107 = vunpack.c.0.s8 %v4106
      %v4108 = vlaneseq
      %v4109 = vshrl.u32 %v4108, 7
      %v4110 = vsub.s32 %v4107, %v4109
      %v4111 = vrot.slane %v4097, %v4110
      %v4112 = vcombine.high %v4104, %v4104
      %v4113 = vcombine.high %v4111, %v4111
      %v4114 = vcombine.high %v3698, %v3698
      %v4116 = vunpack.c.l.s4 1983009808
      %v4117 = vunpack.c.0.s8 %v4116
      %v4118 = vlaneseq
      %v4119 = vshrl.u32 %v4118, 7
      %v4120 = vsub.s32 %v4117, %v4119
      %v4121 = vrot.slane %v3698, %v4120
      %v4123 = vunpack.c.l.s4 1983009808
      %v4124 = vunpack.c.0.s8 %v4123
      %v4125 = vlaneseq
      %v4126 = vshrl.u32 %v4125, 7
      %v4127 = vsub.s32 %v4124, %v4126
      %v4128 = vrot.slane %v4114, %v4127
      %v4129 = vcombine.high %v4121, %v4121
      %v4130 = vcombine.high %v4128, %v4128
      %v4131 = vcombine.high %v3699, %v3699
      %v4133 = vunpack.c.l.s4 1983009808
      %v4134 = vunpack.c.0.s8 %v4133
      %v4135 = vlaneseq
      %v4136 = vshrl.u32 %v4135, 7
      %v4137 = vsub.s32 %v4134, %v4136
      %v4138 = vrot.slane %v3699, %v4137
      %v4140 = vunpack.c.l.s4 1983009808
      %v4141 = vunpack.c.0.s8 %v4140
      %v4142 = vlaneseq
      %v4143 = vshrl.u32 %v4142, 7
      %v4144 = vsub.s32 %v4141, %v4143
      %v4145 = vrot.slane %v4131, %v4144
      %v4146 = vcombine.high %v4138, %v4138
      %v4147 = vcombine.high %v4145, %v4145
      %v4148 = vcombine.high %v3700, %v3700
      %v4150 = vunpack.c.l.s4 1983009808
      %v4151 = vunpack.c.0.s8 %v4150
      %v4152 = vlaneseq
      %v4153 = vshrl.u32 %v4152, 7
      %v4154 = vsub.s32 %v4151, %v4153
      %v4155 = vrot.slane %v3700, %v4154
      %v4157 = vunpack.c.l.s4 1983009808
      %v4158 = vunpack.c.0.s8 %v4157
      %v4159 = vlaneseq
      %v4160 = vshrl.u32 %v4159, 7
      %v4161 = vsub.s32 %v4158, %v4160
      %v4162 = vrot.slane %v4148, %v4161
      %v4163 = vcombine.high %v4155, %v4155
      %v4164 = vcombine.high %v4162, %v4162
      %v4165 = vcombine.high %v3701, %v3701
      %v4167 = vunpack.c.l.s4 1983009808
      %v4168 = vunpack.c.0.s8 %v4167
      %v4169 = vlaneseq
      %v4170 = vshrl.u32 %v4169, 7
      %v4171 = vsub.s32 %v4168, %v4170
      %v4172 = vrot.slane %v3701, %v4171
      %v4174 = vunpack.c.l.s4 1983009808
      %v4175 = vunpack.c.0.s8 %v4174
      %v4176 = vlaneseq
      %v4177 = vshrl.u32 %v4176, 7
      %v4178 = vsub.s32 %v4175, %v4177
      %v4179 = vrot.slane %v4165, %v4178
      %v4180 = vcombine.high %v4172, %v4172
      %v4181 = vcombine.high %v4179, %v4179
      %v4182 = vcombine.high %v3702, %v3702
      %v4184 = vunpack.c.l.s4 1983009808
      %v4185 = vunpack.c.0.s8 %v4184
      %v4186 = vlaneseq
      %v4187 = vshrl.u32 %v4186, 7
      %v4188 = vsub.s32 %v4185, %v4187
      %v4189 = vrot.slane %v3702, %v4188
      %v4191 = vunpack.c.l.s4 1983009808
      %v4192 = vunpack.c.0.s8 %v4191
      %v4193 = vlaneseq
      %v4194 = vshrl.u32 %v4193, 7
      %v4195 = vsub.s32 %v4192, %v4194
      %v4196 = vrot.slane %v4182, %v4195
      %v4197 = vcombine.high %v4189, %v4189
      %v4198 = vcombine.high %v4196, %v4196
      %v4199 = vcombine.high %v3703, %v3703
      %v4201 = vunpack.c.l.s4 1983009808
      %v4202 = vunpack.c.0.s8 %v4201
      %v4203 = vlaneseq
      %v4204 = vshrl.u32 %v4203, 7
      %v4205 = vsub.s32 %v4202, %v4204
      %v4206 = vrot.slane %v3703, %v4205
      %v4208 = vunpack.c.l.s4 1983009808
      %v4209 = vunpack.c.0.s8 %v4208
      %v4210 = vlaneseq
      %v4211 = vshrl.u32 %v4210, 7
      %v4212 = vsub.s32 %v4209, %v4211
      %v4213 = vrot.slane %v4199, %v4212
      %v4214 = vcombine.high %v4206, %v4206
      %v4215 = vcombine.high %v4213, %v4213
      %v4216 = vcombine.high %v3704, %v3704
      %v4218 = vunpack.c.l.s4 1983009808
      %v4219 = vunpack.c.0.s8 %v4218
      %v4220 = vlaneseq
      %v4221 = vshrl.u32 %v4220, 7
      %v4222 = vsub.s32 %v4219, %v4221
      %v4223 = vrot.slane %v3704, %v4222
      %v4225 = vunpack.c.l.s4 1983009808
      %v4226 = vunpack.c.0.s8 %v4225
      %v4227 = vlaneseq
      %v4228 = vshrl.u32 %v4227, 7
      %v4229 = vsub.s32 %v4226, %v4228
      %v4230 = vrot.slane %v4216, %v4229
      %v4231 = vcombine.high %v4223, %v4223
      %v4232 = vcombine.high %v4230, %v4230
      %v4233 = vcombine.high %v3705, %v3705
      %v4235 = vunpack.c.l.s4 1983009808
      %v4236 = vunpack.c.0.s8 %v4235
      %v4237 = vlaneseq
      %v4238 = vshrl.u32 %v4237, 7
      %v4239 = vsub.s32 %v4236, %v4238
      %v4240 = vrot.slane %v3705, %v4239
      %v4242 = vunpack.c.l.s4 1983009808
      %v4243 = vunpack.c.0.s8 %v4242
      %v4244 = vlaneseq
      %v4245 = vshrl.u32 %v4244, 7
      %v4246 = vsub.s32 %v4243, %v4245
      %v4247 = vrot.slane %v4233, %v4246
      %v4248 = vcombine.high %v4240, %v4240
      %v4249 = vcombine.high %v4247, %v4247
      %v4250 = vcombine.high %v3706, %v3706
      %v4252 = vunpack.c.l.s4 1983009808
      %v4253 = vunpack.c.0.s8 %v4252
      %v4254 = vlaneseq
      %v4255 = vshrl.u32 %v4254, 7
      %v4256 = vsub.s32 %v4253, %v4255
      %v4257 = vrot.slane %v3706, %v4256
      %v4259 = vunpack.c.l.s4 1983009808
      %v4260 = vunpack.c.0.s8 %v4259
      %v4261 = vlaneseq
      %v4262 = vshrl.u32 %v4261, 7
      %v4263 = vsub.s32 %v4260, %v4262
      %v4264 = vrot.slane %v4250, %v4263
      %v4265 = vcombine.high %v4257, %v4257
      %v4266 = vcombine.high %v4264, %v4264
      %v4267 = vcombine.high %v3707, %v3707
      %v4269 = vunpack.c.l.s4 1983009808
      %v4270 = vunpack.c.0.s8 %v4269
      %v4271 = vlaneseq
      %v4272 = vshrl.u32 %v4271, 7
      %v4273 = vsub.s32 %v4270, %v4272
      %v4274 = vrot.slane %v3707, %v4273
      %v4276 = vunpack.c.l.s4 1983009808
      %v4277 = vunpack.c.0.s8 %v4276
      %v4278 = vlaneseq
      %v4279 = vshrl.u32 %v4278, 7
      %v4280 = vsub.s32 %v4277, %v4279
      %v4281 = vrot.slane %v4267, %v4280
      %v4282 = vcombine.high %v4274, %v4274
      %v4283 = vcombine.high %v4281, %v4281
      %vm4412 = vcmask 58368
      %v4413 = vsel %vm4412, %v3747, -inf
      %v4414 = vrot.slane %v4413, 4
      %v4415 = vmax.f32 %v4413, %v4414
      %v4416 = vrot.slane %v4415, 2
      %v4417 = vmax.f32 %v4415, %v4416
      %v4418 = vrot.slane %v4417, 1
      %v4419 = vmax.f32 %v4417, %v4418
      %v4420 = vsel %vm4412, %v3755, -inf
      %v4421 = vrot.slane %v4420, 4
      %v4422 = vmax.f32 %v4420, %v4421
      %v4423 = vrot.slane %v4422, 2
      %v4424 = vmax.f32 %v4422, %v4423
      %v4425 = vrot.slane %v4424, 1
      %v4426 = vmax.f32 %v4424, %v4425
      %v4427 = vsel %vm4412, %v3754, -inf
      %v4428 = vrot.slane %v4427, 4
      %v4429 = vmax.f32 %v4427, %v4428
      %v4430 = vrot.slane %v4429, 2
      %v4431 = vmax.f32 %v4429, %v4430
      %v4432 = vrot.slane %v4431, 1
      %v4433 = vmax.f32 %v4431, %v4432
      %v4434 = vsel %vm4412, %v3756, -inf
      %v4435 = vrot.slane %v4434, 4
      %v4436 = vmax.f32 %v4434, %v4435
      %v4437 = vrot.slane %v4436, 2
      %v4438 = vmax.f32 %v4436, %v4437
      %v4439 = vrot.slane %v4438, 1
      %v4440 = vmax.f32 %v4438, %v4439
      %v4441 = vsel %vm4412, %v3764, -inf
      %v4442 = vrot.slane %v4441, 4
      %v4443 = vmax.f32 %v4441, %v4442
      %v4444 = vrot.slane %v4443, 2
      %v4445 = vmax.f32 %v4443, %v4444
      %v4446 = vrot.slane %v4445, 1
      %v4447 = vmax.f32 %v4445, %v4446
      %v4448 = vsel %vm4412, %v3772, -inf
      %v4449 = vrot.slane %v4448, 4
      %v4450 = vmax.f32 %v4448, %v4449
      %v4451 = vrot.slane %v4450, 2
      %v4452 = vmax.f32 %v4450, %v4451
      %v4453 = vrot.slane %v4452, 1
      %v4454 = vmax.f32 %v4452, %v4453
      %v4455 = vsel %vm4412, %v3771, -inf
      %v4456 = vrot.slane %v4455, 4
      %v4457 = vmax.f32 %v4455, %v4456
      %v4458 = vrot.slane %v4457, 2
      %v4459 = vmax.f32 %v4457, %v4458
      %v4460 = vrot.slane %v4459, 1
      %v4461 = vmax.f32 %v4459, %v4460
      %v4462 = vsel %vm4412, %v3773, -inf
      %v4463 = vrot.slane %v4462, 4
      %v4464 = vmax.f32 %v4462, %v4463
      %v4465 = vrot.slane %v4464, 2
      %v4466 = vmax.f32 %v4464, %v4465
      %v4467 = vrot.slane %v4466, 1
      %v4468 = vmax.f32 %v4466, %v4467
      %v4469 = vsel %vm4412, %v3781, -inf
      %v4470 = vrot.slane %v4469, 4
      %v4471 = vmax.f32 %v4469, %v4470
      %v4472 = vrot.slane %v4471, 2
      %v4473 = vmax.f32 %v4471, %v4472
      %v4474 = vrot.slane %v4473, 1
      %v4475 = vmax.f32 %v4473, %v4474
      %v4476 = vsel %vm4412, %v3789, -inf
      %v4477 = vrot.slane %v4476, 4
      %v4478 = vmax.f32 %v4476, %v4477
      %v4479 = vrot.slane %v4478, 2
      %v4480 = vmax.f32 %v4478, %v4479
      %v4481 = vrot.slane %v4480, 1
      %v4482 = vmax.f32 %v4480, %v4481
      %v4483 = vsel %vm4412, %v3788, -inf
      %v4484 = vrot.slane %v4483, 4
      %v4485 = vmax.f32 %v4483, %v4484
      %v4486 = vrot.slane %v4485, 2
      %v4487 = vmax.f32 %v4485, %v4486
      %v4488 = vrot.slane %v4487, 1
      %v4489 = vmax.f32 %v4487, %v4488
      %v4490 = vsel %vm4412, %v3790, -inf
      %v4491 = vrot.slane %v4490, 4
      %v4492 = vmax.f32 %v4490, %v4491
      %v4493 = vrot.slane %v4492, 2
      %v4494 = vmax.f32 %v4492, %v4493
      %v4495 = vrot.slane %v4494, 1
      %v4496 = vmax.f32 %v4494, %v4495
      %v4497 = vsel %vm4412, %v3798, -inf
      %v4498 = vrot.slane %v4497, 4
      %v4499 = vmax.f32 %v4497, %v4498
      %v4500 = vrot.slane %v4499, 2
      %v4501 = vmax.f32 %v4499, %v4500
      %v4502 = vrot.slane %v4501, 1
      %v4503 = vmax.f32 %v4501, %v4502
      %v4504 = vsel %vm4412, %v3806, -inf
      %v4505 = vrot.slane %v4504, 4
      %v4506 = vmax.f32 %v4504, %v4505
      %v4507 = vrot.slane %v4506, 2
      %v4508 = vmax.f32 %v4506, %v4507
      %v4509 = vrot.slane %v4508, 1
      %v4510 = vmax.f32 %v4508, %v4509
      %v4511 = vsel %vm4412, %v3805, -inf
      %v4512 = vrot.slane %v4511, 4
      %v4513 = vmax.f32 %v4511, %v4512
      %v4514 = vrot.slane %v4513, 2
      %v4515 = vmax.f32 %v4513, %v4514
      %v4516 = vrot.slane %v4515, 1
      %v4517 = vmax.f32 %v4515, %v4516
      %v4518 = vsel %vm4412, %v3807, -inf
      %v4519 = vrot.slane %v4518, 4
      %v4520 = vmax.f32 %v4518, %v4519
      %v4521 = vrot.slane %v4520, 2
      %v4522 = vmax.f32 %v4520, %v4521
      %v4523 = vrot.slane %v4522, 1
      %v4524 = vmax.f32 %v4522, %v4523
      %v4525 = vsel %vm4412, %v3815, -inf
      %v4526 = vrot.slane %v4525, 4
      %v4527 = vmax.f32 %v4525, %v4526
      %v4528 = vrot.slane %v4527, 2
      %v4529 = vmax.f32 %v4527, %v4528
      %v4530 = vrot.slane %v4529, 1
      %v4531 = vmax.f32 %v4529, %v4530
      %v4532 = vsel %vm4412, %v3823, -inf
      %v4533 = vrot.slane %v4532, 4
      %v4534 = vmax.f32 %v4532, %v4533
      %v4535 = vrot.slane %v4534, 2
      %v4536 = vmax.f32 %v4534, %v4535
      %v4537 = vrot.slane %v4536, 1
      %v4538 = vmax.f32 %v4536, %v4537
      %v4539 = vsel %vm4412, %v3822, -inf
      %v4540 = vrot.slane %v4539, 4
      %v4541 = vmax.f32 %v4539, %v4540
      %v4542 = vrot.slane %v4541, 2
      %v4543 = vmax.f32 %v4541, %v4542
      %v4544 = vrot.slane %v4543, 1
      %v4545 = vmax.f32 %v4543, %v4544
      %v4546 = vsel %vm4412, %v3824, -inf
      %v4547 = vrot.slane %v4546, 4
      %v4548 = vmax.f32 %v4546, %v4547
      %v4549 = vrot.slane %v4548, 2
      %v4550 = vmax.f32 %v4548, %v4549
      %v4551 = vrot.slane %v4550, 1
      %v4552 = vmax.f32 %v4550, %v4551
      %v4553 = vsel %vm4412, %v3832, -inf
      %v4554 = vrot.slane %v4553, 4
      %v4555 = vmax.f32 %v4553, %v4554
      %v4556 = vrot.slane %v4555, 2
      %v4557 = vmax.f32 %v4555, %v4556
      %v4558 = vrot.slane %v4557, 1
      %v4559 = vmax.f32 %v4557, %v4558
      %v4560 = vsel %vm4412, %v3840, -inf
      %v4561 = vrot.slane %v4560, 4
      %v4562 = vmax.f32 %v4560, %v4561
      %v4563 = vrot.slane %v4562, 2
      %v4564 = vmax.f32 %v4562, %v4563
      %v4565 = vrot.slane %v4564, 1
      %v4566 = vmax.f32 %v4564, %v4565
      %v4567 = vsel %vm4412, %v3839, -inf
      %v4568 = vrot.slane %v4567, 4
      %v4569 = vmax.f32 %v4567, %v4568
      %v4570 = vrot.slane %v4569, 2
      %v4571 = vmax.f32 %v4569, %v4570
      %v4572 = vrot.slane %v4571, 1
      %v4573 = vmax.f32 %v4571, %v4572
      %v4574 = vsel %vm4412, %v3841, -inf
      %v4575 = vrot.slane %v4574, 4
      %v4576 = vmax.f32 %v4574, %v4575
      %v4577 = vrot.slane %v4576, 2
      %v4578 = vmax.f32 %v4576, %v4577
      %v4579 = vrot.slane %v4578, 1
      %v4580 = vmax.f32 %v4578, %v4579
      %v4581 = vsel %vm4412, %v3849, -inf
      %v4582 = vrot.slane %v4581, 4
      %v4583 = vmax.f32 %v4581, %v4582
      %v4584 = vrot.slane %v4583, 2
      %v4585 = vmax.f32 %v4583, %v4584
      %v4586 = vrot.slane %v4585, 1
      %v4587 = vmax.f32 %v4585, %v4586
      %v4588 = vsel %vm4412, %v3857, -inf
      %v4589 = vrot.slane %v4588, 4
      %v4590 = vmax.f32 %v4588, %v4589
      %v4591 = vrot.slane %v4590, 2
      %v4592 = vmax.f32 %v4590, %v4591
      %v4593 = vrot.slane %v4592, 1
      %v4594 = vmax.f32 %v4592, %v4593
      %v4595 = vsel %vm4412, %v3856, -inf
      %v4596 = vrot.slane %v4595, 4
      %v4597 = vmax.f32 %v4595, %v4596
      %v4598 = vrot.slane %v4597, 2
      %v4599 = vmax.f32 %v4597, %v4598
      %v4600 = vrot.slane %v4599, 1
      %v4601 = vmax.f32 %v4599, %v4600
      %v4602 = vsel %vm4412, %v3858, -inf
      %v4603 = vrot.slane %v4602, 4
      %v4604 = vmax.f32 %v4602, %v4603
      %v4605 = vrot.slane %v4604, 2
      %v4606 = vmax.f32 %v4604, %v4605
      %v4607 = vrot.slane %v4606, 1
      %v4608 = vmax.f32 %v4606, %v4607
      %v4609 = vsel %vm4412, %v3866, -inf
      %v4610 = vrot.slane %v4609, 4
      %v4611 = vmax.f32 %v4609, %v4610
      %v4612 = vrot.slane %v4611, 2
      %v4613 = vmax.f32 %v4611, %v4612
      %v4614 = vrot.slane %v4613, 1
      %v4615 = vmax.f32 %v4613, %v4614
      %v4616 = vsel %vm4412, %v3874, -inf
      %v4617 = vrot.slane %v4616, 4
      %v4618 = vmax.f32 %v4616, %v4617
      %v4619 = vrot.slane %v4618, 2
      %v4620 = vmax.f32 %v4618, %v4619
      %v4621 = vrot.slane %v4620, 1
      %v4622 = vmax.f32 %v4620, %v4621
      %v4623 = vsel %vm4412, %v3873, -inf
      %v4624 = vrot.slane %v4623, 4
      %v4625 = vmax.f32 %v4623, %v4624
      %v4626 = vrot.slane %v4625, 2
      %v4627 = vmax.f32 %v4625, %v4626
      %v4628 = vrot.slane %v4627, 1
      %v4629 = vmax.f32 %v4627, %v4628
      %v4630 = vsel %vm4412, %v3875, -inf
      %v4631 = vrot.slane %v4630, 4
      %v4632 = vmax.f32 %v4630, %v4631
      %v4633 = vrot.slane %v4632, 2
      %v4634 = vmax.f32 %v4632, %v4633
      %v4635 = vrot.slane %v4634, 1
      %v4636 = vmax.f32 %v4634, %v4635
      %v4637 = vsel %vm4412, %v3883, -inf
      %v4638 = vrot.slane %v4637, 4
      %v4639 = vmax.f32 %v4637, %v4638
      %v4640 = vrot.slane %v4639, 2
      %v4641 = vmax.f32 %v4639, %v4640
      %v4642 = vrot.slane %v4641, 1
      %v4643 = vmax.f32 %v4641, %v4642
      %v4644 = vsel %vm4412, %v3891, -inf
      %v4645 = vrot.slane %v4644, 4
      %v4646 = vmax.f32 %v4644, %v4645
      %v4647 = vrot.slane %v4646, 2
      %v4648 = vmax.f32 %v4646, %v4647
      %v4649 = vrot.slane %v4648, 1
      %v4650 = vmax.f32 %v4648, %v4649
      %v4651 = vsel %vm4412, %v3890, -inf
      %v4652 = vrot.slane %v4651, 4
      %v4653 = vmax.f32 %v4651, %v4652
      %v4654 = vrot.slane %v4653, 2
      %v4655 = vmax.f32 %v4653, %v4654
      %v4656 = vrot.slane %v4655, 1
      %v4657 = vmax.f32 %v4655, %v4656
      %v4658 = vsel %vm4412, %v3892, -inf
      %v4659 = vrot.slane %v4658, 4
      %v4660 = vmax.f32 %v4658, %v4659
      %v4661 = vrot.slane %v4660, 2
      %v4662 = vmax.f32 %v4660, %v4661
      %v4663 = vrot.slane %v4662, 1
      %v4664 = vmax.f32 %v4662, %v4663
      %v4665 = vsel %vm4412, %v3900, -inf
      %v4666 = vrot.slane %v4665, 4
      %v4667 = vmax.f32 %v4665, %v4666
      %v4668 = vrot.slane %v4667, 2
      %v4669 = vmax.f32 %v4667, %v4668
      %v4670 = vrot.slane %v4669, 1
      %v4671 = vmax.f32 %v4669, %v4670
      %v4672 = vsel %vm4412, %v3908, -inf
      %v4673 = vrot.slane %v4672, 4
      %v4674 = vmax.f32 %v4672, %v4673
      %v4675 = vrot.slane %v4674, 2
      %v4676 = vmax.f32 %v4674, %v4675
      %v4677 = vrot.slane %v4676, 1
      %v4678 = vmax.f32 %v4676, %v4677
      %v4679 = vsel %vm4412, %v3907, -inf
      %v4680 = vrot.slane %v4679, 4
      %v4681 = vmax.f32 %v4679, %v4680
      %v4682 = vrot.slane %v4681, 2
      %v4683 = vmax.f32 %v4681, %v4682
      %v4684 = vrot.slane %v4683, 1
      %v4685 = vmax.f32 %v4683, %v4684
      %v4686 = vsel %vm4412, %v3909, -inf
      %v4687 = vrot.slane %v4686, 4
      %v4688 = vmax.f32 %v4686, %v4687
      %v4689 = vrot.slane %v4688, 2
      %v4690 = vmax.f32 %v4688, %v4689
      %v4691 = vrot.slane %v4690, 1
      %v4692 = vmax.f32 %v4690, %v4691
      %v4693 = vsel %vm4412, %v3917, -inf
      %v4694 = vrot.slane %v4693, 4
      %v4695 = vmax.f32 %v4693, %v4694
      %v4696 = vrot.slane %v4695, 2
      %v4697 = vmax.f32 %v4695, %v4696
      %v4698 = vrot.slane %v4697, 1
      %v4699 = vmax.f32 %v4697, %v4698
      %v4700 = vsel %vm4412, %v3925, -inf
      %v4701 = vrot.slane %v4700, 4
      %v4702 = vmax.f32 %v4700, %v4701
      %v4703 = vrot.slane %v4702, 2
      %v4704 = vmax.f32 %v4702, %v4703
      %v4705 = vrot.slane %v4704, 1
      %v4706 = vmax.f32 %v4704, %v4705
      %v4707 = vsel %vm4412, %v3924, -inf
      %v4708 = vrot.slane %v4707, 4
      %v4709 = vmax.f32 %v4707, %v4708
      %v4710 = vrot.slane %v4709, 2
      %v4711 = vmax.f32 %v4709, %v4710
      %v4712 = vrot.slane %v4711, 1
      %v4713 = vmax.f32 %v4711, %v4712
      %v4714 = vsel %vm4412, %v3926, -inf
      %v4715 = vrot.slane %v4714, 4
      %v4716 = vmax.f32 %v4714, %v4715
      %v4717 = vrot.slane %v4716, 2
      %v4718 = vmax.f32 %v4716, %v4717
      %v4719 = vrot.slane %v4718, 1
      %v4720 = vmax.f32 %v4718, %v4719
      %v4721 = vsel %vm4412, %v3934, -inf
      %v4722 = vrot.slane %v4721, 4
      %v4723 = vmax.f32 %v4721, %v4722
      %v4724 = vrot.slane %v4723, 2
      %v4725 = vmax.f32 %v4723, %v4724
      %v4726 = vrot.slane %v4725, 1
      %v4727 = vmax.f32 %v4725, %v4726
      %v4728 = vsel %vm4412, %v3942, -inf
      %v4729 = vrot.slane %v4728, 4
      %v4730 = vmax.f32 %v4728, %v4729
      %v4731 = vrot.slane %v4730, 2
      %v4732 = vmax.f32 %v4730, %v4731
      %v4733 = vrot.slane %v4732, 1
      %v4734 = vmax.f32 %v4732, %v4733
      %v4735 = vsel %vm4412, %v3941, -inf
      %v4736 = vrot.slane %v4735, 4
      %v4737 = vmax.f32 %v4735, %v4736
      %v4738 = vrot.slane %v4737, 2
      %v4739 = vmax.f32 %v4737, %v4738
      %v4740 = vrot.slane %v4739, 1
      %v4741 = vmax.f32 %v4739, %v4740
      %v4742 = vsel %vm4412, %v3943, -inf
      %v4743 = vrot.slane %v4742, 4
      %v4744 = vmax.f32 %v4742, %v4743
      %v4745 = vrot.slane %v4744, 2
      %v4746 = vmax.f32 %v4744, %v4745
      %v4747 = vrot.slane %v4746, 1
      %v4748 = vmax.f32 %v4746, %v4747
      %v4749 = vsel %vm4412, %v3951, -inf
      %v4750 = vrot.slane %v4749, 4
      %v4751 = vmax.f32 %v4749, %v4750
      %v4752 = vrot.slane %v4751, 2
      %v4753 = vmax.f32 %v4751, %v4752
      %v4754 = vrot.slane %v4753, 1
      %v4755 = vmax.f32 %v4753, %v4754
      %v4756 = vsel %vm4412, %v3959, -inf
      %v4757 = vrot.slane %v4756, 4
      %v4758 = vmax.f32 %v4756, %v4757
      %v4759 = vrot.slane %v4758, 2
      %v4760 = vmax.f32 %v4758, %v4759
      %v4761 = vrot.slane %v4760, 1
      %v4762 = vmax.f32 %v4760, %v4761
      %v4763 = vsel %vm4412, %v3958, -inf
      %v4764 = vrot.slane %v4763, 4
      %v4765 = vmax.f32 %v4763, %v4764
      %v4766 = vrot.slane %v4765, 2
      %v4767 = vmax.f32 %v4765, %v4766
      %v4768 = vrot.slane %v4767, 1
      %v4769 = vmax.f32 %v4767, %v4768
      %v4770 = vsel %vm4412, %v3960, -inf
      %v4771 = vrot.slane %v4770, 4
      %v4772 = vmax.f32 %v4770, %v4771
      %v4773 = vrot.slane %v4772, 2
      %v4774 = vmax.f32 %v4772, %v4773
      %v4775 = vrot.slane %v4774, 1
      %v4776 = vmax.f32 %v4774, %v4775
      %v4777 = vsel %vm4412, %v3968, -inf
      %v4778 = vrot.slane %v4777, 4
      %v4779 = vmax.f32 %v4777, %v4778
      %v4780 = vrot.slane %v4779, 2
      %v4781 = vmax.f32 %v4779, %v4780
      %v4782 = vrot.slane %v4781, 1
      %v4783 = vmax.f32 %v4781, %v4782
      %v4784 = vsel %vm4412, %v3976, -inf
      %v4785 = vrot.slane %v4784, 4
      %v4786 = vmax.f32 %v4784, %v4785
      %v4787 = vrot.slane %v4786, 2
      %v4788 = vmax.f32 %v4786, %v4787
      %v4789 = vrot.slane %v4788, 1
      %v4790 = vmax.f32 %v4788, %v4789
      %v4791 = vsel %vm4412, %v3975, -inf
      %v4792 = vrot.slane %v4791, 4
      %v4793 = vmax.f32 %v4791, %v4792
      %v4794 = vrot.slane %v4793, 2
      %v4795 = vmax.f32 %v4793, %v4794
      %v4796 = vrot.slane %v4795, 1
      %v4797 = vmax.f32 %v4795, %v4796
      %v4798 = vsel %vm4412, %v3977, -inf
      %v4799 = vrot.slane %v4798, 4
      %v4800 = vmax.f32 %v4798, %v4799
      %v4801 = vrot.slane %v4800, 2
      %v4802 = vmax.f32 %v4800, %v4801
      %v4803 = vrot.slane %v4802, 1
      %v4804 = vmax.f32 %v4802, %v4803
      %v4805 = vsel %vm4412, %v3985, -inf
      %v4806 = vrot.slane %v4805, 4
      %v4807 = vmax.f32 %v4805, %v4806
      %v4808 = vrot.slane %v4807, 2
      %v4809 = vmax.f32 %v4807, %v4808
      %v4810 = vrot.slane %v4809, 1
      %v4811 = vmax.f32 %v4809, %v4810
      %v4812 = vsel %vm4412, %v3993, -inf
      %v4813 = vrot.slane %v4812, 4
      %v4814 = vmax.f32 %v4812, %v4813
      %v4815 = vrot.slane %v4814, 2
      %v4816 = vmax.f32 %v4814, %v4815
      %v4817 = vrot.slane %v4816, 1
      %v4818 = vmax.f32 %v4816, %v4817
      %v4819 = vsel %vm4412, %v3992, -inf
      %v4820 = vrot.slane %v4819, 4
      %v4821 = vmax.f32 %v4819, %v4820
      %v4822 = vrot.slane %v4821, 2
      %v4823 = vmax.f32 %v4821, %v4822
      %v4824 = vrot.slane %v4823, 1
      %v4825 = vmax.f32 %v4823, %v4824
      %v4826 = vsel %vm4412, %v3994, -inf
      %v4827 = vrot.slane %v4826, 4
      %v4828 = vmax.f32 %v4826, %v4827
      %v4829 = vrot.slane %v4828, 2
      %v4830 = vmax.f32 %v4828, %v4829
      %v4831 = vrot.slane %v4830, 1
      %v4832 = vmax.f32 %v4830, %v4831
      %v4833 = vsel %vm4412, %v4002, -inf
      %v4834 = vrot.slane %v4833, 4
      %v4835 = vmax.f32 %v4833, %v4834
      %v4836 = vrot.slane %v4835, 2
      %v4837 = vmax.f32 %v4835, %v4836
      %v4838 = vrot.slane %v4837, 1
      %v4839 = vmax.f32 %v4837, %v4838
      %v4840 = vsel %vm4412, %v4010, -inf
      %v4841 = vrot.slane %v4840, 4
      %v4842 = vmax.f32 %v4840, %v4841
      %v4843 = vrot.slane %v4842, 2
      %v4844 = vmax.f32 %v4842, %v4843
      %v4845 = vrot.slane %v4844, 1
      %v4846 = vmax.f32 %v4844, %v4845
      %v4847 = vsel %vm4412, %v4009, -inf
      %v4848 = vrot.slane %v4847, 4
      %v4849 = vmax.f32 %v4847, %v4848
      %v4850 = vrot.slane %v4849, 2
      %v4851 = vmax.f32 %v4849, %v4850
      %v4852 = vrot.slane %v4851, 1
      %v4853 = vmax.f32 %v4851, %v4852
      %v4854 = vsel %vm4412, %v4011, -inf
      %v4855 = vrot.slane %v4854, 4
      %v4856 = vmax.f32 %v4854, %v4855
      %v4857 = vrot.slane %v4856, 2
      %v4858 = vmax.f32 %v4856, %v4857
      %v4859 = vrot.slane %v4858, 1
      %v4860 = vmax.f32 %v4858, %v4859
      %v4861 = vsel %vm4412, %v4019, -inf
      %v4862 = vrot.slane %v4861, 4
      %v4863 = vmax.f32 %v4861, %v4862
      %v4864 = vrot.slane %v4863, 2
      %v4865 = vmax.f32 %v4863, %v4864
      %v4866 = vrot.slane %v4865, 1
      %v4867 = vmax.f32 %v4865, %v4866
      %v4868 = vsel %vm4412, %v4027, -inf
      %v4869 = vrot.slane %v4868, 4
      %v4870 = vmax.f32 %v4868, %v4869
      %v4871 = vrot.slane %v4870, 2
      %v4872 = vmax.f32 %v4870, %v4871
      %v4873 = vrot.slane %v4872, 1
      %v4874 = vmax.f32 %v4872, %v4873
      %v4875 = vsel %vm4412, %v4026, -inf
      %v4876 = vrot.slane %v4875, 4
      %v4877 = vmax.f32 %v4875, %v4876
      %v4878 = vrot.slane %v4877, 2
      %v4879 = vmax.f32 %v4877, %v4878
      %v4880 = vrot.slane %v4879, 1
      %v4881 = vmax.f32 %v4879, %v4880
      %v4882 = vsel %vm4412, %v4028, -inf
      %v4883 = vrot.slane %v4882, 4
      %v4884 = vmax.f32 %v4882, %v4883
      %v4885 = vrot.slane %v4884, 2
      %v4886 = vmax.f32 %v4884, %v4885
      %v4887 = vrot.slane %v4886, 1
      %v4888 = vmax.f32 %v4886, %v4887
      %v4889 = vsel %vm4412, %v4036, -inf
      %v4890 = vrot.slane %v4889, 4
      %v4891 = vmax.f32 %v4889, %v4890
      %v4892 = vrot.slane %v4891, 2
      %v4893 = vmax.f32 %v4891, %v4892
      %v4894 = vrot.slane %v4893, 1
      %v4895 = vmax.f32 %v4893, %v4894
      %v4896 = vsel %vm4412, %v4044, -inf
      %v4897 = vrot.slane %v4896, 4
      %v4898 = vmax.f32 %v4896, %v4897
      %v4899 = vrot.slane %v4898, 2
      %v4900 = vmax.f32 %v4898, %v4899
      %v4901 = vrot.slane %v4900, 1
      %v4902 = vmax.f32 %v4900, %v4901
      %v4903 = vsel %vm4412, %v4043, -inf
      %v4904 = vrot.slane %v4903, 4
      %v4905 = vmax.f32 %v4903, %v4904
      %v4906 = vrot.slane %v4905, 2
      %v4907 = vmax.f32 %v4905, %v4906
      %v4908 = vrot.slane %v4907, 1
      %v4909 = vmax.f32 %v4907, %v4908
      %v4910 = vsel %vm4412, %v4045, -inf
      %v4911 = vrot.slane %v4910, 4
      %v4912 = vmax.f32 %v4910, %v4911
      %v4913 = vrot.slane %v4912, 2
      %v4914 = vmax.f32 %v4912, %v4913
      %v4915 = vrot.slane %v4914, 1
      %v4916 = vmax.f32 %v4914, %v4915
      %v4917 = vsel %vm4412, %v4053, -inf
      %v4918 = vrot.slane %v4917, 4
      %v4919 = vmax.f32 %v4917, %v4918
      %v4920 = vrot.slane %v4919, 2
      %v4921 = vmax.f32 %v4919, %v4920
      %v4922 = vrot.slane %v4921, 1
      %v4923 = vmax.f32 %v4921, %v4922
      %v4924 = vsel %vm4412, %v4061, -inf
      %v4925 = vrot.slane %v4924, 4
      %v4926 = vmax.f32 %v4924, %v4925
      %v4927 = vrot.slane %v4926, 2
      %v4928 = vmax.f32 %v4926, %v4927
      %v4929 = vrot.slane %v4928, 1
      %v4930 = vmax.f32 %v4928, %v4929
      %v4931 = vsel %vm4412, %v4060, -inf
      %v4932 = vrot.slane %v4931, 4
      %v4933 = vmax.f32 %v4931, %v4932
      %v4934 = vrot.slane %v4933, 2
      %v4935 = vmax.f32 %v4933, %v4934
      %v4936 = vrot.slane %v4935, 1
      %v4937 = vmax.f32 %v4935, %v4936
      %v4938 = vsel %vm4412, %v4062, -inf
      %v4939 = vrot.slane %v4938, 4
      %v4940 = vmax.f32 %v4938, %v4939
      %v4941 = vrot.slane %v4940, 2
      %v4942 = vmax.f32 %v4940, %v4941
      %v4943 = vrot.slane %v4942, 1
      %v4944 = vmax.f32 %v4942, %v4943
      %v4945 = vsel %vm4412, %v4070, -inf
      %v4946 = vrot.slane %v4945, 4
      %v4947 = vmax.f32 %v4945, %v4946
      %v4948 = vrot.slane %v4947, 2
      %v4949 = vmax.f32 %v4947, %v4948
      %v4950 = vrot.slane %v4949, 1
      %v4951 = vmax.f32 %v4949, %v4950
      %v4952 = vsel %vm4412, %v4078, -inf
      %v4953 = vrot.slane %v4952, 4
      %v4954 = vmax.f32 %v4952, %v4953
      %v4955 = vrot.slane %v4954, 2
      %v4956 = vmax.f32 %v4954, %v4955
      %v4957 = vrot.slane %v4956, 1
      %v4958 = vmax.f32 %v4956, %v4957
      %v4959 = vsel %vm4412, %v4077, -inf
      %v4960 = vrot.slane %v4959, 4
      %v4961 = vmax.f32 %v4959, %v4960
      %v4962 = vrot.slane %v4961, 2
      %v4963 = vmax.f32 %v4961, %v4962
      %v4964 = vrot.slane %v4963, 1
      %v4965 = vmax.f32 %v4963, %v4964
      %v4966 = vsel %vm4412, %v4079, -inf
      %v4967 = vrot.slane %v4966, 4
      %v4968 = vmax.f32 %v4966, %v4967
      %v4969 = vrot.slane %v4968, 2
      %v4970 = vmax.f32 %v4968, %v4969
      %v4971 = vrot.slane %v4970, 1
      %v4972 = vmax.f32 %v4970, %v4971
      %v4973 = vsel %vm4412, %v4087, -inf
      %v4974 = vrot.slane %v4973, 4
      %v4975 = vmax.f32 %v4973, %v4974
      %v4976 = vrot.slane %v4975, 2
      %v4977 = vmax.f32 %v4975, %v4976
      %v4978 = vrot.slane %v4977, 1
      %v4979 = vmax.f32 %v4977, %v4978
      %v4980 = vsel %vm4412, %v4095, -inf
      %v4981 = vrot.slane %v4980, 4
      %v4982 = vmax.f32 %v4980, %v4981
      %v4983 = vrot.slane %v4982, 2
      %v4984 = vmax.f32 %v4982, %v4983
      %v4985 = vrot.slane %v4984, 1
      %v4986 = vmax.f32 %v4984, %v4985
      %v4987 = vsel %vm4412, %v4094, -inf
      %v4988 = vrot.slane %v4987, 4
      %v4989 = vmax.f32 %v4987, %v4988
      %v4990 = vrot.slane %v4989, 2
      %v4991 = vmax.f32 %v4989, %v4990
      %v4992 = vrot.slane %v4991, 1
      %v4993 = vmax.f32 %v4991, %v4992
      %v4994 = vsel %vm4412, %v4096, -inf
      %v4995 = vrot.slane %v4994, 4
      %v4996 = vmax.f32 %v4994, %v4995
      %v4997 = vrot.slane %v4996, 2
      %v4998 = vmax.f32 %v4996, %v4997
      %v4999 = vrot.slane %v4998, 1
      %v5000 = vmax.f32 %v4998, %v4999
      %v5001 = vsel %vm4412, %v4104, -inf
      %v5002 = vrot.slane %v5001, 4
      %v5003 = vmax.f32 %v5001, %v5002
      %v5004 = vrot.slane %v5003, 2
      %v5005 = vmax.f32 %v5003, %v5004
      %v5006 = vrot.slane %v5005, 1
      %v5007 = vmax.f32 %v5005, %v5006
      %v5008 = vsel %vm4412, %v4112, -inf
      %v5009 = vrot.slane %v5008, 4
      %v5010 = vmax.f32 %v5008, %v5009
      %v5011 = vrot.slane %v5010, 2
      %v5012 = vmax.f32 %v5010, %v5011
      %v5013 = vrot.slane %v5012, 1
      %v5014 = vmax.f32 %v5012, %v5013
      %v5015 = vsel %vm4412, %v4111, -inf
      %v5016 = vrot.slane %v5015, 4
      %v5017 = vmax.f32 %v5015, %v5016
      %v5018 = vrot.slane %v5017, 2
      %v5019 = vmax.f32 %v5017, %v5018
      %v5020 = vrot.slane %v5019, 1
      %v5021 = vmax.f32 %v5019, %v5020
      %v5022 = vsel %vm4412, %v4113, -inf
      %v5023 = vrot.slane %v5022, 4
      %v5024 = vmax.f32 %v5022, %v5023
      %v5025 = vrot.slane %v5024, 2
      %v5026 = vmax.f32 %v5024, %v5025
      %v5027 = vrot.slane %v5026, 1
      %v5028 = vmax.f32 %v5026, %v5027
      %v5029 = vsel %vm4412, %v4121, -inf
      %v5030 = vrot.slane %v5029, 4
      %v5031 = vmax.f32 %v5029, %v5030
      %v5032 = vrot.slane %v5031, 2
      %v5033 = vmax.f32 %v5031, %v5032
      %v5034 = vrot.slane %v5033, 1
      %v5035 = vmax.f32 %v5033, %v5034
      %v5036 = vsel %vm4412, %v4129, -inf
      %v5037 = vrot.slane %v5036, 4
      %v5038 = vmax.f32 %v5036, %v5037
      %v5039 = vrot.slane %v5038, 2
      %v5040 = vmax.f32 %v5038, %v5039
      %v5041 = vrot.slane %v5040, 1
      %v5042 = vmax.f32 %v5040, %v5041
      %v5043 = vsel %vm4412, %v4128, -inf
      %v5044 = vrot.slane %v5043, 4
      %v5045 = vmax.f32 %v5043, %v5044
      %v5046 = vrot.slane %v5045, 2
      %v5047 = vmax.f32 %v5045, %v5046
      %v5048 = vrot.slane %v5047, 1
      %v5049 = vmax.f32 %v5047, %v5048
      %v5050 = vsel %vm4412, %v4130, -inf
      %v5051 = vrot.slane %v5050, 4
      %v5052 = vmax.f32 %v5050, %v5051
      %v5053 = vrot.slane %v5052, 2
      %v5054 = vmax.f32 %v5052, %v5053
      %v5055 = vrot.slane %v5054, 1
      %v5056 = vmax.f32 %v5054, %v5055
      %v5057 = vsel %vm4412, %v4138, -inf
      %v5058 = vrot.slane %v5057, 4
      %v5059 = vmax.f32 %v5057, %v5058
      %v5060 = vrot.slane %v5059, 2
      %v5061 = vmax.f32 %v5059, %v5060
      %v5062 = vrot.slane %v5061, 1
      %v5063 = vmax.f32 %v5061, %v5062
      %v5064 = vsel %vm4412, %v4146, -inf
      %v5065 = vrot.slane %v5064, 4
      %v5066 = vmax.f32 %v5064, %v5065
      %v5067 = vrot.slane %v5066, 2
      %v5068 = vmax.f32 %v5066, %v5067
      %v5069 = vrot.slane %v5068, 1
      %v5070 = vmax.f32 %v5068, %v5069
      %v5071 = vsel %vm4412, %v4145, -inf
      %v5072 = vrot.slane %v5071, 4
      %v5073 = vmax.f32 %v5071, %v5072
      %v5074 = vrot.slane %v5073, 2
      %v5075 = vmax.f32 %v5073, %v5074
      %v5076 = vrot.slane %v5075, 1
      %v5077 = vmax.f32 %v5075, %v5076
      %v5078 = vsel %vm4412, %v4147, -inf
      %v5079 = vrot.slane %v5078, 4
      %v5080 = vmax.f32 %v5078, %v5079
      %v5081 = vrot.slane %v5080, 2
      %v5082 = vmax.f32 %v5080, %v5081
      %v5083 = vrot.slane %v5082, 1
      %v5084 = vmax.f32 %v5082, %v5083
      %v5085 = vsel %vm4412, %v4155, -inf
      %v5086 = vrot.slane %v5085, 4
      %v5087 = vmax.f32 %v5085, %v5086
      %v5088 = vrot.slane %v5087, 2
      %v5089 = vmax.f32 %v5087, %v5088
      %v5090 = vrot.slane %v5089, 1
      %v5091 = vmax.f32 %v5089, %v5090
      %v5092 = vsel %vm4412, %v4163, -inf
      %v5093 = vrot.slane %v5092, 4
      %v5094 = vmax.f32 %v5092, %v5093
      %v5095 = vrot.slane %v5094, 2
      %v5096 = vmax.f32 %v5094, %v5095
      %v5097 = vrot.slane %v5096, 1
      %v5098 = vmax.f32 %v5096, %v5097
      %v5099 = vsel %vm4412, %v4162, -inf
      %v5100 = vrot.slane %v5099, 4
      %v5101 = vmax.f32 %v5099, %v5100
      %v5102 = vrot.slane %v5101, 2
      %v5103 = vmax.f32 %v5101, %v5102
      %v5104 = vrot.slane %v5103, 1
      %v5105 = vmax.f32 %v5103, %v5104
      %v5106 = vsel %vm4412, %v4164, -inf
      %v5107 = vrot.slane %v5106, 4
      %v5108 = vmax.f32 %v5106, %v5107
      %v5109 = vrot.slane %v5108, 2
      %v5110 = vmax.f32 %v5108, %v5109
      %v5111 = vrot.slane %v5110, 1
      %v5112 = vmax.f32 %v5110, %v5111
      %v5113 = vsel %vm4412, %v4172, -inf
      %v5114 = vrot.slane %v5113, 4
      %v5115 = vmax.f32 %v5113, %v5114
      %v5116 = vrot.slane %v5115, 2
      %v5117 = vmax.f32 %v5115, %v5116
      %v5118 = vrot.slane %v5117, 1
      %v5119 = vmax.f32 %v5117, %v5118
      %v5120 = vsel %vm4412, %v4180, -inf
      %v5121 = vrot.slane %v5120, 4
      %v5122 = vmax.f32 %v5120, %v5121
      %v5123 = vrot.slane %v5122, 2
      %v5124 = vmax.f32 %v5122, %v5123
      %v5125 = vrot.slane %v5124, 1
      %v5126 = vmax.f32 %v5124, %v5125
      %v5127 = vsel %vm4412, %v4179, -inf
      %v5128 = vrot.slane %v5127, 4
      %v5129 = vmax.f32 %v5127, %v5128
      %v5130 = vrot.slane %v5129, 2
      %v5131 = vmax.f32 %v5129, %v5130
      %v5132 = vrot.slane %v5131, 1
      %v5133 = vmax.f32 %v5131, %v5132
      %v5134 = vsel %vm4412, %v4181, -inf
      %v5135 = vrot.slane %v5134, 4
      %v5136 = vmax.f32 %v5134, %v5135
      %v5137 = vrot.slane %v5136, 2
      %v5138 = vmax.f32 %v5136, %v5137
      %v5139 = vrot.slane %v5138, 1
      %v5140 = vmax.f32 %v5138, %v5139
      %v5141 = vsel %vm4412, %v4189, -inf
      %v5142 = vrot.slane %v5141, 4
      %v5143 = vmax.f32 %v5141, %v5142
      %v5144 = vrot.slane %v5143, 2
      %v5145 = vmax.f32 %v5143, %v5144
      %v5146 = vrot.slane %v5145, 1
      %v5147 = vmax.f32 %v5145, %v5146
      %v5148 = vsel %vm4412, %v4197, -inf
      %v5149 = vrot.slane %v5148, 4
      %v5150 = vmax.f32 %v5148, %v5149
      %v5151 = vrot.slane %v5150, 2
      %v5152 = vmax.f32 %v5150, %v5151
      %v5153 = vrot.slane %v5152, 1
      %v5154 = vmax.f32 %v5152, %v5153
      %v5155 = vsel %vm4412, %v4196, -inf
      %v5156 = vrot.slane %v5155, 4
      %v5157 = vmax.f32 %v5155, %v5156
      %v5158 = vrot.slane %v5157, 2
      %v5159 = vmax.f32 %v5157, %v5158
      %v5160 = vrot.slane %v5159, 1
      %v5161 = vmax.f32 %v5159, %v5160
      %v5162 = vsel %vm4412, %v4198, -inf
      %v5163 = vrot.slane %v5162, 4
      %v5164 = vmax.f32 %v5162, %v5163
      %v5165 = vrot.slane %v5164, 2
      %v5166 = vmax.f32 %v5164, %v5165
      %v5167 = vrot.slane %v5166, 1
      %v5168 = vmax.f32 %v5166, %v5167
      %v5169 = vsel %vm4412, %v4206, -inf
      %v5170 = vrot.slane %v5169, 4
      %v5171 = vmax.f32 %v5169, %v5170
      %v5172 = vrot.slane %v5171, 2
      %v5173 = vmax.f32 %v5171, %v5172
      %v5174 = vrot.slane %v5173, 1
      %v5175 = vmax.f32 %v5173, %v5174
      %v5176 = vsel %vm4412, %v4214, -inf
      %v5177 = vrot.slane %v5176, 4
      %v5178 = vmax.f32 %v5176, %v5177
      %v5179 = vrot.slane %v5178, 2
      %v5180 = vmax.f32 %v5178, %v5179
      %v5181 = vrot.slane %v5180, 1
      %v5182 = vmax.f32 %v5180, %v5181
      %v5183 = vsel %vm4412, %v4213, -inf
      %v5184 = vrot.slane %v5183, 4
      %v5185 = vmax.f32 %v5183, %v5184
      %v5186 = vrot.slane %v5185, 2
      %v5187 = vmax.f32 %v5185, %v5186
      %v5188 = vrot.slane %v5187, 1
      %v5189 = vmax.f32 %v5187, %v5188
      %v5190 = vsel %vm4412, %v4215, -inf
      %v5191 = vrot.slane %v5190, 4
      %v5192 = vmax.f32 %v5190, %v5191
      %v5193 = vrot.slane %v5192, 2
      %v5194 = vmax.f32 %v5192, %v5193
      %v5195 = vrot.slane %v5194, 1
      %v5196 = vmax.f32 %v5194, %v5195
      %v5197 = vsel %vm4412, %v4223, -inf
      %v5198 = vrot.slane %v5197, 4
      %v5199 = vmax.f32 %v5197, %v5198
      %v5200 = vrot.slane %v5199, 2
      %v5201 = vmax.f32 %v5199, %v5200
      %v5202 = vrot.slane %v5201, 1
      %v5203 = vmax.f32 %v5201, %v5202
      %v5204 = vsel %vm4412, %v4231, -inf
      %v5205 = vrot.slane %v5204, 4
      %v5206 = vmax.f32 %v5204, %v5205
      %v5207 = vrot.slane %v5206, 2
      %v5208 = vmax.f32 %v5206, %v5207
      %v5209 = vrot.slane %v5208, 1
      %v5210 = vmax.f32 %v5208, %v5209
      %v5211 = vsel %vm4412, %v4230, -inf
      %v5212 = vrot.slane %v5211, 4
      %v5213 = vmax.f32 %v5211, %v5212
      %v5214 = vrot.slane %v5213, 2
      %v5215 = vmax.f32 %v5213, %v5214
      %v5216 = vrot.slane %v5215, 1
      %v5217 = vmax.f32 %v5215, %v5216
      %v5218 = vsel %vm4412, %v4232, -inf
      %v5219 = vrot.slane %v5218, 4
      %v5220 = vmax.f32 %v5218, %v5219
      %v5221 = vrot.slane %v5220, 2
      %v5222 = vmax.f32 %v5220, %v5221
      %v5223 = vrot.slane %v5222, 1
      %v5224 = vmax.f32 %v5222, %v5223
      %v5225 = vsel %vm4412, %v4240, -inf
      %v5226 = vrot.slane %v5225, 4
      %v5227 = vmax.f32 %v5225, %v5226
      %v5228 = vrot.slane %v5227, 2
      %v5229 = vmax.f32 %v5227, %v5228
      %v5230 = vrot.slane %v5229, 1
      %v5231 = vmax.f32 %v5229, %v5230
      %v5232 = vsel %vm4412, %v4248, -inf
      %v5233 = vrot.slane %v5232, 4
      %v5234 = vmax.f32 %v5232, %v5233
      %v5235 = vrot.slane %v5234, 2
      %v5236 = vmax.f32 %v5234, %v5235
      %v5237 = vrot.slane %v5236, 1
      %v5238 = vmax.f32 %v5236, %v5237
      %v5239 = vsel %vm4412, %v4247, -inf
      %v5240 = vrot.slane %v5239, 4
      %v5241 = vmax.f32 %v5239, %v5240
      %v5242 = vrot.slane %v5241, 2
      %v5243 = vmax.f32 %v5241, %v5242
      %v5244 = vrot.slane %v5243, 1
      %v5245 = vmax.f32 %v5243, %v5244
      %v5246 = vsel %vm4412, %v4249, -inf
      %v5247 = vrot.slane %v5246, 4
      %v5248 = vmax.f32 %v5246, %v5247
      %v5249 = vrot.slane %v5248, 2
      %v5250 = vmax.f32 %v5248, %v5249
      %v5251 = vrot.slane %v5250, 1
      %v5252 = vmax.f32 %v5250, %v5251
      %v5253 = vsel %vm4412, %v4257, -inf
      %v5254 = vrot.slane %v5253, 4
      %v5255 = vmax.f32 %v5253, %v5254
      %v5256 = vrot.slane %v5255, 2
      %v5257 = vmax.f32 %v5255, %v5256
      %v5258 = vrot.slane %v5257, 1
      %v5259 = vmax.f32 %v5257, %v5258
      %v5260 = vsel %vm4412, %v4265, -inf
      %v5261 = vrot.slane %v5260, 4
      %v5262 = vmax.f32 %v5260, %v5261
      %v5263 = vrot.slane %v5262, 2
      %v5264 = vmax.f32 %v5262, %v5263
      %v5265 = vrot.slane %v5264, 1
      %v5266 = vmax.f32 %v5264, %v5265
      %v5267 = vsel %vm4412, %v4264, -inf
      %v5268 = vrot.slane %v5267, 4
      %v5269 = vmax.f32 %v5267, %v5268
      %v5270 = vrot.slane %v5269, 2
      %v5271 = vmax.f32 %v5269, %v5270
      %v5272 = vrot.slane %v5271, 1
      %v5273 = vmax.f32 %v5271, %v5272
      %v5274 = vsel %vm4412, %v4266, -inf
      %v5275 = vrot.slane %v5274, 4
      %v5276 = vmax.f32 %v5274, %v5275
      %v5277 = vrot.slane %v5276, 2
      %v5278 = vmax.f32 %v5276, %v5277
      %v5279 = vrot.slane %v5278, 1
      %v5280 = vmax.f32 %v5278, %v5279
      %v5281 = vsel %vm4412, %v4274, -inf
      %v5282 = vrot.slane %v5281, 4
      %v5283 = vmax.f32 %v5281, %v5282
      %v5284 = vrot.slane %v5283, 2
      %v5285 = vmax.f32 %v5283, %v5284
      %v5286 = vrot.slane %v5285, 1
      %v5287 = vmax.f32 %v5285, %v5286
      %v5288 = vsel %vm4412, %v4282, -inf
      %v5289 = vrot.slane %v5288, 4
      %v5290 = vmax.f32 %v5288, %v5289
      %v5291 = vrot.slane %v5290, 2
      %v5292 = vmax.f32 %v5290, %v5291
      %v5293 = vrot.slane %v5292, 1
      %v5294 = vmax.f32 %v5292, %v5293
      %v5295 = vsel %vm4412, %v4281, -inf
      %v5296 = vrot.slane %v5295, 4
      %v5297 = vmax.f32 %v5295, %v5296
      %v5298 = vrot.slane %v5297, 2
      %v5299 = vmax.f32 %v5297, %v5298
      %v5300 = vrot.slane %v5299, 1
      %v5301 = vmax.f32 %v5299, %v5300
      %v5302 = vsel %vm4412, %v4283, -inf
      %v5303 = vrot.slane %v5302, 4
      %v5304 = vmax.f32 %v5302, %v5303
      %v5305 = vrot.slane %v5304, 2
      %v5306 = vmax.f32 %v5304, %v5305
      %v5307 = vrot.slane %v5306, 1
      %v5308 = vmax.f32 %v5306, %v5307
      %vm5309 = vcmask 64512
      %v5310 = vsel %vm5309, %v4419, -inf
      %v5311 = vsel %vm5309, %v4475, -inf
      %v5312 = vmax.f32 %v5310, %v5311
      %v5313 = vsel %vm5309, %v4426, -inf
      %v5314 = vsel %vm5309, %v4482, -inf
      %v5315 = vmax.f32 %v5313, %v5314
      %v5316 = vsel %vm5309, %v4433, -inf
      %v5317 = vsel %vm5309, %v4489, -inf
      %v5318 = vmax.f32 %v5316, %v5317
      %v5319 = vsel %vm5309, %v4440, -inf
      %v5320 = vsel %vm5309, %v4496, -inf
      %v5321 = vmax.f32 %v5319, %v5320
      %v5322 = vsel %vm5309, %v4447, -inf
      %v5323 = vsel %vm5309, %v4503, -inf
      %v5324 = vmax.f32 %v5322, %v5323
      %v5325 = vsel %vm5309, %v4454, -inf
      %v5326 = vsel %vm5309, %v4510, -inf
      %v5327 = vmax.f32 %v5325, %v5326
      %v5328 = vsel %vm5309, %v4461, -inf
      %v5329 = vsel %vm5309, %v4517, -inf
      %v5330 = vmax.f32 %v5328, %v5329
      %v5331 = vsel %vm5309, %v4468, -inf
      %v5332 = vsel %vm5309, %v4524, -inf
      %v5333 = vmax.f32 %v5331, %v5332
      %v5334 = vsel %vm5309, %v4531, -inf
      %v5335 = vsel %vm5309, %v4587, -inf
      %v5336 = vmax.f32 %v5334, %v5335
      %v5337 = vsel %vm5309, %v4538, -inf
      %v5338 = vsel %vm5309, %v4594, -inf
      %v5339 = vmax.f32 %v5337, %v5338
      %v5340 = vsel %vm5309, %v4545, -inf
      %v5341 = vsel %vm5309, %v4601, -inf
      %v5342 = vmax.f32 %v5340, %v5341
      %v5343 = vsel %vm5309, %v4552, -inf
      %v5344 = vsel %vm5309, %v4608, -inf
      %v5345 = vmax.f32 %v5343, %v5344
      %v5346 = vsel %vm5309, %v4559, -inf
      %v5347 = vsel %vm5309, %v4615, -inf
      %v5348 = vmax.f32 %v5346, %v5347
      %v5349 = vsel %vm5309, %v4566, -inf
      %v5350 = vsel %vm5309, %v4622, -inf
      %v5351 = vmax.f32 %v5349, %v5350
      %v5352 = vsel %vm5309, %v4573, -inf
      %v5353 = vsel %vm5309, %v4629, -inf
      %v5354 = vmax.f32 %v5352, %v5353
      %v5355 = vsel %vm5309, %v4580, -inf
      %v5356 = vsel %vm5309, %v4636, -inf
      %v5357 = vmax.f32 %v5355, %v5356
      %v5358 = vsel %vm5309, %v4643, -inf
      %v5359 = vsel %vm5309, %v4699, -inf
      %v5360 = vmax.f32 %v5358, %v5359
      %v5361 = vsel %vm5309, %v4650, -inf
      %v5362 = vsel %vm5309, %v4706, -inf
      %v5363 = vmax.f32 %v5361, %v5362
      %v5364 = vsel %vm5309, %v4657, -inf
      %v5365 = vsel %vm5309, %v4713, -inf
      %v5366 = vmax.f32 %v5364, %v5365
      %v5367 = vsel %vm5309, %v4664, -inf
      %v5368 = vsel %vm5309, %v4720, -inf
      %v5369 = vmax.f32 %v5367, %v5368
      %v5370 = vsel %vm5309, %v4671, -inf
      %v5371 = vsel %vm5309, %v4727, -inf
      %v5372 = vmax.f32 %v5370, %v5371
      %v5373 = vsel %vm5309, %v4678, -inf
      %v5374 = vsel %vm5309, %v4734, -inf
      %v5375 = vmax.f32 %v5373, %v5374
      %v5376 = vsel %vm5309, %v4685, -inf
      %v5377 = vsel %vm5309, %v4741, -inf
      %v5378 = vmax.f32 %v5376, %v5377
      %v5379 = vsel %vm5309, %v4692, -inf
      %v5380 = vsel %vm5309, %v4748, -inf
      %v5381 = vmax.f32 %v5379, %v5380
      %v5382 = vsel %vm5309, %v4755, -inf
      %v5383 = vsel %vm5309, %v4811, -inf
      %v5384 = vmax.f32 %v5382, %v5383
      %v5385 = vsel %vm5309, %v4762, -inf
      %v5386 = vsel %vm5309, %v4818, -inf
      %v5387 = vmax.f32 %v5385, %v5386
      %v5388 = vsel %vm5309, %v4769, -inf
      %v5389 = vsel %vm5309, %v4825, -inf
      %v5390 = vmax.f32 %v5388, %v5389
      %v5391 = vsel %vm5309, %v4776, -inf
      %v5392 = vsel %vm5309, %v4832, -inf
      %v5393 = vmax.f32 %v5391, %v5392
      %v5394 = vsel %vm5309, %v4783, -inf
      %v5395 = vsel %vm5309, %v4839, -inf
      %v5396 = vmax.f32 %v5394, %v5395
      %v5397 = vsel %vm5309, %v4790, -inf
      %v5398 = vsel %vm5309, %v4846, -inf
      %v5399 = vmax.f32 %v5397, %v5398
      %v5400 = vsel %vm5309, %v4797, -inf
      %v5401 = vsel %vm5309, %v4853, -inf
      %v5402 = vmax.f32 %v5400, %v5401
      %v5403 = vsel %vm5309, %v4804, -inf
      %v5404 = vsel %vm5309, %v4860, -inf
      %v5405 = vmax.f32 %v5403, %v5404
      %v5406 = vsel %vm5309, %v4867, -inf
      %v5407 = vsel %vm5309, %v4923, -inf
      %v5408 = vmax.f32 %v5406, %v5407
      %v5409 = vsel %vm5309, %v4874, -inf
      %v5410 = vsel %vm5309, %v4930, -inf
      %v5411 = vmax.f32 %v5409, %v5410
      %v5412 = vsel %vm5309, %v4881, -inf
      %v5413 = vsel %vm5309, %v4937, -inf
      %v5414 = vmax.f32 %v5412, %v5413
      %v5415 = vsel %vm5309, %v4888, -inf
      %v5416 = vsel %vm5309, %v4944, -inf
      %v5417 = vmax.f32 %v5415, %v5416
      %v5418 = vsel %vm5309, %v4895, -inf
      %v5419 = vsel %vm5309, %v4951, -inf
      %v5420 = vmax.f32 %v5418, %v5419
      %v5421 = vsel %vm5309, %v4902, -inf
      %v5422 = vsel %vm5309, %v4958, -inf
      %v5423 = vmax.f32 %v5421, %v5422
      %v5424 = vsel %vm5309, %v4909, -inf
      %v5425 = vsel %vm5309, %v4965, -inf
      %v5426 = vmax.f32 %v5424, %v5425
      %v5427 = vsel %vm5309, %v4916, -inf
      %v5428 = vsel %vm5309, %v4972, -inf
      %v5429 = vmax.f32 %v5427, %v5428
      %v5430 = vsel %vm5309, %v4979, -inf
      %v5431 = vsel %vm5309, %v5035, -inf
      %v5432 = vmax.f32 %v5430, %v5431
      %v5433 = vsel %vm5309, %v4986, -inf
      %v5434 = vsel %vm5309, %v5042, -inf
      %v5435 = vmax.f32 %v5433, %v5434
      %v5436 = vsel %vm5309, %v4993, -inf
      %v5437 = vsel %vm5309, %v5049, -inf
      %v5438 = vmax.f32 %v5436, %v5437
      %v5439 = vsel %vm5309, %v5000, -inf
      %v5440 = vsel %vm5309, %v5056, -inf
      %v5441 = vmax.f32 %v5439, %v5440
      %v5442 = vsel %vm5309, %v5007, -inf
      %v5443 = vsel %vm5309, %v5063, -inf
      %v5444 = vmax.f32 %v5442, %v5443
      %v5445 = vsel %vm5309, %v5014, -inf
      %v5446 = vsel %vm5309, %v5070, -inf
      %v5447 = vmax.f32 %v5445, %v5446
      %v5448 = vsel %vm5309, %v5021, -inf
      %v5449 = vsel %vm5309, %v5077, -inf
      %v5450 = vmax.f32 %v5448, %v5449
      %v5451 = vsel %vm5309, %v5028, -inf
      %v5452 = vsel %vm5309, %v5084, -inf
      %v5453 = vmax.f32 %v5451, %v5452
      %v5454 = vsel %vm5309, %v5091, -inf
      %v5455 = vsel %vm5309, %v5147, -inf
      %v5456 = vmax.f32 %v5454, %v5455
      %v5457 = vsel %vm5309, %v5098, -inf
      %v5458 = vsel %vm5309, %v5154, -inf
      %v5459 = vmax.f32 %v5457, %v5458
      %v5460 = vsel %vm5309, %v5105, -inf
      %v5461 = vsel %vm5309, %v5161, -inf
      %v5462 = vmax.f32 %v5460, %v5461
      %v5463 = vsel %vm5309, %v5112, -inf
      %v5464 = vsel %vm5309, %v5168, -inf
      %v5465 = vmax.f32 %v5463, %v5464
      %v5466 = vsel %vm5309, %v5119, -inf
      %v5467 = vsel %vm5309, %v5175, -inf
      %v5468 = vmax.f32 %v5466, %v5467
      %v5469 = vsel %vm5309, %v5126, -inf
      %v5470 = vsel %vm5309, %v5182, -inf
      %v5471 = vmax.f32 %v5469, %v5470
      %v5472 = vsel %vm5309, %v5133, -inf
      %v5473 = vsel %vm5309, %v5189, -inf
      %v5474 = vmax.f32 %v5472, %v5473
      %v5475 = vsel %vm5309, %v5140, -inf
      %v5476 = vsel %vm5309, %v5196, -inf
      %v5477 = vmax.f32 %v5475, %v5476
      %v5478 = vsel %vm5309, %v5203, -inf
      %v5479 = vsel %vm5309, %v5259, -inf
      %v5480 = vmax.f32 %v5478, %v5479
      %v5481 = vsel %vm5309, %v5210, -inf
      %v5482 = vsel %vm5309, %v5266, -inf
      %v5483 = vmax.f32 %v5481, %v5482
      %v5484 = vsel %vm5309, %v5217, -inf
      %v5485 = vsel %vm5309, %v5273, -inf
      %v5486 = vmax.f32 %v5484, %v5485
      %v5487 = vsel %vm5309, %v5224, -inf
      %v5488 = vsel %vm5309, %v5280, -inf
      %v5489 = vmax.f32 %v5487, %v5488
      %v5490 = vsel %vm5309, %v5231, -inf
      %v5491 = vsel %vm5309, %v5287, -inf
      %v5492 = vmax.f32 %v5490, %v5491
      %v5493 = vsel %vm5309, %v5238, -inf
      %v5494 = vsel %vm5309, %v5294, -inf
      %v5495 = vmax.f32 %v5493, %v5494
      %v5496 = vsel %vm5309, %v5245, -inf
      %v5497 = vsel %vm5309, %v5301, -inf
      %v5498 = vmax.f32 %v5496, %v5497
      %v5499 = vsel %vm5309, %v5252, -inf
      %v5500 = vsel %vm5309, %v5308, -inf
      %v5501 = vmax.f32 %v5499, %v5500
      %v5502 = vpack.c.bf16 %v5312, %v5312
      %v5503 = vpack.c.bf16 %v5315, %v5315
      %v5504 = vpack.c.bf16 %v5318, %v5318
      %v5505 = vpack.c.bf16 %v5321, %v5321
      %v5506 = vpack.c.bf16 %v5324, %v5324
      %v5507 = vpack.c.bf16 %v5327, %v5327
      %v5508 = vpack.c.bf16 %v5330, %v5330
      %v5509 = vpack.c.bf16 %v5333, %v5333
      %v5510 = vpack.c.bf16 %v5336, %v5336
      %v5511 = vpack.c.bf16 %v5339, %v5339
      %v5512 = vpack.c.bf16 %v5342, %v5342
      %v5513 = vpack.c.bf16 %v5345, %v5345
      %v5514 = vpack.c.bf16 %v5348, %v5348
      %v5515 = vpack.c.bf16 %v5351, %v5351
      %v5516 = vpack.c.bf16 %v5354, %v5354
      %v5517 = vpack.c.bf16 %v5357, %v5357
      %v5518 = vpack.c.bf16 %v5360, %v5360
      %v5519 = vpack.c.bf16 %v5363, %v5363
      %v5520 = vpack.c.bf16 %v5366, %v5366
      %v5521 = vpack.c.bf16 %v5369, %v5369
      %v5522 = vpack.c.bf16 %v5372, %v5372
      %v5523 = vpack.c.bf16 %v5375, %v5375
      %v5524 = vpack.c.bf16 %v5378, %v5378
      %v5525 = vpack.c.bf16 %v5381, %v5381
      %v5526 = vpack.c.bf16 %v5384, %v5384
      %v5527 = vpack.c.bf16 %v5387, %v5387
      %v5528 = vpack.c.bf16 %v5390, %v5390
      %v5529 = vpack.c.bf16 %v5393, %v5393
      %v5530 = vpack.c.bf16 %v5396, %v5396
      %v5531 = vpack.c.bf16 %v5399, %v5399
      %v5532 = vpack.c.bf16 %v5402, %v5402
      %v5533 = vpack.c.bf16 %v5405, %v5405
      %v5534 = vpack.c.bf16 %v5408, %v5408
      %v5535 = vpack.c.bf16 %v5411, %v5411
      %v5536 = vpack.c.bf16 %v5414, %v5414
      %v5537 = vpack.c.bf16 %v5417, %v5417
      %v5538 = vpack.c.bf16 %v5420, %v5420
      %v5539 = vpack.c.bf16 %v5423, %v5423
      %v5540 = vpack.c.bf16 %v5426, %v5426
      %v5541 = vpack.c.bf16 %v5429, %v5429
      %v5542 = vpack.c.bf16 %v5432, %v5432
      %v5543 = vpack.c.bf16 %v5435, %v5435
      %v5544 = vpack.c.bf16 %v5438, %v5438
      %v5545 = vpack.c.bf16 %v5441, %v5441
      %v5546 = vpack.c.bf16 %v5444, %v5444
      %v5547 = vpack.c.bf16 %v5447, %v5447
      %v5548 = vpack.c.bf16 %v5450, %v5450
      %v5549 = vpack.c.bf16 %v5453, %v5453
      %v5550 = vpack.c.bf16 %v5456, %v5456
      %v5551 = vpack.c.bf16 %v5459, %v5459
      %v5552 = vpack.c.bf16 %v5462, %v5462
      %v5553 = vpack.c.bf16 %v5465, %v5465
      %v5554 = vpack.c.bf16 %v5468, %v5468
      %v5555 = vpack.c.bf16 %v5471, %v5471
      %v5556 = vpack.c.bf16 %v5474, %v5474
      %v5557 = vpack.c.bf16 %v5477, %v5477
      %v5558 = vpack.c.bf16 %v5480, %v5480
      %v5559 = vpack.c.bf16 %v5483, %v5483
      %v5560 = vpack.c.bf16 %v5486, %v5486
      %v5561 = vpack.c.bf16 %v5489, %v5489
      %v5562 = vpack.c.bf16 %v5492, %v5492
      %v5563 = vpack.c.bf16 %v5495, %v5495
      %v5564 = vpack.c.bf16 %v5498, %v5498
      %v5565 = vpack.c.bf16 %v5501, %v5501
      %v5630 = vunpack.c.l.b16 %v5502
      %v5631 = vunpack.c.l.b16 %v5503
      %v5632 = vunpack.c.l.b16 %v5504
      %v5633 = vunpack.c.l.b16 %v5505
      %v5634 = vunpack.c.l.b16 %v5506
      %v5635 = vunpack.c.l.b16 %v5507
      %v5636 = vunpack.c.l.b16 %v5508
      %v5637 = vunpack.c.l.b16 %v5509
      %v5638 = vunpack.c.l.b16 %v5510
      %v5639 = vunpack.c.l.b16 %v5511
      %v5640 = vunpack.c.l.b16 %v5512
      %v5641 = vunpack.c.l.b16 %v5513
      %v5642 = vunpack.c.l.b16 %v5514
      %v5643 = vunpack.c.l.b16 %v5515
      %v5644 = vunpack.c.l.b16 %v5516
      %v5645 = vunpack.c.l.b16 %v5517
      %v5646 = vunpack.c.l.b16 %v5518
      %v5647 = vunpack.c.l.b16 %v5519
      %v5648 = vunpack.c.l.b16 %v5520
      %v5649 = vunpack.c.l.b16 %v5521
      %v5650 = vunpack.c.l.b16 %v5522
      %v5651 = vunpack.c.l.b16 %v5523
      %v5652 = vunpack.c.l.b16 %v5524
      %v5653 = vunpack.c.l.b16 %v5525
      %v5654 = vunpack.c.l.b16 %v5526
      %v5655 = vunpack.c.l.b16 %v5527
      %v5656 = vunpack.c.l.b16 %v5528
      %v5657 = vunpack.c.l.b16 %v5529
      %v5658 = vunpack.c.l.b16 %v5530
      %v5659 = vunpack.c.l.b16 %v5531
      %v5660 = vunpack.c.l.b16 %v5532
      %v5661 = vunpack.c.l.b16 %v5533
      %v5662 = vunpack.c.l.b16 %v5534
      %v5663 = vunpack.c.l.b16 %v5535
      %v5664 = vunpack.c.l.b16 %v5536
      %v5665 = vunpack.c.l.b16 %v5537
      %v5666 = vunpack.c.l.b16 %v5538
      %v5667 = vunpack.c.l.b16 %v5539
      %v5668 = vunpack.c.l.b16 %v5540
      %v5669 = vunpack.c.l.b16 %v5541
      %v5670 = vunpack.c.l.b16 %v5542
      %v5671 = vunpack.c.l.b16 %v5543
      %v5672 = vunpack.c.l.b16 %v5544
      %v5673 = vunpack.c.l.b16 %v5545
      %v5674 = vunpack.c.l.b16 %v5546
      %v5675 = vunpack.c.l.b16 %v5547
      %v5676 = vunpack.c.l.b16 %v5548
      %v5677 = vunpack.c.l.b16 %v5549
      %v5678 = vunpack.c.l.b16 %v5550
      %v5679 = vunpack.c.l.b16 %v5551
      %v5680 = vunpack.c.l.b16 %v5552
      %v5681 = vunpack.c.l.b16 %v5553
      %v5682 = vunpack.c.l.b16 %v5554
      %v5683 = vunpack.c.l.b16 %v5555
      %v5684 = vunpack.c.l.b16 %v5556
      %v5685 = vunpack.c.l.b16 %v5557
      %v5686 = vunpack.c.l.b16 %v5558
      %v5687 = vunpack.c.l.b16 %v5559
      %v5688 = vunpack.c.l.b16 %v5560
      %v5689 = vunpack.c.l.b16 %v5561
      %v5690 = vunpack.c.l.b16 %v5562
      %v5691 = vunpack.c.l.b16 %v5563
      %v5692 = vunpack.c.l.b16 %v5564
      %v5693 = vunpack.c.l.b16 %v5565
      %v5694 = vpack.c.b16 %v5630, %v5630
      %v5695 = vpack.c.b16 %v5631, %v5631
      %v5696 = vpack.c.b16 %v5632, %v5632
      %v5697 = vpack.c.b16 %v5633, %v5633
      %v5698 = vpack.c.b16 %v5634, %v5634
      %v5699 = vpack.c.b16 %v5635, %v5635
      %v5700 = vpack.c.b16 %v5636, %v5636
      %v5701 = vpack.c.b16 %v5637, %v5637
      %v5702 = vpack.c.b16 %v5638, %v5638
      %v5703 = vpack.c.b16 %v5639, %v5639
      %v5704 = vpack.c.b16 %v5640, %v5640
      %v5705 = vpack.c.b16 %v5641, %v5641
      %v5706 = vpack.c.b16 %v5642, %v5642
      %v5707 = vpack.c.b16 %v5643, %v5643
      %v5708 = vpack.c.b16 %v5644, %v5644
      %v5709 = vpack.c.b16 %v5645, %v5645
      %v5710 = vpack.c.b16 %v5646, %v5646
      %v5711 = vpack.c.b16 %v5647, %v5647
      %v5712 = vpack.c.b16 %v5648, %v5648
      %v5713 = vpack.c.b16 %v5649, %v5649
      %v5714 = vpack.c.b16 %v5650, %v5650
      %v5715 = vpack.c.b16 %v5651, %v5651
      %v5716 = vpack.c.b16 %v5652, %v5652
      %v5717 = vpack.c.b16 %v5653, %v5653
      %v5718 = vpack.c.b16 %v5654, %v5654
      %v5719 = vpack.c.b16 %v5655, %v5655
      %v5720 = vpack.c.b16 %v5656, %v5656
      %v5721 = vpack.c.b16 %v5657, %v5657
      %v5722 = vpack.c.b16 %v5658, %v5658
      %v5723 = vpack.c.b16 %v5659, %v5659
      %v5724 = vpack.c.b16 %v5660, %v5660
      %v5725 = vpack.c.b16 %v5661, %v5661
      %v5726 = vpack.c.b16 %v5662, %v5662
      %v5727 = vpack.c.b16 %v5663, %v5663
      %v5728 = vpack.c.b16 %v5664, %v5664
      %v5729 = vpack.c.b16 %v5665, %v5665
      %v5730 = vpack.c.b16 %v5666, %v5666
      %v5731 = vpack.c.b16 %v5667, %v5667
      %v5732 = vpack.c.b16 %v5668, %v5668
      %v5733 = vpack.c.b16 %v5669, %v5669
      %v5734 = vpack.c.b16 %v5670, %v5670
      %v5735 = vpack.c.b16 %v5671, %v5671
      %v5736 = vpack.c.b16 %v5672, %v5672
      %v5737 = vpack.c.b16 %v5673, %v5673
      %v5738 = vpack.c.b16 %v5674, %v5674
      %v5739 = vpack.c.b16 %v5675, %v5675
      %v5740 = vpack.c.b16 %v5676, %v5676
      %v5741 = vpack.c.b16 %v5677, %v5677
      %v5742 = vpack.c.b16 %v5678, %v5678
      %v5743 = vpack.c.b16 %v5679, %v5679
      %v5744 = vpack.c.b16 %v5680, %v5680
      %v5745 = vpack.c.b16 %v5681, %v5681
      %v5746 = vpack.c.b16 %v5682, %v5682
      %v5747 = vpack.c.b16 %v5683, %v5683
      %v5748 = vpack.c.b16 %v5684, %v5684
      %v5749 = vpack.c.b16 %v5685, %v5685
      %v5750 = vpack.c.b16 %v5686, %v5686
      %v5751 = vpack.c.b16 %v5687, %v5687
      %v5752 = vpack.c.b16 %v5688, %v5688
      %v5753 = vpack.c.b16 %v5689, %v5689
      %v5754 = vpack.c.b16 %v5690, %v5690
      %v5755 = vpack.c.b16 %v5691, %v5691
      %v5756 = vpack.c.b16 %v5692, %v5692
      %v5757 = vpack.c.b16 %v5693, %v5693
      %v5758 = vunpack.c.l.b16 %v5694
      %v5759 = vunpack.c.l.b16 %v5695
      %v5760 = vunpack.c.l.b16 %v5696
      %v5761 = vunpack.c.l.b16 %v5697
      %v5762 = vunpack.c.l.b16 %v5698
      %v5763 = vunpack.c.l.b16 %v5699
      %v5764 = vunpack.c.l.b16 %v5700
      %v5765 = vunpack.c.l.b16 %v5701
      %v5766 = vunpack.c.l.b16 %v5702
      %v5767 = vunpack.c.l.b16 %v5703
      %v5768 = vunpack.c.l.b16 %v5704
      %v5769 = vunpack.c.l.b16 %v5705
      %v5770 = vunpack.c.l.b16 %v5706
      %v5771 = vunpack.c.l.b16 %v5707
      %v5772 = vunpack.c.l.b16 %v5708
      %v5773 = vunpack.c.l.b16 %v5709
      %v5774 = vunpack.c.l.b16 %v5710
      %v5775 = vunpack.c.l.b16 %v5711
      %v5776 = vunpack.c.l.b16 %v5712
      %v5777 = vunpack.c.l.b16 %v5713
      %v5778 = vunpack.c.l.b16 %v5714
      %v5779 = vunpack.c.l.b16 %v5715
      %v5780 = vunpack.c.l.b16 %v5716
      %v5781 = vunpack.c.l.b16 %v5717
      %v5782 = vunpack.c.l.b16 %v5718
      %v5783 = vunpack.c.l.b16 %v5719
      %v5784 = vunpack.c.l.b16 %v5720
      %v5785 = vunpack.c.l.b16 %v5721
      %v5786 = vunpack.c.l.b16 %v5722
      %v5787 = vunpack.c.l.b16 %v5723
      %v5788 = vunpack.c.l.b16 %v5724
      %v5789 = vunpack.c.l.b16 %v5725
      %v5790 = vunpack.c.l.b16 %v5726
      %v5791 = vunpack.c.l.b16 %v5727
      %v5792 = vunpack.c.l.b16 %v5728
      %v5793 = vunpack.c.l.b16 %v5729
      %v5794 = vunpack.c.l.b16 %v5730
      %v5795 = vunpack.c.l.b16 %v5731
      %v5796 = vunpack.c.l.b16 %v5732
      %v5797 = vunpack.c.l.b16 %v5733
      %v5798 = vunpack.c.l.b16 %v5734
      %v5799 = vunpack.c.l.b16 %v5735
      %v5800 = vunpack.c.l.b16 %v5736
      %v5801 = vunpack.c.l.b16 %v5737
      %v5802 = vunpack.c.l.b16 %v5738
      %v5803 = vunpack.c.l.b16 %v5739
      %v5804 = vunpack.c.l.b16 %v5740
      %v5805 = vunpack.c.l.b16 %v5741
      %v5806 = vunpack.c.l.b16 %v5742
      %v5807 = vunpack.c.l.b16 %v5743
      %v5808 = vunpack.c.l.b16 %v5744
      %v5809 = vunpack.c.l.b16 %v5745
      %v5810 = vunpack.c.l.b16 %v5746
      %v5811 = vunpack.c.l.b16 %v5747
      %v5812 = vunpack.c.l.b16 %v5748
      %v5813 = vunpack.c.l.b16 %v5749
      %v5814 = vunpack.c.l.b16 %v5750
      %v5815 = vunpack.c.l.b16 %v5751
      %v5816 = vunpack.c.l.b16 %v5752
      %v5817 = vunpack.c.l.b16 %v5753
      %v5818 = vunpack.c.l.b16 %v5754
      %v5819 = vunpack.c.l.b16 %v5755
      %v5820 = vunpack.c.l.b16 %v5756
      %v5821 = vunpack.c.l.b16 %v5757
      %vm5822 = vcmask 1041409
      %v5823 = vsel %vm5822, %v5759, %v5758
      %vm5824 = vcmask 1042434
      %v5825 = vsel %vm5824, %v5760, %v5823
      %vm5826 = vcmask 1043459
      %v5827 = vsel %vm5826, %v5761, %v5825
      %vm5828 = vcmask 1044484
      %v5829 = vsel %vm5828, %v5762, %v5827
      %vm5830 = vcmask 1045509
      %v5831 = vsel %vm5830, %v5763, %v5829
      %vm5832 = vcmask 1046534
      %v5833 = vsel %vm5832, %v5764, %v5831
      %vm5834 = vcmask 1047559
      %v5835 = vsel %vm5834, %v5765, %v5833
      %v5836 = vsel %vm5822, %v5767, %v5766
      %v5837 = vsel %vm5824, %v5768, %v5836
      %v5838 = vsel %vm5826, %v5769, %v5837
      %v5839 = vsel %vm5828, %v5770, %v5838
      %v5840 = vsel %vm5830, %v5771, %v5839
      %v5841 = vsel %vm5832, %v5772, %v5840
      %v5842 = vsel %vm5834, %v5773, %v5841
      %v5843 = vsel %vm5822, %v5775, %v5774
      %v5844 = vsel %vm5824, %v5776, %v5843
      %v5845 = vsel %vm5826, %v5777, %v5844
      %v5846 = vsel %vm5828, %v5778, %v5845
      %v5847 = vsel %vm5830, %v5779, %v5846
      %v5848 = vsel %vm5832, %v5780, %v5847
      %v5849 = vsel %vm5834, %v5781, %v5848
      %v5850 = vsel %vm5822, %v5783, %v5782
      %v5851 = vsel %vm5824, %v5784, %v5850
      %v5852 = vsel %vm5826, %v5785, %v5851
      %v5853 = vsel %vm5828, %v5786, %v5852
      %v5854 = vsel %vm5830, %v5787, %v5853
      %v5855 = vsel %vm5832, %v5788, %v5854
      %v5856 = vsel %vm5834, %v5789, %v5855
      %v5857 = vsel %vm5822, %v5791, %v5790
      %v5858 = vsel %vm5824, %v5792, %v5857
      %v5859 = vsel %vm5826, %v5793, %v5858
      %v5860 = vsel %vm5828, %v5794, %v5859
      %v5861 = vsel %vm5830, %v5795, %v5860
      %v5862 = vsel %vm5832, %v5796, %v5861
      %v5863 = vsel %vm5834, %v5797, %v5862
      %v5864 = vsel %vm5822, %v5799, %v5798
      %v5865 = vsel %vm5824, %v5800, %v5864
      %v5866 = vsel %vm5826, %v5801, %v5865
      %v5867 = vsel %vm5828, %v5802, %v5866
      %v5868 = vsel %vm5830, %v5803, %v5867
      %v5869 = vsel %vm5832, %v5804, %v5868
      %v5870 = vsel %vm5834, %v5805, %v5869
      %v5871 = vsel %vm5822, %v5807, %v5806
      %v5872 = vsel %vm5824, %v5808, %v5871
      %v5873 = vsel %vm5826, %v5809, %v5872
      %v5874 = vsel %vm5828, %v5810, %v5873
      %v5875 = vsel %vm5830, %v5811, %v5874
      %v5876 = vsel %vm5832, %v5812, %v5875
      %v5877 = vsel %vm5834, %v5813, %v5876
      %v5878 = vsel %vm5822, %v5815, %v5814
      %v5879 = vsel %vm5824, %v5816, %v5878
      %v5880 = vsel %vm5826, %v5817, %v5879
      %v5881 = vsel %vm5828, %v5818, %v5880
      %v5882 = vsel %vm5830, %v5819, %v5881
      %v5883 = vsel %vm5832, %v5820, %v5882
      %v5884 = vsel %vm5834, %v5821, %v5883
      %v5885 = vpack.c.b16 %v5835, %v5835
      %v5886 = vpack.c.b16 %v5842, %v5842
      %v5887 = vpack.c.b16 %v5849, %v5849
      %v5888 = vpack.c.b16 %v5856, %v5856
      %v5889 = vpack.c.b16 %v5863, %v5863
      %v5890 = vpack.c.b16 %v5870, %v5870
      %v5891 = vpack.c.b16 %v5877, %v5877
      %v5892 = vpack.c.b16 %v5884, %v5884
      %vm5901 = vcmask 60416
      %5902 = vst.msk [vmem:[%s170] sm:$0xf] %vm5901, %v5885
      %5903 = vst.msk [vmem:[%s170 + $0x4] sm:$0xf] %vm5901, %v5886
      %5904 = vst.msk [vmem:[%s170 + $0x8] sm:$0xf] %vm5901, %v5887
      %5905 = vst.msk [vmem:[%s170 + $0xc] sm:$0xf] %vm5901, %v5888
      %5906 = vst.msk [vmem:[%s170 + $0x10] sm:$0xf] %vm5901, %v5889
      %5907 = vst.msk [vmem:[%s170 + $0x14] sm:$0xf] %vm5901, %v5890
      %5908 = vst.msk [vmem:[%s170 + $0x18] sm:$0xf] %vm5901, %v5891
      %5909 = vst.msk [vmem:[%s170 + $0x1c] sm:$0xf] %vm5901, %v5892
      %p5910 = scmp.lt.s32.totalorder %s14, 1
      %s5911 = scalar_select %p5910, %s14, 1
      %s5912 = smul.addr %s5911, 8
      %s5913 = smul.addr %s5912, 4
      %s5914 = scalar_lea.vmem %s3, %s5913
      // Predicated region
      $region33: #{img_model_forward.3} parent=31 // pred_check
        %p5915 = pneg %p100
      $region34: #{img_model_forward.3} parent=31 // pred_check_branch
        %5917 = sbr.rel (%p5915) target = $region36
      $region35: #{img_model_forward.3} parent=31 // pred_region
        _
      $region36: #{img_model_forward.3} parent=31 // pred_fallthru
        _
    $region32: #{img_model_forward.3} parent=5 // pred_fallthru
      _
    %p5918 = scmp.le.s32.totalorder 2, %s9
    // Predicated region
    $region37: #{img_model_forward.3} parent=5 // pred_check
      %p5919 = pneg %p5918
    $region38: #{img_model_forward.3} parent=5 // pred_check_branch
      %5921 = sbr.rel (%p5919) target = $region40
    $region39: #{img_model_forward.3} parent=5 // pred_region
      %s5922 = ssub.s32 %s9, 2
      // Predicated region
      $region41: #{img_model_forward.3} parent=39 // pred_check
        %p5923 = pneg %p106
      $region42: #{img_model_forward.3} parent=39 // pred_check_branch
        %5925 = sbr.rel (%p5923) target = $region44
      $region43: #{img_model_forward.3} parent=39 // pred_region
        %p5926 = scmp.lt.s32.totalorder %s15, 1
        %s5927 = scalar_select %p5926, %s15, 1
        %s5928 = smul.addr %s5927, 8
        %s5929 = smul.addr %s5928, 4
        %s5930 = scalar_lea.vmem %s3, %s5929
      $region44: #{img_model_forward.3} parent=39 // pred_fallthru
        _
    $region40: #{img_model_forward.3} parent=5 // pred_fallthru
      _
  $region6: #{img_model_forward.3} parent=0 // loop_footer
    %s13 = sadd.s32 1, %s9
  $region7: #{img_model_forward.3} parent=0 // loop_footer_branch
    %8 = sbr.rel target = $region3
  $region8: #{img_model_forward.3} parent=0 // loop_exit
    _

</llo_original>
